<compile_context>
chip_gen: v7x
topology: tpu7x:2x2x1
jax: 0.10.0
libtpu: 0.0.40
codegen_flags: <defaults>
</compile_context>

<pallas_src>
import functools

import jax
import jax.numpy as jnp
from jax.experimental import pallas as pl
from jax.experimental.pallas import tpu as pltpu

ACT_DTYPE = jnp.bfloat16            # activations / conv operands (MXU-native)
VMEM_LIMIT = 48 * 1024 * 1024       # raise v5e's 16 MiB default, stay < v7x 64 MiB physical


# ----------------------------------------------------------------------------
# Conv3d (kernel=3, stride=1, padding=1), fused bias + ReLU + BN batch stats.
# Grid step (n, z) reads padded depth planes z, z+1, z+2 and writes out[n, z].
# ----------------------------------------------------------------------------
def _conv3d_mxu_kernel(x0_ref, x1_ref, x2_ref, w_ref, b_ref, *out_refs,
                       H, W, relu, with_stats):
    """General path (Cin, Cout >= 8): 27 static-slice (H*W, Cin)x(Cin, Cout) MXU matmuls."""
    o_ref = out_refs[0]
    cout = o_ref.shape[-1]
    planes = (x0_ref, x1_ref, x2_ref)
    acc = jnp.zeros((H * W, cout), jnp.float32)
    for dz in range(3):
        for dy in range(3):
            for dx in range(3):
                win = planes[dz][0, 0, dy:dy + H, dx:dx + W, :]      # (H, W, Cin), static
                win = win.reshape(H * W, win.shape[-1])
                acc = acc + jnp.dot(win, w_ref[dz, dy, dx],
                                    preferred_element_type=jnp.float32)
    y = acc + b_ref[...]                                             # (H*W, Cout) + (1, Cout)
    if relu:
        y = jnp.maximum(y, 0.0)
    o_ref[...] = y.reshape(o_ref.shape).astype(o_ref.dtype)

    if with_stats:
        sum_ref, sq_ref = out_refs[1], out_refs[2]

        @pl.when(pl.program_id(1) == 0)
        def _():
            sum_ref[...] = jnp.zeros_like(sum_ref)
            sq_ref[...] = jnp.zeros_like(sq_ref)

        sum_ref[...] += jnp.sum(y, axis=0, keepdims=True).reshape(1, 1, cout)
        sq_ref[...] += jnp.sum(y * y, axis=0, keepdims=True).reshape(1, 1, cout)


def _conv3d_cin1_kernel(x0_ref, x1_ref, x2_ref, w_ref, b_ref, *out_refs,
                        H, W, relu, with_stats):
    """Cin == 1 (first encoder conv): 27 VPU broadcast multiply-accumulates."""
    o_ref = out_refs[0]
    cout = o_ref.shape[-1]
    planes = (x0_ref, x1_ref, x2_ref)
    acc = jnp.zeros((H * W, cout), jnp.float32)
    for dz in range(3):
        for dy in range(3):
            for dx in range(3):
                tap = dz * 9 + dy * 3 + dx
                win = planes[dz][0, 0, dy:dy + H, dx:dx + W, :]      # (H, W, 1)
                win = win.reshape(H * W, 1).astype(jnp.float32)
                acc = acc + win * w_ref[tap:tap + 1, :]              # (H*W,1)*(1,Cout)
    y = acc + b_ref[...]
    if relu:
        y = jnp.maximum(y, 0.0)
    o_ref[...] = y.reshape(o_ref.shape).astype(o_ref.dtype)

    if with_stats:
        sum_ref, sq_ref = out_refs[1], out_refs[2]

        @pl.when(pl.program_id(1) == 0)
        def _():
            sum_ref[...] = jnp.zeros_like(sum_ref)
            sq_ref[...] = jnp.zeros_like(sq_ref)

        sum_ref[...] += jnp.sum(y, axis=0, keepdims=True).reshape(1, 1, cout)
        sq_ref[...] += jnp.sum(y * y, axis=0, keepdims=True).reshape(1, 1, cout)


def _conv3d_cout1_kernel(x0_ref, x1_ref, x2_ref, w_ref, b_ref, o_ref, *, H, W):
    """Cout == 1 (last decoder conv): VPU MACs + one lane reduction (no N=1 matmuls)."""
    planes = (x0_ref, x1_ref, x2_ref)
    cin = x0_ref.shape[-1]
    acc = jnp.zeros((H * W, cin), jnp.float32)
    for dz in range(3):
        for dy in range(3):
            for dx in range(3):
                tap = dz * 9 + dy * 3 + dx
                win = planes[dz][0, 0, dy:dy + H, dx:dx + W, :]      # (H, W, Cin)
                win = win.reshape(H * W, cin).astype(jnp.float32)
                acc = acc + win * w_ref[tap:tap + 1, :]              # (H*W,Cin)*(1,Cin)
    out = jnp.sum(acc, axis=-1, keepdims=True) + b_ref[...]          # (H*W, 1) + (1, 1)
    o_ref[...] = out.reshape(o_ref.shape).astype(o_ref.dtype)


def conv3d_3x3x3(x, w, b, *, relu, with_stats, out_dtype=ACT_DTYPE):
    """x: (N, D, H, W, Cin); w: (Cout, Cin, 3, 3, 3) PyTorch layout; b: (Cout,).

    Returns y (N, D, H, W, Cout) and, if with_stats, per-batch-element channel
    sums / sums-of-squares of the post-activation output (for BatchNorm).
    """
    N, D, H, W, Cin = x.shape
    Cout = w.shape[0]
    xpad = jnp.pad(x.astype(ACT_DTYPE), ((0, 0), (1, 1), (1, 1), (1, 1), (0, 0)))
    b2 = b.reshape(1, Cout).astype(jnp.float32)

    if Cin == 1:
        wt = jnp.transpose(w, (2, 3, 4, 1, 0)).reshape(27, Cout).astype(jnp.float32)
        w_spec = pl.BlockSpec((27, Cout), lambda n, z: (0, 0))
        kernel = functools.partial(_conv3d_cin1_kernel, H=H, W=W,
                                   relu=relu, with_stats=with_stats)
    elif Cout == 1:
        assert (not with_stats) and (not relu)
        wt = jnp.transpose(w, (2, 3, 4, 0, 1)).reshape(27, Cin).astype(jnp.float32)
        w_spec = pl.BlockSpec((27, Cin), lambda n, z: (0, 0))
        kernel = functools.partial(_conv3d_cout1_kernel, H=H, W=W)
    else:
        wt = jnp.transpose(w, (2, 3, 4, 1, 0)).astype(ACT_DTYPE)     # (3,3,3,Cin,Cout)
        w_spec = pl.BlockSpec((3, 3, 3, Cin, Cout), lambda n, z: (0, 0, 0, 0, 0))
        kernel = functools.partial(_conv3d_mxu_kernel, H=H, W=W,
                                   relu=relu, with_stats=with_stats)

    def plane_spec(dz):
        # padded depth plane z+dz (whole (H+2, W+2, Cin) slab in VMEM)
        return pl.BlockSpec((1, 1, H + 2, W + 2, Cin),
                            lambda n, z, dz=dz: (n, z + dz, 0, 0, 0))

    out_shapes = [jax.ShapeDtypeStruct((N, D, H, W, Cout), out_dtype)]
    out_specs = [pl.BlockSpec((1, 1, H, W, Cout), lambda n, z: (n, z, 0, 0, 0))]
    if with_stats:
        stat_spec = pl.BlockSpec((1, 1, Cout), lambda n, z: (n, 0, 0))   # resident across z
        out_shapes += [jax.ShapeDtypeStruct((N, 1, Cout), jnp.float32)] * 2
        out_specs += [stat_spec, stat_spec]

    return pl.pallas_call(
        kernel,
        out_shape=tuple(out_shapes) if with_stats else out_shapes[0],
        grid=(N, D),
        in_specs=[plane_spec(0), plane_spec(1), plane_spec(2), w_spec,
                  pl.BlockSpec((1, Cout), lambda n, z: (0, 0))],
        out_specs=tuple(out_specs) if with_stats else out_specs[0],
        compiler_params=pltpu.CompilerParams(
            dimension_semantics=("parallel", "arbitrary"),   # keep N parallel for megacore
            vmem_limit_bytes=VMEM_LIMIT),
    )(xpad, xpad, xpad, wt, b2)


# ----------------------------------------------------------------------------
# BatchNorm3d normalize (training-mode batch statistics), lane-dense layout.
# ----------------------------------------------------------------------------
def _affine_kernel(x_ref, sc_ref, sh_ref, o_ref):
    o_ref[...] = (x_ref[...].astype(jnp.float32) * sc_ref[...]
                  + sh_ref[...]).astype(o_ref.dtype)


def batchnorm_affine(x, scale, shift):
    """x: (N, D, H, W, C); per-channel scale/shift.  Lane-dense (W*C) last dim."""
    N, D, H, W, C = x.shape
    x2 = x.reshape(N * D, H, W * C)
    sc = jnp.tile(scale.astype(jnp.float32), W).reshape(1, 1, W * C)
    sh = jnp.tile(shift.astype(jnp.float32), W).reshape(1, 1, W * C)
    y = pl.pallas_call(
        _affine_kernel,
        out_shape=jax.ShapeDtypeStruct(x2.shape, x.dtype),
        grid=(N * D,),
        in_specs=[
            pl.BlockSpec((1, H, W * C), lambda i: (i, 0, 0)),
            pl.BlockSpec((1, 1, W * C), lambda i: (0, 0, 0)),
            pl.BlockSpec((1, 1, W * C), lambda i: (0, 0, 0)),
        ],
        out_specs=pl.BlockSpec((1, H, W * C), lambda i: (i, 0, 0)),
        compiler_params=pltpu.CompilerParams(
            dimension_semantics=("parallel",),
            vmem_limit_bytes=VMEM_LIMIT),
    )(x2, sc, sh)
    return y.reshape(N, D, H, W, C)


def _bn_scale_shift(sums, sqs, count, gamma, beta, eps=1e-5):
    # Biased batch statistics (PyTorch training-mode forward).
    # Per-plane partial sums were reduced in-kernel (tree reduction), so only ~D
    # sequential f32 adds remain; clamp guards round-off in E[x^2] - mean^2.
    # TODO(synk): switch to a two-pass / Welford variance if bit-exact parity with
    # PyTorch is required for very large reductions.
    total = jnp.sum(sums, axis=(0, 1))
    total_sq = jnp.sum(sqs, axis=(0, 1))
    mean = total / count
    var = jnp.maximum(total_sq / count - mean * mean, 0.0)
    scale = gamma.astype(jnp.float32) * jax.lax.rsqrt(var + eps)
    shift = beta.astype(jnp.float32) - mean * scale
    return scale, shift


# ----------------------------------------------------------------------------
# Cheap glue kept in plain JAX.
# ----------------------------------------------------------------------------
def maxpool3d_2(x):
    # nn.MaxPool3d(2): kernel=2, stride=2 (all spatial dims even where used).
    N, D, H, W, C = x.shape
    x = x.reshape(N, D // 2, 2, H // 2, 2, W // 2, 2, C)
    return jnp.max(x, axis=(2, 4, 6))


def _interp_matrix(in_sz, out_sz):
    # PyTorch Upsample(mode='trilinear', align_corners=False) as an (out, in) matrix.
    scale = in_sz / out_sz
    o = jnp.arange(out_sz, dtype=jnp.float32)
    src = jnp.maximum((o + 0.5) * scale - 0.5, 0.0)
    i0 = jnp.clip(jnp.floor(src).astype(jnp.int32), 0, in_sz - 1)
    i1 = jnp.minimum(i0 + 1, in_sz - 1)
    w1 = src - i0.astype(jnp.float32)
    w0 = 1.0 - w1
    eye = jnp.eye(in_sz, dtype=jnp.float32)
    return w0[:, None] * eye[i0] + w1[:, None] * eye[i1]


def upsample_trilinear(x, size):
    # Separable trilinear interpolation via small matrix contractions (MXU friendly).
    Ad = _interp_matrix(x.shape[1], size[0])
    Ah = _interp_matrix(x.shape[2], size[1])
    Aw = _interp_matrix(x.shape[3], size[2])
    xf = x.astype(jnp.float32)
    xf = jnp.einsum('od,ndhwc->nohwc', Ad, xf)
    xf = jnp.einsum('ph,ndhwc->ndpwc', Ah, xf)
    xf = jnp.einsum('qw,ndhwc->ndhqc', Aw, xf)
    return xf.astype(ACT_DTYPE)


# ----------------------------------------------------------------------------
# Parameters (deterministic synthetic init, PyTorch-shaped) and forward.
# ----------------------------------------------------------------------------
def _conv_init(key, cin, cout):
    kw, kb = jax.random.split(key)
    bound = 1.0 / float(cin * 27) ** 0.5
    w = jax.random.uniform(kw, (cout, cin, 3, 3, 3), jnp.float32, -bound, bound)
    b = jax.random.uniform(kb, (cout,), jnp.float32, -bound, bound)
    return w, b


def init_params(key, hidden_dim):
    enc_c = [(1, 64), (64, 64), (64, 64), (64, 64), (64, 64), (64, hidden_dim)]
    dec_c = [(hidden_dim, 64), (64, 64), (64, 64), (64, 64), (64, 64), (64, 1)]
    keys = jax.random.split(key, len(enc_c) + len(dec_c))
    params = {"enc_conv": [], "enc_bn": [], "dec_conv": [], "dec_bn": []}
    for i, (ci, co) in enumerate(enc_c):
        params["enc_conv"].append(_conv_init(keys[i], ci, co))
    for i, (ci, co) in enumerate(dec_c):
        params["dec_conv"].append(_conv_init(keys[len(enc_c) + i], ci, co))
    for _ in range(5):  # 5 BatchNorm3d(64) in encoder, 5 in decoder (default init)
        params["enc_bn"].append((jnp.ones((64,), jnp.float32),
                                 jnp.zeros((64,), jnp.float32)))
        params["dec_bn"].append((jnp.ones((64,), jnp.float32),
                                 jnp.zeros((64,), jnp.float32)))
    return params


def ae3d_forward(x_ncdhw, params):
    x = jnp.transpose(x_ncdhw, (0, 2, 3, 4, 1)).astype(jnp.float32)   # NCDHW -> NDHWC

    # ---------------- encoder ----------------
    for i in range(5):                       # Conv+ReLU (+BN stats), BN, MaxPool (first 4)
        w, b = params["enc_conv"][i]
        x, s, q = conv3d_3x3x3(x, w, b, relu=True, with_stats=True)
        g, be = params["enc_bn"][i]
        n, d, h, ww, _ = x.shape
        scale, shift = _bn_scale_shift(s, q, float(n * d * h * ww), g, be)
        x = batchnorm_affine(x, scale, shift)
        if i < 4:
            x = maxpool3d_2(x)
    w, b = params["enc_conv"][5]                                   # Conv(64 -> hidden)
    x = conv3d_3x3x3(x, w, b, relu=False, with_stats=False)
    z = jnp.mean(x.astype(jnp.float32), axis=(1, 2, 3))            # AdaptiveAvgPool + Flatten

    # ---------------- decoder ----------------
    y = z.reshape(z.shape[0], 1, 1, 1, z.shape[1]).astype(ACT_DTYPE)   # Unflatten (NDHWC)
    sizes = [(3, 4, 3), (7, 8, 7), (14, 17, 14), (29, 35, 29), (58, 70, 58)]
    for i, sz in enumerate(sizes):
        y = upsample_trilinear(y, sz)
        w, b = params["dec_conv"][i]
        y, s, q = conv3d_3x3x3(y, w, b, relu=True, with_stats=True)
        g, be = params["dec_bn"][i]
        n, d, h, ww, _ = y.shape
        scale, shift = _bn_scale_shift(s, q, float(n * d * h * ww), g, be)
        y = batchnorm_affine(y, scale, shift)
    w, b = params["dec_conv"][5]                                   # Conv(64 -> 1), no activation
    y = conv3d_3x3x3(y, w, b, relu=False, with_stats=False, out_dtype=jnp.float32)

    return jnp.transpose(y, (0, 4, 1, 2, 3))                       # back to NCDHW


if __name__ == "__main__":
    hidden_dim = 32                          # small; module default is 256
    key = jax.random.PRNGKey(0)
    pkey, xkey = jax.random.split(key)
    params = init_params(pkey, hidden_dim)

    # NCDHW like PyTorch: (N=2, C=1, D=16, H=16, W=16); 16 survives 4x MaxPool3d(2).
    x = jax.random.normal(xkey, (2, 1, 16, 16, 16), jnp.float32)

    out = ae3d_forward(x, params)
    out = jax.block_until_ready(out)
    assert out.shape == (2, 1, 58, 70, 58), out.shape   # fixed by the decoder Upsample sizes
    assert bool(jnp.all(jnp.isfinite(out)))
    print("KERNEL_OK")
</pallas_src>

<mosaic_0001>
module attributes {stable_mosaic.version = 11 : i64} {
  func.func @_conv3d_cin1_kernel(%arg0: i32, %arg1: i32, %arg2: memref<1x1x18x18x1xbf16, #tpu.memory_space<vmem>>, %arg3: memref<1x1x18x18x1xbf16, #tpu.memory_space<vmem>>, %arg4: memref<1x1x18x18x1xbf16, #tpu.memory_space<vmem>>, %arg5: memref<27x64xf32, #tpu.memory_space<vmem>>, %arg6: memref<1x64xf32, #tpu.memory_space<vmem>>, %arg7: memref<1x1x16x16x64xbf16, #tpu.memory_space<vmem>>, %arg8: memref<1x1x64xf32, #tpu.memory_space<vmem>>, %arg9: memref<1x1x64xf32, #tpu.memory_space<vmem>>) attributes {dimension_semantics = [#tpu.dimension_semantics<parallel>, #tpu.dimension_semantics<arbitrary>], iteration_bounds = array<i64: 2, 16>, scalar_prefetch = 0 : i64, scratch_operands = 0 : i64, tpu.core_type = #tpu.core_type<tc>, window_params = [{transform_indices = @transform_0, window_bounds = array<i64: 1, 1, 18, 18, 1>}, {transform_indices = @transform_1, window_bounds = array<i64: 1, 1, 18, 18, 1>}, {transform_indices = @transform_2, window_bounds = array<i64: 1, 1, 18, 18, 1>}, {pipeline_mode = #tpu.pipeline_mode<synchronous>, transform_indices = @transform_3, window_bounds = array<i64: 27, 64>}, {pipeline_mode = #tpu.pipeline_mode<synchronous>, transform_indices = @transform_4, window_bounds = array<i64: 1, 64>}, {transform_indices = @transform_5, window_bounds = array<i64: 1, 1, 16, 16, 64>}, {transform_indices = @transform_6, window_bounds = array<i64: 1, 1, 64>}, {transform_indices = @transform_7, window_bounds = array<i64: 1, 1, 64>}]} {
    %cst = arith.constant 0.000000e+00 : f32
    %0 = vector.broadcast %cst : f32 to vector<256x64xf32>
    %c0 = arith.constant 0 : index
    %c0_0 = arith.constant 0 : index
    %c0_1 = arith.constant 0 : index
    %c0_2 = arith.constant 0 : index
    %c0_3 = arith.constant 0 : index
    %1 = vector.load %arg2[%c0, %c0_0, %c0_1, %c0_2, %c0_3] : memref<1x1x18x18x1xbf16, #tpu.memory_space<vmem>>, vector<1x1x16x16x1xbf16>
    %2 = vector.shape_cast %1 : vector<1x1x16x16x1xbf16> to vector<16x16x1xbf16>
    %3 = vector.shape_cast %2 : vector<16x16x1xbf16> to vector<256x1xbf16>
    %4 = arith.extf %3 : vector<256x1xbf16> to vector<256x1xf32>
    %c0_4 = arith.constant 0 : index
    %c0_5 = arith.constant 0 : index
    %5 = vector.load %arg5[%c0_4, %c0_5] : memref<27x64xf32, #tpu.memory_space<vmem>>, vector<1x64xf32>
    %6 = vector.broadcast %4 : vector<256x1xf32> to vector<256x64xf32>
    %7 = vector.broadcast %5 : vector<1x64xf32> to vector<256x64xf32>
    %8 = arith.mulf %6, %7 : vector<256x64xf32>
    %9 = arith.addf %0, %8 : vector<256x64xf32>
    %c0_6 = arith.constant 0 : index
    %c0_7 = arith.constant 0 : index
    %c0_8 = arith.constant 0 : index
    %c1 = arith.constant 1 : index
    %c0_9 = arith.constant 0 : index
    %10 = vector.load %arg2[%c0_6, %c0_7, %c0_8, %c1, %c0_9] : memref<1x1x18x18x1xbf16, #tpu.memory_space<vmem>>, vector<1x1x16x16x1xbf16>
    %11 = vector.shape_cast %10 : vector<1x1x16x16x1xbf16> to vector<16x16x1xbf16>
    %12 = vector.shape_cast %11 : vector<16x16x1xbf16> to vector<256x1xbf16>
    %13 = arith.extf %12 : vector<256x1xbf16> to vector<256x1xf32>
    %c1_10 = arith.constant 1 : index
    %c0_11 = arith.constant 0 : index
    %14 = vector.load %arg5[%c1_10, %c0_11] : memref<27x64xf32, #tpu.memory_space<vmem>>, vector<1x64xf32>
    %15 = vector.broadcast %13 : vector<256x1xf32> to vector<256x64xf32>
    %16 = vector.broadcast %14 : vector<1x64xf32> to vector<256x64xf32>
    %17 = arith.mulf %15, %16 : vector<256x64xf32>
    %18 = arith.addf %9, %17 : vector<256x64xf32>
    %c0_12 = arith.constant 0 : index
    %c0_13 = arith.constant 0 : index
    %c0_14 = arith.constant 0 : index
    %c2 = arith.constant 2 : index
    %c0_15 = arith.constant 0 : index
    %19 = vector.load %arg2[%c0_12, %c0_13, %c0_14, %c2, %c0_15] : memref<1x1x18x18x1xbf16, #tpu.memory_space<vmem>>, vector<1x1x16x16x1xbf16>
    %20 = vector.shape_cast %19 : vector<1x1x16x16x1xbf16> to vector<16x16x1xbf16>
    %21 = vector.shape_cast %20 : vector<16x16x1xbf16> to vector<256x1xbf16>
    %22 = arith.extf %21 : vector<256x1xbf16> to vector<256x1xf32>
    %c2_16 = arith.constant 2 : index
    %c0_17 = arith.constant 0 : index
    %23 = vector.load %arg5[%c2_16, %c0_17] : memref<27x64xf32, #tpu.memory_space<vmem>>, vector<1x64xf32>
    %24 = vector.broadcast %22 : vector<256x1xf32> to vector<256x64xf32>
    %25 = vector.broadcast %23 : vector<1x64xf32> to vector<256x64xf32>
    %26 = arith.mulf %24, %25 : vector<256x64xf32>
    %27 = arith.addf %18, %26 : vector<256x64xf32>
    %c0_18 = arith.constant 0 : index
    %c0_19 = arith.constant 0 : index
    %c1_20 = arith.constant 1 : index
    %c0_21 = arith.constant 0 : index
    %c0_22 = arith.constant 0 : index
    %28 = vector.load %arg2[%c0_18, %c0_19, %c1_20, %c0_21, %c0_22] : memref<1x1x18x18x1xbf16, #tpu.memory_space<vmem>>, vector<1x1x16x16x1xbf16>
    %29 = vector.shape_cast %28 : vector<1x1x16x16x1xbf16> to vector<16x16x1xbf16>
    %30 = vector.shape_cast %29 : vector<16x16x1xbf16> to vector<256x1xbf16>
    %31 = arith.extf %30 : vector<256x1xbf16> to vector<256x1xf32>
    %c3 = arith.constant 3 : index
    %c0_23 = arith.constant 0 : index
    %32 = vector.load %arg5[%c3, %c0_23] : memref<27x64xf32, #tpu.memory_space<vmem>>, vector<1x64xf32>
    %33 = vector.broadcast %31 : vector<256x1xf32> to vector<256x64xf32>
    %34 = vector.broadcast %32 : vector<1x64xf32> to vector<256x64xf32>
    %35 = arith.mulf %33, %34 : vector<256x64xf32>
    %36 = arith.addf %27, %35 : vector<256x64xf32>
    %c0_24 = arith.constant 0 : index
    %c0_25 = arith.constant 0 : index
    %c1_26 = arith.constant 1 : index
    %c1_27 = arith.constant 1 : index
    %c0_28 = arith.constant 0 : index
    %37 = vector.load %arg2[%c0_24, %c0_25, %c1_26, %c1_27, %c0_28] : memref<1x1x18x18x1xbf16, #tpu.memory_space<vmem>>, vector<1x1x16x16x1xbf16>
    %38 = vector.shape_cast %37 : vector<1x1x16x16x1xbf16> to vector<16x16x1xbf16>
    %39 = vector.shape_cast %38 : vector<16x16x1xbf16> to vector<256x1xbf16>
    %40 = arith.extf %39 : vector<256x1xbf16> to vector<256x1xf32>
    %c4 = arith.constant 4 : index
    %c0_29 = arith.constant 0 : index
    %41 = vector.load %arg5[%c4, %c0_29] : memref<27x64xf32, #tpu.memory_space<vmem>>, vector<1x64xf32>
    %42 = vector.broadcast %40 : vector<256x1xf32> to vector<256x64xf32>
    %43 = vector.broadcast %41 : vector<1x64xf32> to vector<256x64xf32>
    %44 = arith.mulf %42, %43 : vector<256x64xf32>
    %45 = arith.addf %36, %44 : vector<256x64xf32>
    %c0_30 = arith.constant 0 : index
    %c0_31 = arith.constant 0 : index
    %c1_32 = arith.constant 1 : index
    %c2_33 = arith.constant 2 : index
    %c0_34 = arith.constant 0 : index
    %46 = vector.load %arg2[%c0_30, %c0_31, %c1_32, %c2_33, %c0_34] : memref<1x1x18x18x1xbf16, #tpu.memory_space<vmem>>, vector<1x1x16x16x1xbf16>
    %47 = vector.shape_cast %46 : vector<1x1x16x16x1xbf16> to vector<16x16x1xbf16>
    %48 = vector.shape_cast %47 : vector<16x16x1xbf16> to vector<256x1xbf16>
    %49 = arith.extf %48 : vector<256x1xbf16> to vector<256x1xf32>
    %c5 = arith.constant 5 : index
    %c0_35 = arith.constant 0 : index
    %50 = vector.load %arg5[%c5, %c0_35] : memref<27x64xf32, #tpu.memory_space<vmem>>, vector<1x64xf32>
    %51 = vector.broadcast %49 : vector<256x1xf32> to vector<256x64xf32>
    %52 = vector.broadcast %50 : vector<1x64xf32> to vector<256x64xf32>
    %53 = arith.mulf %51, %52 : vector<256x64xf32>
    %54 = arith.addf %45, %53 : vector<256x64xf32>
    %c0_36 = arith.constant 0 : index
    %c0_37 = arith.constant 0 : index
    %c2_38 = arith.constant 2 : index
    %c0_39 = arith.constant 0 : index
    %c0_40 = arith.constant 0 : index
    %55 = vector.load %arg2[%c0_36, %c0_37, %c2_38, %c0_39, %c0_40] : memref<1x1x18x18x1xbf16, #tpu.memory_space<vmem>>, vector<1x1x16x16x1xbf16>
    %56 = vector.shape_cast %55 : vector<1x1x16x16x1xbf16> to vector<16x16x1xbf16>
    %57 = vector.shape_cast %56 : vector<16x16x1xbf16> to vector<256x1xbf16>
    %58 = arith.extf %57 : vector<256x1xbf16> to vector<256x1xf32>
    %c6 = arith.constant 6 : index
    %c0_41 = arith.constant 0 : index
    %59 = vector.load %arg5[%c6, %c0_41] : memref<27x64xf32, #tpu.memory_space<vmem>>, vector<1x64xf32>
    %60 = vector.broadcast %58 : vector<256x1xf32> to vector<256x64xf32>
    %61 = vector.broadcast %59 : vector<1x64xf32> to vector<256x64xf32>
    %62 = arith.mulf %60, %61 : vector<256x64xf32>
    %63 = arith.addf %54, %62 : vector<256x64xf32>
    %c0_42 = arith.constant 0 : index
    %c0_43 = arith.constant 0 : index
    %c2_44 = arith.constant 2 : index
    %c1_45 = arith.constant 1 : index
    %c0_46 = arith.constant 0 : index
    %64 = vector.load %arg2[%c0_42, %c0_43, %c2_44, %c1_45, %c0_46] : memref<1x1x18x18x1xbf16, #tpu.memory_space<vmem>>, vector<1x1x16x16x1xbf16>
    %65 = vector.shape_cast %64 : vector<1x1x16x16x1xbf16> to vector<16x16x1xbf16>
    %66 = vector.shape_cast %65 : vector<16x16x1xbf16> to vector<256x1xbf16>
    %67 = arith.extf %66 : vector<256x1xbf16> to vector<256x1xf32>
    %c7 = arith.constant 7 : index
    %c0_47 = arith.constant 0 : index
    %68 = vector.load %arg5[%c7, %c0_47] : memref<27x64xf32, #tpu.memory_space<vmem>>, vector<1x64xf32>
    %69 = vector.broadcast %67 : vector<256x1xf32> to vector<256x64xf32>
    %70 = vector.broadcast %68 : vector<1x64xf32> to vector<256x64xf32>
    %71 = arith.mulf %69, %70 : vector<256x64xf32>
    %72 = arith.addf %63, %71 : vector<256x64xf32>
    %c0_48 = arith.constant 0 : index
    %c0_49 = arith.constant 0 : index
    %c2_50 = arith.constant 2 : index
    %c2_51 = arith.constant 2 : index
    %c0_52 = arith.constant 0 : index
    %73 = vector.load %arg2[%c0_48, %c0_49, %c2_50, %c2_51, %c0_52] : memref<1x1x18x18x1xbf16, #tpu.memory_space<vmem>>, vector<1x1x16x16x1xbf16>
    %74 = vector.shape_cast %73 : vector<1x1x16x16x1xbf16> to vector<16x16x1xbf16>
    %75 = vector.shape_cast %74 : vector<16x16x1xbf16> to vector<256x1xbf16>
    %76 = arith.extf %75 : vector<256x1xbf16> to vector<256x1xf32>
    %c8 = arith.constant 8 : index
    %c0_53 = arith.constant 0 : index
    %77 = vector.load %arg5[%c8, %c0_53] : memref<27x64xf32, #tpu.memory_space<vmem>>, vector<1x64xf32>
    %78 = vector.broadcast %76 : vector<256x1xf32> to vector<256x64xf32>
    %79 = vector.broadcast %77 : vector<1x64xf32> to vector<256x64xf32>
    %80 = arith.mulf %78, %79 : vector<256x64xf32>
    %81 = arith.addf %72, %80 : vector<256x64xf32>
    %c0_54 = arith.constant 0 : index
    %c0_55 = arith.constant 0 : index
    %c0_56 = arith.constant 0 : index
    %c0_57 = arith.constant 0 : index
    %c0_58 = arith.constant 0 : index
    %82 = vector.load %arg3[%c0_54, %c0_55, %c0_56, %c0_57, %c0_58] : memref<1x1x18x18x1xbf16, #tpu.memory_space<vmem>>, vector<1x1x16x16x1xbf16>
    %83 = vector.shape_cast %82 : vector<1x1x16x16x1xbf16> to vector<16x16x1xbf16>
    %84 = vector.shape_cast %83 : vector<16x16x1xbf16> to vector<256x1xbf16>
    %85 = arith.extf %84 : vector<256x1xbf16> to vector<256x1xf32>
    %c9 = arith.constant 9 : index
    %c0_59 = arith.constant 0 : index
    %86 = vector.load %arg5[%c9, %c0_59] : memref<27x64xf32, #tpu.memory_space<vmem>>, vector<1x64xf32>
    %87 = vector.broadcast %85 : vector<256x1xf32> to vector<256x64xf32>
    %88 = vector.broadcast %86 : vector<1x64xf32> to vector<256x64xf32>
    %89 = arith.mulf %87, %88 : vector<256x64xf32>
    %90 = arith.addf %81, %89 : vector<256x64xf32>
    %c0_60 = arith.constant 0 : index
    %c0_61 = arith.constant 0 : index
    %c0_62 = arith.constant 0 : index
    %c1_63 = arith.constant 1 : index
    %c0_64 = arith.constant 0 : index
    %91 = vector.load %arg3[%c0_60, %c0_61, %c0_62, %c1_63, %c0_64] : memref<1x1x18x18x1xbf16, #tpu.memory_space<vmem>>, vector<1x1x16x16x1xbf16>
    %92 = vector.shape_cast %91 : vector<1x1x16x16x1xbf16> to vector<16x16x1xbf16>
    %93 = vector.shape_cast %92 : vector<16x16x1xbf16> to vector<256x1xbf16>
    %94 = arith.extf %93 : vector<256x1xbf16> to vector<256x1xf32>
    %c10 = arith.constant 10 : index
    %c0_65 = arith.constant 0 : index
    %95 = vector.load %arg5[%c10, %c0_65] : memref<27x64xf32, #tpu.memory_space<vmem>>, vector<1x64xf32>
    %96 = vector.broadcast %94 : vector<256x1xf32> to vector<256x64xf32>
    %97 = vector.broadcast %95 : vector<1x64xf32> to vector<256x64xf32>
    %98 = arith.mulf %96, %97 : vector<256x64xf32>
    %99 = arith.addf %90, %98 : vector<256x64xf32>
    %c0_66 = arith.constant 0 : index
    %c0_67 = arith.constant 0 : index
    %c0_68 = arith.constant 0 : index
    %c2_69 = arith.constant 2 : index
    %c0_70 = arith.constant 0 : index
    %100 = vector.load %arg3[%c0_66, %c0_67, %c0_68, %c2_69, %c0_70] : memref<1x1x18x18x1xbf16, #tpu.memory_space<vmem>>, vector<1x1x16x16x1xbf16>
    %101 = vector.shape_cast %100 : vector<1x1x16x16x1xbf16> to vector<16x16x1xbf16>
    %102 = vector.shape_cast %101 : vector<16x16x1xbf16> to vector<256x1xbf16>
    %103 = arith.extf %102 : vector<256x1xbf16> to vector<256x1xf32>
    %c11 = arith.constant 11 : index
    %c0_71 = arith.constant 0 : index
    %104 = vector.load %arg5[%c11, %c0_71] : memref<27x64xf32, #tpu.memory_space<vmem>>, vector<1x64xf32>
    %105 = vector.broadcast %103 : vector<256x1xf32> to vector<256x64xf32>
    %106 = vector.broadcast %104 : vector<1x64xf32> to vector<256x64xf32>
    %107 = arith.mulf %105, %106 : vector<256x64xf32>
    %108 = arith.addf %99, %107 : vector<256x64xf32>
    %c0_72 = arith.constant 0 : index
    %c0_73 = arith.constant 0 : index
    %c1_74 = arith.constant 1 : index
    %c0_75 = arith.constant 0 : index
    %c0_76 = arith.constant 0 : index
    %109 = vector.load %arg3[%c0_72, %c0_73, %c1_74, %c0_75, %c0_76] : memref<1x1x18x18x1xbf16, #tpu.memory_space<vmem>>, vector<1x1x16x16x1xbf16>
    %110 = vector.shape_cast %109 : vector<1x1x16x16x1xbf16> to vector<16x16x1xbf16>
    %111 = vector.shape_cast %110 : vector<16x16x1xbf16> to vector<256x1xbf16>
    %112 = arith.extf %111 : vector<256x1xbf16> to vector<256x1xf32>
    %c12 = arith.constant 12 : index
    %c0_77 = arith.constant 0 : index
    %113 = vector.load %arg5[%c12, %c0_77] : memref<27x64xf32, #tpu.memory_space<vmem>>, vector<1x64xf32>
    %114 = vector.broadcast %112 : vector<256x1xf32> to vector<256x64xf32>
    %115 = vector.broadcast %113 : vector<1x64xf32> to vector<256x64xf32>
    %116 = arith.mulf %114, %115 : vector<256x64xf32>
    %117 = arith.addf %108, %116 : vector<256x64xf32>
    %c0_78 = arith.constant 0 : index
    %c0_79 = arith.constant 0 : index
    %c1_80 = arith.constant 1 : index
    %c1_81 = arith.constant 1 : index
    %c0_82 = arith.constant 0 : index
    %118 = vector.load %arg3[%c0_78, %c0_79, %c1_80, %c1_81, %c0_82] : memref<1x1x18x18x1xbf16, #tpu.memory_space<vmem>>, vector<1x1x16x16x1xbf16>
    %119 = vector.shape_cast %118 : vector<1x1x16x16x1xbf16> to vector<16x16x1xbf16>
    %120 = vector.shape_cast %119 : vector<16x16x1xbf16> to vector<256x1xbf16>
    %121 = arith.extf %120 : vector<256x1xbf16> to vector<256x1xf32>
    %c13 = arith.constant 13 : index
    %c0_83 = arith.constant 0 : index
    %122 = vector.load %arg5[%c13, %c0_83] : memref<27x64xf32, #tpu.memory_space<vmem>>, vector<1x64xf32>
    %123 = vector.broadcast %121 : vector<256x1xf32> to vector<256x64xf32>
    %124 = vector.broadcast %122 : vector<1x64xf32> to vector<256x64xf32>
    %125 = arith.mulf %123, %124 : vector<256x64xf32>
    %126 = arith.addf %117, %125 : vector<256x64xf32>
    %c0_84 = arith.constant 0 : index
    %c0_85 = arith.constant 0 : index
    %c1_86 = arith.constant 1 : index
    %c2_87 = arith.constant 2 : index
    %c0_88 = arith.constant 0 : index
    %127 = vector.load %arg3[%c0_84, %c0_85, %c1_86, %c2_87, %c0_88] : memref<1x1x18x18x1xbf16, #tpu.memory_space<vmem>>, vector<1x1x16x16x1xbf16>
    %128 = vector.shape_cast %127 : vector<1x1x16x16x1xbf16> to vector<16x16x1xbf16>
    %129 = vector.shape_cast %128 : vector<16x16x1xbf16> to vector<256x1xbf16>
    %130 = arith.extf %129 : vector<256x1xbf16> to vector<256x1xf32>
    %c14 = arith.constant 14 : index
    %c0_89 = arith.constant 0 : index
    %131 = vector.load %arg5[%c14, %c0_89] : memref<27x64xf32, #tpu.memory_space<vmem>>, vector<1x64xf32>
    %132 = vector.broadcast %130 : vector<256x1xf32> to vector<256x64xf32>
    %133 = vector.broadcast %131 : vector<1x64xf32> to vector<256x64xf32>
    %134 = arith.mulf %132, %133 : vector<256x64xf32>
    %135 = arith.addf %126, %134 : vector<256x64xf32>
    %c0_90 = arith.constant 0 : index
    %c0_91 = arith.constant 0 : index
    %c2_92 = arith.constant 2 : index
    %c0_93 = arith.constant 0 : index
    %c0_94 = arith.constant 0 : index
    %136 = vector.load %arg3[%c0_90, %c0_91, %c2_92, %c0_93, %c0_94] : memref<1x1x18x18x1xbf16, #tpu.memory_space<vmem>>, vector<1x1x16x16x1xbf16>
    %137 = vector.shape_cast %136 : vector<1x1x16x16x1xbf16> to vector<16x16x1xbf16>
    %138 = vector.shape_cast %137 : vector<16x16x1xbf16> to vector<256x1xbf16>
    %139 = arith.extf %138 : vector<256x1xbf16> to vector<256x1xf32>
    %c15 = arith.constant 15 : index
    %c0_95 = arith.constant 0 : index
    %140 = vector.load %arg5[%c15, %c0_95] : memref<27x64xf32, #tpu.memory_space<vmem>>, vector<1x64xf32>
    %141 = vector.broadcast %139 : vector<256x1xf32> to vector<256x64xf32>
    %142 = vector.broadcast %140 : vector<1x64xf32> to vector<256x64xf32>
    %143 = arith.mulf %141, %142 : vector<256x64xf32>
    %144 = arith.addf %135, %143 : vector<256x64xf32>
    %c0_96 = arith.constant 0 : index
    %c0_97 = arith.constant 0 : index
    %c2_98 = arith.constant 2 : index
    %c1_99 = arith.constant 1 : index
    %c0_100 = arith.constant 0 : index
    %145 = vector.load %arg3[%c0_96, %c0_97, %c2_98, %c1_99, %c0_100] : memref<1x1x18x18x1xbf16, #tpu.memory_space<vmem>>, vector<1x1x16x16x1xbf16>
    %146 = vector.shape_cast %145 : vector<1x1x16x16x1xbf16> to vector<16x16x1xbf16>
    %147 = vector.shape_cast %146 : vector<16x16x1xbf16> to vector<256x1xbf16>
    %148 = arith.extf %147 : vector<256x1xbf16> to vector<256x1xf32>
    %c16 = arith.constant 16 : index
    %c0_101 = arith.constant 0 : index
    %149 = vector.load %arg5[%c16, %c0_101] : memref<27x64xf32, #tpu.memory_space<vmem>>, vector<1x64xf32>
    %150 = vector.broadcast %148 : vector<256x1xf32> to vector<256x64xf32>
    %151 = vector.broadcast %149 : vector<1x64xf32> to vector<256x64xf32>
    %152 = arith.mulf %150, %151 : vector<256x64xf32>
    %153 = arith.addf %144, %152 : vector<256x64xf32>
    %c0_102 = arith.constant 0 : index
    %c0_103 = arith.constant 0 : index
    %c2_104 = arith.constant 2 : index
    %c2_105 = arith.constant 2 : index
    %c0_106 = arith.constant 0 : index
    %154 = vector.load %arg3[%c0_102, %c0_103, %c2_104, %c2_105, %c0_106] : memref<1x1x18x18x1xbf16, #tpu.memory_space<vmem>>, vector<1x1x16x16x1xbf16>
    %155 = vector.shape_cast %154 : vector<1x1x16x16x1xbf16> to vector<16x16x1xbf16>
    %156 = vector.shape_cast %155 : vector<16x16x1xbf16> to vector<256x1xbf16>
    %157 = arith.extf %156 : vector<256x1xbf16> to vector<256x1xf32>
    %c17 = arith.constant 17 : index
    %c0_107 = arith.constant 0 : index
    %158 = vector.load %arg5[%c17, %c0_107] : memref<27x64xf32, #tpu.memory_space<vmem>>, vector<1x64xf32>
    %159 = vector.broadcast %157 : vector<256x1xf32> to vector<256x64xf32>
    %160 = vector.broadcast %158 : vector<1x64xf32> to vector<256x64xf32>
    %161 = arith.mulf %159, %160 : vector<256x64xf32>
    %162 = arith.addf %153, %161 : vector<256x64xf32>
    %c0_108 = arith.constant 0 : index
    %c0_109 = arith.constant 0 : index
    %c0_110 = arith.constant 0 : index
    %c0_111 = arith.constant 0 : index
    %c0_112 = arith.constant 0 : index
    %163 = vector.load %arg4[%c0_108, %c0_109, %c0_110, %c0_111, %c0_112] : memref<1x1x18x18x1xbf16, #tpu.memory_space<vmem>>, vector<1x1x16x16x1xbf16>
    %164 = vector.shape_cast %163 : vector<1x1x16x16x1xbf16> to vector<16x16x1xbf16>
    %165 = vector.shape_cast %164 : vector<16x16x1xbf16> to vector<256x1xbf16>
    %166 = arith.extf %165 : vector<256x1xbf16> to vector<256x1xf32>
    %c18 = arith.constant 18 : index
    %c0_113 = arith.constant 0 : index
    %167 = vector.load %arg5[%c18, %c0_113] : memref<27x64xf32, #tpu.memory_space<vmem>>, vector<1x64xf32>
    %168 = vector.broadcast %166 : vector<256x1xf32> to vector<256x64xf32>
    %169 = vector.broadcast %167 : vector<1x64xf32> to vector<256x64xf32>
    %170 = arith.mulf %168, %169 : vector<256x64xf32>
    %171 = arith.addf %162, %170 : vector<256x64xf32>
    %c0_114 = arith.constant 0 : index
    %c0_115 = arith.constant 0 : index
    %c0_116 = arith.constant 0 : index
    %c1_117 = arith.constant 1 : index
    %c0_118 = arith.constant 0 : index
    %172 = vector.load %arg4[%c0_114, %c0_115, %c0_116, %c1_117, %c0_118] : memref<1x1x18x18x1xbf16, #tpu.memory_space<vmem>>, vector<1x1x16x16x1xbf16>
    %173 = vector.shape_cast %172 : vector<1x1x16x16x1xbf16> to vector<16x16x1xbf16>
    %174 = vector.shape_cast %173 : vector<16x16x1xbf16> to vector<256x1xbf16>
    %175 = arith.extf %174 : vector<256x1xbf16> to vector<256x1xf32>
    %c19 = arith.constant 19 : index
    %c0_119 = arith.constant 0 : index
    %176 = vector.load %arg5[%c19, %c0_119] : memref<27x64xf32, #tpu.memory_space<vmem>>, vector<1x64xf32>
    %177 = vector.broadcast %175 : vector<256x1xf32> to vector<256x64xf32>
    %178 = vector.broadcast %176 : vector<1x64xf32> to vector<256x64xf32>
    %179 = arith.mulf %177, %178 : vector<256x64xf32>
    %180 = arith.addf %171, %179 : vector<256x64xf32>
    %c0_120 = arith.constant 0 : index
    %c0_121 = arith.constant 0 : index
    %c0_122 = arith.constant 0 : index
    %c2_123 = arith.constant 2 : index
    %c0_124 = arith.constant 0 : index
    %181 = vector.load %arg4[%c0_120, %c0_121, %c0_122, %c2_123, %c0_124] : memref<1x1x18x18x1xbf16, #tpu.memory_space<vmem>>, vector<1x1x16x16x1xbf16>
    %182 = vector.shape_cast %181 : vector<1x1x16x16x1xbf16> to vector<16x16x1xbf16>
    %183 = vector.shape_cast %182 : vector<16x16x1xbf16> to vector<256x1xbf16>
    %184 = arith.extf %183 : vector<256x1xbf16> to vector<256x1xf32>
    %c20 = arith.constant 20 : index
    %c0_125 = arith.constant 0 : index
    %185 = vector.load %arg5[%c20, %c0_125] : memref<27x64xf32, #tpu.memory_space<vmem>>, vector<1x64xf32>
    %186 = vector.broadcast %184 : vector<256x1xf32> to vector<256x64xf32>
    %187 = vector.broadcast %185 : vector<1x64xf32> to vector<256x64xf32>
    %188 = arith.mulf %186, %187 : vector<256x64xf32>
    %189 = arith.addf %180, %188 : vector<256x64xf32>
    %c0_126 = arith.constant 0 : index
    %c0_127 = arith.constant 0 : index
    %c1_128 = arith.constant 1 : index
    %c0_129 = arith.constant 0 : index
    %c0_130 = arith.constant 0 : index
    %190 = vector.load %arg4[%c0_126, %c0_127, %c1_128, %c0_129, %c0_130] : memref<1x1x18x18x1xbf16, #tpu.memory_space<vmem>>, vector<1x1x16x16x1xbf16>
    %191 = vector.shape_cast %190 : vector<1x1x16x16x1xbf16> to vector<16x16x1xbf16>
    %192 = vector.shape_cast %191 : vector<16x16x1xbf16> to vector<256x1xbf16>
    %193 = arith.extf %192 : vector<256x1xbf16> to vector<256x1xf32>
    %c21 = arith.constant 21 : index
    %c0_131 = arith.constant 0 : index
    %194 = vector.load %arg5[%c21, %c0_131] : memref<27x64xf32, #tpu.memory_space<vmem>>, vector<1x64xf32>
    %195 = vector.broadcast %193 : vector<256x1xf32> to vector<256x64xf32>
    %196 = vector.broadcast %194 : vector<1x64xf32> to vector<256x64xf32>
    %197 = arith.mulf %195, %196 : vector<256x64xf32>
    %198 = arith.addf %189, %197 : vector<256x64xf32>
    %c0_132 = arith.constant 0 : index
    %c0_133 = arith.constant 0 : index
    %c1_134 = arith.constant 1 : index
    %c1_135 = arith.constant 1 : index
    %c0_136 = arith.constant 0 : index
    %199 = vector.load %arg4[%c0_132, %c0_133, %c1_134, %c1_135, %c0_136] : memref<1x1x18x18x1xbf16, #tpu.memory_space<vmem>>, vector<1x1x16x16x1xbf16>
    %200 = vector.shape_cast %199 : vector<1x1x16x16x1xbf16> to vector<16x16x1xbf16>
    %201 = vector.shape_cast %200 : vector<16x16x1xbf16> to vector<256x1xbf16>
    %202 = arith.extf %201 : vector<256x1xbf16> to vector<256x1xf32>
    %c22 = arith.constant 22 : index
    %c0_137 = arith.constant 0 : index
    %203 = vector.load %arg5[%c22, %c0_137] : memref<27x64xf32, #tpu.memory_space<vmem>>, vector<1x64xf32>
    %204 = vector.broadcast %202 : vector<256x1xf32> to vector<256x64xf32>
    %205 = vector.broadcast %203 : vector<1x64xf32> to vector<256x64xf32>
    %206 = arith.mulf %204, %205 : vector<256x64xf32>
    %207 = arith.addf %198, %206 : vector<256x64xf32>
    %c0_138 = arith.constant 0 : index
    %c0_139 = arith.constant 0 : index
    %c1_140 = arith.constant 1 : index
    %c2_141 = arith.constant 2 : index
    %c0_142 = arith.constant 0 : index
    %208 = vector.load %arg4[%c0_138, %c0_139, %c1_140, %c2_141, %c0_142] : memref<1x1x18x18x1xbf16, #tpu.memory_space<vmem>>, vector<1x1x16x16x1xbf16>
    %209 = vector.shape_cast %208 : vector<1x1x16x16x1xbf16> to vector<16x16x1xbf16>
    %210 = vector.shape_cast %209 : vector<16x16x1xbf16> to vector<256x1xbf16>
    %211 = arith.extf %210 : vector<256x1xbf16> to vector<256x1xf32>
    %c23 = arith.constant 23 : index
    %c0_143 = arith.constant 0 : index
    %212 = vector.load %arg5[%c23, %c0_143] : memref<27x64xf32, #tpu.memory_space<vmem>>, vector<1x64xf32>
    %213 = vector.broadcast %211 : vector<256x1xf32> to vector<256x64xf32>
    %214 = vector.broadcast %212 : vector<1x64xf32> to vector<256x64xf32>
    %215 = arith.mulf %213, %214 : vector<256x64xf32>
    %216 = arith.addf %207, %215 : vector<256x64xf32>
    %c0_144 = arith.constant 0 : index
    %c0_145 = arith.constant 0 : index
    %c2_146 = arith.constant 2 : index
    %c0_147 = arith.constant 0 : index
    %c0_148 = arith.constant 0 : index
    %217 = vector.load %arg4[%c0_144, %c0_145, %c2_146, %c0_147, %c0_148] : memref<1x1x18x18x1xbf16, #tpu.memory_space<vmem>>, vector<1x1x16x16x1xbf16>
    %218 = vector.shape_cast %217 : vector<1x1x16x16x1xbf16> to vector<16x16x1xbf16>
    %219 = vector.shape_cast %218 : vector<16x16x1xbf16> to vector<256x1xbf16>
    %220 = arith.extf %219 : vector<256x1xbf16> to vector<256x1xf32>
    %c24 = arith.constant 24 : index
    %c0_149 = arith.constant 0 : index
    %221 = vector.load %arg5[%c24, %c0_149] : memref<27x64xf32, #tpu.memory_space<vmem>>, vector<1x64xf32>
    %222 = vector.broadcast %220 : vector<256x1xf32> to vector<256x64xf32>
    %223 = vector.broadcast %221 : vector<1x64xf32> to vector<256x64xf32>
    %224 = arith.mulf %222, %223 : vector<256x64xf32>
    %225 = arith.addf %216, %224 : vector<256x64xf32>
    %c0_150 = arith.constant 0 : index
    %c0_151 = arith.constant 0 : index
    %c2_152 = arith.constant 2 : index
    %c1_153 = arith.constant 1 : index
    %c0_154 = arith.constant 0 : index
    %226 = vector.load %arg4[%c0_150, %c0_151, %c2_152, %c1_153, %c0_154] : memref<1x1x18x18x1xbf16, #tpu.memory_space<vmem>>, vector<1x1x16x16x1xbf16>
    %227 = vector.shape_cast %226 : vector<1x1x16x16x1xbf16> to vector<16x16x1xbf16>
    %228 = vector.shape_cast %227 : vector<16x16x1xbf16> to vector<256x1xbf16>
    %229 = arith.extf %228 : vector<256x1xbf16> to vector<256x1xf32>
    %c25 = arith.constant 25 : index
    %c0_155 = arith.constant 0 : index
    %230 = vector.load %arg5[%c25, %c0_155] : memref<27x64xf32, #tpu.memory_space<vmem>>, vector<1x64xf32>
    %231 = vector.broadcast %229 : vector<256x1xf32> to vector<256x64xf32>
    %232 = vector.broadcast %230 : vector<1x64xf32> to vector<256x64xf32>
    %233 = arith.mulf %231, %232 : vector<256x64xf32>
    %234 = arith.addf %225, %233 : vector<256x64xf32>
    %c0_156 = arith.constant 0 : index
    %c0_157 = arith.constant 0 : index
    %c2_158 = arith.constant 2 : index
    %c2_159 = arith.constant 2 : index
    %c0_160 = arith.constant 0 : index
    %235 = vector.load %arg4[%c0_156, %c0_157, %c2_158, %c2_159, %c0_160] : memref<1x1x18x18x1xbf16, #tpu.memory_space<vmem>>, vector<1x1x16x16x1xbf16>
    %236 = vector.shape_cast %235 : vector<1x1x16x16x1xbf16> to vector<16x16x1xbf16>
    %237 = vector.shape_cast %236 : vector<16x16x1xbf16> to vector<256x1xbf16>
    %238 = arith.extf %237 : vector<256x1xbf16> to vector<256x1xf32>
    %c26 = arith.constant 26 : index
    %c0_161 = arith.constant 0 : index
    %239 = vector.load %arg5[%c26, %c0_161] : memref<27x64xf32, #tpu.memory_space<vmem>>, vector<1x64xf32>
    %240 = vector.broadcast %238 : vector<256x1xf32> to vector<256x64xf32>
    %241 = vector.broadcast %239 : vector<1x64xf32> to vector<256x64xf32>
    %242 = arith.mulf %240, %241 : vector<256x64xf32>
    %243 = arith.addf %234, %242 : vector<256x64xf32>
    %c0_162 = arith.constant 0 : index
    %c0_163 = arith.constant 0 : index
    %244 = vector.load %arg6[%c0_162, %c0_163] : memref<1x64xf32, #tpu.memory_space<vmem>>, vector<1x64xf32>
    %245 = vector.broadcast %244 : vector<1x64xf32> to vector<256x64xf32>
    %246 = arith.addf %243, %245 : vector<256x64xf32>
    %cst_164 = arith.constant 0.000000e+00 : f32
    %247 = vector.broadcast %cst_164 : f32 to vector<256x64xf32>
    %248 = arith.maximumf %246, %247 : vector<256x64xf32>
    %249 = vector.shape_cast %248 : vector<256x64xf32> to vector<1x1x16x16x64xf32>
    %250 = arith.truncf %249 : vector<1x1x16x16x64xf32> to vector<1x1x16x16x64xbf16>
    %c0_165 = arith.constant 0 : index
    %c0_166 = arith.constant 0 : index
    %c0_167 = arith.constant 0 : index
    %c0_168 = arith.constant 0 : index
    %c0_169 = arith.constant 0 : index
    %251 = vector.load %arg7[%c0_165, %c0_166, %c0_167, %c0_168, %c0_169] : memref<1x1x16x16x64xbf16, #tpu.memory_space<vmem>>, vector<1x1x16x16x64xbf16>
    tpu.vector_store %arg7[%c0_165, %c0_166, %c0_167, %c0_168, %c0_169], %250 {strides = array<i32>} : memref<1x1x16x16x64xbf16, #tpu.memory_space<vmem>>, vector<1x1x16x16x64xbf16>,
    %c0_i32 = arith.constant 0 : i32
    %252 = arith.cmpi eq, %arg1, %c0_i32 : i32
    %253 = arith.extui %252 : i1 to i32
    %c0_i32_170 = arith.constant 0 : i32
    %254 = arith.cmpi ne, %253, %c0_i32_170 : i32
    scf.if %254 {
      %cst_185 = arith.constant 0.000000e+00 : f32
      %268 = vector.broadcast %cst_185 : f32 to vector<1x1x64xf32>
      %c0_186 = arith.constant 0 : index
      %c0_187 = arith.constant 0 : index
      %c0_188 = arith.constant 0 : index
      %269 = vector.load %arg8[%c0_186, %c0_187, %c0_188] : memref<1x1x64xf32, #tpu.memory_space<vmem>>, vector<1x1x64xf32>
      tpu.vector_store %arg8[%c0_186, %c0_187, %c0_188], %268 {strides = array<i32>} : memref<1x1x64xf32, #tpu.memory_space<vmem>>, vector<1x1x64xf32>,
      %cst_189 = arith.constant 0.000000e+00 : f32
      %270 = vector.broadcast %cst_189 : f32 to vector<1x1x64xf32>
      %c0_190 = arith.constant 0 : index
      %c0_191 = arith.constant 0 : index
      %c0_192 = arith.constant 0 : index
      %271 = vector.load %arg9[%c0_190, %c0_191, %c0_192] : memref<1x1x64xf32, #tpu.memory_space<vmem>>, vector<1x1x64xf32>
      tpu.vector_store %arg9[%c0_190, %c0_191, %c0_192], %270 {strides = array<i32>} : memref<1x1x64xf32, #tpu.memory_space<vmem>>, vector<1x1x64xf32>,
    } else {
    }
    %c0_171 = arith.constant 0 : index
    %c0_172 = arith.constant 0 : index
    %c0_173 = arith.constant 0 : index
    %255 = vector.load %arg8[%c0_171, %c0_172, %c0_173] : memref<1x1x64xf32, #tpu.memory_space<vmem>>, vector<1x1x64xf32>
    %cst_174 = arith.constant dense<0.000000e+00> : vector<64xf32>
    %256 = vector.multi_reduction <add>, %248, %cst_174 [0] : vector<256x64xf32> to vector<64xf32>
    %257 = vector.shape_cast %256 : vector<64xf32> to vector<1x64xf32>
    %258 = vector.shape_cast %257 : vector<1x64xf32> to vector<1x1x64xf32>
    %259 = arith.addf %255, %258 : vector<1x1x64xf32>
    %c0_175 = arith.constant 0 : index
    %c0_176 = arith.constant 0 : index
    %c0_177 = arith.constant 0 : index
    %260 = vector.load %arg8[%c0_175, %c0_176, %c0_177] : memref<1x1x64xf32, #tpu.memory_space<vmem>>, vector<1x1x64xf32>
    tpu.vector_store %arg8[%c0_175, %c0_176, %c0_177], %259 {strides = array<i32>} : memref<1x1x64xf32, #tpu.memory_space<vmem>>, vector<1x1x64xf32>,
    %c0_178 = arith.constant 0 : index
    %c0_179 = arith.constant 0 : index
    %c0_180 = arith.constant 0 : index
    %261 = vector.load %arg9[%c0_178, %c0_179, %c0_180] : memref<1x1x64xf32, #tpu.memory_space<vmem>>, vector<1x1x64xf32>
    %262 = arith.mulf %248, %248 : vector<256x64xf32>
    %cst_181 = arith.constant dense<0.000000e+00> : vector<64xf32>
    %263 = vector.multi_reduction <add>, %262, %cst_181 [0] : vector<256x64xf32> to vector<64xf32>
    %264 = vector.shape_cast %263 : vector<64xf32> to vector<1x64xf32>
    %265 = vector.shape_cast %264 : vector<1x64xf32> to vector<1x1x64xf32>
    %266 = arith.addf %261, %265 : vector<1x1x64xf32>
    %c0_182 = arith.constant 0 : index
    %c0_183 = arith.constant 0 : index
    %c0_184 = arith.constant 0 : index
    %267 = vector.load %arg9[%c0_182, %c0_183, %c0_184] : memref<1x1x64xf32, #tpu.memory_space<vmem>>, vector<1x1x64xf32>
    tpu.vector_store %arg9[%c0_182, %c0_183, %c0_184], %266 {strides = array<i32>} : memref<1x1x64xf32, #tpu.memory_space<vmem>>, vector<1x1x64xf32>,
    return
  }
  func.func @transform_0(%arg0: i32, %arg1: i32) -> (i32, i32, i32, i32, i32) {
    %c0_i32 = arith.constant 0 : i32
    %0 = arith.addi %arg1, %c0_i32 : i32
    %c0_i32_0 = arith.constant 0 : i32
    %c0_i32_1 = arith.constant 0 : i32
    %c0_i32_2 = arith.constant 0 : i32
    %c0_i32_3 = arith.constant 0 : i32
    return %arg0, %0, %c0_i32_0, %c0_i32_1, %c0_i32_2 : i32, i32, i32, i32, i32
  }
  func.func @transform_1(%arg0: i32, %arg1: i32) -> (i32, i32, i32, i32, i32) {
    %c1_i32 = arith.constant 1 : i32
    %0 = arith.addi %arg1, %c1_i32 : i32
    %c0_i32 = arith.constant 0 : i32
    %c0_i32_0 = arith.constant 0 : i32
    %c0_i32_1 = arith.constant 0 : i32
    %c0_i32_2 = arith.constant 0 : i32
    return %arg0, %0, %c0_i32, %c0_i32_0, %c0_i32_1 : i32, i32, i32, i32, i32
  }
  func.func @transform_2(%arg0: i32, %arg1: i32) -> (i32, i32, i32, i32, i32) {
    %c2_i32 = arith.constant 2 : i32
    %0 = arith.addi %arg1, %c2_i32 : i32
    %c0_i32 = arith.constant 0 : i32
    %c0_i32_0 = arith.constant 0 : i32
    %c0_i32_1 = arith.constant 0 : i32
    %c0_i32_2 = arith.constant 0 : i32
    return %arg0, %0, %c0_i32, %c0_i32_0, %c0_i32_1 : i32, i32, i32, i32, i32
  }
  func.func @transform_3(%arg0: i32, %arg1: i32) -> (i32, i32) {
    %c0_i32 = arith.constant 0 : i32
    %c0_i32_0 = arith.constant 0 : i32
    %c0_i32_1 = arith.constant 0 : i32
    return %c0_i32, %c0_i32_0 : i32, i32
  }
  func.func @transform_4(%arg0: i32, %arg1: i32) -> (i32, i32) {
    %c0_i32 = arith.constant 0 : i32
    %c0_i32_0 = arith.constant 0 : i32
    %c0_i32_1 = arith.constant 0 : i32
    return %c0_i32, %c0_i32_0 : i32, i32
  }
  func.func @transform_5(%arg0: i32, %arg1: i32) -> (i32, i32, i32, i32, i32) {
    %c0_i32 = arith.constant 0 : i32
    %c0_i32_0 = arith.constant 0 : i32
    %c0_i32_1 = arith.constant 0 : i32
    %c0_i32_2 = arith.constant 0 : i32
    return %arg0, %arg1, %c0_i32, %c0_i32_0, %c0_i32_1 : i32, i32, i32, i32, i32
  }
  func.func @transform_6(%arg0: i32, %arg1: i32) -> (i32, i32, i32) {
    %c0_i32 = arith.constant 0 : i32
    %c0_i32_0 = arith.constant 0 : i32
    %c0_i32_1 = arith.constant 0 : i32
    return %arg0, %c0_i32, %c0_i32_0 : i32, i32, i32
  }
  func.func @transform_7(%arg0: i32, %arg1: i32) -> (i32, i32, i32) {
    %c0_i32 = arith.constant 0 : i32
    %c0_i32_0 = arith.constant 0 : i32
    %c0_i32_1 = arith.constant 0 : i32
    return %arg0, %c0_i32, %c0_i32_0 : i32, i32, i32
  }
}

</mosaic_0001>

<llo_original>
// kernel: tpu_custom_call.1
$region0: #{tpu_custom_call.1}
  #allocation0 [shape = 'u32[]', space=smem, size = 0x4, offset = 0x4, fixed_abs, tag = 'smem constant byte address 0x4 - core index']
  #allocation1 [shape = 'u32[144,128]{1,0:T(1,128)}', space=vmem, size = 0x12000, scoped, tag = 'internal scratch']
  %s0 = inlined_call_operand.vmem [shape: bf16[2,18,18,18,1], index: 0, kind: input, shape index: {}]
  %s1 = inlined_call_operand.vmem [shape: bf16[2,18,18,18,1], index: 1, kind: input, shape index: {}]
  %s2 = inlined_call_operand.vmem [shape: bf16[2,18,18,18,1], index: 2, kind: input, shape index: {}]
  %s3 = inlined_call_operand.vmem [shape: f32[27,64], index: 3, kind: input, shape index: {}]
  %s4 = inlined_call_operand.vmem [shape: f32[1,64], index: 4, kind: input, shape index: {}]
  %s5 = inlined_call_operand.hbm [shape: bf16[2,16,16,16,64], index: 5, kind: output, shape index: {0}]
  %s6 = inlined_call_operand.hbm [shape: f32[2,1,64], index: 6, kind: output, shape index: {1}]
  %s7 = inlined_call_operand.hbm [shape: f32[2,1,64], index: 7, kind: output, shape index: {2}]
  %8 = xla_tuple %s5, %s6, %s7
  %s9 = sld [smem:[#allocation0]]
  $region73: #{tpu_custom_call.1} parent=0
    _
  %s11 = ssub.s32 1, %s9
  %s12 = scalar_select 0, %s11, %s9
  $region1: #{tpu_custom_call.1} parent=0
    #allocation2 [shape = 'u8[131072]{0}', space=vmem, size = 0x20000, scoped, tag = 'output window, operand 0']
    #allocation3 [shape = 's32[2]{0}', space=sflag, size = 0x8, scoped, tag = 'scoped memory for tpu_custom_call.1']
    #allocation4 [shape = 'u8[1024]{0}', space=vmem, size = 0x400, scoped, tag = 'output window, operand 1']
    #allocation5 [shape = 's32[2]{0}', space=sflag, size = 0x8, scoped, tag = 'scoped memory for tpu_custom_call.1']
    #allocation6 [shape = 'u8[1024]{0}', space=vmem, size = 0x400, scoped, tag = 'output window, operand 2']
    %13 = vsyncpa [#allocation3], 0
    %s14 = scalar_lea.sflag [#allocation3], 1
    %15 = vsyncpa %s14, 0
    %16 = vsyncpa [#allocation5], 0
    %s17 = scalar_lea.sflag [#allocation5], 1
    %18 = vsyncpa %s17, 0
    loop: start=0, step=1, limit=34
    $region2: #{tpu_custom_call.1} parent=1 // loop_pre_header
      _
    $region3: #{tpu_custom_call.1} parent=1 // loop_header
      %s20 = sphi 0, %s24
      %p21 = scmp.ge.s32.totalorder %s20, 34
      %s27 = sphi 0, %s39
      %s28 = sphi 0, %s35
      %s29 = sphi 0, %s27
      %s30 = sphi 0, %s28
      %s31 = sphi 0, %s29
      %s32 = sphi 0, %s30
      %s44 = sphi 0, %s46
      %s47 = sphi 0, %s44
      %s48 = sphi 0, %s47
      %s64 = sphi 0, %s48
      %s74 = sphi 0, %s76
      %s77 = sphi 0, %s74
      %s78 = sphi 0, %s77
      %s94 = sphi 0, %s78
      %s104 = sphi 0, %s106
      %s107 = sphi 0, %s104
      %s108 = sphi 0, %s107
      %s124 = sphi 0, %s108
      %s128 = sphi 0, %s128
      %s130 = sphi 0, %s128
      %s131 = sphi 0, %s130
      %s145 = sphi 0, %s131
      %s149 = sphi 0, %s149
      %s151 = sphi 0, %s149
      %s152 = sphi 0, %s151
      %s166 = sphi 0, %s152
      %s174 = sphi 0, %s176
      %s177 = sphi 0, %s174
      %s178 = sphi 0, %s177
      %s194 = sphi 0, %s178
      %s200 = sphi 0, %s202
      %s203 = sphi 0, %s200
      %s204 = sphi 0, %s203
      %s220 = sphi 0, %s204
      %s226 = sphi 0, %s228
      %s229 = sphi 0, %s226
      %s230 = sphi 0, %s229
      %s246 = sphi 0, %s230
    $region4: #{tpu_custom_call.1} parent=1 // loop_header_branch
      %23 = sbr.rel (%p21) target = $region8
    $region5: #{tpu_custom_call.1} parent=1 // loop_body
      %s25 = ssub.s32 %s20, 1
      %s26 = ssub.s32 %s20, 2
      %s33 = sadd.s32 1, %s28
      %p34 = scmp.ge.s32.totalorder %s33, 16
      %s35 = scalar_select %p34, 0, %s33
      %s36 = sadd.s32 1, %s27
      %s37 = scalar_select %p34, %s36, %s27
      %p38 = scmp.ge.s32.totalorder %s37, 2
      %s39 = scalar_select %p38, 0, %s37
      %s40 = ssub.s32 %s27, %s39
      %s41 = ssub.s32 %s28, %s35
      %s42 = sor.u32 %s40, %s41
      %p43 = scmp.eq.s32.totalorder %s42, 0
      %s45 = sadd.s32 %s44, 1
      %s46 = scalar_select %p43, %s44, %s45
      %p49 = pneg %p43
      %p50 = scmp.eq.s32.totalorder %s20, 31
      %p51 = por %p49, %p50
      %p52 = scmp.ne.s32.totalorder %s44, %s47
      %p53 = scmp.eq.s32.totalorder %s20, 0
      %p54 = por %p52, %p53
      %p55 = scmp.ne.s32.totalorder %s44, %s47
      %p56 = scmp.eq.s32.totalorder %s25, 31
      %p57 = por %p55, %p56
      %p58 = scmp.ne.s32.totalorder %s47, %s48
      %p59 = scmp.eq.s32.totalorder %s25, 0
      %p60 = por %p58, %p59
      %p61 = scmp.ne.s32.totalorder %s47, %s48
      %p62 = scmp.eq.s32.totalorder %s26, 31
      %p63 = por %p61, %p62
      %p65 = scmp.ne.s32.totalorder %s48, %s64
      %p66 = scmp.eq.s32.totalorder %s26, 0
      %p67 = por %p65, %p66
      %s68 = sadd.s32 %s28, 1
      %s69 = sadd.s32 %s35, 1
      %s70 = ssub.s32 %s27, %s39
      %s71 = ssub.s32 %s68, %s69
      %s72 = sor.u32 %s70, %s71
      %p73 = scmp.eq.s32.totalorder %s72, 0
      %s75 = sadd.s32 %s74, 1
      %s76 = scalar_select %p73, %s74, %s75
      %p79 = pneg %p73
      %p80 = scmp.eq.s32.totalorder %s20, 31
      %p81 = por %p79, %p80
      %p82 = scmp.ne.s32.totalorder %s74, %s77
      %p83 = scmp.eq.s32.totalorder %s20, 0
      %p84 = por %p82, %p83
      %p85 = scmp.ne.s32.totalorder %s74, %s77
      %p86 = scmp.eq.s32.totalorder %s25, 31
      %p87 = por %p85, %p86
      %p88 = scmp.ne.s32.totalorder %s77, %s78
      %p89 = scmp.eq.s32.totalorder %s25, 0
      %p90 = por %p88, %p89
      %p91 = scmp.ne.s32.totalorder %s77, %s78
      %p92 = scmp.eq.s32.totalorder %s26, 31
      %p93 = por %p91, %p92
      %p95 = scmp.ne.s32.totalorder %s78, %s94
      %p96 = scmp.eq.s32.totalorder %s26, 0
      %p97 = por %p95, %p96
      %s98 = sadd.s32 %s28, 2
      %s99 = sadd.s32 %s35, 2
      %s100 = ssub.s32 %s27, %s39
      %s101 = ssub.s32 %s98, %s99
      %s102 = sor.u32 %s100, %s101
      %p103 = scmp.eq.s32.totalorder %s102, 0
      %s105 = sadd.s32 %s104, 1
      %s106 = scalar_select %p103, %s104, %s105
      %p109 = pneg %p103
      %p110 = scmp.eq.s32.totalorder %s20, 31
      %p111 = por %p109, %p110
      %p112 = scmp.ne.s32.totalorder %s104, %s107
      %p113 = scmp.eq.s32.totalorder %s20, 0
      %p114 = por %p112, %p113
      %p115 = scmp.ne.s32.totalorder %s104, %s107
      %p116 = scmp.eq.s32.totalorder %s25, 31
      %p117 = por %p115, %p116
      %p118 = scmp.ne.s32.totalorder %s107, %s108
      %p119 = scmp.eq.s32.totalorder %s25, 0
      %p120 = por %p118, %p119
      %p121 = scmp.ne.s32.totalorder %s107, %s108
      %p122 = scmp.eq.s32.totalorder %s26, 31
      %p123 = por %p121, %p122
      %p125 = scmp.ne.s32.totalorder %s108, %s124
      %p126 = scmp.eq.s32.totalorder %s26, 0
      %p127 = por %p125, %p126
      %s129 = sadd.s32 %s128, 1
      %p132 = scmp.eq.s32.totalorder %s20, 31
      %p133 = scmp.ne.s32.totalorder %s128, %s130
      %p134 = scmp.eq.s32.totalorder %s20, 0
      %p135 = por %p133, %p134
      %p136 = scmp.ne.s32.totalorder %s128, %s130
      %p137 = scmp.eq.s32.totalorder %s25, 31
      %p138 = por %p136, %p137
      %p139 = scmp.ne.s32.totalorder %s130, %s131
      %p140 = scmp.eq.s32.totalorder %s25, 0
      %p141 = por %p139, %p140
      %p142 = scmp.ne.s32.totalorder %s130, %s131
      %p143 = scmp.eq.s32.totalorder %s26, 31
      %p144 = por %p142, %p143
      %p146 = scmp.ne.s32.totalorder %s131, %s145
      %p147 = scmp.eq.s32.totalorder %s26, 0
      %p148 = por %p146, %p147
      %s150 = sadd.s32 %s149, 1
      %p153 = scmp.eq.s32.totalorder %s20, 31
      %p154 = scmp.ne.s32.totalorder %s149, %s151
      %p155 = scmp.eq.s32.totalorder %s20, 0
      %p156 = por %p154, %p155
      %p157 = scmp.ne.s32.totalorder %s149, %s151
      %p158 = scmp.eq.s32.totalorder %s25, 31
      %p159 = por %p157, %p158
      %p160 = scmp.ne.s32.totalorder %s151, %s152
      %p161 = scmp.eq.s32.totalorder %s25, 0
      %p162 = por %p160, %p161
      %p163 = scmp.ne.s32.totalorder %s151, %s152
      %p164 = scmp.eq.s32.totalorder %s26, 31
      %p165 = por %p163, %p164
      %p167 = scmp.ne.s32.totalorder %s152, %s166
      %p168 = scmp.eq.s32.totalorder %s26, 0
      %p169 = por %p167, %p168
      %s170 = ssub.s32 %s27, %s39
      %s171 = ssub.s32 %s28, %s35
      %s172 = sor.u32 %s170, %s171
      %p173 = scmp.eq.s32.totalorder %s172, 0
      %s175 = sadd.s32 %s174, 1
      %s176 = scalar_select %p173, %s174, %s175
      %p179 = pneg %p173
      %p180 = scmp.eq.s32.totalorder %s20, 31
      %p181 = por %p179, %p180
      %p182 = scmp.ne.s32.totalorder %s174, %s177
      %p183 = scmp.eq.s32.totalorder %s20, 0
      %p184 = por %p182, %p183
      %p185 = scmp.ne.s32.totalorder %s174, %s177
      %p186 = scmp.eq.s32.totalorder %s25, 31
      %p187 = por %p185, %p186
      %p188 = scmp.ne.s32.totalorder %s177, %s178
      %p189 = scmp.eq.s32.totalorder %s25, 0
      %p190 = por %p188, %p189
      %p191 = scmp.ne.s32.totalorder %s177, %s178
      %p192 = scmp.eq.s32.totalorder %s26, 31
      %p193 = por %p191, %p192
      %p195 = scmp.ne.s32.totalorder %s178, %s194
      %p196 = scmp.eq.s32.totalorder %s26, 0
      %p197 = por %p195, %p196
      %s198 = ssub.s32 %s27, %s39
      %p199 = scmp.eq.s32.totalorder %s198, 0
      %s201 = sadd.s32 %s200, 1
      %s202 = scalar_select %p199, %s200, %s201
      %p205 = pneg %p199
      %p206 = scmp.eq.s32.totalorder %s20, 31
      %p207 = por %p205, %p206
      %p208 = scmp.ne.s32.totalorder %s200, %s203
      %p209 = scmp.eq.s32.totalorder %s20, 0
      %p210 = por %p208, %p209
      %p211 = scmp.ne.s32.totalorder %s200, %s203
      %p212 = scmp.eq.s32.totalorder %s25, 31
      %p213 = por %p211, %p212
      %p214 = scmp.ne.s32.totalorder %s203, %s204
      %p215 = scmp.eq.s32.totalorder %s25, 0
      %p216 = por %p214, %p215
      %p217 = scmp.ne.s32.totalorder %s203, %s204
      %p218 = scmp.eq.s32.totalorder %s26, 31
      %p219 = por %p217, %p218
      %p221 = scmp.ne.s32.totalorder %s204, %s220
      %p222 = scmp.eq.s32.totalorder %s26, 0
      %p223 = por %p221, %p222
      %s224 = ssub.s32 %s27, %s39
      %p225 = scmp.eq.s32.totalorder %s224, 0
      %s227 = sadd.s32 %s226, 1
      %s228 = scalar_select %p225, %s226, %s227
      %p231 = pneg %p225
      %p232 = scmp.eq.s32.totalorder %s20, 31
      %p233 = por %p231, %p232
      %p234 = scmp.ne.s32.totalorder %s226, %s229
      %p235 = scmp.eq.s32.totalorder %s20, 0
      %p236 = por %p234, %p235
      %p237 = scmp.ne.s32.totalorder %s226, %s229
      %p238 = scmp.eq.s32.totalorder %s25, 31
      %p239 = por %p237, %p238
      %p240 = scmp.ne.s32.totalorder %s229, %s230
      %p241 = scmp.eq.s32.totalorder %s25, 0
      %p242 = por %p240, %p241
      %p243 = scmp.ne.s32.totalorder %s229, %s230
      %p244 = scmp.eq.s32.totalorder %s26, 31
      %p245 = por %p243, %p244
      %p247 = scmp.ne.s32.totalorder %s230, %s246
      %p248 = scmp.eq.s32.totalorder %s26, 0
      %p249 = por %p247, %p248
      %p250 = scmp.le.s32.totalorder 1, %s20
      %p251 = scmp.lt.s32.totalorder %s20, 33
      %p252 = pnand %p250, %p251
      %p253 = pneg %p252
      // Predicated region
      $region9: #{tpu_custom_call.1} parent=5 // pred_check
        _
      $region10: #{tpu_custom_call.1} parent=5 // pred_check_branch
        %255 = sbr.rel (%p252) target = $region12
      $region11: #{tpu_custom_call.1} parent=5 // pred_region
        %s256 = ssub.s32 %s20, 1
        // Predicated region
        $region13: #{tpu_custom_call.1} parent=11 // pred_check
          %p257 = pneg %p141
        $region14: #{tpu_custom_call.1} parent=11 // pred_check_branch
          %259 = sbr.rel (%p257) target = $region16
        $region15: #{tpu_custom_call.1} parent=11 // pred_region
          _
        $region16: #{tpu_custom_call.1} parent=11 // pred_fallthru
          _
        // Predicated region
        $region17: #{tpu_custom_call.1} parent=11 // pred_check
          %p260 = pneg %p162
        $region18: #{tpu_custom_call.1} parent=11 // pred_check_branch
          %262 = sbr.rel (%p260) target = $region20
        $region19: #{tpu_custom_call.1} parent=11 // pred_region
          _
        $region20: #{tpu_custom_call.1} parent=11 // pred_fallthru
          _
      $region12: #{tpu_custom_call.1} parent=5 // pred_fallthru
        _
      %p263 = scmp.lt.s32.totalorder %s20, 32
      // Predicated region
      $region21: #{tpu_custom_call.1} parent=5 // pred_check
        %p264 = pneg %p263
      $region22: #{tpu_custom_call.1} parent=5 // pred_check_branch
        %266 = sbr.rel (%p264) target = $region24
      $region23: #{tpu_custom_call.1} parent=5 // pred_region
        // Predicated region
        $region25: #{tpu_custom_call.1} parent=23 // pred_check
          %p267 = pneg %p54
        $region26: #{tpu_custom_call.1} parent=23 // pred_check_branch
          %269 = sbr.rel (%p267) target = $region28
        $region27: #{tpu_custom_call.1} parent=23 // pred_region
          %p270 = scmp.lt.s32.totalorder %s27, 1
          %s271 = scalar_select %p270, %s27, 1
          %p272 = scmp.lt.s32.totalorder %s28, 17
          %s273 = scalar_select %p272, %s28, 17
          %s274 = smul.addr %s273, 54
          %s275 = smul.addr %s271, 972
          %s276 = sadd.s32 %s274, %s275
          %s277 = smul.addr %s276, 4
          %s278 = scalar_lea.vmem %s0, %s277
        $region28: #{tpu_custom_call.1} parent=23 // pred_fallthru
          _
        // Predicated region
        $region29: #{tpu_custom_call.1} parent=23 // pred_check
          %p279 = pneg %p84
        $region30: #{tpu_custom_call.1} parent=23 // pred_check_branch
          %281 = sbr.rel (%p279) target = $region32
        $region31: #{tpu_custom_call.1} parent=23 // pred_region
          %s282 = sadd.s32 %s28, 1
          %p283 = scmp.lt.s32.totalorder %s27, 1
          %s284 = scalar_select %p283, %s27, 1
          %p285 = scmp.lt.s32.totalorder %s282, 17
          %s286 = scalar_select %p285, %s282, 17
          %s287 = smul.addr %s286, 54
          %s288 = smul.addr %s284, 972
          %s289 = sadd.s32 %s287, %s288
          %s290 = smul.addr %s289, 4
          %s291 = scalar_lea.vmem %s1, %s290
          %s292 = sadd.s32 %s28, 1
        $region32: #{tpu_custom_call.1} parent=23 // pred_fallthru
          _
        // Predicated region
        $region33: #{tpu_custom_call.1} parent=23 // pred_check
          %p293 = pneg %p114
        $region34: #{tpu_custom_call.1} parent=23 // pred_check_branch
          %295 = sbr.rel (%p293) target = $region36
        $region35: #{tpu_custom_call.1} parent=23 // pred_region
          %s296 = sadd.s32 %s28, 2
          %p297 = scmp.lt.s32.totalorder %s27, 1
          %s298 = scalar_select %p297, %s27, 1
          %p299 = scmp.lt.s32.totalorder %s296, 17
          %s300 = scalar_select %p299, %s296, 17
          %s301 = smul.addr %s300, 54
          %s302 = smul.addr %s298, 972
          %s303 = sadd.s32 %s301, %s302
          %s304 = smul.addr %s303, 4
          %s305 = scalar_lea.vmem %s2, %s304
          %s306 = sadd.s32 %s28, 2
        $region36: #{tpu_custom_call.1} parent=23 // pred_fallthru
          _
      $region24: #{tpu_custom_call.1} parent=5 // pred_fallthru
        _
      %p307 = scmp.le.s32.totalorder 1, %s20
      %p308 = scmp.lt.s32.totalorder %s20, 33
      %p309 = pnand %p307, %p308
      %p310 = pneg %p309
      // Predicated region
      $region37: #{tpu_custom_call.1} parent=5 // pred_check
        _
      $region38: #{tpu_custom_call.1} parent=5 // pred_check_branch
        %312 = sbr.rel (%p309) target = $region40
      $region39: #{tpu_custom_call.1} parent=5 // pred_region
        %s313 = ssub.s32 %s20, 1
        %p314 = scmp.lt.s32.totalorder %s29, 1
        %s315 = scalar_select %p314, %s29, 1
        %p316 = scmp.lt.s32.totalorder %s30, 17
        %s317 = scalar_select %p316, %s30, 17
        %s318 = smul.addr %s317, 54
        %s319 = smul.addr %s315, 972
        %s320 = sadd.s32 %s318, %s319
        %s321 = smul.addr %s320, 4
        %s322 = scalar_lea.vmem %s0, %s321
        %p323 = pneg %p60
        %p324 = pneg %p57
        %s325 = sadd.s32 %s30, 1
        %p326 = scmp.lt.s32.totalorder %s29, 1
        %s327 = scalar_select %p326, %s29, 1
        %p328 = scmp.lt.s32.totalorder %s325, 17
        %s329 = scalar_select %p328, %s325, 17
        %s330 = smul.addr %s329, 54
        %s331 = smul.addr %s327, 972
        %s332 = sadd.s32 %s330, %s331
        %s333 = smul.addr %s332, 4
        %s334 = scalar_lea.vmem %s1, %s333
        %p335 = pneg %p90
        %p336 = pneg %p87
        %s337 = sadd.s32 %s30, 2
        %p338 = scmp.lt.s32.totalorder %s29, 1
        %s339 = scalar_select %p338, %s29, 1
        %p340 = scmp.lt.s32.totalorder %s337, 17
        %s341 = scalar_select %p340, %s337, 17
        %s342 = smul.addr %s341, 54
        %s343 = smul.addr %s339, 972
        %s344 = sadd.s32 %s342, %s343
        %s345 = smul.addr %s344, 4
        %s346 = scalar_lea.vmem %s2, %s345
        %p347 = pneg %p120
        %p348 = pneg %p117
        %p349 = pneg %p141
        %p350 = pneg %p138
        %p351 = pneg %p162
        %p352 = pneg %p159
        %p353 = pneg %p190
        %p354 = pneg %p187
        %s355 = sand.u32 %s177, 1
        %s356 = scalar_lea.sflag [#allocation3], %s355
        %s357 = sand.u32 %s177, 1
        %s358 = smul.addr %s357, 128
        %s359 = scalar_lea.vmem [#allocation2], %s358
        %p360 = pneg %p216
        %p361 = pneg %p213
        %s362 = sand.u32 %s25, 1
        %s363 = scalar_lea.sflag [#allocation5], %s362
        %s364 = sand.u32 %s203, 1
        %s365 = scalar_lea.vmem [#allocation4], %s364
        %p366 = pneg %p242
        %p367 = pneg %p239
        %s368 = sand.u32 %s25, 1
        %s369 = scalar_lea.sflag [#allocation5], %s368
        %s370 = sand.u32 %s229, 1
        %s371 = scalar_lea.vmem [#allocation6], %s370
        %p372 = scmp.lt.s32.totalorder %s29, 1
        %s373 = scalar_select %p372, %s29, 1
        %p374 = scmp.lt.s32.totalorder %s30, 17
        %s375 = scalar_select %p374, %s30, 17
        %s376 = smul.addr %s375, 54
        %s377 = smul.addr %s373, 972
        %s378 = sadd.s32 %s376, %s377
        %s379 = smul.addr %s378, 4
        %s380 = scalar_lea.vmem %s0, %s379
        %s381 = sadd.s32 %s30, 1
        %p382 = scmp.lt.s32.totalorder %s29, 1
        %s383 = scalar_select %p382, %s29, 1
        %p384 = scmp.lt.s32.totalorder %s381, 17
        %s385 = scalar_select %p384, %s381, 17
        %s386 = smul.addr %s385, 54
        %s387 = smul.addr %s383, 972
        %s388 = sadd.s32 %s386, %s387
        %s389 = smul.addr %s388, 4
        %s390 = scalar_lea.vmem %s1, %s389
        %s391 = sadd.s32 %s30, 1
        %s392 = sadd.s32 %s30, 2
        %p393 = scmp.lt.s32.totalorder %s29, 1
        %s394 = scalar_select %p393, %s29, 1
        %p395 = scmp.lt.s32.totalorder %s392, 17
        %s396 = scalar_select %p395, %s392, 17
        %s397 = smul.addr %s396, 54
        %s398 = smul.addr %s394, 972
        %s399 = sadd.s32 %s397, %s398
        %s400 = smul.addr %s399, 4
        %s401 = scalar_lea.vmem %s2, %s400
        %s402 = sadd.s32 %s30, 2
        %v403 = vld [vmem:[%s380] sm:$0xf]
        %v404 = vld [vmem:[%s380 + $0x4] sm:$0xf]
        %v405 = vld [vmem:[%s380 + $0xc] sm:$0xf]
        %v406 = vld [vmem:[%s380 + $0x10] sm:$0xf]
        %v407 = vld [vmem:[%s380 + $0x18] sm:$0xf]
        %v408 = vld [vmem:[%s380 + $0x1c] sm:$0xf]
        %v409 = vld [vmem:[%s380 + $0x24] sm:$0xf]
        %v410 = vld [vmem:[%s380 + $0x28] sm:$0xf]
        %v411 = vld [vmem:[%s380 + $0x30] sm:$0xf]
        %v412 = vld [vmem:[%s380 + $0x34] sm:$0xf]
        %v413 = vld [vmem:[%s380 + $0x3c] sm:$0xf]
        %v414 = vld [vmem:[%s380 + $0x40] sm:$0xf]
        %v415 = vld [vmem:[%s380 + $0x48] sm:$0xf]
        %v416 = vld [vmem:[%s380 + $0x4c] sm:$0xf]
        %v417 = vld [vmem:[%s380 + $0x54] sm:$0xf]
        %v418 = vld [vmem:[%s380 + $0x58] sm:$0xf]
        %v419 = vld [vmem:[%s380 + $0x60] sm:$0xf]
        %v420 = vld [vmem:[%s380 + $0x64] sm:$0xf]
        %v421 = vld [vmem:[%s380 + $0x6c] sm:$0xf]
        %v422 = vld [vmem:[%s380 + $0x70] sm:$0xf]
        %v423 = vld [vmem:[%s380 + $0x78] sm:$0xf]
        %v424 = vld [vmem:[%s380 + $0x7c] sm:$0xf]
        %v425 = vld [vmem:[%s380 + $0x84] sm:$0xf]
        %v426 = vld [vmem:[%s380 + $0x88] sm:$0xf]
        %v427 = vld [vmem:[%s380 + $0x90] sm:$0xf]
        %v428 = vld [vmem:[%s380 + $0x94] sm:$0xf]
        %v429 = vld [vmem:[%s380 + $0x9c] sm:$0xf]
        %v430 = vld [vmem:[%s380 + $0xa0] sm:$0xf]
        %v431 = vld [vmem:[%s380 + $0xa8] sm:$0xf]
        %v432 = vld [vmem:[%s380 + $0xac] sm:$0xf]
        %v433 = vld [vmem:[%s380 + $0xb4] sm:$0xf]
        %v434 = vld [vmem:[%s380 + $0xb8] sm:$0xf]
        %v435 = vunpack.c.l.bf16 %v403
        %v436 = vunpack.c.l.bf16 %v404
        %v437 = vunpack.c.l.bf16 %v405
        %v438 = vunpack.c.l.bf16 %v406
        %v439 = vunpack.c.l.bf16 %v407
        %v440 = vunpack.c.l.bf16 %v408
        %v441 = vunpack.c.l.bf16 %v409
        %v442 = vunpack.c.l.bf16 %v410
        %v443 = vunpack.c.l.bf16 %v411
        %v444 = vunpack.c.l.bf16 %v412
        %v445 = vunpack.c.l.bf16 %v413
        %v446 = vunpack.c.l.bf16 %v414
        %v447 = vunpack.c.l.bf16 %v415
        %v448 = vunpack.c.l.bf16 %v416
        %v449 = vunpack.c.l.bf16 %v417
        %v450 = vunpack.c.l.bf16 %v418
        %v451 = vunpack.c.l.bf16 %v419
        %v452 = vunpack.c.l.bf16 %v420
        %v453 = vunpack.c.l.bf16 %v421
        %v454 = vunpack.c.l.bf16 %v422
        %v455 = vunpack.c.l.bf16 %v423
        %v456 = vunpack.c.l.bf16 %v424
        %v457 = vunpack.c.l.bf16 %v425
        %v458 = vunpack.c.l.bf16 %v426
        %v459 = vunpack.c.l.bf16 %v427
        %v460 = vunpack.c.l.bf16 %v428
        %v461 = vunpack.c.l.bf16 %v429
        %v462 = vunpack.c.l.bf16 %v430
        %v463 = vunpack.c.l.bf16 %v431
        %v464 = vunpack.c.l.bf16 %v432
        %v465 = vunpack.c.l.bf16 %v433
        %v466 = vunpack.c.l.bf16 %v434
        %v467 = vld [vmem:[%s3] sm:$0x1]
        %469 = vset.pattern.permute.xlu0 0
        %470 = vperm.xlu0 %469, %v435
        %v471 = vpop.permute.xlu0 %470
        %474 = vset.pattern.permute.xlu0 0
        %475 = vperm.xlu0 %474, %v436
        %v476 = vpop.permute.xlu0 %475
        %479 = vset.pattern.permute.xlu0 0
        %480 = vperm.xlu0 %479, %v437
        %v481 = vpop.permute.xlu0 %480
        %484 = vset.pattern.permute.xlu0 0
        %485 = vperm.xlu0 %484, %v438
        %v486 = vpop.permute.xlu0 %485
        %489 = vset.pattern.permute.xlu0 0
        %490 = vperm.xlu0 %489, %v439
        %v491 = vpop.permute.xlu0 %490
        %494 = vset.pattern.permute.xlu0 0
        %495 = vperm.xlu0 %494, %v440
        %v496 = vpop.permute.xlu0 %495
        %499 = vset.pattern.permute.xlu0 0
        %500 = vperm.xlu0 %499, %v441
        %v501 = vpop.permute.xlu0 %500
        %504 = vset.pattern.permute.xlu0 0
        %505 = vperm.xlu0 %504, %v442
        %v506 = vpop.permute.xlu0 %505
        %509 = vset.pattern.permute.xlu0 0
        %510 = vperm.xlu0 %509, %v443
        %v511 = vpop.permute.xlu0 %510
        %514 = vset.pattern.permute.xlu0 0
        %515 = vperm.xlu0 %514, %v444
        %v516 = vpop.permute.xlu0 %515
        %519 = vset.pattern.permute.xlu0 0
        %520 = vperm.xlu0 %519, %v445
        %v521 = vpop.permute.xlu0 %520
        %524 = vset.pattern.permute.xlu0 0
        %525 = vperm.xlu0 %524, %v446
        %v526 = vpop.permute.xlu0 %525
        %529 = vset.pattern.permute.xlu0 0
        %530 = vperm.xlu0 %529, %v447
        %v531 = vpop.permute.xlu0 %530
        %534 = vset.pattern.permute.xlu0 0
        %535 = vperm.xlu0 %534, %v448
        %v536 = vpop.permute.xlu0 %535
        %539 = vset.pattern.permute.xlu0 0
        %540 = vperm.xlu0 %539, %v449
        %v541 = vpop.permute.xlu0 %540
        %544 = vset.pattern.permute.xlu0 0
        %545 = vperm.xlu0 %544, %v450
        %v546 = vpop.permute.xlu0 %545
        %549 = vset.pattern.permute.xlu0 0
        %550 = vperm.xlu0 %549, %v451
        %v551 = vpop.permute.xlu0 %550
        %554 = vset.pattern.permute.xlu0 0
        %555 = vperm.xlu0 %554, %v452
        %v556 = vpop.permute.xlu0 %555
        %559 = vset.pattern.permute.xlu0 0
        %560 = vperm.xlu0 %559, %v453
        %v561 = vpop.permute.xlu0 %560
        %564 = vset.pattern.permute.xlu0 0
        %565 = vperm.xlu0 %564, %v454
        %v566 = vpop.permute.xlu0 %565
        %569 = vset.pattern.permute.xlu0 0
        %570 = vperm.xlu0 %569, %v455
        %v571 = vpop.permute.xlu0 %570
        %574 = vset.pattern.permute.xlu0 0
        %575 = vperm.xlu0 %574, %v456
        %v576 = vpop.permute.xlu0 %575
        %579 = vset.pattern.permute.xlu0 0
        %580 = vperm.xlu0 %579, %v457
        %v581 = vpop.permute.xlu0 %580
        %584 = vset.pattern.permute.xlu0 0
        %585 = vperm.xlu0 %584, %v458
        %v586 = vpop.permute.xlu0 %585
        %589 = vset.pattern.permute.xlu0 0
        %590 = vperm.xlu0 %589, %v459
        %v591 = vpop.permute.xlu0 %590
        %594 = vset.pattern.permute.xlu0 0
        %595 = vperm.xlu0 %594, %v460
        %v596 = vpop.permute.xlu0 %595
        %599 = vset.pattern.permute.xlu0 0
        %600 = vperm.xlu0 %599, %v461
        %v601 = vpop.permute.xlu0 %600
        %604 = vset.pattern.permute.xlu0 0
        %605 = vperm.xlu0 %604, %v462
        %v606 = vpop.permute.xlu0 %605
        %609 = vset.pattern.permute.xlu0 0
        %610 = vperm.xlu0 %609, %v463
        %v611 = vpop.permute.xlu0 %610
        %614 = vset.pattern.permute.xlu0 0
        %615 = vperm.xlu0 %614, %v464
        %v616 = vpop.permute.xlu0 %615
        %619 = vset.pattern.permute.xlu0 0
        %620 = vperm.xlu0 %619, %v465
        %v621 = vpop.permute.xlu0 %620
        %624 = vset.pattern.permute.xlu0 0
        %625 = vperm.xlu0 %624, %v466
        %v626 = vpop.permute.xlu0 %625
        %v628 = vlaneseq
        %v629 = vshrl.u32 %v628, 7
        %v630 = vsub.s32 0, %v629
        %v631 = vrot.slane %v467, %v630
        %v632 = vmul.f32 %v471, %v631
        %v633 = vmul.f32 %v476, %v631
        %v634 = vmul.f32 %v481, %v631
        %v635 = vmul.f32 %v486, %v631
        %v636 = vmul.f32 %v491, %v631
        %v637 = vmul.f32 %v496, %v631
        %v638 = vmul.f32 %v501, %v631
        %v639 = vmul.f32 %v506, %v631
        %v640 = vmul.f32 %v511, %v631
        %v641 = vmul.f32 %v516, %v631
        %v642 = vmul.f32 %v521, %v631
        %v643 = vmul.f32 %v526, %v631
        %v644 = vmul.f32 %v531, %v631
        %v645 = vmul.f32 %v536, %v631
        %v646 = vmul.f32 %v541, %v631
        %v647 = vmul.f32 %v546, %v631
        %v648 = vmul.f32 %v551, %v631
        %v649 = vmul.f32 %v556, %v631
        %v650 = vmul.f32 %v561, %v631
        %v651 = vmul.f32 %v566, %v631
        %v652 = vmul.f32 %v571, %v631
        %v653 = vmul.f32 %v576, %v631
        %v654 = vmul.f32 %v581, %v631
        %v655 = vmul.f32 %v586, %v631
        %v656 = vmul.f32 %v591, %v631
        %v657 = vmul.f32 %v596, %v631
        %v658 = vmul.f32 %v601, %v631
        %v659 = vmul.f32 %v606, %v631
        %v660 = vmul.f32 %v611, %v631
        %v661 = vmul.f32 %v616, %v631
        %v662 = vmul.f32 %v621, %v631
        %v663 = vmul.f32 %v626, %v631
        %v664 = vadd.f32 %v632, 0.0
        %v665 = vadd.f32 %v633, 0.0
        %v666 = vadd.f32 %v634, 0.0
        %v667 = vadd.f32 %v635, 0.0
        %v668 = vadd.f32 %v636, 0.0
        %v669 = vadd.f32 %v637, 0.0
        %v670 = vadd.f32 %v638, 0.0
        %v671 = vadd.f32 %v639, 0.0
        %v672 = vadd.f32 %v640, 0.0
        %v673 = vadd.f32 %v641, 0.0
        %v674 = vadd.f32 %v642, 0.0
        %v675 = vadd.f32 %v643, 0.0
        %v676 = vadd.f32 %v644, 0.0
        %v677 = vadd.f32 %v645, 0.0
        %v678 = vadd.f32 %v646, 0.0
        %v679 = vadd.f32 %v647, 0.0
        %v680 = vadd.f32 %v648, 0.0
        %v681 = vadd.f32 %v649, 0.0
        %v682 = vadd.f32 %v650, 0.0
        %v683 = vadd.f32 %v651, 0.0
        %v684 = vadd.f32 %v652, 0.0
        %v685 = vadd.f32 %v653, 0.0
        %v686 = vadd.f32 %v654, 0.0
        %v687 = vadd.f32 %v655, 0.0
        %v688 = vadd.f32 %v656, 0.0
        %v689 = vadd.f32 %v657, 0.0
        %v690 = vadd.f32 %v658, 0.0
        %v691 = vadd.f32 %v659, 0.0
        %v692 = vadd.f32 %v660, 0.0
        %v693 = vadd.f32 %v661, 0.0
        %v694 = vadd.f32 %v662, 0.0
        %v695 = vadd.f32 %v663, 0.0
        %v696 = vld [vmem:[%s380] sm:$0xf]
        %v697 = vld [vmem:[%s380 + $0x4] sm:$0xf]
        %v698 = vld [vmem:[%s380 + $0x8] sm:$0x1]
        %v699 = vld [vmem:[%s380 + $0xc] sm:$0xf]
        %v700 = vld [vmem:[%s380 + $0x10] sm:$0xf]
        %v701 = vld [vmem:[%s380 + $0x14] sm:$0x1]
        %v702 = vld [vmem:[%s380 + $0x18] sm:$0xf]
        %v703 = vld [vmem:[%s380 + $0x1c] sm:$0xf]
        %v704 = vld [vmem:[%s380 + $0x20] sm:$0x1]
        %v705 = vld [vmem:[%s380 + $0x24] sm:$0xf]
        %v706 = vld [vmem:[%s380 + $0x28] sm:$0xf]
        %v707 = vld [vmem:[%s380 + $0x2c] sm:$0x1]
        %v708 = vld [vmem:[%s380 + $0x30] sm:$0xf]
        %v709 = vld [vmem:[%s380 + $0x34] sm:$0xf]
        %v710 = vld [vmem:[%s380 + $0x38] sm:$0x1]
        %v711 = vld [vmem:[%s380 + $0x3c] sm:$0xf]
        %v712 = vld [vmem:[%s380 + $0x40] sm:$0xf]
        %v713 = vld [vmem:[%s380 + $0x44] sm:$0x1]
        %v714 = vld [vmem:[%s380 + $0x48] sm:$0xf]
        %v715 = vld [vmem:[%s380 + $0x4c] sm:$0xf]
        %v716 = vld [vmem:[%s380 + $0x50] sm:$0x1]
        %v717 = vld [vmem:[%s380 + $0x54] sm:$0xf]
        %v718 = vld [vmem:[%s380 + $0x58] sm:$0xf]
        %v719 = vld [vmem:[%s380 + $0x5c] sm:$0x1]
        %v720 = vld [vmem:[%s380 + $0x60] sm:$0xf]
        %v721 = vld [vmem:[%s380 + $0x64] sm:$0xf]
        %v722 = vld [vmem:[%s380 + $0x68] sm:$0x1]
        %v723 = vld [vmem:[%s380 + $0x6c] sm:$0xf]
        %v724 = vld [vmem:[%s380 + $0x70] sm:$0xf]
        %v725 = vld [vmem:[%s380 + $0x74] sm:$0x1]
        %v726 = vld [vmem:[%s380 + $0x78] sm:$0xf]
        %v727 = vld [vmem:[%s380 + $0x7c] sm:$0xf]
        %v728 = vld [vmem:[%s380 + $0x80] sm:$0x1]
        %v729 = vld [vmem:[%s380 + $0x84] sm:$0xf]
        %v730 = vld [vmem:[%s380 + $0x88] sm:$0xf]
        %v731 = vld [vmem:[%s380 + $0x8c] sm:$0x1]
        %v732 = vld [vmem:[%s380 + $0x90] sm:$0xf]
        %v733 = vld [vmem:[%s380 + $0x94] sm:$0xf]
        %v734 = vld [vmem:[%s380 + $0x98] sm:$0x1]
        %v735 = vld [vmem:[%s380 + $0x9c] sm:$0xf]
        %v736 = vld [vmem:[%s380 + $0xa0] sm:$0xf]
        %v737 = vld [vmem:[%s380 + $0xa4] sm:$0x1]
        %v738 = vld [vmem:[%s380 + $0xa8] sm:$0xf]
        %v739 = vld [vmem:[%s380 + $0xac] sm:$0xf]
        %v740 = vld [vmem:[%s380 + $0xb0] sm:$0x1]
        %v741 = vld [vmem:[%s380 + $0xb4] sm:$0xf]
        %v742 = vld [vmem:[%s380 + $0xb8] sm:$0xf]
        %v743 = vld [vmem:[%s380 + $0xbc] sm:$0x1]
        %vm744 = vsmask.f32 3328
        %vm745 = vsmask.f32 7440
        %vm746 = vmor %vm744, %vm745
        %v748 = vshrl.u32 %v696, 16
        %v750 = vrot.slane %v748, 4
        %v751 = vshll.u32 %v696, 16
        %v753 = vrot.slane %v751, 5
        %v754 = vor.u32 %v750, %v753
        %v755 = vrot.slane %v754, 4
        %v757 = vshll.u32 %v697, 16
        %v759 = vrot.slane %v757, 5
        %v760 = vsel %vm746, %v755, %v759
        %v761 = vshrl.u32 %v697, 16
        %v763 = vrot.slane %v761, 4
        %v764 = vor.u32 %v763, %v759
        %v765 = vrot.slane %v764, 4
        %v767 = vshll.u32 %v698, 16
        %v769 = vrot.slane %v767, 5
        %v770 = vsel %vm746, %v765, %v769
        %v772 = vshrl.u32 %v699, 16
        %v774 = vrot.slane %v772, 4
        %v775 = vshll.u32 %v699, 16
        %v777 = vrot.slane %v775, 5
        %v778 = vor.u32 %v774, %v777
        %v779 = vrot.slane %v778, 4
        %v781 = vshll.u32 %v700, 16
        %v783 = vrot.slane %v781, 5
        %v784 = vsel %vm746, %v779, %v783
        %v785 = vshrl.u32 %v700, 16
        %v787 = vrot.slane %v785, 4
        %v788 = vor.u32 %v787, %v783
        %v789 = vrot.slane %v788, 4
        %v791 = vshll.u32 %v701, 16
        %v793 = vrot.slane %v791, 5
        %v794 = vsel %vm746, %v789, %v793
        %v796 = vshrl.u32 %v702, 16
        %v798 = vrot.slane %v796, 4
        %v799 = vshll.u32 %v702, 16
        %v801 = vrot.slane %v799, 5
        %v802 = vor.u32 %v798, %v801
        %v803 = vrot.slane %v802, 4
        %v805 = vshll.u32 %v703, 16
        %v807 = vrot.slane %v805, 5
        %v808 = vsel %vm746, %v803, %v807
        %v809 = vshrl.u32 %v703, 16
        %v811 = vrot.slane %v809, 4
        %v812 = vor.u32 %v811, %v807
        %v813 = vrot.slane %v812, 4
        %v815 = vshll.u32 %v704, 16
        %v817 = vrot.slane %v815, 5
        %v818 = vsel %vm746, %v813, %v817
        %v820 = vshrl.u32 %v705, 16
        %v822 = vrot.slane %v820, 4
        %v823 = vshll.u32 %v705, 16
        %v825 = vrot.slane %v823, 5
        %v826 = vor.u32 %v822, %v825
        %v827 = vrot.slane %v826, 4
        %v829 = vshll.u32 %v706, 16
        %v831 = vrot.slane %v829, 5
        %v832 = vsel %vm746, %v827, %v831
        %v833 = vshrl.u32 %v706, 16
        %v835 = vrot.slane %v833, 4
        %v836 = vor.u32 %v835, %v831
        %v837 = vrot.slane %v836, 4
        %v839 = vshll.u32 %v707, 16
        %v841 = vrot.slane %v839, 5
        %v842 = vsel %vm746, %v837, %v841
        %v844 = vshrl.u32 %v708, 16
        %v846 = vrot.slane %v844, 4
        %v847 = vshll.u32 %v708, 16
        %v849 = vrot.slane %v847, 5
        %v850 = vor.u32 %v846, %v849
        %v851 = vrot.slane %v850, 4
        %v853 = vshll.u32 %v709, 16
        %v855 = vrot.slane %v853, 5
        %v856 = vsel %vm746, %v851, %v855
        %v857 = vshrl.u32 %v709, 16
        %v859 = vrot.slane %v857, 4
        %v860 = vor.u32 %v859, %v855
        %v861 = vrot.slane %v860, 4
        %v863 = vshll.u32 %v710, 16
        %v865 = vrot.slane %v863, 5
        %v866 = vsel %vm746, %v861, %v865
        %v868 = vshrl.u32 %v711, 16
        %v870 = vrot.slane %v868, 4
        %v871 = vshll.u32 %v711, 16
        %v873 = vrot.slane %v871, 5
        %v874 = vor.u32 %v870, %v873
        %v875 = vrot.slane %v874, 4
        %v877 = vshll.u32 %v712, 16
        %v879 = vrot.slane %v877, 5
        %v880 = vsel %vm746, %v875, %v879
        %v881 = vshrl.u32 %v712, 16
        %v883 = vrot.slane %v881, 4
        %v884 = vor.u32 %v883, %v879
        %v885 = vrot.slane %v884, 4
        %v887 = vshll.u32 %v713, 16
        %v889 = vrot.slane %v887, 5
        %v890 = vsel %vm746, %v885, %v889
        %v892 = vshrl.u32 %v714, 16
        %v894 = vrot.slane %v892, 4
        %v895 = vshll.u32 %v714, 16
        %v897 = vrot.slane %v895, 5
        %v898 = vor.u32 %v894, %v897
        %v899 = vrot.slane %v898, 4
        %v901 = vshll.u32 %v715, 16
        %v903 = vrot.slane %v901, 5
        %v904 = vsel %vm746, %v899, %v903
        %v905 = vshrl.u32 %v715, 16
        %v907 = vrot.slane %v905, 4
        %v908 = vor.u32 %v907, %v903
        %v909 = vrot.slane %v908, 4
        %v911 = vshll.u32 %v716, 16
        %v913 = vrot.slane %v911, 5
        %v914 = vsel %vm746, %v909, %v913
        %v916 = vshrl.u32 %v717, 16
        %v918 = vrot.slane %v916, 4
        %v919 = vshll.u32 %v717, 16
        %v921 = vrot.slane %v919, 5
        %v922 = vor.u32 %v918, %v921
        %v923 = vrot.slane %v922, 4
        %v925 = vshll.u32 %v718, 16
        %v927 = vrot.slane %v925, 5
        %v928 = vsel %vm746, %v923, %v927
        %v929 = vshrl.u32 %v718, 16
        %v931 = vrot.slane %v929, 4
        %v932 = vor.u32 %v931, %v927
        %v933 = vrot.slane %v932, 4
        %v935 = vshll.u32 %v719, 16
        %v937 = vrot.slane %v935, 5
        %v938 = vsel %vm746, %v933, %v937
        %v940 = vshrl.u32 %v720, 16
        %v942 = vrot.slane %v940, 4
        %v943 = vshll.u32 %v720, 16
        %v945 = vrot.slane %v943, 5
        %v946 = vor.u32 %v942, %v945
        %v947 = vrot.slane %v946, 4
        %v949 = vshll.u32 %v721, 16
        %v951 = vrot.slane %v949, 5
        %v952 = vsel %vm746, %v947, %v951
        %v953 = vshrl.u32 %v721, 16
        %v955 = vrot.slane %v953, 4
        %v956 = vor.u32 %v955, %v951
        %v957 = vrot.slane %v956, 4
        %v959 = vshll.u32 %v722, 16
        %v961 = vrot.slane %v959, 5
        %v962 = vsel %vm746, %v957, %v961
        %v964 = vshrl.u32 %v723, 16
        %v966 = vrot.slane %v964, 4
        %v967 = vshll.u32 %v723, 16
        %v969 = vrot.slane %v967, 5
        %v970 = vor.u32 %v966, %v969
        %v971 = vrot.slane %v970, 4
        %v973 = vshll.u32 %v724, 16
        %v975 = vrot.slane %v973, 5
        %v976 = vsel %vm746, %v971, %v975
        %v977 = vshrl.u32 %v724, 16
        %v979 = vrot.slane %v977, 4
        %v980 = vor.u32 %v979, %v975
        %v981 = vrot.slane %v980, 4
        %v983 = vshll.u32 %v725, 16
        %v985 = vrot.slane %v983, 5
        %v986 = vsel %vm746, %v981, %v985
        %v988 = vshrl.u32 %v726, 16
        %v990 = vrot.slane %v988, 4
        %v991 = vshll.u32 %v726, 16
        %v993 = vrot.slane %v991, 5
        %v994 = vor.u32 %v990, %v993
        %v995 = vrot.slane %v994, 4
        %v997 = vshll.u32 %v727, 16
        %v999 = vrot.slane %v997, 5
        %v1000 = vsel %vm746, %v995, %v999
        %v1001 = vshrl.u32 %v727, 16
        %v1003 = vrot.slane %v1001, 4
        %v1004 = vor.u32 %v1003, %v999
        %v1005 = vrot.slane %v1004, 4
        %v1007 = vshll.u32 %v728, 16
        %v1009 = vrot.slane %v1007, 5
        %v1010 = vsel %vm746, %v1005, %v1009
        %v1012 = vshrl.u32 %v729, 16
        %v1014 = vrot.slane %v1012, 4
        %v1015 = vshll.u32 %v729, 16
        %v1017 = vrot.slane %v1015, 5
        %v1018 = vor.u32 %v1014, %v1017
        %v1019 = vrot.slane %v1018, 4
        %v1021 = vshll.u32 %v730, 16
        %v1023 = vrot.slane %v1021, 5
        %v1024 = vsel %vm746, %v1019, %v1023
        %v1025 = vshrl.u32 %v730, 16
        %v1027 = vrot.slane %v1025, 4
        %v1028 = vor.u32 %v1027, %v1023
        %v1029 = vrot.slane %v1028, 4
        %v1031 = vshll.u32 %v731, 16
        %v1033 = vrot.slane %v1031, 5
        %v1034 = vsel %vm746, %v1029, %v1033
        %v1036 = vshrl.u32 %v732, 16
        %v1038 = vrot.slane %v1036, 4
        %v1039 = vshll.u32 %v732, 16
        %v1041 = vrot.slane %v1039, 5
        %v1042 = vor.u32 %v1038, %v1041
        %v1043 = vrot.slane %v1042, 4
        %v1045 = vshll.u32 %v733, 16
        %v1047 = vrot.slane %v1045, 5
        %v1048 = vsel %vm746, %v1043, %v1047
        %v1049 = vshrl.u32 %v733, 16
        %v1051 = vrot.slane %v1049, 4
        %v1052 = vor.u32 %v1051, %v1047
        %v1053 = vrot.slane %v1052, 4
        %v1055 = vshll.u32 %v734, 16
        %v1057 = vrot.slane %v1055, 5
        %v1058 = vsel %vm746, %v1053, %v1057
        %v1060 = vshrl.u32 %v735, 16
        %v1062 = vrot.slane %v1060, 4
        %v1063 = vshll.u32 %v735, 16
        %v1065 = vrot.slane %v1063, 5
        %v1066 = vor.u32 %v1062, %v1065
        %v1067 = vrot.slane %v1066, 4
        %v1069 = vshll.u32 %v736, 16
        %v1071 = vrot.slane %v1069, 5
        %v1072 = vsel %vm746, %v1067, %v1071
        %v1073 = vshrl.u32 %v736, 16
        %v1075 = vrot.slane %v1073, 4
        %v1076 = vor.u32 %v1075, %v1071
        %v1077 = vrot.slane %v1076, 4
        %v1079 = vshll.u32 %v737, 16
        %v1081 = vrot.slane %v1079, 5
        %v1082 = vsel %vm746, %v1077, %v1081
        %v1084 = vshrl.u32 %v738, 16
        %v1086 = vrot.slane %v1084, 4
        %v1087 = vshll.u32 %v738, 16
        %v1089 = vrot.slane %v1087, 5
        %v1090 = vor.u32 %v1086, %v1089
        %v1091 = vrot.slane %v1090, 4
        %v1093 = vshll.u32 %v739, 16
        %v1095 = vrot.slane %v1093, 5
        %v1096 = vsel %vm746, %v1091, %v1095
        %v1097 = vshrl.u32 %v739, 16
        %v1099 = vrot.slane %v1097, 4
        %v1100 = vor.u32 %v1099, %v1095
        %v1101 = vrot.slane %v1100, 4
        %v1103 = vshll.u32 %v740, 16
        %v1105 = vrot.slane %v1103, 5
        %v1106 = vsel %vm746, %v1101, %v1105
        %v1108 = vshrl.u32 %v741, 16
        %v1110 = vrot.slane %v1108, 4
        %v1111 = vshll.u32 %v741, 16
        %v1113 = vrot.slane %v1111, 5
        %v1114 = vor.u32 %v1110, %v1113
        %v1115 = vrot.slane %v1114, 4
        %v1117 = vshll.u32 %v742, 16
        %v1119 = vrot.slane %v1117, 5
        %v1120 = vsel %vm746, %v1115, %v1119
        %v1121 = vshrl.u32 %v742, 16
        %v1123 = vrot.slane %v1121, 4
        %v1124 = vor.u32 %v1123, %v1119
        %v1125 = vrot.slane %v1124, 4
        %v1127 = vshll.u32 %v743, 16
        %v1129 = vrot.slane %v1127, 5
        %v1130 = vsel %vm746, %v1125, %v1129
        %v1163 = vunpack.c.l.bf16 %v760
        %v1164 = vunpack.c.l.bf16 %v770
        %v1165 = vunpack.c.l.bf16 %v784
        %v1166 = vunpack.c.l.bf16 %v794
        %v1167 = vunpack.c.l.bf16 %v808
        %v1168 = vunpack.c.l.bf16 %v818
        %v1169 = vunpack.c.l.bf16 %v832
        %v1170 = vunpack.c.l.bf16 %v842
        %v1171 = vunpack.c.l.bf16 %v856
        %v1172 = vunpack.c.l.bf16 %v866
        %v1173 = vunpack.c.l.bf16 %v880
        %v1174 = vunpack.c.l.bf16 %v890
        %v1175 = vunpack.c.l.bf16 %v904
        %v1176 = vunpack.c.l.bf16 %v914
        %v1177 = vunpack.c.l.bf16 %v928
        %v1178 = vunpack.c.l.bf16 %v938
        %v1179 = vunpack.c.l.bf16 %v952
        %v1180 = vunpack.c.l.bf16 %v962
        %v1181 = vunpack.c.l.bf16 %v976
        %v1182 = vunpack.c.l.bf16 %v986
        %v1183 = vunpack.c.l.bf16 %v1000
        %v1184 = vunpack.c.l.bf16 %v1010
        %v1185 = vunpack.c.l.bf16 %v1024
        %v1186 = vunpack.c.l.bf16 %v1034
        %v1187 = vunpack.c.l.bf16 %v1048
        %v1188 = vunpack.c.l.bf16 %v1058
        %v1189 = vunpack.c.l.bf16 %v1072
        %v1190 = vunpack.c.l.bf16 %v1082
        %v1191 = vunpack.c.l.bf16 %v1096
        %v1192 = vunpack.c.l.bf16 %v1106
        %v1193 = vunpack.c.l.bf16 %v1120
        %v1194 = vunpack.c.l.bf16 %v1130
        %v1195 = vld [vmem:[%s3 + $0x1] sm:$0x1]
        %1197 = vset.pattern.permute.xlu0 0
        %1198 = vperm.xlu0 %1197, %v1163
        %v1199 = vpop.permute.xlu0 %1198
        %1202 = vset.pattern.permute.xlu0 0
        %1203 = vperm.xlu0 %1202, %v1164
        %v1204 = vpop.permute.xlu0 %1203
        %1207 = vset.pattern.permute.xlu0 0
        %1208 = vperm.xlu0 %1207, %v1165
        %v1209 = vpop.permute.xlu0 %1208
        %1212 = vset.pattern.permute.xlu0 0
        %1213 = vperm.xlu0 %1212, %v1166
        %v1214 = vpop.permute.xlu0 %1213
        %1217 = vset.pattern.permute.xlu0 0
        %1218 = vperm.xlu0 %1217, %v1167
        %v1219 = vpop.permute.xlu0 %1218
        %1222 = vset.pattern.permute.xlu0 0
        %1223 = vperm.xlu0 %1222, %v1168
        %v1224 = vpop.permute.xlu0 %1223
        %1227 = vset.pattern.permute.xlu0 0
        %1228 = vperm.xlu0 %1227, %v1169
        %v1229 = vpop.permute.xlu0 %1228
        %1232 = vset.pattern.permute.xlu0 0
        %1233 = vperm.xlu0 %1232, %v1170
        %v1234 = vpop.permute.xlu0 %1233
        %1237 = vset.pattern.permute.xlu0 0
        %1238 = vperm.xlu0 %1237, %v1171
        %v1239 = vpop.permute.xlu0 %1238
        %1242 = vset.pattern.permute.xlu0 0
        %1243 = vperm.xlu0 %1242, %v1172
        %v1244 = vpop.permute.xlu0 %1243
        %1247 = vset.pattern.permute.xlu0 0
        %1248 = vperm.xlu0 %1247, %v1173
        %v1249 = vpop.permute.xlu0 %1248
        %1252 = vset.pattern.permute.xlu0 0
        %1253 = vperm.xlu0 %1252, %v1174
        %v1254 = vpop.permute.xlu0 %1253
        %1257 = vset.pattern.permute.xlu0 0
        %1258 = vperm.xlu0 %1257, %v1175
        %v1259 = vpop.permute.xlu0 %1258
        %1262 = vset.pattern.permute.xlu0 0
        %1263 = vperm.xlu0 %1262, %v1176
        %v1264 = vpop.permute.xlu0 %1263
        %1267 = vset.pattern.permute.xlu0 0
        %1268 = vperm.xlu0 %1267, %v1177
        %v1269 = vpop.permute.xlu0 %1268
        %1272 = vset.pattern.permute.xlu0 0
        %1273 = vperm.xlu0 %1272, %v1178
        %v1274 = vpop.permute.xlu0 %1273
        %1277 = vset.pattern.permute.xlu0 0
        %1278 = vperm.xlu0 %1277, %v1179
        %v1279 = vpop.permute.xlu0 %1278
        %1282 = vset.pattern.permute.xlu0 0
        %1283 = vperm.xlu0 %1282, %v1180
        %v1284 = vpop.permute.xlu0 %1283
        %1287 = vset.pattern.permute.xlu0 0
        %1288 = vperm.xlu0 %1287, %v1181
        %v1289 = vpop.permute.xlu0 %1288
        %1292 = vset.pattern.permute.xlu0 0
        %1293 = vperm.xlu0 %1292, %v1182
        %v1294 = vpop.permute.xlu0 %1293
        %1297 = vset.pattern.permute.xlu0 0
        %1298 = vperm.xlu0 %1297, %v1183
        %v1299 = vpop.permute.xlu0 %1298
        %1302 = vset.pattern.permute.xlu0 0
        %1303 = vperm.xlu0 %1302, %v1184
        %v1304 = vpop.permute.xlu0 %1303
        %1307 = vset.pattern.permute.xlu0 0
        %1308 = vperm.xlu0 %1307, %v1185
        %v1309 = vpop.permute.xlu0 %1308
        %1312 = vset.pattern.permute.xlu0 0
        %1313 = vperm.xlu0 %1312, %v1186
        %v1314 = vpop.permute.xlu0 %1313
        %1317 = vset.pattern.permute.xlu0 0
        %1318 = vperm.xlu0 %1317, %v1187
        %v1319 = vpop.permute.xlu0 %1318
        %1322 = vset.pattern.permute.xlu0 0
        %1323 = vperm.xlu0 %1322, %v1188
        %v1324 = vpop.permute.xlu0 %1323
        %1327 = vset.pattern.permute.xlu0 0
        %1328 = vperm.xlu0 %1327, %v1189
        %v1329 = vpop.permute.xlu0 %1328
        %1332 = vset.pattern.permute.xlu0 0
        %1333 = vperm.xlu0 %1332, %v1190
        %v1334 = vpop.permute.xlu0 %1333
        %1337 = vset.pattern.permute.xlu0 0
        %1338 = vperm.xlu0 %1337, %v1191
        %v1339 = vpop.permute.xlu0 %1338
        %1342 = vset.pattern.permute.xlu0 0
        %1343 = vperm.xlu0 %1342, %v1192
        %v1344 = vpop.permute.xlu0 %1343
        %1347 = vset.pattern.permute.xlu0 0
        %1348 = vperm.xlu0 %1347, %v1193
        %v1349 = vpop.permute.xlu0 %1348
        %1352 = vset.pattern.permute.xlu0 0
        %1353 = vperm.xlu0 %1352, %v1194
        %v1354 = vpop.permute.xlu0 %1353
        %v1356 = vlaneseq
        %v1357 = vshrl.u32 %v1356, 7
        %v1358 = vsub.s32 0, %v1357
        %v1359 = vrot.slane %v1195, %v1358
        %v1360 = vmul.f32 %v1199, %v1359
        %v1361 = vmul.f32 %v1204, %v1359
        %v1362 = vmul.f32 %v1209, %v1359
        %v1363 = vmul.f32 %v1214, %v1359
        %v1364 = vmul.f32 %v1219, %v1359
        %v1365 = vmul.f32 %v1224, %v1359
        %v1366 = vmul.f32 %v1229, %v1359
        %v1367 = vmul.f32 %v1234, %v1359
        %v1368 = vmul.f32 %v1239, %v1359
        %v1369 = vmul.f32 %v1244, %v1359
        %v1370 = vmul.f32 %v1249, %v1359
        %v1371 = vmul.f32 %v1254, %v1359
        %v1372 = vmul.f32 %v1259, %v1359
        %v1373 = vmul.f32 %v1264, %v1359
        %v1374 = vmul.f32 %v1269, %v1359
        %v1375 = vmul.f32 %v1274, %v1359
        %v1376 = vmul.f32 %v1279, %v1359
        %v1377 = vmul.f32 %v1284, %v1359
        %v1378 = vmul.f32 %v1289, %v1359
        %v1379 = vmul.f32 %v1294, %v1359
        %v1380 = vmul.f32 %v1299, %v1359
        %v1381 = vmul.f32 %v1304, %v1359
        %v1382 = vmul.f32 %v1309, %v1359
        %v1383 = vmul.f32 %v1314, %v1359
        %v1384 = vmul.f32 %v1319, %v1359
        %v1385 = vmul.f32 %v1324, %v1359
        %v1386 = vmul.f32 %v1329, %v1359
        %v1387 = vmul.f32 %v1334, %v1359
        %v1388 = vmul.f32 %v1339, %v1359
        %v1389 = vmul.f32 %v1344, %v1359
        %v1390 = vmul.f32 %v1349, %v1359
        %v1391 = vmul.f32 %v1354, %v1359
        %v1392 = vadd.f32 %v664, %v1360
        %v1393 = vadd.f32 %v665, %v1361
        %v1394 = vadd.f32 %v666, %v1362
        %v1395 = vadd.f32 %v667, %v1363
        %v1396 = vadd.f32 %v668, %v1364
        %v1397 = vadd.f32 %v669, %v1365
        %v1398 = vadd.f32 %v670, %v1366
        %v1399 = vadd.f32 %v671, %v1367
        %v1400 = vadd.f32 %v672, %v1368
        %v1401 = vadd.f32 %v673, %v1369
        %v1402 = vadd.f32 %v674, %v1370
        %v1403 = vadd.f32 %v675, %v1371
        %v1404 = vadd.f32 %v676, %v1372
        %v1405 = vadd.f32 %v677, %v1373
        %v1406 = vadd.f32 %v678, %v1374
        %v1407 = vadd.f32 %v679, %v1375
        %v1408 = vadd.f32 %v680, %v1376
        %v1409 = vadd.f32 %v681, %v1377
        %v1410 = vadd.f32 %v682, %v1378
        %v1411 = vadd.f32 %v683, %v1379
        %v1412 = vadd.f32 %v684, %v1380
        %v1413 = vadd.f32 %v685, %v1381
        %v1414 = vadd.f32 %v686, %v1382
        %v1415 = vadd.f32 %v687, %v1383
        %v1416 = vadd.f32 %v688, %v1384
        %v1417 = vadd.f32 %v689, %v1385
        %v1418 = vadd.f32 %v690, %v1386
        %v1419 = vadd.f32 %v691, %v1387
        %v1420 = vadd.f32 %v692, %v1388
        %v1421 = vadd.f32 %v693, %v1389
        %v1422 = vadd.f32 %v694, %v1390
        %v1423 = vadd.f32 %v695, %v1391
        %v1424 = vld [vmem:[%s380] sm:$0xe]
        %v1425 = vld [vmem:[%s380 + $0xc] sm:$0xe]
        %v1426 = vld [vmem:[%s380 + $0x18] sm:$0xe]
        %v1427 = vld [vmem:[%s380 + $0x24] sm:$0xe]
        %v1428 = vld [vmem:[%s380 + $0x30] sm:$0xe]
        %v1429 = vld [vmem:[%s380 + $0x3c] sm:$0xe]
        %v1430 = vld [vmem:[%s380 + $0x48] sm:$0xe]
        %v1431 = vld [vmem:[%s380 + $0x54] sm:$0xe]
        %v1432 = vld [vmem:[%s380 + $0x60] sm:$0xe]
        %v1433 = vld [vmem:[%s380 + $0x6c] sm:$0xe]
        %v1434 = vld [vmem:[%s380 + $0x78] sm:$0xe]
        %v1435 = vld [vmem:[%s380 + $0x84] sm:$0xe]
        %v1436 = vld [vmem:[%s380 + $0x90] sm:$0xe]
        %v1437 = vld [vmem:[%s380 + $0x9c] sm:$0xe]
        %v1438 = vld [vmem:[%s380 + $0xa8] sm:$0xe]
        %v1439 = vld [vmem:[%s380 + $0xb4] sm:$0xe]
        %vm1488 = vcmask 1042432
        %vm1489 = vcmask 1046532
        %vm1490 = vmor %vm1488, %vm1489
        %v1491 = vrot.slane %v1424, 5
        %v1492 = vrot.slane %v1491, 4
        %v1493 = vrot.slane %v697, 5
        %v1494 = vsel %vm1490, %v1492, %v1493
        %v1495 = vrot.slane %v1493, 4
        %v1496 = vrot.slane %v698, 5
        %v1497 = vsel %vm1490, %v1495, %v1496
        %v1498 = vrot.slane %v1425, 5
        %v1499 = vrot.slane %v1498, 4
        %v1500 = vrot.slane %v700, 5
        %v1501 = vsel %vm1490, %v1499, %v1500
        %v1502 = vrot.slane %v1500, 4
        %v1503 = vrot.slane %v701, 5
        %v1504 = vsel %vm1490, %v1502, %v1503
        %v1505 = vrot.slane %v1426, 5
        %v1506 = vrot.slane %v1505, 4
        %v1507 = vrot.slane %v703, 5
        %v1508 = vsel %vm1490, %v1506, %v1507
        %v1509 = vrot.slane %v1507, 4
        %v1510 = vrot.slane %v704, 5
        %v1511 = vsel %vm1490, %v1509, %v1510
        %v1512 = vrot.slane %v1427, 5
        %v1513 = vrot.slane %v1512, 4
        %v1514 = vrot.slane %v706, 5
        %v1515 = vsel %vm1490, %v1513, %v1514
        %v1516 = vrot.slane %v1514, 4
        %v1517 = vrot.slane %v707, 5
        %v1518 = vsel %vm1490, %v1516, %v1517
        %v1519 = vrot.slane %v1428, 5
        %v1520 = vrot.slane %v1519, 4
        %v1521 = vrot.slane %v709, 5
        %v1522 = vsel %vm1490, %v1520, %v1521
        %v1523 = vrot.slane %v1521, 4
        %v1524 = vrot.slane %v710, 5
        %v1525 = vsel %vm1490, %v1523, %v1524
        %v1526 = vrot.slane %v1429, 5
        %v1527 = vrot.slane %v1526, 4
        %v1528 = vrot.slane %v712, 5
        %v1529 = vsel %vm1490, %v1527, %v1528
        %v1530 = vrot.slane %v1528, 4
        %v1531 = vrot.slane %v713, 5
        %v1532 = vsel %vm1490, %v1530, %v1531
        %v1533 = vrot.slane %v1430, 5
        %v1534 = vrot.slane %v1533, 4
        %v1535 = vrot.slane %v715, 5
        %v1536 = vsel %vm1490, %v1534, %v1535
        %v1537 = vrot.slane %v1535, 4
        %v1538 = vrot.slane %v716, 5
        %v1539 = vsel %vm1490, %v1537, %v1538
        %v1540 = vrot.slane %v1431, 5
        %v1541 = vrot.slane %v1540, 4
        %v1542 = vrot.slane %v718, 5
        %v1543 = vsel %vm1490, %v1541, %v1542
        %v1544 = vrot.slane %v1542, 4
        %v1545 = vrot.slane %v719, 5
        %v1546 = vsel %vm1490, %v1544, %v1545
        %v1547 = vrot.slane %v1432, 5
        %v1548 = vrot.slane %v1547, 4
        %v1549 = vrot.slane %v721, 5
        %v1550 = vsel %vm1490, %v1548, %v1549
        %v1551 = vrot.slane %v1549, 4
        %v1552 = vrot.slane %v722, 5
        %v1553 = vsel %vm1490, %v1551, %v1552
        %v1554 = vrot.slane %v1433, 5
        %v1555 = vrot.slane %v1554, 4
        %v1556 = vrot.slane %v724, 5
        %v1557 = vsel %vm1490, %v1555, %v1556
        %v1558 = vrot.slane %v1556, 4
        %v1559 = vrot.slane %v725, 5
        %v1560 = vsel %vm1490, %v1558, %v1559
        %v1561 = vrot.slane %v1434, 5
        %v1562 = vrot.slane %v1561, 4
        %v1563 = vrot.slane %v727, 5
        %v1564 = vsel %vm1490, %v1562, %v1563
        %v1565 = vrot.slane %v1563, 4
        %v1566 = vrot.slane %v728, 5
        %v1567 = vsel %vm1490, %v1565, %v1566
        %v1568 = vrot.slane %v1435, 5
        %v1569 = vrot.slane %v1568, 4
        %v1570 = vrot.slane %v730, 5
        %v1571 = vsel %vm1490, %v1569, %v1570
        %v1572 = vrot.slane %v1570, 4
        %v1573 = vrot.slane %v731, 5
        %v1574 = vsel %vm1490, %v1572, %v1573
        %v1575 = vrot.slane %v1436, 5
        %v1576 = vrot.slane %v1575, 4
        %v1577 = vrot.slane %v733, 5
        %v1578 = vsel %vm1490, %v1576, %v1577
        %v1579 = vrot.slane %v1577, 4
        %v1580 = vrot.slane %v734, 5
        %v1581 = vsel %vm1490, %v1579, %v1580
        %v1582 = vrot.slane %v1437, 5
        %v1583 = vrot.slane %v1582, 4
        %v1584 = vrot.slane %v736, 5
        %v1585 = vsel %vm1490, %v1583, %v1584
        %v1586 = vrot.slane %v1584, 4
        %v1587 = vrot.slane %v737, 5
        %v1588 = vsel %vm1490, %v1586, %v1587
        %v1589 = vrot.slane %v1438, 5
        %v1590 = vrot.slane %v1589, 4
        %v1591 = vrot.slane %v739, 5
        %v1592 = vsel %vm1490, %v1590, %v1591
        %v1593 = vrot.slane %v1591, 4
        %v1594 = vrot.slane %v740, 5
        %v1595 = vsel %vm1490, %v1593, %v1594
        %v1596 = vrot.slane %v1439, 5
        %v1597 = vrot.slane %v1596, 4
        %v1598 = vrot.slane %v742, 5
        %v1599 = vsel %vm1490, %v1597, %v1598
        %v1600 = vrot.slane %v1598, 4
        %v1601 = vrot.slane %v743, 5
        %v1602 = vsel %vm1490, %v1600, %v1601
        %v1635 = vunpack.c.l.bf16 %v1494
        %v1636 = vunpack.c.l.bf16 %v1497
        %v1637 = vunpack.c.l.bf16 %v1501
        %v1638 = vunpack.c.l.bf16 %v1504
        %v1639 = vunpack.c.l.bf16 %v1508
        %v1640 = vunpack.c.l.bf16 %v1511
        %v1641 = vunpack.c.l.bf16 %v1515
        %v1642 = vunpack.c.l.bf16 %v1518
        %v1643 = vunpack.c.l.bf16 %v1522
        %v1644 = vunpack.c.l.bf16 %v1525
        %v1645 = vunpack.c.l.bf16 %v1529
        %v1646 = vunpack.c.l.bf16 %v1532
        %v1647 = vunpack.c.l.bf16 %v1536
        %v1648 = vunpack.c.l.bf16 %v1539
        %v1649 = vunpack.c.l.bf16 %v1543
        %v1650 = vunpack.c.l.bf16 %v1546
        %v1651 = vunpack.c.l.bf16 %v1550
        %v1652 = vunpack.c.l.bf16 %v1553
        %v1653 = vunpack.c.l.bf16 %v1557
        %v1654 = vunpack.c.l.bf16 %v1560
        %v1655 = vunpack.c.l.bf16 %v1564
        %v1656 = vunpack.c.l.bf16 %v1567
        %v1657 = vunpack.c.l.bf16 %v1571
        %v1658 = vunpack.c.l.bf16 %v1574
        %v1659 = vunpack.c.l.bf16 %v1578
        %v1660 = vunpack.c.l.bf16 %v1581
        %v1661 = vunpack.c.l.bf16 %v1585
        %v1662 = vunpack.c.l.bf16 %v1588
        %v1663 = vunpack.c.l.bf16 %v1592
        %v1664 = vunpack.c.l.bf16 %v1595
        %v1665 = vunpack.c.l.bf16 %v1599
        %v1666 = vunpack.c.l.bf16 %v1602
        %v1667 = vld [vmem:[%s3 + $0x2] sm:$0x1]
        %1669 = vset.pattern.permute.xlu0 0
        %1670 = vperm.xlu0 %1669, %v1635
        %v1671 = vpop.permute.xlu0 %1670
        %1674 = vset.pattern.permute.xlu0 0
        %1675 = vperm.xlu0 %1674, %v1636
        %v1676 = vpop.permute.xlu0 %1675
        %1679 = vset.pattern.permute.xlu0 0
        %1680 = vperm.xlu0 %1679, %v1637
        %v1681 = vpop.permute.xlu0 %1680
        %1684 = vset.pattern.permute.xlu0 0
        %1685 = vperm.xlu0 %1684, %v1638
        %v1686 = vpop.permute.xlu0 %1685
        %1689 = vset.pattern.permute.xlu0 0
        %1690 = vperm.xlu0 %1689, %v1639
        %v1691 = vpop.permute.xlu0 %1690
        %1694 = vset.pattern.permute.xlu0 0
        %1695 = vperm.xlu0 %1694, %v1640
        %v1696 = vpop.permute.xlu0 %1695
        %1699 = vset.pattern.permute.xlu0 0
        %1700 = vperm.xlu0 %1699, %v1641
        %v1701 = vpop.permute.xlu0 %1700
        %1704 = vset.pattern.permute.xlu0 0
        %1705 = vperm.xlu0 %1704, %v1642
        %v1706 = vpop.permute.xlu0 %1705
        %1709 = vset.pattern.permute.xlu0 0
        %1710 = vperm.xlu0 %1709, %v1643
        %v1711 = vpop.permute.xlu0 %1710
        %1714 = vset.pattern.permute.xlu0 0
        %1715 = vperm.xlu0 %1714, %v1644
        %v1716 = vpop.permute.xlu0 %1715
        %1719 = vset.pattern.permute.xlu0 0
        %1720 = vperm.xlu0 %1719, %v1645
        %v1721 = vpop.permute.xlu0 %1720
        %1724 = vset.pattern.permute.xlu0 0
        %1725 = vperm.xlu0 %1724, %v1646
        %v1726 = vpop.permute.xlu0 %1725
        %1729 = vset.pattern.permute.xlu0 0
        %1730 = vperm.xlu0 %1729, %v1647
        %v1731 = vpop.permute.xlu0 %1730
        %1734 = vset.pattern.permute.xlu0 0
        %1735 = vperm.xlu0 %1734, %v1648
        %v1736 = vpop.permute.xlu0 %1735
        %1739 = vset.pattern.permute.xlu0 0
        %1740 = vperm.xlu0 %1739, %v1649
        %v1741 = vpop.permute.xlu0 %1740
        %1744 = vset.pattern.permute.xlu0 0
        %1745 = vperm.xlu0 %1744, %v1650
        %v1746 = vpop.permute.xlu0 %1745
        %1749 = vset.pattern.permute.xlu0 0
        %1750 = vperm.xlu0 %1749, %v1651
        %v1751 = vpop.permute.xlu0 %1750
        %1754 = vset.pattern.permute.xlu0 0
        %1755 = vperm.xlu0 %1754, %v1652
        %v1756 = vpop.permute.xlu0 %1755
        %1759 = vset.pattern.permute.xlu0 0
        %1760 = vperm.xlu0 %1759, %v1653
        %v1761 = vpop.permute.xlu0 %1760
        %1764 = vset.pattern.permute.xlu0 0
        %1765 = vperm.xlu0 %1764, %v1654
        %v1766 = vpop.permute.xlu0 %1765
        %1769 = vset.pattern.permute.xlu0 0
        %1770 = vperm.xlu0 %1769, %v1655
        %v1771 = vpop.permute.xlu0 %1770
        %1774 = vset.pattern.permute.xlu0 0
        %1775 = vperm.xlu0 %1774, %v1656
        %v1776 = vpop.permute.xlu0 %1775
        %1779 = vset.pattern.permute.xlu0 0
        %1780 = vperm.xlu0 %1779, %v1657
        %v1781 = vpop.permute.xlu0 %1780
        %1784 = vset.pattern.permute.xlu0 0
        %1785 = vperm.xlu0 %1784, %v1658
        %v1786 = vpop.permute.xlu0 %1785
        %1789 = vset.pattern.permute.xlu0 0
        %1790 = vperm.xlu0 %1789, %v1659
        %v1791 = vpop.permute.xlu0 %1790
        %1794 = vset.pattern.permute.xlu0 0
        %1795 = vperm.xlu0 %1794, %v1660
        %v1796 = vpop.permute.xlu0 %1795
        %1799 = vset.pattern.permute.xlu0 0
        %1800 = vperm.xlu0 %1799, %v1661
        %v1801 = vpop.permute.xlu0 %1800
        %1804 = vset.pattern.permute.xlu0 0
        %1805 = vperm.xlu0 %1804, %v1662
        %v1806 = vpop.permute.xlu0 %1805
        %1809 = vset.pattern.permute.xlu0 0
        %1810 = vperm.xlu0 %1809, %v1663
        %v1811 = vpop.permute.xlu0 %1810
        %1814 = vset.pattern.permute.xlu0 0
        %1815 = vperm.xlu0 %1814, %v1664
        %v1816 = vpop.permute.xlu0 %1815
        %1819 = vset.pattern.permute.xlu0 0
        %1820 = vperm.xlu0 %1819, %v1665
        %v1821 = vpop.permute.xlu0 %1820
        %1824 = vset.pattern.permute.xlu0 0
        %1825 = vperm.xlu0 %1824, %v1666
        %v1826 = vpop.permute.xlu0 %1825
        %v1828 = vlaneseq
        %v1829 = vshrl.u32 %v1828, 7
        %v1830 = vsub.s32 0, %v1829
        %v1831 = vrot.slane %v1667, %v1830
        %v1832 = vmul.f32 %v1671, %v1831
        %v1833 = vmul.f32 %v1676, %v1831
        %v1834 = vmul.f32 %v1681, %v1831
        %v1835 = vmul.f32 %v1686, %v1831
        %v1836 = vmul.f32 %v1691, %v1831
        %v1837 = vmul.f32 %v1696, %v1831
        %v1838 = vmul.f32 %v1701, %v1831
        %v1839 = vmul.f32 %v1706, %v1831
        %v1840 = vmul.f32 %v1711, %v1831
        %v1841 = vmul.f32 %v1716, %v1831
        %v1842 = vmul.f32 %v1721, %v1831
        %v1843 = vmul.f32 %v1726, %v1831
        %v1844 = vmul.f32 %v1731, %v1831
        %v1845 = vmul.f32 %v1736, %v1831
        %v1846 = vmul.f32 %v1741, %v1831
        %v1847 = vmul.f32 %v1746, %v1831
        %v1848 = vmul.f32 %v1751, %v1831
        %v1849 = vmul.f32 %v1756, %v1831
        %v1850 = vmul.f32 %v1761, %v1831
        %v1851 = vmul.f32 %v1766, %v1831
        %v1852 = vmul.f32 %v1771, %v1831
        %v1853 = vmul.f32 %v1776, %v1831
        %v1854 = vmul.f32 %v1781, %v1831
        %v1855 = vmul.f32 %v1786, %v1831
        %v1856 = vmul.f32 %v1791, %v1831
        %v1857 = vmul.f32 %v1796, %v1831
        %v1858 = vmul.f32 %v1801, %v1831
        %v1859 = vmul.f32 %v1806, %v1831
        %v1860 = vmul.f32 %v1811, %v1831
        %v1861 = vmul.f32 %v1816, %v1831
        %v1862 = vmul.f32 %v1821, %v1831
        %v1863 = vmul.f32 %v1826, %v1831
        %v1864 = vadd.f32 %v1392, %v1832
        %v1865 = vadd.f32 %v1393, %v1833
        %v1866 = vadd.f32 %v1394, %v1834
        %v1867 = vadd.f32 %v1395, %v1835
        %v1868 = vadd.f32 %v1396, %v1836
        %v1869 = vadd.f32 %v1397, %v1837
        %v1870 = vadd.f32 %v1398, %v1838
        %v1871 = vadd.f32 %v1399, %v1839
        %v1872 = vadd.f32 %v1400, %v1840
        %v1873 = vadd.f32 %v1401, %v1841
        %v1874 = vadd.f32 %v1402, %v1842
        %v1875 = vadd.f32 %v1403, %v1843
        %v1876 = vadd.f32 %v1404, %v1844
        %v1877 = vadd.f32 %v1405, %v1845
        %v1878 = vadd.f32 %v1406, %v1846
        %v1879 = vadd.f32 %v1407, %v1847
        %v1880 = vadd.f32 %v1408, %v1848
        %v1881 = vadd.f32 %v1409, %v1849
        %v1882 = vadd.f32 %v1410, %v1850
        %v1883 = vadd.f32 %v1411, %v1851
        %v1884 = vadd.f32 %v1412, %v1852
        %v1885 = vadd.f32 %v1413, %v1853
        %v1886 = vadd.f32 %v1414, %v1854
        %v1887 = vadd.f32 %v1415, %v1855
        %v1888 = vadd.f32 %v1416, %v1856
        %v1889 = vadd.f32 %v1417, %v1857
        %v1890 = vadd.f32 %v1418, %v1858
        %v1891 = vadd.f32 %v1419, %v1859
        %v1892 = vadd.f32 %v1420, %v1860
        %v1893 = vadd.f32 %v1421, %v1861
        %v1894 = vadd.f32 %v1422, %v1862
        %v1895 = vadd.f32 %v1423, %v1863
        %s1896 = scalar_lea.vmem %s380, 12
        %v1897 = vld [vmem:[%s1896] sm:$0xf]
        %v1898 = vld [vmem:[%s1896 + $0x4] sm:$0xf]
        %v1899 = vld [vmem:[%s1896 + $0xc] sm:$0xf]
        %v1900 = vld [vmem:[%s1896 + $0x10] sm:$0xf]
        %v1901 = vld [vmem:[%s1896 + $0x18] sm:$0xf]
        %v1902 = vld [vmem:[%s1896 + $0x1c] sm:$0xf]
        %v1903 = vld [vmem:[%s1896 + $0x24] sm:$0xf]
        %v1904 = vld [vmem:[%s1896 + $0x28] sm:$0xf]
        %v1905 = vld [vmem:[%s1896 + $0x30] sm:$0xf]
        %v1906 = vld [vmem:[%s1896 + $0x34] sm:$0xf]
        %v1907 = vld [vmem:[%s1896 + $0x3c] sm:$0xf]
        %v1908 = vld [vmem:[%s1896 + $0x40] sm:$0xf]
        %v1909 = vld [vmem:[%s1896 + $0x48] sm:$0xf]
        %v1910 = vld [vmem:[%s1896 + $0x4c] sm:$0xf]
        %v1911 = vld [vmem:[%s1896 + $0x54] sm:$0xf]
        %v1912 = vld [vmem:[%s1896 + $0x58] sm:$0xf]
        %v1913 = vld [vmem:[%s1896 + $0x60] sm:$0xf]
        %v1914 = vld [vmem:[%s1896 + $0x64] sm:$0xf]
        %v1915 = vld [vmem:[%s1896 + $0x6c] sm:$0xf]
        %v1916 = vld [vmem:[%s1896 + $0x70] sm:$0xf]
        %v1917 = vld [vmem:[%s1896 + $0x78] sm:$0xf]
        %v1918 = vld [vmem:[%s1896 + $0x7c] sm:$0xf]
        %v1919 = vld [vmem:[%s1896 + $0x84] sm:$0xf]
        %v1920 = vld [vmem:[%s1896 + $0x88] sm:$0xf]
        %v1921 = vld [vmem:[%s1896 + $0x90] sm:$0xf]
        %v1922 = vld [vmem:[%s1896 + $0x94] sm:$0xf]
        %v1923 = vld [vmem:[%s1896 + $0x9c] sm:$0xf]
        %v1924 = vld [vmem:[%s1896 + $0xa0] sm:$0xf]
        %v1925 = vld [vmem:[%s1896 + $0xa8] sm:$0xf]
        %v1926 = vld [vmem:[%s1896 + $0xac] sm:$0xf]
        %v1927 = vld [vmem:[%s1896 + $0xb4] sm:$0xf]
        %v1928 = vld [vmem:[%s1896 + $0xb8] sm:$0xf]
        %v1929 = vunpack.c.l.bf16 %v1897
        %v1930 = vunpack.c.l.bf16 %v1898
        %v1931 = vunpack.c.l.bf16 %v1899
        %v1932 = vunpack.c.l.bf16 %v1900
        %v1933 = vunpack.c.l.bf16 %v1901
        %v1934 = vunpack.c.l.bf16 %v1902
        %v1935 = vunpack.c.l.bf16 %v1903
        %v1936 = vunpack.c.l.bf16 %v1904
        %v1937 = vunpack.c.l.bf16 %v1905
        %v1938 = vunpack.c.l.bf16 %v1906
        %v1939 = vunpack.c.l.bf16 %v1907
        %v1940 = vunpack.c.l.bf16 %v1908
        %v1941 = vunpack.c.l.bf16 %v1909
        %v1942 = vunpack.c.l.bf16 %v1910
        %v1943 = vunpack.c.l.bf16 %v1911
        %v1944 = vunpack.c.l.bf16 %v1912
        %v1945 = vunpack.c.l.bf16 %v1913
        %v1946 = vunpack.c.l.bf16 %v1914
        %v1947 = vunpack.c.l.bf16 %v1915
        %v1948 = vunpack.c.l.bf16 %v1916
        %v1949 = vunpack.c.l.bf16 %v1917
        %v1950 = vunpack.c.l.bf16 %v1918
        %v1951 = vunpack.c.l.bf16 %v1919
        %v1952 = vunpack.c.l.bf16 %v1920
        %v1953 = vunpack.c.l.bf16 %v1921
        %v1954 = vunpack.c.l.bf16 %v1922
        %v1955 = vunpack.c.l.bf16 %v1923
        %v1956 = vunpack.c.l.bf16 %v1924
        %v1957 = vunpack.c.l.bf16 %v1925
        %v1958 = vunpack.c.l.bf16 %v1926
        %v1959 = vunpack.c.l.bf16 %v1927
        %v1960 = vunpack.c.l.bf16 %v1928
        %v1961 = vld [vmem:[%s3 + $0x3] sm:$0x1]
        %1963 = vset.pattern.permute.xlu0 0
        %1964 = vperm.xlu0 %1963, %v1929
        %v1965 = vpop.permute.xlu0 %1964
        %1968 = vset.pattern.permute.xlu0 0
        %1969 = vperm.xlu0 %1968, %v1930
        %v1970 = vpop.permute.xlu0 %1969
        %1973 = vset.pattern.permute.xlu0 0
        %1974 = vperm.xlu0 %1973, %v1931
        %v1975 = vpop.permute.xlu0 %1974
        %1978 = vset.pattern.permute.xlu0 0
        %1979 = vperm.xlu0 %1978, %v1932
        %v1980 = vpop.permute.xlu0 %1979
        %1983 = vset.pattern.permute.xlu0 0
        %1984 = vperm.xlu0 %1983, %v1933
        %v1985 = vpop.permute.xlu0 %1984
        %1988 = vset.pattern.permute.xlu0 0
        %1989 = vperm.xlu0 %1988, %v1934
        %v1990 = vpop.permute.xlu0 %1989
        %1993 = vset.pattern.permute.xlu0 0
        %1994 = vperm.xlu0 %1993, %v1935
        %v1995 = vpop.permute.xlu0 %1994
        %1998 = vset.pattern.permute.xlu0 0
        %1999 = vperm.xlu0 %1998, %v1936
        %v2000 = vpop.permute.xlu0 %1999
        %2003 = vset.pattern.permute.xlu0 0
        %2004 = vperm.xlu0 %2003, %v1937
        %v2005 = vpop.permute.xlu0 %2004
        %2008 = vset.pattern.permute.xlu0 0
        %2009 = vperm.xlu0 %2008, %v1938
        %v2010 = vpop.permute.xlu0 %2009
        %2013 = vset.pattern.permute.xlu0 0
        %2014 = vperm.xlu0 %2013, %v1939
        %v2015 = vpop.permute.xlu0 %2014
        %2018 = vset.pattern.permute.xlu0 0
        %2019 = vperm.xlu0 %2018, %v1940
        %v2020 = vpop.permute.xlu0 %2019
        %2023 = vset.pattern.permute.xlu0 0
        %2024 = vperm.xlu0 %2023, %v1941
        %v2025 = vpop.permute.xlu0 %2024
        %2028 = vset.pattern.permute.xlu0 0
        %2029 = vperm.xlu0 %2028, %v1942
        %v2030 = vpop.permute.xlu0 %2029
        %2033 = vset.pattern.permute.xlu0 0
        %2034 = vperm.xlu0 %2033, %v1943
        %v2035 = vpop.permute.xlu0 %2034
        %2038 = vset.pattern.permute.xlu0 0
        %2039 = vperm.xlu0 %2038, %v1944
        %v2040 = vpop.permute.xlu0 %2039
        %2043 = vset.pattern.permute.xlu0 0
        %2044 = vperm.xlu0 %2043, %v1945
        %v2045 = vpop.permute.xlu0 %2044
        %2048 = vset.pattern.permute.xlu0 0
        %2049 = vperm.xlu0 %2048, %v1946
        %v2050 = vpop.permute.xlu0 %2049
        %2053 = vset.pattern.permute.xlu0 0
        %2054 = vperm.xlu0 %2053, %v1947
        %v2055 = vpop.permute.xlu0 %2054
        %2058 = vset.pattern.permute.xlu0 0
        %2059 = vperm.xlu0 %2058, %v1948
        %v2060 = vpop.permute.xlu0 %2059
        %2063 = vset.pattern.permute.xlu0 0
        %2064 = vperm.xlu0 %2063, %v1949
        %v2065 = vpop.permute.xlu0 %2064
        %2068 = vset.pattern.permute.xlu0 0
        %2069 = vperm.xlu0 %2068, %v1950
        %v2070 = vpop.permute.xlu0 %2069
        %2073 = vset.pattern.permute.xlu0 0
        %2074 = vperm.xlu0 %2073, %v1951
        %v2075 = vpop.permute.xlu0 %2074
        %2078 = vset.pattern.permute.xlu0 0
        %2079 = vperm.xlu0 %2078, %v1952
        %v2080 = vpop.permute.xlu0 %2079
        %2083 = vset.pattern.permute.xlu0 0
        %2084 = vperm.xlu0 %2083, %v1953
        %v2085 = vpop.permute.xlu0 %2084
        %2088 = vset.pattern.permute.xlu0 0
        %2089 = vperm.xlu0 %2088, %v1954
        %v2090 = vpop.permute.xlu0 %2089
        %2093 = vset.pattern.permute.xlu0 0
        %2094 = vperm.xlu0 %2093, %v1955
        %v2095 = vpop.permute.xlu0 %2094
        %2098 = vset.pattern.permute.xlu0 0
        %2099 = vperm.xlu0 %2098, %v1956
        %v2100 = vpop.permute.xlu0 %2099
        %2103 = vset.pattern.permute.xlu0 0
        %2104 = vperm.xlu0 %2103, %v1957
        %v2105 = vpop.permute.xlu0 %2104
        %2108 = vset.pattern.permute.xlu0 0
        %2109 = vperm.xlu0 %2108, %v1958
        %v2110 = vpop.permute.xlu0 %2109
        %2113 = vset.pattern.permute.xlu0 0
        %2114 = vperm.xlu0 %2113, %v1959
        %v2115 = vpop.permute.xlu0 %2114
        %2118 = vset.pattern.permute.xlu0 0
        %2119 = vperm.xlu0 %2118, %v1960
        %v2120 = vpop.permute.xlu0 %2119
        %v2122 = vlaneseq
        %v2123 = vshrl.u32 %v2122, 7
        %v2124 = vsub.s32 0, %v2123
        %v2125 = vrot.slane %v1961, %v2124
        %v2126 = vmul.f32 %v1965, %v2125
        %v2127 = vmul.f32 %v1970, %v2125
        %v2128 = vmul.f32 %v1975, %v2125
        %v2129 = vmul.f32 %v1980, %v2125
        %v2130 = vmul.f32 %v1985, %v2125
        %v2131 = vmul.f32 %v1990, %v2125
        %v2132 = vmul.f32 %v1995, %v2125
        %v2133 = vmul.f32 %v2000, %v2125
        %v2134 = vmul.f32 %v2005, %v2125
        %v2135 = vmul.f32 %v2010, %v2125
        %v2136 = vmul.f32 %v2015, %v2125
        %v2137 = vmul.f32 %v2020, %v2125
        %v2138 = vmul.f32 %v2025, %v2125
        %v2139 = vmul.f32 %v2030, %v2125
        %v2140 = vmul.f32 %v2035, %v2125
        %v2141 = vmul.f32 %v2040, %v2125
        %v2142 = vmul.f32 %v2045, %v2125
        %v2143 = vmul.f32 %v2050, %v2125
        %v2144 = vmul.f32 %v2055, %v2125
        %v2145 = vmul.f32 %v2060, %v2125
        %v2146 = vmul.f32 %v2065, %v2125
        %v2147 = vmul.f32 %v2070, %v2125
        %v2148 = vmul.f32 %v2075, %v2125
        %v2149 = vmul.f32 %v2080, %v2125
        %v2150 = vmul.f32 %v2085, %v2125
        %v2151 = vmul.f32 %v2090, %v2125
        %v2152 = vmul.f32 %v2095, %v2125
        %v2153 = vmul.f32 %v2100, %v2125
        %v2154 = vmul.f32 %v2105, %v2125
        %v2155 = vmul.f32 %v2110, %v2125
        %v2156 = vmul.f32 %v2115, %v2125
        %v2157 = vmul.f32 %v2120, %v2125
        %v2158 = vadd.f32 %v1864, %v2126
        %v2159 = vadd.f32 %v1865, %v2127
        %v2160 = vadd.f32 %v1866, %v2128
        %v2161 = vadd.f32 %v1867, %v2129
        %v2162 = vadd.f32 %v1868, %v2130
        %v2163 = vadd.f32 %v1869, %v2131
        %v2164 = vadd.f32 %v1870, %v2132
        %v2165 = vadd.f32 %v1871, %v2133
        %v2166 = vadd.f32 %v1872, %v2134
        %v2167 = vadd.f32 %v1873, %v2135
        %v2168 = vadd.f32 %v1874, %v2136
        %v2169 = vadd.f32 %v1875, %v2137
        %v2170 = vadd.f32 %v1876, %v2138
        %v2171 = vadd.f32 %v1877, %v2139
        %v2172 = vadd.f32 %v1878, %v2140
        %v2173 = vadd.f32 %v1879, %v2141
        %v2174 = vadd.f32 %v1880, %v2142
        %v2175 = vadd.f32 %v1881, %v2143
        %v2176 = vadd.f32 %v1882, %v2144
        %v2177 = vadd.f32 %v1883, %v2145
        %v2178 = vadd.f32 %v1884, %v2146
        %v2179 = vadd.f32 %v1885, %v2147
        %v2180 = vadd.f32 %v1886, %v2148
        %v2181 = vadd.f32 %v1887, %v2149
        %v2182 = vadd.f32 %v1888, %v2150
        %v2183 = vadd.f32 %v1889, %v2151
        %v2184 = vadd.f32 %v1890, %v2152
        %v2185 = vadd.f32 %v1891, %v2153
        %v2186 = vadd.f32 %v1892, %v2154
        %v2187 = vadd.f32 %v1893, %v2155
        %v2188 = vadd.f32 %v1894, %v2156
        %v2189 = vadd.f32 %v1895, %v2157
        %v2190 = vld [vmem:[%s1896] sm:$0xf]
        %v2191 = vld [vmem:[%s1896 + $0x4] sm:$0xf]
        %v2192 = vld [vmem:[%s1896 + $0x8] sm:$0x1]
        %v2193 = vld [vmem:[%s1896 + $0xc] sm:$0xf]
        %v2194 = vld [vmem:[%s1896 + $0x10] sm:$0xf]
        %v2195 = vld [vmem:[%s1896 + $0x14] sm:$0x1]
        %v2196 = vld [vmem:[%s1896 + $0x18] sm:$0xf]
        %v2197 = vld [vmem:[%s1896 + $0x1c] sm:$0xf]
        %v2198 = vld [vmem:[%s1896 + $0x20] sm:$0x1]
        %v2199 = vld [vmem:[%s1896 + $0x24] sm:$0xf]
        %v2200 = vld [vmem:[%s1896 + $0x28] sm:$0xf]
        %v2201 = vld [vmem:[%s1896 + $0x2c] sm:$0x1]
        %v2202 = vld [vmem:[%s1896 + $0x30] sm:$0xf]
        %v2203 = vld [vmem:[%s1896 + $0x34] sm:$0xf]
        %v2204 = vld [vmem:[%s1896 + $0x38] sm:$0x1]
        %v2205 = vld [vmem:[%s1896 + $0x3c] sm:$0xf]
        %v2206 = vld [vmem:[%s1896 + $0x40] sm:$0xf]
        %v2207 = vld [vmem:[%s1896 + $0x44] sm:$0x1]
        %v2208 = vld [vmem:[%s1896 + $0x48] sm:$0xf]
        %v2209 = vld [vmem:[%s1896 + $0x4c] sm:$0xf]
        %v2210 = vld [vmem:[%s1896 + $0x50] sm:$0x1]
        %v2211 = vld [vmem:[%s1896 + $0x54] sm:$0xf]
        %v2212 = vld [vmem:[%s1896 + $0x58] sm:$0xf]
        %v2213 = vld [vmem:[%s1896 + $0x5c] sm:$0x1]
        %v2214 = vld [vmem:[%s1896 + $0x60] sm:$0xf]
        %v2215 = vld [vmem:[%s1896 + $0x64] sm:$0xf]
        %v2216 = vld [vmem:[%s1896 + $0x68] sm:$0x1]
        %v2217 = vld [vmem:[%s1896 + $0x6c] sm:$0xf]
        %v2218 = vld [vmem:[%s1896 + $0x70] sm:$0xf]
        %v2219 = vld [vmem:[%s1896 + $0x74] sm:$0x1]
        %v2220 = vld [vmem:[%s1896 + $0x78] sm:$0xf]
        %v2221 = vld [vmem:[%s1896 + $0x7c] sm:$0xf]
        %v2222 = vld [vmem:[%s1896 + $0x80] sm:$0x1]
        %v2223 = vld [vmem:[%s1896 + $0x84] sm:$0xf]
        %v2224 = vld [vmem:[%s1896 + $0x88] sm:$0xf]
        %v2225 = vld [vmem:[%s1896 + $0x8c] sm:$0x1]
        %v2226 = vld [vmem:[%s1896 + $0x90] sm:$0xf]
        %v2227 = vld [vmem:[%s1896 + $0x94] sm:$0xf]
        %v2228 = vld [vmem:[%s1896 + $0x98] sm:$0x1]
        %v2229 = vld [vmem:[%s1896 + $0x9c] sm:$0xf]
        %v2230 = vld [vmem:[%s1896 + $0xa0] sm:$0xf]
        %v2231 = vld [vmem:[%s1896 + $0xa4] sm:$0x1]
        %v2232 = vld [vmem:[%s1896 + $0xa8] sm:$0xf]
        %v2233 = vld [vmem:[%s1896 + $0xac] sm:$0xf]
        %v2234 = vld [vmem:[%s1896 + $0xb0] sm:$0x1]
        %v2235 = vld [vmem:[%s1896 + $0xb4] sm:$0xf]
        %v2236 = vld [vmem:[%s1896 + $0xb8] sm:$0xf]
        %v2237 = vld [vmem:[%s1896 + $0xbc] sm:$0x1]
        %v2239 = vshrl.u32 %v2190, 16
        %v2241 = vrot.slane %v2239, 4
        %v2242 = vshll.u32 %v2190, 16
        %v2244 = vrot.slane %v2242, 5
        %v2245 = vor.u32 %v2241, %v2244
        %v2246 = vrot.slane %v2245, 4
        %v2248 = vshll.u32 %v2191, 16
        %v2250 = vrot.slane %v2248, 5
        %v2251 = vsel %vm746, %v2246, %v2250
        %v2252 = vshrl.u32 %v2191, 16
        %v2254 = vrot.slane %v2252, 4
        %v2255 = vor.u32 %v2254, %v2250
        %v2256 = vrot.slane %v2255, 4
        %v2258 = vshll.u32 %v2192, 16
        %v2260 = vrot.slane %v2258, 5
        %v2261 = vsel %vm746, %v2256, %v2260
        %v2263 = vshrl.u32 %v2193, 16
        %v2265 = vrot.slane %v2263, 4
        %v2266 = vshll.u32 %v2193, 16
        %v2268 = vrot.slane %v2266, 5
        %v2269 = vor.u32 %v2265, %v2268
        %v2270 = vrot.slane %v2269, 4
        %v2272 = vshll.u32 %v2194, 16
        %v2274 = vrot.slane %v2272, 5
        %v2275 = vsel %vm746, %v2270, %v2274
        %v2276 = vshrl.u32 %v2194, 16
        %v2278 = vrot.slane %v2276, 4
        %v2279 = vor.u32 %v2278, %v2274
        %v2280 = vrot.slane %v2279, 4
        %v2282 = vshll.u32 %v2195, 16
        %v2284 = vrot.slane %v2282, 5
        %v2285 = vsel %vm746, %v2280, %v2284
        %v2287 = vshrl.u32 %v2196, 16
        %v2289 = vrot.slane %v2287, 4
        %v2290 = vshll.u32 %v2196, 16
        %v2292 = vrot.slane %v2290, 5
        %v2293 = vor.u32 %v2289, %v2292
        %v2294 = vrot.slane %v2293, 4
        %v2296 = vshll.u32 %v2197, 16
        %v2298 = vrot.slane %v2296, 5
        %v2299 = vsel %vm746, %v2294, %v2298
        %v2300 = vshrl.u32 %v2197, 16
        %v2302 = vrot.slane %v2300, 4
        %v2303 = vor.u32 %v2302, %v2298
        %v2304 = vrot.slane %v2303, 4
        %v2306 = vshll.u32 %v2198, 16
        %v2308 = vrot.slane %v2306, 5
        %v2309 = vsel %vm746, %v2304, %v2308
        %v2311 = vshrl.u32 %v2199, 16
        %v2313 = vrot.slane %v2311, 4
        %v2314 = vshll.u32 %v2199, 16
        %v2316 = vrot.slane %v2314, 5
        %v2317 = vor.u32 %v2313, %v2316
        %v2318 = vrot.slane %v2317, 4
        %v2320 = vshll.u32 %v2200, 16
        %v2322 = vrot.slane %v2320, 5
        %v2323 = vsel %vm746, %v2318, %v2322
        %v2324 = vshrl.u32 %v2200, 16
        %v2326 = vrot.slane %v2324, 4
        %v2327 = vor.u32 %v2326, %v2322
        %v2328 = vrot.slane %v2327, 4
        %v2330 = vshll.u32 %v2201, 16
        %v2332 = vrot.slane %v2330, 5
        %v2333 = vsel %vm746, %v2328, %v2332
        %v2335 = vshrl.u32 %v2202, 16
        %v2337 = vrot.slane %v2335, 4
        %v2338 = vshll.u32 %v2202, 16
        %v2340 = vrot.slane %v2338, 5
        %v2341 = vor.u32 %v2337, %v2340
        %v2342 = vrot.slane %v2341, 4
        %v2344 = vshll.u32 %v2203, 16
        %v2346 = vrot.slane %v2344, 5
        %v2347 = vsel %vm746, %v2342, %v2346
        %v2348 = vshrl.u32 %v2203, 16
        %v2350 = vrot.slane %v2348, 4
        %v2351 = vor.u32 %v2350, %v2346
        %v2352 = vrot.slane %v2351, 4
        %v2354 = vshll.u32 %v2204, 16
        %v2356 = vrot.slane %v2354, 5
        %v2357 = vsel %vm746, %v2352, %v2356
        %v2359 = vshrl.u32 %v2205, 16
        %v2361 = vrot.slane %v2359, 4
        %v2362 = vshll.u32 %v2205, 16
        %v2364 = vrot.slane %v2362, 5
        %v2365 = vor.u32 %v2361, %v2364
        %v2366 = vrot.slane %v2365, 4
        %v2368 = vshll.u32 %v2206, 16
        %v2370 = vrot.slane %v2368, 5
        %v2371 = vsel %vm746, %v2366, %v2370
        %v2372 = vshrl.u32 %v2206, 16
        %v2374 = vrot.slane %v2372, 4
        %v2375 = vor.u32 %v2374, %v2370
        %v2376 = vrot.slane %v2375, 4
        %v2378 = vshll.u32 %v2207, 16
        %v2380 = vrot.slane %v2378, 5
        %v2381 = vsel %vm746, %v2376, %v2380
        %v2383 = vshrl.u32 %v2208, 16
        %v2385 = vrot.slane %v2383, 4
        %v2386 = vshll.u32 %v2208, 16
        %v2388 = vrot.slane %v2386, 5
        %v2389 = vor.u32 %v2385, %v2388
        %v2390 = vrot.slane %v2389, 4
        %v2392 = vshll.u32 %v2209, 16
        %v2394 = vrot.slane %v2392, 5
        %v2395 = vsel %vm746, %v2390, %v2394
        %v2396 = vshrl.u32 %v2209, 16
        %v2398 = vrot.slane %v2396, 4
        %v2399 = vor.u32 %v2398, %v2394
        %v2400 = vrot.slane %v2399, 4
        %v2402 = vshll.u32 %v2210, 16
        %v2404 = vrot.slane %v2402, 5
        %v2405 = vsel %vm746, %v2400, %v2404
        %v2407 = vshrl.u32 %v2211, 16
        %v2409 = vrot.slane %v2407, 4
        %v2410 = vshll.u32 %v2211, 16
        %v2412 = vrot.slane %v2410, 5
        %v2413 = vor.u32 %v2409, %v2412
        %v2414 = vrot.slane %v2413, 4
        %v2416 = vshll.u32 %v2212, 16
        %v2418 = vrot.slane %v2416, 5
        %v2419 = vsel %vm746, %v2414, %v2418
        %v2420 = vshrl.u32 %v2212, 16
        %v2422 = vrot.slane %v2420, 4
        %v2423 = vor.u32 %v2422, %v2418
        %v2424 = vrot.slane %v2423, 4
        %v2426 = vshll.u32 %v2213, 16
        %v2428 = vrot.slane %v2426, 5
        %v2429 = vsel %vm746, %v2424, %v2428
        %v2431 = vshrl.u32 %v2214, 16
        %v2433 = vrot.slane %v2431, 4
        %v2434 = vshll.u32 %v2214, 16
        %v2436 = vrot.slane %v2434, 5
        %v2437 = vor.u32 %v2433, %v2436
        %v2438 = vrot.slane %v2437, 4
        %v2440 = vshll.u32 %v2215, 16
        %v2442 = vrot.slane %v2440, 5
        %v2443 = vsel %vm746, %v2438, %v2442
        %v2444 = vshrl.u32 %v2215, 16
        %v2446 = vrot.slane %v2444, 4
        %v2447 = vor.u32 %v2446, %v2442
        %v2448 = vrot.slane %v2447, 4
        %v2450 = vshll.u32 %v2216, 16
        %v2452 = vrot.slane %v2450, 5
        %v2453 = vsel %vm746, %v2448, %v2452
        %v2455 = vshrl.u32 %v2217, 16
        %v2457 = vrot.slane %v2455, 4
        %v2458 = vshll.u32 %v2217, 16
        %v2460 = vrot.slane %v2458, 5
        %v2461 = vor.u32 %v2457, %v2460
        %v2462 = vrot.slane %v2461, 4
        %v2464 = vshll.u32 %v2218, 16
        %v2466 = vrot.slane %v2464, 5
        %v2467 = vsel %vm746, %v2462, %v2466
        %v2468 = vshrl.u32 %v2218, 16
        %v2470 = vrot.slane %v2468, 4
        %v2471 = vor.u32 %v2470, %v2466
        %v2472 = vrot.slane %v2471, 4
        %v2474 = vshll.u32 %v2219, 16
        %v2476 = vrot.slane %v2474, 5
        %v2477 = vsel %vm746, %v2472, %v2476
        %v2479 = vshrl.u32 %v2220, 16
        %v2481 = vrot.slane %v2479, 4
        %v2482 = vshll.u32 %v2220, 16
        %v2484 = vrot.slane %v2482, 5
        %v2485 = vor.u32 %v2481, %v2484
        %v2486 = vrot.slane %v2485, 4
        %v2488 = vshll.u32 %v2221, 16
        %v2490 = vrot.slane %v2488, 5
        %v2491 = vsel %vm746, %v2486, %v2490
        %v2492 = vshrl.u32 %v2221, 16
        %v2494 = vrot.slane %v2492, 4
        %v2495 = vor.u32 %v2494, %v2490
        %v2496 = vrot.slane %v2495, 4
        %v2498 = vshll.u32 %v2222, 16
        %v2500 = vrot.slane %v2498, 5
        %v2501 = vsel %vm746, %v2496, %v2500
        %v2503 = vshrl.u32 %v2223, 16
        %v2505 = vrot.slane %v2503, 4
        %v2506 = vshll.u32 %v2223, 16
        %v2508 = vrot.slane %v2506, 5
        %v2509 = vor.u32 %v2505, %v2508
        %v2510 = vrot.slane %v2509, 4
        %v2512 = vshll.u32 %v2224, 16
        %v2514 = vrot.slane %v2512, 5
        %v2515 = vsel %vm746, %v2510, %v2514
        %v2516 = vshrl.u32 %v2224, 16
        %v2518 = vrot.slane %v2516, 4
        %v2519 = vor.u32 %v2518, %v2514
        %v2520 = vrot.slane %v2519, 4
        %v2522 = vshll.u32 %v2225, 16
        %v2524 = vrot.slane %v2522, 5
        %v2525 = vsel %vm746, %v2520, %v2524
        %v2527 = vshrl.u32 %v2226, 16
        %v2529 = vrot.slane %v2527, 4
        %v2530 = vshll.u32 %v2226, 16
        %v2532 = vrot.slane %v2530, 5
        %v2533 = vor.u32 %v2529, %v2532
        %v2534 = vrot.slane %v2533, 4
        %v2536 = vshll.u32 %v2227, 16
        %v2538 = vrot.slane %v2536, 5
        %v2539 = vsel %vm746, %v2534, %v2538
        %v2540 = vshrl.u32 %v2227, 16
        %v2542 = vrot.slane %v2540, 4
        %v2543 = vor.u32 %v2542, %v2538
        %v2544 = vrot.slane %v2543, 4
        %v2546 = vshll.u32 %v2228, 16
        %v2548 = vrot.slane %v2546, 5
        %v2549 = vsel %vm746, %v2544, %v2548
        %v2551 = vshrl.u32 %v2229, 16
        %v2553 = vrot.slane %v2551, 4
        %v2554 = vshll.u32 %v2229, 16
        %v2556 = vrot.slane %v2554, 5
        %v2557 = vor.u32 %v2553, %v2556
        %v2558 = vrot.slane %v2557, 4
        %v2560 = vshll.u32 %v2230, 16
        %v2562 = vrot.slane %v2560, 5
        %v2563 = vsel %vm746, %v2558, %v2562
        %v2564 = vshrl.u32 %v2230, 16
        %v2566 = vrot.slane %v2564, 4
        %v2567 = vor.u32 %v2566, %v2562
        %v2568 = vrot.slane %v2567, 4
        %v2570 = vshll.u32 %v2231, 16
        %v2572 = vrot.slane %v2570, 5
        %v2573 = vsel %vm746, %v2568, %v2572
        %v2575 = vshrl.u32 %v2232, 16
        %v2577 = vrot.slane %v2575, 4
        %v2578 = vshll.u32 %v2232, 16
        %v2580 = vrot.slane %v2578, 5
        %v2581 = vor.u32 %v2577, %v2580
        %v2582 = vrot.slane %v2581, 4
        %v2584 = vshll.u32 %v2233, 16
        %v2586 = vrot.slane %v2584, 5
        %v2587 = vsel %vm746, %v2582, %v2586
        %v2588 = vshrl.u32 %v2233, 16
        %v2590 = vrot.slane %v2588, 4
        %v2591 = vor.u32 %v2590, %v2586
        %v2592 = vrot.slane %v2591, 4
        %v2594 = vshll.u32 %v2234, 16
        %v2596 = vrot.slane %v2594, 5
        %v2597 = vsel %vm746, %v2592, %v2596
        %v2599 = vshrl.u32 %v2235, 16
        %v2601 = vrot.slane %v2599, 4
        %v2602 = vshll.u32 %v2235, 16
        %v2604 = vrot.slane %v2602, 5
        %v2605 = vor.u32 %v2601, %v2604
        %v2606 = vrot.slane %v2605, 4
        %v2608 = vshll.u32 %v2236, 16
        %v2610 = vrot.slane %v2608, 5
        %v2611 = vsel %vm746, %v2606, %v2610
        %v2612 = vshrl.u32 %v2236, 16
        %v2614 = vrot.slane %v2612, 4
        %v2615 = vor.u32 %v2614, %v2610
        %v2616 = vrot.slane %v2615, 4
        %v2618 = vshll.u32 %v2237, 16
        %v2620 = vrot.slane %v2618, 5
        %v2621 = vsel %vm746, %v2616, %v2620
        %v2654 = vunpack.c.l.bf16 %v2251
        %v2655 = vunpack.c.l.bf16 %v2261
        %v2656 = vunpack.c.l.bf16 %v2275
        %v2657 = vunpack.c.l.bf16 %v2285
        %v2658 = vunpack.c.l.bf16 %v2299
        %v2659 = vunpack.c.l.bf16 %v2309
        %v2660 = vunpack.c.l.bf16 %v2323
        %v2661 = vunpack.c.l.bf16 %v2333
        %v2662 = vunpack.c.l.bf16 %v2347
        %v2663 = vunpack.c.l.bf16 %v2357
        %v2664 = vunpack.c.l.bf16 %v2371
        %v2665 = vunpack.c.l.bf16 %v2381
        %v2666 = vunpack.c.l.bf16 %v2395
        %v2667 = vunpack.c.l.bf16 %v2405
        %v2668 = vunpack.c.l.bf16 %v2419
        %v2669 = vunpack.c.l.bf16 %v2429
        %v2670 = vunpack.c.l.bf16 %v2443
        %v2671 = vunpack.c.l.bf16 %v2453
        %v2672 = vunpack.c.l.bf16 %v2467
        %v2673 = vunpack.c.l.bf16 %v2477
        %v2674 = vunpack.c.l.bf16 %v2491
        %v2675 = vunpack.c.l.bf16 %v2501
        %v2676 = vunpack.c.l.bf16 %v2515
        %v2677 = vunpack.c.l.bf16 %v2525
        %v2678 = vunpack.c.l.bf16 %v2539
        %v2679 = vunpack.c.l.bf16 %v2549
        %v2680 = vunpack.c.l.bf16 %v2563
        %v2681 = vunpack.c.l.bf16 %v2573
        %v2682 = vunpack.c.l.bf16 %v2587
        %v2683 = vunpack.c.l.bf16 %v2597
        %v2684 = vunpack.c.l.bf16 %v2611
        %v2685 = vunpack.c.l.bf16 %v2621
        %v2686 = vld [vmem:[%s3 + $0x4] sm:$0x1]
        %2688 = vset.pattern.permute.xlu0 0
        %2689 = vperm.xlu0 %2688, %v2654
        %v2690 = vpop.permute.xlu0 %2689
        %2693 = vset.pattern.permute.xlu0 0
        %2694 = vperm.xlu0 %2693, %v2655
        %v2695 = vpop.permute.xlu0 %2694
        %2698 = vset.pattern.permute.xlu0 0
        %2699 = vperm.xlu0 %2698, %v2656
        %v2700 = vpop.permute.xlu0 %2699
        %2703 = vset.pattern.permute.xlu0 0
        %2704 = vperm.xlu0 %2703, %v2657
        %v2705 = vpop.permute.xlu0 %2704
        %2708 = vset.pattern.permute.xlu0 0
        %2709 = vperm.xlu0 %2708, %v2658
        %v2710 = vpop.permute.xlu0 %2709
        %2713 = vset.pattern.permute.xlu0 0
        %2714 = vperm.xlu0 %2713, %v2659
        %v2715 = vpop.permute.xlu0 %2714
        %2718 = vset.pattern.permute.xlu0 0
        %2719 = vperm.xlu0 %2718, %v2660
        %v2720 = vpop.permute.xlu0 %2719
        %2723 = vset.pattern.permute.xlu0 0
        %2724 = vperm.xlu0 %2723, %v2661
        %v2725 = vpop.permute.xlu0 %2724
        %2728 = vset.pattern.permute.xlu0 0
        %2729 = vperm.xlu0 %2728, %v2662
        %v2730 = vpop.permute.xlu0 %2729
        %2733 = vset.pattern.permute.xlu0 0
        %2734 = vperm.xlu0 %2733, %v2663
        %v2735 = vpop.permute.xlu0 %2734
        %2738 = vset.pattern.permute.xlu0 0
        %2739 = vperm.xlu0 %2738, %v2664
        %v2740 = vpop.permute.xlu0 %2739
        %2743 = vset.pattern.permute.xlu0 0
        %2744 = vperm.xlu0 %2743, %v2665
        %v2745 = vpop.permute.xlu0 %2744
        %2748 = vset.pattern.permute.xlu0 0
        %2749 = vperm.xlu0 %2748, %v2666
        %v2750 = vpop.permute.xlu0 %2749
        %2753 = vset.pattern.permute.xlu0 0
        %2754 = vperm.xlu0 %2753, %v2667
        %v2755 = vpop.permute.xlu0 %2754
        %2758 = vset.pattern.permute.xlu0 0
        %2759 = vperm.xlu0 %2758, %v2668
        %v2760 = vpop.permute.xlu0 %2759
        %2763 = vset.pattern.permute.xlu0 0
        %2764 = vperm.xlu0 %2763, %v2669
        %v2765 = vpop.permute.xlu0 %2764
        %2768 = vset.pattern.permute.xlu0 0
        %2769 = vperm.xlu0 %2768, %v2670
        %v2770 = vpop.permute.xlu0 %2769
        %2773 = vset.pattern.permute.xlu0 0
        %2774 = vperm.xlu0 %2773, %v2671
        %v2775 = vpop.permute.xlu0 %2774
        %2778 = vset.pattern.permute.xlu0 0
        %2779 = vperm.xlu0 %2778, %v2672
        %v2780 = vpop.permute.xlu0 %2779
        %2783 = vset.pattern.permute.xlu0 0
        %2784 = vperm.xlu0 %2783, %v2673
        %v2785 = vpop.permute.xlu0 %2784
        %2788 = vset.pattern.permute.xlu0 0
        %2789 = vperm.xlu0 %2788, %v2674
        %v2790 = vpop.permute.xlu0 %2789
        %2793 = vset.pattern.permute.xlu0 0
        %2794 = vperm.xlu0 %2793, %v2675
        %v2795 = vpop.permute.xlu0 %2794
        %2798 = vset.pattern.permute.xlu0 0
        %2799 = vperm.xlu0 %2798, %v2676
        %v2800 = vpop.permute.xlu0 %2799
        %2803 = vset.pattern.permute.xlu0 0
        %2804 = vperm.xlu0 %2803, %v2677
        %v2805 = vpop.permute.xlu0 %2804
        %2808 = vset.pattern.permute.xlu0 0
        %2809 = vperm.xlu0 %2808, %v2678
        %v2810 = vpop.permute.xlu0 %2809
        %2813 = vset.pattern.permute.xlu0 0
        %2814 = vperm.xlu0 %2813, %v2679
        %v2815 = vpop.permute.xlu0 %2814
        %2818 = vset.pattern.permute.xlu0 0
        %2819 = vperm.xlu0 %2818, %v2680
        %v2820 = vpop.permute.xlu0 %2819
        %2823 = vset.pattern.permute.xlu0 0
        %2824 = vperm.xlu0 %2823, %v2681
        %v2825 = vpop.permute.xlu0 %2824
        %2828 = vset.pattern.permute.xlu0 0
        %2829 = vperm.xlu0 %2828, %v2682
        %v2830 = vpop.permute.xlu0 %2829
        %2833 = vset.pattern.permute.xlu0 0
        %2834 = vperm.xlu0 %2833, %v2683
        %v2835 = vpop.permute.xlu0 %2834
        %2838 = vset.pattern.permute.xlu0 0
        %2839 = vperm.xlu0 %2838, %v2684
        %v2840 = vpop.permute.xlu0 %2839
        %2843 = vset.pattern.permute.xlu0 0
        %2844 = vperm.xlu0 %2843, %v2685
        %v2845 = vpop.permute.xlu0 %2844
        %v2847 = vlaneseq
        %v2848 = vshrl.u32 %v2847, 7
        %v2849 = vsub.s32 0, %v2848
        %v2850 = vrot.slane %v2686, %v2849
        %v2851 = vmul.f32 %v2690, %v2850
        %v2852 = vmul.f32 %v2695, %v2850
        %v2853 = vmul.f32 %v2700, %v2850
        %v2854 = vmul.f32 %v2705, %v2850
        %v2855 = vmul.f32 %v2710, %v2850
        %v2856 = vmul.f32 %v2715, %v2850
        %v2857 = vmul.f32 %v2720, %v2850
        %v2858 = vmul.f32 %v2725, %v2850
        %v2859 = vmul.f32 %v2730, %v2850
        %v2860 = vmul.f32 %v2735, %v2850
        %v2861 = vmul.f32 %v2740, %v2850
        %v2862 = vmul.f32 %v2745, %v2850
        %v2863 = vmul.f32 %v2750, %v2850
        %v2864 = vmul.f32 %v2755, %v2850
        %v2865 = vmul.f32 %v2760, %v2850
        %v2866 = vmul.f32 %v2765, %v2850
        %v2867 = vmul.f32 %v2770, %v2850
        %v2868 = vmul.f32 %v2775, %v2850
        %v2869 = vmul.f32 %v2780, %v2850
        %v2870 = vmul.f32 %v2785, %v2850
        %v2871 = vmul.f32 %v2790, %v2850
        %v2872 = vmul.f32 %v2795, %v2850
        %v2873 = vmul.f32 %v2800, %v2850
        %v2874 = vmul.f32 %v2805, %v2850
        %v2875 = vmul.f32 %v2810, %v2850
        %v2876 = vmul.f32 %v2815, %v2850
        %v2877 = vmul.f32 %v2820, %v2850
        %v2878 = vmul.f32 %v2825, %v2850
        %v2879 = vmul.f32 %v2830, %v2850
        %v2880 = vmul.f32 %v2835, %v2850
        %v2881 = vmul.f32 %v2840, %v2850
        %v2882 = vmul.f32 %v2845, %v2850
        %v2883 = vadd.f32 %v2158, %v2851
        %v2884 = vadd.f32 %v2159, %v2852
        %v2885 = vadd.f32 %v2160, %v2853
        %v2886 = vadd.f32 %v2161, %v2854
        %v2887 = vadd.f32 %v2162, %v2855
        %v2888 = vadd.f32 %v2163, %v2856
        %v2889 = vadd.f32 %v2164, %v2857
        %v2890 = vadd.f32 %v2165, %v2858
        %v2891 = vadd.f32 %v2166, %v2859
        %v2892 = vadd.f32 %v2167, %v2860
        %v2893 = vadd.f32 %v2168, %v2861
        %v2894 = vadd.f32 %v2169, %v2862
        %v2895 = vadd.f32 %v2170, %v2863
        %v2896 = vadd.f32 %v2171, %v2864
        %v2897 = vadd.f32 %v2172, %v2865
        %v2898 = vadd.f32 %v2173, %v2866
        %v2899 = vadd.f32 %v2174, %v2867
        %v2900 = vadd.f32 %v2175, %v2868
        %v2901 = vadd.f32 %v2176, %v2869
        %v2902 = vadd.f32 %v2177, %v2870
        %v2903 = vadd.f32 %v2178, %v2871
        %v2904 = vadd.f32 %v2179, %v2872
        %v2905 = vadd.f32 %v2180, %v2873
        %v2906 = vadd.f32 %v2181, %v2874
        %v2907 = vadd.f32 %v2182, %v2875
        %v2908 = vadd.f32 %v2183, %v2876
        %v2909 = vadd.f32 %v2184, %v2877
        %v2910 = vadd.f32 %v2185, %v2878
        %v2911 = vadd.f32 %v2186, %v2879
        %v2912 = vadd.f32 %v2187, %v2880
        %v2913 = vadd.f32 %v2188, %v2881
        %v2914 = vadd.f32 %v2189, %v2882
        %v2915 = vld [vmem:[%s1896] sm:$0xe]
        %v2916 = vld [vmem:[%s1896 + $0xc] sm:$0xe]
        %v2917 = vld [vmem:[%s1896 + $0x18] sm:$0xe]
        %v2918 = vld [vmem:[%s1896 + $0x24] sm:$0xe]
        %v2919 = vld [vmem:[%s1896 + $0x30] sm:$0xe]
        %v2920 = vld [vmem:[%s1896 + $0x3c] sm:$0xe]
        %v2921 = vld [vmem:[%s1896 + $0x48] sm:$0xe]
        %v2922 = vld [vmem:[%s1896 + $0x54] sm:$0xe]
        %v2923 = vld [vmem:[%s1896 + $0x60] sm:$0xe]
        %v2924 = vld [vmem:[%s1896 + $0x6c] sm:$0xe]
        %v2925 = vld [vmem:[%s1896 + $0x78] sm:$0xe]
        %v2926 = vld [vmem:[%s1896 + $0x84] sm:$0xe]
        %v2927 = vld [vmem:[%s1896 + $0x90] sm:$0xe]
        %v2928 = vld [vmem:[%s1896 + $0x9c] sm:$0xe]
        %v2929 = vld [vmem:[%s1896 + $0xa8] sm:$0xe]
        %v2930 = vld [vmem:[%s1896 + $0xb4] sm:$0xe]
        %v2979 = vrot.slane %v2915, 5
        %v2980 = vrot.slane %v2979, 4
        %v2981 = vrot.slane %v2191, 5
        %v2982 = vsel %vm1490, %v2980, %v2981
        %v2983 = vrot.slane %v2981, 4
        %v2984 = vrot.slane %v2192, 5
        %v2985 = vsel %vm1490, %v2983, %v2984
        %v2986 = vrot.slane %v2916, 5
        %v2987 = vrot.slane %v2986, 4
        %v2988 = vrot.slane %v2194, 5
        %v2989 = vsel %vm1490, %v2987, %v2988
        %v2990 = vrot.slane %v2988, 4
        %v2991 = vrot.slane %v2195, 5
        %v2992 = vsel %vm1490, %v2990, %v2991
        %v2993 = vrot.slane %v2917, 5
        %v2994 = vrot.slane %v2993, 4
        %v2995 = vrot.slane %v2197, 5
        %v2996 = vsel %vm1490, %v2994, %v2995
        %v2997 = vrot.slane %v2995, 4
        %v2998 = vrot.slane %v2198, 5
        %v2999 = vsel %vm1490, %v2997, %v2998
        %v3000 = vrot.slane %v2918, 5
        %v3001 = vrot.slane %v3000, 4
        %v3002 = vrot.slane %v2200, 5
        %v3003 = vsel %vm1490, %v3001, %v3002
        %v3004 = vrot.slane %v3002, 4
        %v3005 = vrot.slane %v2201, 5
        %v3006 = vsel %vm1490, %v3004, %v3005
        %v3007 = vrot.slane %v2919, 5
        %v3008 = vrot.slane %v3007, 4
        %v3009 = vrot.slane %v2203, 5
        %v3010 = vsel %vm1490, %v3008, %v3009
        %v3011 = vrot.slane %v3009, 4
        %v3012 = vrot.slane %v2204, 5
        %v3013 = vsel %vm1490, %v3011, %v3012
        %v3014 = vrot.slane %v2920, 5
        %v3015 = vrot.slane %v3014, 4
        %v3016 = vrot.slane %v2206, 5
        %v3017 = vsel %vm1490, %v3015, %v3016
        %v3018 = vrot.slane %v3016, 4
        %v3019 = vrot.slane %v2207, 5
        %v3020 = vsel %vm1490, %v3018, %v3019
        %v3021 = vrot.slane %v2921, 5
        %v3022 = vrot.slane %v3021, 4
        %v3023 = vrot.slane %v2209, 5
        %v3024 = vsel %vm1490, %v3022, %v3023
        %v3025 = vrot.slane %v3023, 4
        %v3026 = vrot.slane %v2210, 5
        %v3027 = vsel %vm1490, %v3025, %v3026
        %v3028 = vrot.slane %v2922, 5
        %v3029 = vrot.slane %v3028, 4
        %v3030 = vrot.slane %v2212, 5
        %v3031 = vsel %vm1490, %v3029, %v3030
        %v3032 = vrot.slane %v3030, 4
        %v3033 = vrot.slane %v2213, 5
        %v3034 = vsel %vm1490, %v3032, %v3033
        %v3035 = vrot.slane %v2923, 5
        %v3036 = vrot.slane %v3035, 4
        %v3037 = vrot.slane %v2215, 5
        %v3038 = vsel %vm1490, %v3036, %v3037
        %v3039 = vrot.slane %v3037, 4
        %v3040 = vrot.slane %v2216, 5
        %v3041 = vsel %vm1490, %v3039, %v3040
        %v3042 = vrot.slane %v2924, 5
        %v3043 = vrot.slane %v3042, 4
        %v3044 = vrot.slane %v2218, 5
        %v3045 = vsel %vm1490, %v3043, %v3044
        %v3046 = vrot.slane %v3044, 4
        %v3047 = vrot.slane %v2219, 5
        %v3048 = vsel %vm1490, %v3046, %v3047
        %v3049 = vrot.slane %v2925, 5
        %v3050 = vrot.slane %v3049, 4
        %v3051 = vrot.slane %v2221, 5
        %v3052 = vsel %vm1490, %v3050, %v3051
        %v3053 = vrot.slane %v3051, 4
        %v3054 = vrot.slane %v2222, 5
        %v3055 = vsel %vm1490, %v3053, %v3054
        %v3056 = vrot.slane %v2926, 5
        %v3057 = vrot.slane %v3056, 4
        %v3058 = vrot.slane %v2224, 5
        %v3059 = vsel %vm1490, %v3057, %v3058
        %v3060 = vrot.slane %v3058, 4
        %v3061 = vrot.slane %v2225, 5
        %v3062 = vsel %vm1490, %v3060, %v3061
        %v3063 = vrot.slane %v2927, 5
        %v3064 = vrot.slane %v3063, 4
        %v3065 = vrot.slane %v2227, 5
        %v3066 = vsel %vm1490, %v3064, %v3065
        %v3067 = vrot.slane %v3065, 4
        %v3068 = vrot.slane %v2228, 5
        %v3069 = vsel %vm1490, %v3067, %v3068
        %v3070 = vrot.slane %v2928, 5
        %v3071 = vrot.slane %v3070, 4
        %v3072 = vrot.slane %v2230, 5
        %v3073 = vsel %vm1490, %v3071, %v3072
        %v3074 = vrot.slane %v3072, 4
        %v3075 = vrot.slane %v2231, 5
        %v3076 = vsel %vm1490, %v3074, %v3075
        %v3077 = vrot.slane %v2929, 5
        %v3078 = vrot.slane %v3077, 4
        %v3079 = vrot.slane %v2233, 5
        %v3080 = vsel %vm1490, %v3078, %v3079
        %v3081 = vrot.slane %v3079, 4
        %v3082 = vrot.slane %v2234, 5
        %v3083 = vsel %vm1490, %v3081, %v3082
        %v3084 = vrot.slane %v2930, 5
        %v3085 = vrot.slane %v3084, 4
        %v3086 = vrot.slane %v2236, 5
        %v3087 = vsel %vm1490, %v3085, %v3086
        %v3088 = vrot.slane %v3086, 4
        %v3089 = vrot.slane %v2237, 5
        %v3090 = vsel %vm1490, %v3088, %v3089
        %v3123 = vunpack.c.l.bf16 %v2982
        %v3124 = vunpack.c.l.bf16 %v2985
        %v3125 = vunpack.c.l.bf16 %v2989
        %v3126 = vunpack.c.l.bf16 %v2992
        %v3127 = vunpack.c.l.bf16 %v2996
        %v3128 = vunpack.c.l.bf16 %v2999
        %v3129 = vunpack.c.l.bf16 %v3003
        %v3130 = vunpack.c.l.bf16 %v3006
        %v3131 = vunpack.c.l.bf16 %v3010
        %v3132 = vunpack.c.l.bf16 %v3013
        %v3133 = vunpack.c.l.bf16 %v3017
        %v3134 = vunpack.c.l.bf16 %v3020
        %v3135 = vunpack.c.l.bf16 %v3024
        %v3136 = vunpack.c.l.bf16 %v3027
        %v3137 = vunpack.c.l.bf16 %v3031
        %v3138 = vunpack.c.l.bf16 %v3034
        %v3139 = vunpack.c.l.bf16 %v3038
        %v3140 = vunpack.c.l.bf16 %v3041
        %v3141 = vunpack.c.l.bf16 %v3045
        %v3142 = vunpack.c.l.bf16 %v3048
        %v3143 = vunpack.c.l.bf16 %v3052
        %v3144 = vunpack.c.l.bf16 %v3055
        %v3145 = vunpack.c.l.bf16 %v3059
        %v3146 = vunpack.c.l.bf16 %v3062
        %v3147 = vunpack.c.l.bf16 %v3066
        %v3148 = vunpack.c.l.bf16 %v3069
        %v3149 = vunpack.c.l.bf16 %v3073
        %v3150 = vunpack.c.l.bf16 %v3076
        %v3151 = vunpack.c.l.bf16 %v3080
        %v3152 = vunpack.c.l.bf16 %v3083
        %v3153 = vunpack.c.l.bf16 %v3087
        %v3154 = vunpack.c.l.bf16 %v3090
        %v3155 = vld [vmem:[%s3 + $0x5] sm:$0x1]
        %3157 = vset.pattern.permute.xlu0 0
        %3158 = vperm.xlu0 %3157, %v3123
        %v3159 = vpop.permute.xlu0 %3158
        %3162 = vset.pattern.permute.xlu0 0
        %3163 = vperm.xlu0 %3162, %v3124
        %v3164 = vpop.permute.xlu0 %3163
        %3167 = vset.pattern.permute.xlu0 0
        %3168 = vperm.xlu0 %3167, %v3125
        %v3169 = vpop.permute.xlu0 %3168
        %3172 = vset.pattern.permute.xlu0 0
        %3173 = vperm.xlu0 %3172, %v3126
        %v3174 = vpop.permute.xlu0 %3173
        %3177 = vset.pattern.permute.xlu0 0
        %3178 = vperm.xlu0 %3177, %v3127
        %v3179 = vpop.permute.xlu0 %3178
        %3182 = vset.pattern.permute.xlu0 0
        %3183 = vperm.xlu0 %3182, %v3128
        %v3184 = vpop.permute.xlu0 %3183
        %3187 = vset.pattern.permute.xlu0 0
        %3188 = vperm.xlu0 %3187, %v3129
        %v3189 = vpop.permute.xlu0 %3188
        %3192 = vset.pattern.permute.xlu0 0
        %3193 = vperm.xlu0 %3192, %v3130
        %v3194 = vpop.permute.xlu0 %3193
        %3197 = vset.pattern.permute.xlu0 0
        %3198 = vperm.xlu0 %3197, %v3131
        %v3199 = vpop.permute.xlu0 %3198
        %3202 = vset.pattern.permute.xlu0 0
        %3203 = vperm.xlu0 %3202, %v3132
        %v3204 = vpop.permute.xlu0 %3203
        %3207 = vset.pattern.permute.xlu0 0
        %3208 = vperm.xlu0 %3207, %v3133
        %v3209 = vpop.permute.xlu0 %3208
        %3212 = vset.pattern.permute.xlu0 0
        %3213 = vperm.xlu0 %3212, %v3134
        %v3214 = vpop.permute.xlu0 %3213
        %3217 = vset.pattern.permute.xlu0 0
        %3218 = vperm.xlu0 %3217, %v3135
        %v3219 = vpop.permute.xlu0 %3218
        %3222 = vset.pattern.permute.xlu0 0
        %3223 = vperm.xlu0 %3222, %v3136
        %v3224 = vpop.permute.xlu0 %3223
        %3227 = vset.pattern.permute.xlu0 0
        %3228 = vperm.xlu0 %3227, %v3137
        %v3229 = vpop.permute.xlu0 %3228
        %3232 = vset.pattern.permute.xlu0 0
        %3233 = vperm.xlu0 %3232, %v3138
        %v3234 = vpop.permute.xlu0 %3233
        %3237 = vset.pattern.permute.xlu0 0
        %3238 = vperm.xlu0 %3237, %v3139
        %v3239 = vpop.permute.xlu0 %3238
        %3242 = vset.pattern.permute.xlu0 0
        %3243 = vperm.xlu0 %3242, %v3140
        %v3244 = vpop.permute.xlu0 %3243
        %3247 = vset.pattern.permute.xlu0 0
        %3248 = vperm.xlu0 %3247, %v3141
        %v3249 = vpop.permute.xlu0 %3248
        %3252 = vset.pattern.permute.xlu0 0
        %3253 = vperm.xlu0 %3252, %v3142
        %v3254 = vpop.permute.xlu0 %3253
        %3257 = vset.pattern.permute.xlu0 0
        %3258 = vperm.xlu0 %3257, %v3143
        %v3259 = vpop.permute.xlu0 %3258
        %3262 = vset.pattern.permute.xlu0 0
        %3263 = vperm.xlu0 %3262, %v3144
        %v3264 = vpop.permute.xlu0 %3263
        %3267 = vset.pattern.permute.xlu0 0
        %3268 = vperm.xlu0 %3267, %v3145
        %v3269 = vpop.permute.xlu0 %3268
        %3272 = vset.pattern.permute.xlu0 0
        %3273 = vperm.xlu0 %3272, %v3146
        %v3274 = vpop.permute.xlu0 %3273
        %3277 = vset.pattern.permute.xlu0 0
        %3278 = vperm.xlu0 %3277, %v3147
        %v3279 = vpop.permute.xlu0 %3278
        %3282 = vset.pattern.permute.xlu0 0
        %3283 = vperm.xlu0 %3282, %v3148
        %v3284 = vpop.permute.xlu0 %3283
        %3287 = vset.pattern.permute.xlu0 0
        %3288 = vperm.xlu0 %3287, %v3149
        %v3289 = vpop.permute.xlu0 %3288
        %3292 = vset.pattern.permute.xlu0 0
        %3293 = vperm.xlu0 %3292, %v3150
        %v3294 = vpop.permute.xlu0 %3293
        %3297 = vset.pattern.permute.xlu0 0
        %3298 = vperm.xlu0 %3297, %v3151
        %v3299 = vpop.permute.xlu0 %3298
        %3302 = vset.pattern.permute.xlu0 0
        %3303 = vperm.xlu0 %3302, %v3152
        %v3304 = vpop.permute.xlu0 %3303
        %3307 = vset.pattern.permute.xlu0 0
        %3308 = vperm.xlu0 %3307, %v3153
        %v3309 = vpop.permute.xlu0 %3308
        %3312 = vset.pattern.permute.xlu0 0
        %3313 = vperm.xlu0 %3312, %v3154
        %v3314 = vpop.permute.xlu0 %3313
        %v3316 = vlaneseq
        %v3317 = vshrl.u32 %v3316, 7
        %v3318 = vsub.s32 0, %v3317
        %v3319 = vrot.slane %v3155, %v3318
        %v3320 = vmul.f32 %v3159, %v3319
        %v3321 = vmul.f32 %v3164, %v3319
        %v3322 = vmul.f32 %v3169, %v3319
        %v3323 = vmul.f32 %v3174, %v3319
        %v3324 = vmul.f32 %v3179, %v3319
        %v3325 = vmul.f32 %v3184, %v3319
        %v3326 = vmul.f32 %v3189, %v3319
        %v3327 = vmul.f32 %v3194, %v3319
        %v3328 = vmul.f32 %v3199, %v3319
        %v3329 = vmul.f32 %v3204, %v3319
        %v3330 = vmul.f32 %v3209, %v3319
        %v3331 = vmul.f32 %v3214, %v3319
        %v3332 = vmul.f32 %v3219, %v3319
        %v3333 = vmul.f32 %v3224, %v3319
        %v3334 = vmul.f32 %v3229, %v3319
        %v3335 = vmul.f32 %v3234, %v3319
        %v3336 = vmul.f32 %v3239, %v3319
        %v3337 = vmul.f32 %v3244, %v3319
        %v3338 = vmul.f32 %v3249, %v3319
        %v3339 = vmul.f32 %v3254, %v3319
        %v3340 = vmul.f32 %v3259, %v3319
        %v3341 = vmul.f32 %v3264, %v3319
        %v3342 = vmul.f32 %v3269, %v3319
        %v3343 = vmul.f32 %v3274, %v3319
        %v3344 = vmul.f32 %v3279, %v3319
        %v3345 = vmul.f32 %v3284, %v3319
        %v3346 = vmul.f32 %v3289, %v3319
        %v3347 = vmul.f32 %v3294, %v3319
        %v3348 = vmul.f32 %v3299, %v3319
        %v3349 = vmul.f32 %v3304, %v3319
        %v3350 = vmul.f32 %v3309, %v3319
        %v3351 = vmul.f32 %v3314, %v3319
        %v3352 = vadd.f32 %v2883, %v3320
        %v3353 = vadd.f32 %v2884, %v3321
        %v3354 = vadd.f32 %v2885, %v3322
        %v3355 = vadd.f32 %v2886, %v3323
        %v3356 = vadd.f32 %v2887, %v3324
        %v3357 = vadd.f32 %v2888, %v3325
        %v3358 = vadd.f32 %v2889, %v3326
        %v3359 = vadd.f32 %v2890, %v3327
        %v3360 = vadd.f32 %v2891, %v3328
        %v3361 = vadd.f32 %v2892, %v3329
        %v3362 = vadd.f32 %v2893, %v3330
        %v3363 = vadd.f32 %v2894, %v3331
        %v3364 = vadd.f32 %v2895, %v3332
        %v3365 = vadd.f32 %v2896, %v3333
        %v3366 = vadd.f32 %v2897, %v3334
        %v3367 = vadd.f32 %v2898, %v3335
        %v3368 = vadd.f32 %v2899, %v3336
        %v3369 = vadd.f32 %v2900, %v3337
        %v3370 = vadd.f32 %v2901, %v3338
        %v3371 = vadd.f32 %v2902, %v3339
        %v3372 = vadd.f32 %v2903, %v3340
        %v3373 = vadd.f32 %v2904, %v3341
        %v3374 = vadd.f32 %v2905, %v3342
        %v3375 = vadd.f32 %v2906, %v3343
        %v3376 = vadd.f32 %v2907, %v3344
        %v3377 = vadd.f32 %v2908, %v3345
        %v3378 = vadd.f32 %v2909, %v3346
        %v3379 = vadd.f32 %v2910, %v3347
        %v3380 = vadd.f32 %v2911, %v3348
        %v3381 = vadd.f32 %v2912, %v3349
        %v3382 = vadd.f32 %v2913, %v3350
        %v3383 = vadd.f32 %v2914, %v3351
        %s3384 = scalar_lea.vmem %s380, 24
        %v3385 = vld [vmem:[%s3384] sm:$0xf]
        %v3386 = vld [vmem:[%s3384 + $0x4] sm:$0xf]
        %v3387 = vld [vmem:[%s3384 + $0xc] sm:$0xf]
        %v3388 = vld [vmem:[%s3384 + $0x10] sm:$0xf]
        %v3389 = vld [vmem:[%s3384 + $0x18] sm:$0xf]
        %v3390 = vld [vmem:[%s3384 + $0x1c] sm:$0xf]
        %v3391 = vld [vmem:[%s3384 + $0x24] sm:$0xf]
        %v3392 = vld [vmem:[%s3384 + $0x28] sm:$0xf]
        %v3393 = vld [vmem:[%s3384 + $0x30] sm:$0xf]
        %v3394 = vld [vmem:[%s3384 + $0x34] sm:$0xf]
        %v3395 = vld [vmem:[%s3384 + $0x3c] sm:$0xf]
        %v3396 = vld [vmem:[%s3384 + $0x40] sm:$0xf]
        %v3397 = vld [vmem:[%s3384 + $0x48] sm:$0xf]
        %v3398 = vld [vmem:[%s3384 + $0x4c] sm:$0xf]
        %v3399 = vld [vmem:[%s3384 + $0x54] sm:$0xf]
        %v3400 = vld [vmem:[%s3384 + $0x58] sm:$0xf]
        %v3401 = vld [vmem:[%s3384 + $0x60] sm:$0xf]
        %v3402 = vld [vmem:[%s3384 + $0x64] sm:$0xf]
        %v3403 = vld [vmem:[%s3384 + $0x6c] sm:$0xf]
        %v3404 = vld [vmem:[%s3384 + $0x70] sm:$0xf]
        %v3405 = vld [vmem:[%s3384 + $0x78] sm:$0xf]
        %v3406 = vld [vmem:[%s3384 + $0x7c] sm:$0xf]
        %v3407 = vld [vmem:[%s3384 + $0x84] sm:$0xf]
        %v3408 = vld [vmem:[%s3384 + $0x88] sm:$0xf]
        %v3409 = vld [vmem:[%s3384 + $0x90] sm:$0xf]
        %v3410 = vld [vmem:[%s3384 + $0x94] sm:$0xf]
        %v3411 = vld [vmem:[%s3384 + $0x9c] sm:$0xf]
        %v3412 = vld [vmem:[%s3384 + $0xa0] sm:$0xf]
        %v3413 = vld [vmem:[%s3384 + $0xa8] sm:$0xf]
        %v3414 = vld [vmem:[%s3384 + $0xac] sm:$0xf]
        %v3415 = vld [vmem:[%s3384 + $0xb4] sm:$0xf]
        %v3416 = vld [vmem:[%s3384 + $0xb8] sm:$0xf]
        %v3417 = vunpack.c.l.bf16 %v3385
        %v3418 = vunpack.c.l.bf16 %v3386
        %v3419 = vunpack.c.l.bf16 %v3387
        %v3420 = vunpack.c.l.bf16 %v3388
        %v3421 = vunpack.c.l.bf16 %v3389
        %v3422 = vunpack.c.l.bf16 %v3390
        %v3423 = vunpack.c.l.bf16 %v3391
        %v3424 = vunpack.c.l.bf16 %v3392
        %v3425 = vunpack.c.l.bf16 %v3393
        %v3426 = vunpack.c.l.bf16 %v3394
        %v3427 = vunpack.c.l.bf16 %v3395
        %v3428 = vunpack.c.l.bf16 %v3396
        %v3429 = vunpack.c.l.bf16 %v3397
        %v3430 = vunpack.c.l.bf16 %v3398
        %v3431 = vunpack.c.l.bf16 %v3399
        %v3432 = vunpack.c.l.bf16 %v3400
        %v3433 = vunpack.c.l.bf16 %v3401
        %v3434 = vunpack.c.l.bf16 %v3402
        %v3435 = vunpack.c.l.bf16 %v3403
        %v3436 = vunpack.c.l.bf16 %v3404
        %v3437 = vunpack.c.l.bf16 %v3405
        %v3438 = vunpack.c.l.bf16 %v3406
        %v3439 = vunpack.c.l.bf16 %v3407
        %v3440 = vunpack.c.l.bf16 %v3408
        %v3441 = vunpack.c.l.bf16 %v3409
        %v3442 = vunpack.c.l.bf16 %v3410
        %v3443 = vunpack.c.l.bf16 %v3411
        %v3444 = vunpack.c.l.bf16 %v3412
        %v3445 = vunpack.c.l.bf16 %v3413
        %v3446 = vunpack.c.l.bf16 %v3414
        %v3447 = vunpack.c.l.bf16 %v3415
        %v3448 = vunpack.c.l.bf16 %v3416
        %v3449 = vld [vmem:[%s3 + $0x6] sm:$0x1]
        %3451 = vset.pattern.permute.xlu0 0
        %3452 = vperm.xlu0 %3451, %v3417
        %v3453 = vpop.permute.xlu0 %3452
        %3456 = vset.pattern.permute.xlu0 0
        %3457 = vperm.xlu0 %3456, %v3418
        %v3458 = vpop.permute.xlu0 %3457
        %3461 = vset.pattern.permute.xlu0 0
        %3462 = vperm.xlu0 %3461, %v3419
        %v3463 = vpop.permute.xlu0 %3462
        %3466 = vset.pattern.permute.xlu0 0
        %3467 = vperm.xlu0 %3466, %v3420
        %v3468 = vpop.permute.xlu0 %3467
        %3471 = vset.pattern.permute.xlu0 0
        %3472 = vperm.xlu0 %3471, %v3421
        %v3473 = vpop.permute.xlu0 %3472
        %3476 = vset.pattern.permute.xlu0 0
        %3477 = vperm.xlu0 %3476, %v3422
        %v3478 = vpop.permute.xlu0 %3477
        %3481 = vset.pattern.permute.xlu0 0
        %3482 = vperm.xlu0 %3481, %v3423
        %v3483 = vpop.permute.xlu0 %3482
        %3486 = vset.pattern.permute.xlu0 0
        %3487 = vperm.xlu0 %3486, %v3424
        %v3488 = vpop.permute.xlu0 %3487
        %3491 = vset.pattern.permute.xlu0 0
        %3492 = vperm.xlu0 %3491, %v3425
        %v3493 = vpop.permute.xlu0 %3492
        %3496 = vset.pattern.permute.xlu0 0
        %3497 = vperm.xlu0 %3496, %v3426
        %v3498 = vpop.permute.xlu0 %3497
        %3501 = vset.pattern.permute.xlu0 0
        %3502 = vperm.xlu0 %3501, %v3427
        %v3503 = vpop.permute.xlu0 %3502
        %3506 = vset.pattern.permute.xlu0 0
        %3507 = vperm.xlu0 %3506, %v3428
        %v3508 = vpop.permute.xlu0 %3507
        %3511 = vset.pattern.permute.xlu0 0
        %3512 = vperm.xlu0 %3511, %v3429
        %v3513 = vpop.permute.xlu0 %3512
        %3516 = vset.pattern.permute.xlu0 0
        %3517 = vperm.xlu0 %3516, %v3430
        %v3518 = vpop.permute.xlu0 %3517
        %3521 = vset.pattern.permute.xlu0 0
        %3522 = vperm.xlu0 %3521, %v3431
        %v3523 = vpop.permute.xlu0 %3522
        %3526 = vset.pattern.permute.xlu0 0
        %3527 = vperm.xlu0 %3526, %v3432
        %v3528 = vpop.permute.xlu0 %3527
        %3531 = vset.pattern.permute.xlu0 0
        %3532 = vperm.xlu0 %3531, %v3433
        %v3533 = vpop.permute.xlu0 %3532
        %3536 = vset.pattern.permute.xlu0 0
        %3537 = vperm.xlu0 %3536, %v3434
        %v3538 = vpop.permute.xlu0 %3537
        %3541 = vset.pattern.permute.xlu0 0
        %3542 = vperm.xlu0 %3541, %v3435
        %v3543 = vpop.permute.xlu0 %3542
        %3546 = vset.pattern.permute.xlu0 0
        %3547 = vperm.xlu0 %3546, %v3436
        %v3548 = vpop.permute.xlu0 %3547
        %3551 = vset.pattern.permute.xlu0 0
        %3552 = vperm.xlu0 %3551, %v3437
        %v3553 = vpop.permute.xlu0 %3552
        %3556 = vset.pattern.permute.xlu0 0
        %3557 = vperm.xlu0 %3556, %v3438
        %v3558 = vpop.permute.xlu0 %3557
        %3561 = vset.pattern.permute.xlu0 0
        %3562 = vperm.xlu0 %3561, %v3439
        %v3563 = vpop.permute.xlu0 %3562
        %3566 = vset.pattern.permute.xlu0 0
        %3567 = vperm.xlu0 %3566, %v3440
        %v3568 = vpop.permute.xlu0 %3567
        %3571 = vset.pattern.permute.xlu0 0
        %3572 = vperm.xlu0 %3571, %v3441
        %v3573 = vpop.permute.xlu0 %3572
        %3576 = vset.pattern.permute.xlu0 0
        %3577 = vperm.xlu0 %3576, %v3442
        %v3578 = vpop.permute.xlu0 %3577
        %3581 = vset.pattern.permute.xlu0 0
        %3582 = vperm.xlu0 %3581, %v3443
        %v3583 = vpop.permute.xlu0 %3582
        %3586 = vset.pattern.permute.xlu0 0
        %3587 = vperm.xlu0 %3586, %v3444
        %v3588 = vpop.permute.xlu0 %3587
        %3591 = vset.pattern.permute.xlu0 0
        %3592 = vperm.xlu0 %3591, %v3445
        %v3593 = vpop.permute.xlu0 %3592
        %3596 = vset.pattern.permute.xlu0 0
        %3597 = vperm.xlu0 %3596, %v3446
        %v3598 = vpop.permute.xlu0 %3597
        %3601 = vset.pattern.permute.xlu0 0
        %3602 = vperm.xlu0 %3601, %v3447
        %v3603 = vpop.permute.xlu0 %3602
        %3606 = vset.pattern.permute.xlu0 0
        %3607 = vperm.xlu0 %3606, %v3448
        %v3608 = vpop.permute.xlu0 %3607
        %v3610 = vlaneseq
        %v3611 = vshrl.u32 %v3610, 7
        %v3612 = vsub.s32 0, %v3611
        %v3613 = vrot.slane %v3449, %v3612
        %v3614 = vmul.f32 %v3453, %v3613
        %v3615 = vmul.f32 %v3458, %v3613
        %v3616 = vmul.f32 %v3463, %v3613
        %v3617 = vmul.f32 %v3468, %v3613
        %v3618 = vmul.f32 %v3473, %v3613
        %v3619 = vmul.f32 %v3478, %v3613
        %v3620 = vmul.f32 %v3483, %v3613
        %v3621 = vmul.f32 %v3488, %v3613
        %v3622 = vmul.f32 %v3493, %v3613
        %v3623 = vmul.f32 %v3498, %v3613
        %v3624 = vmul.f32 %v3503, %v3613
        %v3625 = vmul.f32 %v3508, %v3613
        %v3626 = vmul.f32 %v3513, %v3613
        %v3627 = vmul.f32 %v3518, %v3613
        %v3628 = vmul.f32 %v3523, %v3613
        %v3629 = vmul.f32 %v3528, %v3613
        %v3630 = vmul.f32 %v3533, %v3613
        %v3631 = vmul.f32 %v3538, %v3613
        %v3632 = vmul.f32 %v3543, %v3613
        %v3633 = vmul.f32 %v3548, %v3613
        %v3634 = vmul.f32 %v3553, %v3613
        %v3635 = vmul.f32 %v3558, %v3613
        %v3636 = vmul.f32 %v3563, %v3613
        %v3637 = vmul.f32 %v3568, %v3613
        %v3638 = vmul.f32 %v3573, %v3613
        %v3639 = vmul.f32 %v3578, %v3613
        %v3640 = vmul.f32 %v3583, %v3613
        %v3641 = vmul.f32 %v3588, %v3613
        %v3642 = vmul.f32 %v3593, %v3613
        %v3643 = vmul.f32 %v3598, %v3613
        %v3644 = vmul.f32 %v3603, %v3613
        %v3645 = vmul.f32 %v3608, %v3613
        %v3646 = vadd.f32 %v3352, %v3614
        %v3647 = vadd.f32 %v3353, %v3615
        %v3648 = vadd.f32 %v3354, %v3616
        %v3649 = vadd.f32 %v3355, %v3617
        %v3650 = vadd.f32 %v3356, %v3618
        %v3651 = vadd.f32 %v3357, %v3619
        %v3652 = vadd.f32 %v3358, %v3620
        %v3653 = vadd.f32 %v3359, %v3621
        %v3654 = vadd.f32 %v3360, %v3622
        %v3655 = vadd.f32 %v3361, %v3623
        %v3656 = vadd.f32 %v3362, %v3624
        %v3657 = vadd.f32 %v3363, %v3625
        %v3658 = vadd.f32 %v3364, %v3626
        %v3659 = vadd.f32 %v3365, %v3627
        %v3660 = vadd.f32 %v3366, %v3628
        %v3661 = vadd.f32 %v3367, %v3629
        %v3662 = vadd.f32 %v3368, %v3630
        %v3663 = vadd.f32 %v3369, %v3631
        %v3664 = vadd.f32 %v3370, %v3632
        %v3665 = vadd.f32 %v3371, %v3633
        %v3666 = vadd.f32 %v3372, %v3634
        %v3667 = vadd.f32 %v3373, %v3635
        %v3668 = vadd.f32 %v3374, %v3636
        %v3669 = vadd.f32 %v3375, %v3637
        %v3670 = vadd.f32 %v3376, %v3638
        %v3671 = vadd.f32 %v3377, %v3639
        %v3672 = vadd.f32 %v3378, %v3640
        %v3673 = vadd.f32 %v3379, %v3641
        %v3674 = vadd.f32 %v3380, %v3642
        %v3675 = vadd.f32 %v3381, %v3643
        %v3676 = vadd.f32 %v3382, %v3644
        %v3677 = vadd.f32 %v3383, %v3645
        %v3678 = vld [vmem:[%s3384] sm:$0xf]
        %v3679 = vld [vmem:[%s3384 + $0x4] sm:$0xf]
        %v3680 = vld [vmem:[%s3384 + $0x8] sm:$0x1]
        %v3681 = vld [vmem:[%s3384 + $0xc] sm:$0xf]
        %v3682 = vld [vmem:[%s3384 + $0x10] sm:$0xf]
        %v3683 = vld [vmem:[%s3384 + $0x14] sm:$0x1]
        %v3684 = vld [vmem:[%s3384 + $0x18] sm:$0xf]
        %v3685 = vld [vmem:[%s3384 + $0x1c] sm:$0xf]
        %v3686 = vld [vmem:[%s3384 + $0x20] sm:$0x1]
        %v3687 = vld [vmem:[%s3384 + $0x24] sm:$0xf]
        %v3688 = vld [vmem:[%s3384 + $0x28] sm:$0xf]
        %v3689 = vld [vmem:[%s3384 + $0x2c] sm:$0x1]
        %v3690 = vld [vmem:[%s3384 + $0x30] sm:$0xf]
        %v3691 = vld [vmem:[%s3384 + $0x34] sm:$0xf]
        %v3692 = vld [vmem:[%s3384 + $0x38] sm:$0x1]
        %v3693 = vld [vmem:[%s3384 + $0x3c] sm:$0xf]
        %v3694 = vld [vmem:[%s3384 + $0x40] sm:$0xf]
        %v3695 = vld [vmem:[%s3384 + $0x44] sm:$0x1]
        %v3696 = vld [vmem:[%s3384 + $0x48] sm:$0xf]
        %v3697 = vld [vmem:[%s3384 + $0x4c] sm:$0xf]
        %v3698 = vld [vmem:[%s3384 + $0x50] sm:$0x1]
        %v3699 = vld [vmem:[%s3384 + $0x54] sm:$0xf]
        %v3700 = vld [vmem:[%s3384 + $0x58] sm:$0xf]
        %v3701 = vld [vmem:[%s3384 + $0x5c] sm:$0x1]
        %v3702 = vld [vmem:[%s3384 + $0x60] sm:$0xf]
        %v3703 = vld [vmem:[%s3384 + $0x64] sm:$0xf]
        %v3704 = vld [vmem:[%s3384 + $0x68] sm:$0x1]
        %v3705 = vld [vmem:[%s3384 + $0x6c] sm:$0xf]
        %v3706 = vld [vmem:[%s3384 + $0x70] sm:$0xf]
        %v3707 = vld [vmem:[%s3384 + $0x74] sm:$0x1]
        %v3708 = vld [vmem:[%s3384 + $0x78] sm:$0xf]
        %v3709 = vld [vmem:[%s3384 + $0x7c] sm:$0xf]
        %v3710 = vld [vmem:[%s3384 + $0x80] sm:$0x1]
        %v3711 = vld [vmem:[%s3384 + $0x84] sm:$0xf]
        %v3712 = vld [vmem:[%s3384 + $0x88] sm:$0xf]
        %v3713 = vld [vmem:[%s3384 + $0x8c] sm:$0x1]
        %v3714 = vld [vmem:[%s3384 + $0x90] sm:$0xf]
        %v3715 = vld [vmem:[%s3384 + $0x94] sm:$0xf]
        %v3716 = vld [vmem:[%s3384 + $0x98] sm:$0x1]
        %v3717 = vld [vmem:[%s3384 + $0x9c] sm:$0xf]
        %v3718 = vld [vmem:[%s3384 + $0xa0] sm:$0xf]
        %v3719 = vld [vmem:[%s3384 + $0xa4] sm:$0x1]
        %v3720 = vld [vmem:[%s3384 + $0xa8] sm:$0xf]
        %v3721 = vld [vmem:[%s3384 + $0xac] sm:$0xf]
        %v3722 = vld [vmem:[%s3384 + $0xb0] sm:$0x1]
        %v3723 = vld [vmem:[%s3384 + $0xb4] sm:$0xf]
        %v3724 = vld [vmem:[%s3384 + $0xb8] sm:$0xf]
        %v3725 = vld [vmem:[%s3384 + $0xbc] sm:$0x1]
        %v3727 = vshrl.u32 %v3678, 16
        %v3729 = vrot.slane %v3727, 4
        %v3730 = vshll.u32 %v3678, 16
        %v3732 = vrot.slane %v3730, 5
        %v3733 = vor.u32 %v3729, %v3732
        %v3734 = vrot.slane %v3733, 4
        %v3736 = vshll.u32 %v3679, 16
        %v3738 = vrot.slane %v3736, 5
        %v3739 = vsel %vm746, %v3734, %v3738
        %v3740 = vshrl.u32 %v3679, 16
        %v3742 = vrot.slane %v3740, 4
        %v3743 = vor.u32 %v3742, %v3738
        %v3744 = vrot.slane %v3743, 4
        %v3746 = vshll.u32 %v3680, 16
        %v3748 = vrot.slane %v3746, 5
        %v3749 = vsel %vm746, %v3744, %v3748
        %v3751 = vshrl.u32 %v3681, 16
        %v3753 = vrot.slane %v3751, 4
        %v3754 = vshll.u32 %v3681, 16
        %v3756 = vrot.slane %v3754, 5
        %v3757 = vor.u32 %v3753, %v3756
        %v3758 = vrot.slane %v3757, 4
        %v3760 = vshll.u32 %v3682, 16
        %v3762 = vrot.slane %v3760, 5
        %v3763 = vsel %vm746, %v3758, %v3762
        %v3764 = vshrl.u32 %v3682, 16
        %v3766 = vrot.slane %v3764, 4
        %v3767 = vor.u32 %v3766, %v3762
        %v3768 = vrot.slane %v3767, 4
        %v3770 = vshll.u32 %v3683, 16
        %v3772 = vrot.slane %v3770, 5
        %v3773 = vsel %vm746, %v3768, %v3772
        %v3775 = vshrl.u32 %v3684, 16
        %v3777 = vrot.slane %v3775, 4
        %v3778 = vshll.u32 %v3684, 16
        %v3780 = vrot.slane %v3778, 5
        %v3781 = vor.u32 %v3777, %v3780
        %v3782 = vrot.slane %v3781, 4
        %v3784 = vshll.u32 %v3685, 16
        %v3786 = vrot.slane %v3784, 5
        %v3787 = vsel %vm746, %v3782, %v3786
        %v3788 = vshrl.u32 %v3685, 16
        %v3790 = vrot.slane %v3788, 4
        %v3791 = vor.u32 %v3790, %v3786
        %v3792 = vrot.slane %v3791, 4
        %v3794 = vshll.u32 %v3686, 16
        %v3796 = vrot.slane %v3794, 5
        %v3797 = vsel %vm746, %v3792, %v3796
        %v3799 = vshrl.u32 %v3687, 16
        %v3801 = vrot.slane %v3799, 4
        %v3802 = vshll.u32 %v3687, 16
        %v3804 = vrot.slane %v3802, 5
        %v3805 = vor.u32 %v3801, %v3804
        %v3806 = vrot.slane %v3805, 4
        %v3808 = vshll.u32 %v3688, 16
        %v3810 = vrot.slane %v3808, 5
        %v3811 = vsel %vm746, %v3806, %v3810
        %v3812 = vshrl.u32 %v3688, 16
        %v3814 = vrot.slane %v3812, 4
        %v3815 = vor.u32 %v3814, %v3810
        %v3816 = vrot.slane %v3815, 4
        %v3818 = vshll.u32 %v3689, 16
        %v3820 = vrot.slane %v3818, 5
        %v3821 = vsel %vm746, %v3816, %v3820
        %v3823 = vshrl.u32 %v3690, 16
        %v3825 = vrot.slane %v3823, 4
        %v3826 = vshll.u32 %v3690, 16
        %v3828 = vrot.slane %v3826, 5
        %v3829 = vor.u32 %v3825, %v3828
        %v3830 = vrot.slane %v3829, 4
        %v3832 = vshll.u32 %v3691, 16
        %v3834 = vrot.slane %v3832, 5
        %v3835 = vsel %vm746, %v3830, %v3834
        %v3836 = vshrl.u32 %v3691, 16
        %v3838 = vrot.slane %v3836, 4
        %v3839 = vor.u32 %v3838, %v3834
        %v3840 = vrot.slane %v3839, 4
        %v3842 = vshll.u32 %v3692, 16
        %v3844 = vrot.slane %v3842, 5
        %v3845 = vsel %vm746, %v3840, %v3844
        %v3847 = vshrl.u32 %v3693, 16
        %v3849 = vrot.slane %v3847, 4
        %v3850 = vshll.u32 %v3693, 16
        %v3852 = vrot.slane %v3850, 5
        %v3853 = vor.u32 %v3849, %v3852
        %v3854 = vrot.slane %v3853, 4
        %v3856 = vshll.u32 %v3694, 16
        %v3858 = vrot.slane %v3856, 5
        %v3859 = vsel %vm746, %v3854, %v3858
        %v3860 = vshrl.u32 %v3694, 16
        %v3862 = vrot.slane %v3860, 4
        %v3863 = vor.u32 %v3862, %v3858
        %v3864 = vrot.slane %v3863, 4
        %v3866 = vshll.u32 %v3695, 16
        %v3868 = vrot.slane %v3866, 5
        %v3869 = vsel %vm746, %v3864, %v3868
        %v3871 = vshrl.u32 %v3696, 16
        %v3873 = vrot.slane %v3871, 4
        %v3874 = vshll.u32 %v3696, 16
        %v3876 = vrot.slane %v3874, 5
        %v3877 = vor.u32 %v3873, %v3876
        %v3878 = vrot.slane %v3877, 4
        %v3880 = vshll.u32 %v3697, 16
        %v3882 = vrot.slane %v3880, 5
        %v3883 = vsel %vm746, %v3878, %v3882
        %v3884 = vshrl.u32 %v3697, 16
        %v3886 = vrot.slane %v3884, 4
        %v3887 = vor.u32 %v3886, %v3882
        %v3888 = vrot.slane %v3887, 4
        %v3890 = vshll.u32 %v3698, 16
        %v3892 = vrot.slane %v3890, 5
        %v3893 = vsel %vm746, %v3888, %v3892
        %v3895 = vshrl.u32 %v3699, 16
        %v3897 = vrot.slane %v3895, 4
        %v3898 = vshll.u32 %v3699, 16
        %v3900 = vrot.slane %v3898, 5
        %v3901 = vor.u32 %v3897, %v3900
        %v3902 = vrot.slane %v3901, 4
        %v3904 = vshll.u32 %v3700, 16
        %v3906 = vrot.slane %v3904, 5
        %v3907 = vsel %vm746, %v3902, %v3906
        %v3908 = vshrl.u32 %v3700, 16
        %v3910 = vrot.slane %v3908, 4
        %v3911 = vor.u32 %v3910, %v3906
        %v3912 = vrot.slane %v3911, 4
        %v3914 = vshll.u32 %v3701, 16
        %v3916 = vrot.slane %v3914, 5
        %v3917 = vsel %vm746, %v3912, %v3916
        %v3919 = vshrl.u32 %v3702, 16
        %v3921 = vrot.slane %v3919, 4
        %v3922 = vshll.u32 %v3702, 16
        %v3924 = vrot.slane %v3922, 5
        %v3925 = vor.u32 %v3921, %v3924
        %v3926 = vrot.slane %v3925, 4
        %v3928 = vshll.u32 %v3703, 16
        %v3930 = vrot.slane %v3928, 5
        %v3931 = vsel %vm746, %v3926, %v3930
        %v3932 = vshrl.u32 %v3703, 16
        %v3934 = vrot.slane %v3932, 4
        %v3935 = vor.u32 %v3934, %v3930
        %v3936 = vrot.slane %v3935, 4
        %v3938 = vshll.u32 %v3704, 16
        %v3940 = vrot.slane %v3938, 5
        %v3941 = vsel %vm746, %v3936, %v3940
        %v3943 = vshrl.u32 %v3705, 16
        %v3945 = vrot.slane %v3943, 4
        %v3946 = vshll.u32 %v3705, 16
        %v3948 = vrot.slane %v3946, 5
        %v3949 = vor.u32 %v3945, %v3948
        %v3950 = vrot.slane %v3949, 4
        %v3952 = vshll.u32 %v3706, 16
        %v3954 = vrot.slane %v3952, 5
        %v3955 = vsel %vm746, %v3950, %v3954
        %v3956 = vshrl.u32 %v3706, 16
        %v3958 = vrot.slane %v3956, 4
        %v3959 = vor.u32 %v3958, %v3954
        %v3960 = vrot.slane %v3959, 4
        %v3962 = vshll.u32 %v3707, 16
        %v3964 = vrot.slane %v3962, 5
        %v3965 = vsel %vm746, %v3960, %v3964
        %v3967 = vshrl.u32 %v3708, 16
        %v3969 = vrot.slane %v3967, 4
        %v3970 = vshll.u32 %v3708, 16
        %v3972 = vrot.slane %v3970, 5
        %v3973 = vor.u32 %v3969, %v3972
        %v3974 = vrot.slane %v3973, 4
        %v3976 = vshll.u32 %v3709, 16
        %v3978 = vrot.slane %v3976, 5
        %v3979 = vsel %vm746, %v3974, %v3978
        %v3980 = vshrl.u32 %v3709, 16
        %v3982 = vrot.slane %v3980, 4
        %v3983 = vor.u32 %v3982, %v3978
        %v3984 = vrot.slane %v3983, 4
        %v3986 = vshll.u32 %v3710, 16
        %v3988 = vrot.slane %v3986, 5
        %v3989 = vsel %vm746, %v3984, %v3988
        %v3991 = vshrl.u32 %v3711, 16
        %v3993 = vrot.slane %v3991, 4
        %v3994 = vshll.u32 %v3711, 16
        %v3996 = vrot.slane %v3994, 5
        %v3997 = vor.u32 %v3993, %v3996
        %v3998 = vrot.slane %v3997, 4
        %v4000 = vshll.u32 %v3712, 16
        %v4002 = vrot.slane %v4000, 5
        %v4003 = vsel %vm746, %v3998, %v4002
        %v4004 = vshrl.u32 %v3712, 16
        %v4006 = vrot.slane %v4004, 4
        %v4007 = vor.u32 %v4006, %v4002
        %v4008 = vrot.slane %v4007, 4
        %v4010 = vshll.u32 %v3713, 16
        %v4012 = vrot.slane %v4010, 5
        %v4013 = vsel %vm746, %v4008, %v4012
        %v4015 = vshrl.u32 %v3714, 16
        %v4017 = vrot.slane %v4015, 4
        %v4018 = vshll.u32 %v3714, 16
        %v4020 = vrot.slane %v4018, 5
        %v4021 = vor.u32 %v4017, %v4020
        %v4022 = vrot.slane %v4021, 4
        %v4024 = vshll.u32 %v3715, 16
        %v4026 = vrot.slane %v4024, 5
        %v4027 = vsel %vm746, %v4022, %v4026
        %v4028 = vshrl.u32 %v3715, 16
        %v4030 = vrot.slane %v4028, 4
        %v4031 = vor.u32 %v4030, %v4026
        %v4032 = vrot.slane %v4031, 4
        %v4034 = vshll.u32 %v3716, 16
        %v4036 = vrot.slane %v4034, 5
        %v4037 = vsel %vm746, %v4032, %v4036
        %v4039 = vshrl.u32 %v3717, 16
        %v4041 = vrot.slane %v4039, 4
        %v4042 = vshll.u32 %v3717, 16
        %v4044 = vrot.slane %v4042, 5
        %v4045 = vor.u32 %v4041, %v4044
        %v4046 = vrot.slane %v4045, 4
        %v4048 = vshll.u32 %v3718, 16
        %v4050 = vrot.slane %v4048, 5
        %v4051 = vsel %vm746, %v4046, %v4050
        %v4052 = vshrl.u32 %v3718, 16
        %v4054 = vrot.slane %v4052, 4
        %v4055 = vor.u32 %v4054, %v4050
        %v4056 = vrot.slane %v4055, 4
        %v4058 = vshll.u32 %v3719, 16
        %v4060 = vrot.slane %v4058, 5
        %v4061 = vsel %vm746, %v4056, %v4060
        %v4063 = vshrl.u32 %v3720, 16
        %v4065 = vrot.slane %v4063, 4
        %v4066 = vshll.u32 %v3720, 16
        %v4068 = vrot.slane %v4066, 5
        %v4069 = vor.u32 %v4065, %v4068
        %v4070 = vrot.slane %v4069, 4
        %v4072 = vshll.u32 %v3721, 16
        %v4074 = vrot.slane %v4072, 5
        %v4075 = vsel %vm746, %v4070, %v4074
        %v4076 = vshrl.u32 %v3721, 16
        %v4078 = vrot.slane %v4076, 4
        %v4079 = vor.u32 %v4078, %v4074
        %v4080 = vrot.slane %v4079, 4
        %v4082 = vshll.u32 %v3722, 16
        %v4084 = vrot.slane %v4082, 5
        %v4085 = vsel %vm746, %v4080, %v4084
        %v4087 = vshrl.u32 %v3723, 16
        %v4089 = vrot.slane %v4087, 4
        %v4090 = vshll.u32 %v3723, 16
        %v4092 = vrot.slane %v4090, 5
        %v4093 = vor.u32 %v4089, %v4092
        %v4094 = vrot.slane %v4093, 4
        %v4096 = vshll.u32 %v3724, 16
        %v4098 = vrot.slane %v4096, 5
        %v4099 = vsel %vm746, %v4094, %v4098
        %v4100 = vshrl.u32 %v3724, 16
        %v4102 = vrot.slane %v4100, 4
        %v4103 = vor.u32 %v4102, %v4098
        %v4104 = vrot.slane %v4103, 4
        %v4106 = vshll.u32 %v3725, 16
        %v4108 = vrot.slane %v4106, 5
        %v4109 = vsel %vm746, %v4104, %v4108
        %v4142 = vunpack.c.l.bf16 %v3739
        %v4143 = vunpack.c.l.bf16 %v3749
        %v4144 = vunpack.c.l.bf16 %v3763
        %v4145 = vunpack.c.l.bf16 %v3773
        %v4146 = vunpack.c.l.bf16 %v3787
        %v4147 = vunpack.c.l.bf16 %v3797
        %v4148 = vunpack.c.l.bf16 %v3811
        %v4149 = vunpack.c.l.bf16 %v3821
        %v4150 = vunpack.c.l.bf16 %v3835
        %v4151 = vunpack.c.l.bf16 %v3845
        %v4152 = vunpack.c.l.bf16 %v3859
        %v4153 = vunpack.c.l.bf16 %v3869
        %v4154 = vunpack.c.l.bf16 %v3883
        %v4155 = vunpack.c.l.bf16 %v3893
        %v4156 = vunpack.c.l.bf16 %v3907
        %v4157 = vunpack.c.l.bf16 %v3917
        %v4158 = vunpack.c.l.bf16 %v3931
        %v4159 = vunpack.c.l.bf16 %v3941
        %v4160 = vunpack.c.l.bf16 %v3955
        %v4161 = vunpack.c.l.bf16 %v3965
        %v4162 = vunpack.c.l.bf16 %v3979
        %v4163 = vunpack.c.l.bf16 %v3989
        %v4164 = vunpack.c.l.bf16 %v4003
        %v4165 = vunpack.c.l.bf16 %v4013
        %v4166 = vunpack.c.l.bf16 %v4027
        %v4167 = vunpack.c.l.bf16 %v4037
        %v4168 = vunpack.c.l.bf16 %v4051
        %v4169 = vunpack.c.l.bf16 %v4061
        %v4170 = vunpack.c.l.bf16 %v4075
        %v4171 = vunpack.c.l.bf16 %v4085
        %v4172 = vunpack.c.l.bf16 %v4099
        %v4173 = vunpack.c.l.bf16 %v4109
        %v4174 = vld [vmem:[%s3 + $0x7] sm:$0x1]
        %4176 = vset.pattern.permute.xlu0 0
        %4177 = vperm.xlu0 %4176, %v4142
        %v4178 = vpop.permute.xlu0 %4177
        %4181 = vset.pattern.permute.xlu0 0
        %4182 = vperm.xlu0 %4181, %v4143
        %v4183 = vpop.permute.xlu0 %4182
        %4186 = vset.pattern.permute.xlu0 0
        %4187 = vperm.xlu0 %4186, %v4144
        %v4188 = vpop.permute.xlu0 %4187
        %4191 = vset.pattern.permute.xlu0 0
        %4192 = vperm.xlu0 %4191, %v4145
        %v4193 = vpop.permute.xlu0 %4192
        %4196 = vset.pattern.permute.xlu0 0
        %4197 = vperm.xlu0 %4196, %v4146
        %v4198 = vpop.permute.xlu0 %4197
        %4201 = vset.pattern.permute.xlu0 0
        %4202 = vperm.xlu0 %4201, %v4147
        %v4203 = vpop.permute.xlu0 %4202
        %4206 = vset.pattern.permute.xlu0 0
        %4207 = vperm.xlu0 %4206, %v4148
        %v4208 = vpop.permute.xlu0 %4207
        %4211 = vset.pattern.permute.xlu0 0
        %4212 = vperm.xlu0 %4211, %v4149
        %v4213 = vpop.permute.xlu0 %4212
        %4216 = vset.pattern.permute.xlu0 0
        %4217 = vperm.xlu0 %4216, %v4150
        %v4218 = vpop.permute.xlu0 %4217
        %4221 = vset.pattern.permute.xlu0 0
        %4222 = vperm.xlu0 %4221, %v4151
        %v4223 = vpop.permute.xlu0 %4222
        %4226 = vset.pattern.permute.xlu0 0
        %4227 = vperm.xlu0 %4226, %v4152
        %v4228 = vpop.permute.xlu0 %4227
        %4231 = vset.pattern.permute.xlu0 0
        %4232 = vperm.xlu0 %4231, %v4153
        %v4233 = vpop.permute.xlu0 %4232
        %4236 = vset.pattern.permute.xlu0 0
        %4237 = vperm.xlu0 %4236, %v4154
        %v4238 = vpop.permute.xlu0 %4237
        %4241 = vset.pattern.permute.xlu0 0
        %4242 = vperm.xlu0 %4241, %v4155
        %v4243 = vpop.permute.xlu0 %4242
        %4246 = vset.pattern.permute.xlu0 0
        %4247 = vperm.xlu0 %4246, %v4156
        %v4248 = vpop.permute.xlu0 %4247
        %4251 = vset.pattern.permute.xlu0 0
        %4252 = vperm.xlu0 %4251, %v4157
        %v4253 = vpop.permute.xlu0 %4252
        %4256 = vset.pattern.permute.xlu0 0
        %4257 = vperm.xlu0 %4256, %v4158
        %v4258 = vpop.permute.xlu0 %4257
        %4261 = vset.pattern.permute.xlu0 0
        %4262 = vperm.xlu0 %4261, %v4159
        %v4263 = vpop.permute.xlu0 %4262
        %4266 = vset.pattern.permute.xlu0 0
        %4267 = vperm.xlu0 %4266, %v4160
        %v4268 = vpop.permute.xlu0 %4267
        %4271 = vset.pattern.permute.xlu0 0
        %4272 = vperm.xlu0 %4271, %v4161
        %v4273 = vpop.permute.xlu0 %4272
        %4276 = vset.pattern.permute.xlu0 0
        %4277 = vperm.xlu0 %4276, %v4162
        %v4278 = vpop.permute.xlu0 %4277
        %4281 = vset.pattern.permute.xlu0 0
        %4282 = vperm.xlu0 %4281, %v4163
        %v4283 = vpop.permute.xlu0 %4282
        %4286 = vset.pattern.permute.xlu0 0
        %4287 = vperm.xlu0 %4286, %v4164
        %v4288 = vpop.permute.xlu0 %4287
        %4291 = vset.pattern.permute.xlu0 0
        %4292 = vperm.xlu0 %4291, %v4165
        %v4293 = vpop.permute.xlu0 %4292
        %4296 = vset.pattern.permute.xlu0 0
        %4297 = vperm.xlu0 %4296, %v4166
        %v4298 = vpop.permute.xlu0 %4297
        %4301 = vset.pattern.permute.xlu0 0
        %4302 = vperm.xlu0 %4301, %v4167
        %v4303 = vpop.permute.xlu0 %4302
        %4306 = vset.pattern.permute.xlu0 0
        %4307 = vperm.xlu0 %4306, %v4168
        %v4308 = vpop.permute.xlu0 %4307
        %4311 = vset.pattern.permute.xlu0 0
        %4312 = vperm.xlu0 %4311, %v4169
        %v4313 = vpop.permute.xlu0 %4312
        %4316 = vset.pattern.permute.xlu0 0
        %4317 = vperm.xlu0 %4316, %v4170
        %v4318 = vpop.permute.xlu0 %4317
        %4321 = vset.pattern.permute.xlu0 0
        %4322 = vperm.xlu0 %4321, %v4171
        %v4323 = vpop.permute.xlu0 %4322
        %4326 = vset.pattern.permute.xlu0 0
        %4327 = vperm.xlu0 %4326, %v4172
        %v4328 = vpop.permute.xlu0 %4327
        %4331 = vset.pattern.permute.xlu0 0
        %4332 = vperm.xlu0 %4331, %v4173
        %v4333 = vpop.permute.xlu0 %4332
        %v4335 = vlaneseq
        %v4336 = vshrl.u32 %v4335, 7
        %v4337 = vsub.s32 0, %v4336
        %v4338 = vrot.slane %v4174, %v4337
        %v4339 = vmul.f32 %v4178, %v4338
        %v4340 = vmul.f32 %v4183, %v4338
        %v4341 = vmul.f32 %v4188, %v4338
        %v4342 = vmul.f32 %v4193, %v4338
        %v4343 = vmul.f32 %v4198, %v4338
        %v4344 = vmul.f32 %v4203, %v4338
        %v4345 = vmul.f32 %v4208, %v4338
        %v4346 = vmul.f32 %v4213, %v4338
        %v4347 = vmul.f32 %v4218, %v4338
        %v4348 = vmul.f32 %v4223, %v4338
        %v4349 = vmul.f32 %v4228, %v4338
        %v4350 = vmul.f32 %v4233, %v4338
        %v4351 = vmul.f32 %v4238, %v4338
        %v4352 = vmul.f32 %v4243, %v4338
        %v4353 = vmul.f32 %v4248, %v4338
        %v4354 = vmul.f32 %v4253, %v4338
        %v4355 = vmul.f32 %v4258, %v4338
        %v4356 = vmul.f32 %v4263, %v4338
        %v4357 = vmul.f32 %v4268, %v4338
        %v4358 = vmul.f32 %v4273, %v4338
        %v4359 = vmul.f32 %v4278, %v4338
        %v4360 = vmul.f32 %v4283, %v4338
        %v4361 = vmul.f32 %v4288, %v4338
        %v4362 = vmul.f32 %v4293, %v4338
        %v4363 = vmul.f32 %v4298, %v4338
        %v4364 = vmul.f32 %v4303, %v4338
        %v4365 = vmul.f32 %v4308, %v4338
        %v4366 = vmul.f32 %v4313, %v4338
        %v4367 = vmul.f32 %v4318, %v4338
        %v4368 = vmul.f32 %v4323, %v4338
        %v4369 = vmul.f32 %v4328, %v4338
        %v4370 = vmul.f32 %v4333, %v4338
        %v4371 = vadd.f32 %v3646, %v4339
        %v4372 = vadd.f32 %v3647, %v4340
        %v4373 = vadd.f32 %v3648, %v4341
        %v4374 = vadd.f32 %v3649, %v4342
        %v4375 = vadd.f32 %v3650, %v4343
        %v4376 = vadd.f32 %v3651, %v4344
        %v4377 = vadd.f32 %v3652, %v4345
        %v4378 = vadd.f32 %v3653, %v4346
        %v4379 = vadd.f32 %v3654, %v4347
        %v4380 = vadd.f32 %v3655, %v4348
        %v4381 = vadd.f32 %v3656, %v4349
        %v4382 = vadd.f32 %v3657, %v4350
        %v4383 = vadd.f32 %v3658, %v4351
        %v4384 = vadd.f32 %v3659, %v4352
        %v4385 = vadd.f32 %v3660, %v4353
        %v4386 = vadd.f32 %v3661, %v4354
        %v4387 = vadd.f32 %v3662, %v4355
        %v4388 = vadd.f32 %v3663, %v4356
        %v4389 = vadd.f32 %v3664, %v4357
        %v4390 = vadd.f32 %v3665, %v4358
        %v4391 = vadd.f32 %v3666, %v4359
        %v4392 = vadd.f32 %v3667, %v4360
        %v4393 = vadd.f32 %v3668, %v4361
        %v4394 = vadd.f32 %v3669, %v4362
        %v4395 = vadd.f32 %v3670, %v4363
        %v4396 = vadd.f32 %v3671, %v4364
        %v4397 = vadd.f32 %v3672, %v4365
        %v4398 = vadd.f32 %v3673, %v4366
        %v4399 = vadd.f32 %v3674, %v4367
        %v4400 = vadd.f32 %v3675, %v4368
        %v4401 = vadd.f32 %v3676, %v4369
        %v4402 = vadd.f32 %v3677, %v4370
        %v4403 = vld [vmem:[%s3384] sm:$0xe]
        %v4404 = vld [vmem:[%s3384 + $0xc] sm:$0xe]
        %v4405 = vld [vmem:[%s3384 + $0x18] sm:$0xe]
        %v4406 = vld [vmem:[%s3384 + $0x24] sm:$0xe]
        %v4407 = vld [vmem:[%s3384 + $0x30] sm:$0xe]
        %v4408 = vld [vmem:[%s3384 + $0x3c] sm:$0xe]
        %v4409 = vld [vmem:[%s3384 + $0x48] sm:$0xe]
        %v4410 = vld [vmem:[%s3384 + $0x54] sm:$0xe]
        %v4411 = vld [vmem:[%s3384 + $0x60] sm:$0xe]
        %v4412 = vld [vmem:[%s3384 + $0x6c] sm:$0xe]
        %v4413 = vld [vmem:[%s3384 + $0x78] sm:$0xe]
        %v4414 = vld [vmem:[%s3384 + $0x84] sm:$0xe]
        %v4415 = vld [vmem:[%s3384 + $0x90] sm:$0xe]
        %v4416 = vld [vmem:[%s3384 + $0x9c] sm:$0xe]
        %v4417 = vld [vmem:[%s3384 + $0xa8] sm:$0xe]
        %v4418 = vld [vmem:[%s3384 + $0xb4] sm:$0xe]
        %v4467 = vrot.slane %v4403, 5
        %v4468 = vrot.slane %v4467, 4
        %v4469 = vrot.slane %v3679, 5
        %v4470 = vsel %vm1490, %v4468, %v4469
        %v4471 = vrot.slane %v4469, 4
        %v4472 = vrot.slane %v3680, 5
        %v4473 = vsel %vm1490, %v4471, %v4472
        %v4474 = vrot.slane %v4404, 5
        %v4475 = vrot.slane %v4474, 4
        %v4476 = vrot.slane %v3682, 5
        %v4477 = vsel %vm1490, %v4475, %v4476
        %v4478 = vrot.slane %v4476, 4
        %v4479 = vrot.slane %v3683, 5
        %v4480 = vsel %vm1490, %v4478, %v4479
        %v4481 = vrot.slane %v4405, 5
        %v4482 = vrot.slane %v4481, 4
        %v4483 = vrot.slane %v3685, 5
        %v4484 = vsel %vm1490, %v4482, %v4483
        %v4485 = vrot.slane %v4483, 4
        %v4486 = vrot.slane %v3686, 5
        %v4487 = vsel %vm1490, %v4485, %v4486
        %v4488 = vrot.slane %v4406, 5
        %v4489 = vrot.slane %v4488, 4
        %v4490 = vrot.slane %v3688, 5
        %v4491 = vsel %vm1490, %v4489, %v4490
        %v4492 = vrot.slane %v4490, 4
        %v4493 = vrot.slane %v3689, 5
        %v4494 = vsel %vm1490, %v4492, %v4493
        %v4495 = vrot.slane %v4407, 5
        %v4496 = vrot.slane %v4495, 4
        %v4497 = vrot.slane %v3691, 5
        %v4498 = vsel %vm1490, %v4496, %v4497
        %v4499 = vrot.slane %v4497, 4
        %v4500 = vrot.slane %v3692, 5
        %v4501 = vsel %vm1490, %v4499, %v4500
        %v4502 = vrot.slane %v4408, 5
        %v4503 = vrot.slane %v4502, 4
        %v4504 = vrot.slane %v3694, 5
        %v4505 = vsel %vm1490, %v4503, %v4504
        %v4506 = vrot.slane %v4504, 4
        %v4507 = vrot.slane %v3695, 5
        %v4508 = vsel %vm1490, %v4506, %v4507
        %v4509 = vrot.slane %v4409, 5
        %v4510 = vrot.slane %v4509, 4
        %v4511 = vrot.slane %v3697, 5
        %v4512 = vsel %vm1490, %v4510, %v4511
        %v4513 = vrot.slane %v4511, 4
        %v4514 = vrot.slane %v3698, 5
        %v4515 = vsel %vm1490, %v4513, %v4514
        %v4516 = vrot.slane %v4410, 5
        %v4517 = vrot.slane %v4516, 4
        %v4518 = vrot.slane %v3700, 5
        %v4519 = vsel %vm1490, %v4517, %v4518
        %v4520 = vrot.slane %v4518, 4
        %v4521 = vrot.slane %v3701, 5
        %v4522 = vsel %vm1490, %v4520, %v4521
        %v4523 = vrot.slane %v4411, 5
        %v4524 = vrot.slane %v4523, 4
        %v4525 = vrot.slane %v3703, 5
        %v4526 = vsel %vm1490, %v4524, %v4525
        %v4527 = vrot.slane %v4525, 4
        %v4528 = vrot.slane %v3704, 5
        %v4529 = vsel %vm1490, %v4527, %v4528
        %v4530 = vrot.slane %v4412, 5
        %v4531 = vrot.slane %v4530, 4
        %v4532 = vrot.slane %v3706, 5
        %v4533 = vsel %vm1490, %v4531, %v4532
        %v4534 = vrot.slane %v4532, 4
        %v4535 = vrot.slane %v3707, 5
        %v4536 = vsel %vm1490, %v4534, %v4535
        %v4537 = vrot.slane %v4413, 5
        %v4538 = vrot.slane %v4537, 4
        %v4539 = vrot.slane %v3709, 5
        %v4540 = vsel %vm1490, %v4538, %v4539
        %v4541 = vrot.slane %v4539, 4
        %v4542 = vrot.slane %v3710, 5
        %v4543 = vsel %vm1490, %v4541, %v4542
        %v4544 = vrot.slane %v4414, 5
        %v4545 = vrot.slane %v4544, 4
        %v4546 = vrot.slane %v3712, 5
        %v4547 = vsel %vm1490, %v4545, %v4546
        %v4548 = vrot.slane %v4546, 4
        %v4549 = vrot.slane %v3713, 5
        %v4550 = vsel %vm1490, %v4548, %v4549
        %v4551 = vrot.slane %v4415, 5
        %v4552 = vrot.slane %v4551, 4
        %v4553 = vrot.slane %v3715, 5
        %v4554 = vsel %vm1490, %v4552, %v4553
        %v4555 = vrot.slane %v4553, 4
        %v4556 = vrot.slane %v3716, 5
        %v4557 = vsel %vm1490, %v4555, %v4556
        %v4558 = vrot.slane %v4416, 5
        %v4559 = vrot.slane %v4558, 4
        %v4560 = vrot.slane %v3718, 5
        %v4561 = vsel %vm1490, %v4559, %v4560
        %v4562 = vrot.slane %v4560, 4
        %v4563 = vrot.slane %v3719, 5
        %v4564 = vsel %vm1490, %v4562, %v4563
        %v4565 = vrot.slane %v4417, 5
        %v4566 = vrot.slane %v4565, 4
        %v4567 = vrot.slane %v3721, 5
        %v4568 = vsel %vm1490, %v4566, %v4567
        %v4569 = vrot.slane %v4567, 4
        %v4570 = vrot.slane %v3722, 5
        %v4571 = vsel %vm1490, %v4569, %v4570
        %v4572 = vrot.slane %v4418, 5
        %v4573 = vrot.slane %v4572, 4
        %v4574 = vrot.slane %v3724, 5
        %v4575 = vsel %vm1490, %v4573, %v4574
        %v4576 = vrot.slane %v4574, 4
        %v4577 = vrot.slane %v3725, 5
        %v4578 = vsel %vm1490, %v4576, %v4577
        %v4611 = vunpack.c.l.bf16 %v4470
        %v4612 = vunpack.c.l.bf16 %v4473
        %v4613 = vunpack.c.l.bf16 %v4477
        %v4614 = vunpack.c.l.bf16 %v4480
        %v4615 = vunpack.c.l.bf16 %v4484
        %v4616 = vunpack.c.l.bf16 %v4487
        %v4617 = vunpack.c.l.bf16 %v4491
        %v4618 = vunpack.c.l.bf16 %v4494
        %v4619 = vunpack.c.l.bf16 %v4498
        %v4620 = vunpack.c.l.bf16 %v4501
        %v4621 = vunpack.c.l.bf16 %v4505
        %v4622 = vunpack.c.l.bf16 %v4508
        %v4623 = vunpack.c.l.bf16 %v4512
        %v4624 = vunpack.c.l.bf16 %v4515
        %v4625 = vunpack.c.l.bf16 %v4519
        %v4626 = vunpack.c.l.bf16 %v4522
        %v4627 = vunpack.c.l.bf16 %v4526
        %v4628 = vunpack.c.l.bf16 %v4529
        %v4629 = vunpack.c.l.bf16 %v4533
        %v4630 = vunpack.c.l.bf16 %v4536
        %v4631 = vunpack.c.l.bf16 %v4540
        %v4632 = vunpack.c.l.bf16 %v4543
        %v4633 = vunpack.c.l.bf16 %v4547
        %v4634 = vunpack.c.l.bf16 %v4550
        %v4635 = vunpack.c.l.bf16 %v4554
        %v4636 = vunpack.c.l.bf16 %v4557
        %v4637 = vunpack.c.l.bf16 %v4561
        %v4638 = vunpack.c.l.bf16 %v4564
        %v4639 = vunpack.c.l.bf16 %v4568
        %v4640 = vunpack.c.l.bf16 %v4571
        %v4641 = vunpack.c.l.bf16 %v4575
        %v4642 = vunpack.c.l.bf16 %v4578
        %v4643 = vld [vmem:[%s3 + $0x8] sm:$0x1]
        %4645 = vset.pattern.permute.xlu0 0
        %4646 = vperm.xlu0 %4645, %v4611
        %v4647 = vpop.permute.xlu0 %4646
        %4650 = vset.pattern.permute.xlu0 0
        %4651 = vperm.xlu0 %4650, %v4612
        %v4652 = vpop.permute.xlu0 %4651
        %4655 = vset.pattern.permute.xlu0 0
        %4656 = vperm.xlu0 %4655, %v4613
        %v4657 = vpop.permute.xlu0 %4656
        %4660 = vset.pattern.permute.xlu0 0
        %4661 = vperm.xlu0 %4660, %v4614
        %v4662 = vpop.permute.xlu0 %4661
        %4665 = vset.pattern.permute.xlu0 0
        %4666 = vperm.xlu0 %4665, %v4615
        %v4667 = vpop.permute.xlu0 %4666
        %4670 = vset.pattern.permute.xlu0 0
        %4671 = vperm.xlu0 %4670, %v4616
        %v4672 = vpop.permute.xlu0 %4671
        %4675 = vset.pattern.permute.xlu0 0
        %4676 = vperm.xlu0 %4675, %v4617
        %v4677 = vpop.permute.xlu0 %4676
        %4680 = vset.pattern.permute.xlu0 0
        %4681 = vperm.xlu0 %4680, %v4618
        %v4682 = vpop.permute.xlu0 %4681
        %4685 = vset.pattern.permute.xlu0 0
        %4686 = vperm.xlu0 %4685, %v4619
        %v4687 = vpop.permute.xlu0 %4686
        %4690 = vset.pattern.permute.xlu0 0
        %4691 = vperm.xlu0 %4690, %v4620
        %v4692 = vpop.permute.xlu0 %4691
        %4695 = vset.pattern.permute.xlu0 0
        %4696 = vperm.xlu0 %4695, %v4621
        %v4697 = vpop.permute.xlu0 %4696
        %4700 = vset.pattern.permute.xlu0 0
        %4701 = vperm.xlu0 %4700, %v4622
        %v4702 = vpop.permute.xlu0 %4701
        %4705 = vset.pattern.permute.xlu0 0
        %4706 = vperm.xlu0 %4705, %v4623
        %v4707 = vpop.permute.xlu0 %4706
        %4710 = vset.pattern.permute.xlu0 0
        %4711 = vperm.xlu0 %4710, %v4624
        %v4712 = vpop.permute.xlu0 %4711
        %4715 = vset.pattern.permute.xlu0 0
        %4716 = vperm.xlu0 %4715, %v4625
        %v4717 = vpop.permute.xlu0 %4716
        %4720 = vset.pattern.permute.xlu0 0
        %4721 = vperm.xlu0 %4720, %v4626
        %v4722 = vpop.permute.xlu0 %4721
        %4725 = vset.pattern.permute.xlu0 0
        %4726 = vperm.xlu0 %4725, %v4627
        %v4727 = vpop.permute.xlu0 %4726
        %4730 = vset.pattern.permute.xlu0 0
        %4731 = vperm.xlu0 %4730, %v4628
        %v4732 = vpop.permute.xlu0 %4731
        %4735 = vset.pattern.permute.xlu0 0
        %4736 = vperm.xlu0 %4735, %v4629
        %v4737 = vpop.permute.xlu0 %4736
        %4740 = vset.pattern.permute.xlu0 0
        %4741 = vperm.xlu0 %4740, %v4630
        %v4742 = vpop.permute.xlu0 %4741
        %4745 = vset.pattern.permute.xlu0 0
        %4746 = vperm.xlu0 %4745, %v4631
        %v4747 = vpop.permute.xlu0 %4746
        %4750 = vset.pattern.permute.xlu0 0
        %4751 = vperm.xlu0 %4750, %v4632
        %v4752 = vpop.permute.xlu0 %4751
        %4755 = vset.pattern.permute.xlu0 0
        %4756 = vperm.xlu0 %4755, %v4633
        %v4757 = vpop.permute.xlu0 %4756
        %4760 = vset.pattern.permute.xlu0 0
        %4761 = vperm.xlu0 %4760, %v4634
        %v4762 = vpop.permute.xlu0 %4761
        %4765 = vset.pattern.permute.xlu0 0
        %4766 = vperm.xlu0 %4765, %v4635
        %v4767 = vpop.permute.xlu0 %4766
        %4770 = vset.pattern.permute.xlu0 0
        %4771 = vperm.xlu0 %4770, %v4636
        %v4772 = vpop.permute.xlu0 %4771
        %4775 = vset.pattern.permute.xlu0 0
        %4776 = vperm.xlu0 %4775, %v4637
        %v4777 = vpop.permute.xlu0 %4776
        %4780 = vset.pattern.permute.xlu0 0
        %4781 = vperm.xlu0 %4780, %v4638
        %v4782 = vpop.permute.xlu0 %4781
        %4785 = vset.pattern.permute.xlu0 0
        %4786 = vperm.xlu0 %4785, %v4639
        %v4787 = vpop.permute.xlu0 %4786
        %4790 = vset.pattern.permute.xlu0 0
        %4791 = vperm.xlu0 %4790, %v4640
        %v4792 = vpop.permute.xlu0 %4791
        %4795 = vset.pattern.permute.xlu0 0
        %4796 = vperm.xlu0 %4795, %v4641
        %v4797 = vpop.permute.xlu0 %4796
        %4800 = vset.pattern.permute.xlu0 0
        %4801 = vperm.xlu0 %4800, %v4642
        %v4802 = vpop.permute.xlu0 %4801
        %v4804 = vlaneseq
        %v4805 = vshrl.u32 %v4804, 7
        %v4806 = vsub.s32 0, %v4805
        %v4807 = vrot.slane %v4643, %v4806
        %v4808 = vmul.f32 %v4647, %v4807
        %v4809 = vmul.f32 %v4652, %v4807
        %v4810 = vmul.f32 %v4657, %v4807
        %v4811 = vmul.f32 %v4662, %v4807
        %v4812 = vmul.f32 %v4667, %v4807
        %v4813 = vmul.f32 %v4672, %v4807
        %v4814 = vmul.f32 %v4677, %v4807
        %v4815 = vmul.f32 %v4682, %v4807
        %v4816 = vmul.f32 %v4687, %v4807
        %v4817 = vmul.f32 %v4692, %v4807
        %v4818 = vmul.f32 %v4697, %v4807
        %v4819 = vmul.f32 %v4702, %v4807
        %v4820 = vmul.f32 %v4707, %v4807
        %v4821 = vmul.f32 %v4712, %v4807
        %v4822 = vmul.f32 %v4717, %v4807
        %v4823 = vmul.f32 %v4722, %v4807
        %v4824 = vmul.f32 %v4727, %v4807
        %v4825 = vmul.f32 %v4732, %v4807
        %v4826 = vmul.f32 %v4737, %v4807
        %v4827 = vmul.f32 %v4742, %v4807
        %v4828 = vmul.f32 %v4747, %v4807
        %v4829 = vmul.f32 %v4752, %v4807
        %v4830 = vmul.f32 %v4757, %v4807
        %v4831 = vmul.f32 %v4762, %v4807
        %v4832 = vmul.f32 %v4767, %v4807
        %v4833 = vmul.f32 %v4772, %v4807
        %v4834 = vmul.f32 %v4777, %v4807
        %v4835 = vmul.f32 %v4782, %v4807
        %v4836 = vmul.f32 %v4787, %v4807
        %v4837 = vmul.f32 %v4792, %v4807
        %v4838 = vmul.f32 %v4797, %v4807
        %v4839 = vmul.f32 %v4802, %v4807
        %v4840 = vadd.f32 %v4371, %v4808
        %v4841 = vadd.f32 %v4372, %v4809
        %v4842 = vadd.f32 %v4373, %v4810
        %v4843 = vadd.f32 %v4374, %v4811
        %v4844 = vadd.f32 %v4375, %v4812
        %v4845 = vadd.f32 %v4376, %v4813
        %v4846 = vadd.f32 %v4377, %v4814
        %v4847 = vadd.f32 %v4378, %v4815
        %v4848 = vadd.f32 %v4379, %v4816
        %v4849 = vadd.f32 %v4380, %v4817
        %v4850 = vadd.f32 %v4381, %v4818
        %v4851 = vadd.f32 %v4382, %v4819
        %v4852 = vadd.f32 %v4383, %v4820
        %v4853 = vadd.f32 %v4384, %v4821
        %v4854 = vadd.f32 %v4385, %v4822
        %v4855 = vadd.f32 %v4386, %v4823
        %v4856 = vadd.f32 %v4387, %v4824
        %v4857 = vadd.f32 %v4388, %v4825
        %v4858 = vadd.f32 %v4389, %v4826
        %v4859 = vadd.f32 %v4390, %v4827
        %v4860 = vadd.f32 %v4391, %v4828
        %v4861 = vadd.f32 %v4392, %v4829
        %v4862 = vadd.f32 %v4393, %v4830
        %v4863 = vadd.f32 %v4394, %v4831
        %v4864 = vadd.f32 %v4395, %v4832
        %v4865 = vadd.f32 %v4396, %v4833
        %v4866 = vadd.f32 %v4397, %v4834
        %v4867 = vadd.f32 %v4398, %v4835
        %v4868 = vadd.f32 %v4399, %v4836
        %v4869 = vadd.f32 %v4400, %v4837
        %v4870 = vadd.f32 %v4401, %v4838
        %v4871 = vadd.f32 %v4402, %v4839
        %v4872 = vld [vmem:[%s390] sm:$0xf]
        %v4873 = vld [vmem:[%s390 + $0x4] sm:$0xf]
        %v4874 = vld [vmem:[%s390 + $0xc] sm:$0xf]
        %v4875 = vld [vmem:[%s390 + $0x10] sm:$0xf]
        %v4876 = vld [vmem:[%s390 + $0x18] sm:$0xf]
        %v4877 = vld [vmem:[%s390 + $0x1c] sm:$0xf]
        %v4878 = vld [vmem:[%s390 + $0x24] sm:$0xf]
        %v4879 = vld [vmem:[%s390 + $0x28] sm:$0xf]
        %v4880 = vld [vmem:[%s390 + $0x30] sm:$0xf]
        %v4881 = vld [vmem:[%s390 + $0x34] sm:$0xf]
        %v4882 = vld [vmem:[%s390 + $0x3c] sm:$0xf]
        %v4883 = vld [vmem:[%s390 + $0x40] sm:$0xf]
        %v4884 = vld [vmem:[%s390 + $0x48] sm:$0xf]
        %v4885 = vld [vmem:[%s390 + $0x4c] sm:$0xf]
        %v4886 = vld [vmem:[%s390 + $0x54] sm:$0xf]
        %v4887 = vld [vmem:[%s390 + $0x58] sm:$0xf]
        %v4888 = vld [vmem:[%s390 + $0x60] sm:$0xf]
        %v4889 = vld [vmem:[%s390 + $0x64] sm:$0xf]
        %v4890 = vld [vmem:[%s390 + $0x6c] sm:$0xf]
        %v4891 = vld [vmem:[%s390 + $0x70] sm:$0xf]
        %v4892 = vld [vmem:[%s390 + $0x78] sm:$0xf]
        %v4893 = vld [vmem:[%s390 + $0x7c] sm:$0xf]
        %v4894 = vld [vmem:[%s390 + $0x84] sm:$0xf]
        %v4895 = vld [vmem:[%s390 + $0x88] sm:$0xf]
        %v4896 = vld [vmem:[%s390 + $0x90] sm:$0xf]
        %v4897 = vld [vmem:[%s390 + $0x94] sm:$0xf]
        %v4898 = vld [vmem:[%s390 + $0x9c] sm:$0xf]
        %v4899 = vld [vmem:[%s390 + $0xa0] sm:$0xf]
        %v4900 = vld [vmem:[%s390 + $0xa8] sm:$0xf]
        %v4901 = vld [vmem:[%s390 + $0xac] sm:$0xf]
        %v4902 = vld [vmem:[%s390 + $0xb4] sm:$0xf]
        %v4903 = vld [vmem:[%s390 + $0xb8] sm:$0xf]
        %v4904 = vunpack.c.l.bf16 %v4872
        %v4905 = vunpack.c.l.bf16 %v4873
        %v4906 = vunpack.c.l.bf16 %v4874
        %v4907 = vunpack.c.l.bf16 %v4875
        %v4908 = vunpack.c.l.bf16 %v4876
        %v4909 = vunpack.c.l.bf16 %v4877
        %v4910 = vunpack.c.l.bf16 %v4878
        %v4911 = vunpack.c.l.bf16 %v4879
        %v4912 = vunpack.c.l.bf16 %v4880
        %v4913 = vunpack.c.l.bf16 %v4881
        %v4914 = vunpack.c.l.bf16 %v4882
        %v4915 = vunpack.c.l.bf16 %v4883
        %v4916 = vunpack.c.l.bf16 %v4884
        %v4917 = vunpack.c.l.bf16 %v4885
        %v4918 = vunpack.c.l.bf16 %v4886
        %v4919 = vunpack.c.l.bf16 %v4887
        %v4920 = vunpack.c.l.bf16 %v4888
        %v4921 = vunpack.c.l.bf16 %v4889
        %v4922 = vunpack.c.l.bf16 %v4890
        %v4923 = vunpack.c.l.bf16 %v4891
        %v4924 = vunpack.c.l.bf16 %v4892
        %v4925 = vunpack.c.l.bf16 %v4893
        %v4926 = vunpack.c.l.bf16 %v4894
        %v4927 = vunpack.c.l.bf16 %v4895
        %v4928 = vunpack.c.l.bf16 %v4896
        %v4929 = vunpack.c.l.bf16 %v4897
        %v4930 = vunpack.c.l.bf16 %v4898
        %v4931 = vunpack.c.l.bf16 %v4899
        %v4932 = vunpack.c.l.bf16 %v4900
        %v4933 = vunpack.c.l.bf16 %v4901
        %v4934 = vunpack.c.l.bf16 %v4902
        %v4935 = vunpack.c.l.bf16 %v4903
        %v4936 = vld [vmem:[%s3 + $0x9] sm:$0x1]
        %4938 = vset.pattern.permute.xlu0 0
        %4939 = vperm.xlu0 %4938, %v4904
        %v4940 = vpop.permute.xlu0 %4939
        %4943 = vset.pattern.permute.xlu0 0
        %4944 = vperm.xlu0 %4943, %v4905
        %v4945 = vpop.permute.xlu0 %4944
        %4948 = vset.pattern.permute.xlu0 0
        %4949 = vperm.xlu0 %4948, %v4906
        %v4950 = vpop.permute.xlu0 %4949
        %4953 = vset.pattern.permute.xlu0 0
        %4954 = vperm.xlu0 %4953, %v4907
        %v4955 = vpop.permute.xlu0 %4954
        %4958 = vset.pattern.permute.xlu0 0
        %4959 = vperm.xlu0 %4958, %v4908
        %v4960 = vpop.permute.xlu0 %4959
        %4963 = vset.pattern.permute.xlu0 0
        %4964 = vperm.xlu0 %4963, %v4909
        %v4965 = vpop.permute.xlu0 %4964
        %4968 = vset.pattern.permute.xlu0 0
        %4969 = vperm.xlu0 %4968, %v4910
        %v4970 = vpop.permute.xlu0 %4969
        %4973 = vset.pattern.permute.xlu0 0
        %4974 = vperm.xlu0 %4973, %v4911
        %v4975 = vpop.permute.xlu0 %4974
        %4978 = vset.pattern.permute.xlu0 0
        %4979 = vperm.xlu0 %4978, %v4912
        %v4980 = vpop.permute.xlu0 %4979
        %4983 = vset.pattern.permute.xlu0 0
        %4984 = vperm.xlu0 %4983, %v4913
        %v4985 = vpop.permute.xlu0 %4984
        %4988 = vset.pattern.permute.xlu0 0
        %4989 = vperm.xlu0 %4988, %v4914
        %v4990 = vpop.permute.xlu0 %4989
        %4993 = vset.pattern.permute.xlu0 0
        %4994 = vperm.xlu0 %4993, %v4915
        %v4995 = vpop.permute.xlu0 %4994
        %4998 = vset.pattern.permute.xlu0 0
        %4999 = vperm.xlu0 %4998, %v4916
        %v5000 = vpop.permute.xlu0 %4999
        %5003 = vset.pattern.permute.xlu0 0
        %5004 = vperm.xlu0 %5003, %v4917
        %v5005 = vpop.permute.xlu0 %5004
        %5008 = vset.pattern.permute.xlu0 0
        %5009 = vperm.xlu0 %5008, %v4918
        %v5010 = vpop.permute.xlu0 %5009
        %5013 = vset.pattern.permute.xlu0 0
        %5014 = vperm.xlu0 %5013, %v4919
        %v5015 = vpop.permute.xlu0 %5014
        %5018 = vset.pattern.permute.xlu0 0
        %5019 = vperm.xlu0 %5018, %v4920
        %v5020 = vpop.permute.xlu0 %5019
        %5023 = vset.pattern.permute.xlu0 0
        %5024 = vperm.xlu0 %5023, %v4921
        %v5025 = vpop.permute.xlu0 %5024
        %5028 = vset.pattern.permute.xlu0 0
        %5029 = vperm.xlu0 %5028, %v4922
        %v5030 = vpop.permute.xlu0 %5029
        %5033 = vset.pattern.permute.xlu0 0
        %5034 = vperm.xlu0 %5033, %v4923
        %v5035 = vpop.permute.xlu0 %5034
        %5038 = vset.pattern.permute.xlu0 0
        %5039 = vperm.xlu0 %5038, %v4924
        %v5040 = vpop.permute.xlu0 %5039
        %5043 = vset.pattern.permute.xlu0 0
        %5044 = vperm.xlu0 %5043, %v4925
        %v5045 = vpop.permute.xlu0 %5044
        %5048 = vset.pattern.permute.xlu0 0
        %5049 = vperm.xlu0 %5048, %v4926
        %v5050 = vpop.permute.xlu0 %5049
        %5053 = vset.pattern.permute.xlu0 0
        %5054 = vperm.xlu0 %5053, %v4927
        %v5055 = vpop.permute.xlu0 %5054
        %5058 = vset.pattern.permute.xlu0 0
        %5059 = vperm.xlu0 %5058, %v4928
        %v5060 = vpop.permute.xlu0 %5059
        %5063 = vset.pattern.permute.xlu0 0
        %5064 = vperm.xlu0 %5063, %v4929
        %v5065 = vpop.permute.xlu0 %5064
        %5068 = vset.pattern.permute.xlu0 0
        %5069 = vperm.xlu0 %5068, %v4930
        %v5070 = vpop.permute.xlu0 %5069
        %5073 = vset.pattern.permute.xlu0 0
        %5074 = vperm.xlu0 %5073, %v4931
        %v5075 = vpop.permute.xlu0 %5074
        %5078 = vset.pattern.permute.xlu0 0
        %5079 = vperm.xlu0 %5078, %v4932
        %v5080 = vpop.permute.xlu0 %5079
        %5083 = vset.pattern.permute.xlu0 0
        %5084 = vperm.xlu0 %5083, %v4933
        %v5085 = vpop.permute.xlu0 %5084
        %5088 = vset.pattern.permute.xlu0 0
        %5089 = vperm.xlu0 %5088, %v4934
        %v5090 = vpop.permute.xlu0 %5089
        %5093 = vset.pattern.permute.xlu0 0
        %5094 = vperm.xlu0 %5093, %v4935
        %v5095 = vpop.permute.xlu0 %5094
        %v5097 = vlaneseq
        %v5098 = vshrl.u32 %v5097, 7
        %v5099 = vsub.s32 0, %v5098
        %v5100 = vrot.slane %v4936, %v5099
        %v5101 = vmul.f32 %v4940, %v5100
        %v5102 = vmul.f32 %v4945, %v5100
        %v5103 = vmul.f32 %v4950, %v5100
        %v5104 = vmul.f32 %v4955, %v5100
        %v5105 = vmul.f32 %v4960, %v5100
        %v5106 = vmul.f32 %v4965, %v5100
        %v5107 = vmul.f32 %v4970, %v5100
        %v5108 = vmul.f32 %v4975, %v5100
        %v5109 = vmul.f32 %v4980, %v5100
        %v5110 = vmul.f32 %v4985, %v5100
        %v5111 = vmul.f32 %v4990, %v5100
        %v5112 = vmul.f32 %v4995, %v5100
        %v5113 = vmul.f32 %v5000, %v5100
        %v5114 = vmul.f32 %v5005, %v5100
        %v5115 = vmul.f32 %v5010, %v5100
        %v5116 = vmul.f32 %v5015, %v5100
        %v5117 = vmul.f32 %v5020, %v5100
        %v5118 = vmul.f32 %v5025, %v5100
        %v5119 = vmul.f32 %v5030, %v5100
        %v5120 = vmul.f32 %v5035, %v5100
        %v5121 = vmul.f32 %v5040, %v5100
        %v5122 = vmul.f32 %v5045, %v5100
        %v5123 = vmul.f32 %v5050, %v5100
        %v5124 = vmul.f32 %v5055, %v5100
        %v5125 = vmul.f32 %v5060, %v5100
        %v5126 = vmul.f32 %v5065, %v5100
        %v5127 = vmul.f32 %v5070, %v5100
        %v5128 = vmul.f32 %v5075, %v5100
        %v5129 = vmul.f32 %v5080, %v5100
        %v5130 = vmul.f32 %v5085, %v5100
        %v5131 = vmul.f32 %v5090, %v5100
        %v5132 = vmul.f32 %v5095, %v5100
        %v5133 = vadd.f32 %v4840, %v5101
        %v5134 = vadd.f32 %v4841, %v5102
        %v5135 = vadd.f32 %v4842, %v5103
        %v5136 = vadd.f32 %v4843, %v5104
        %v5137 = vadd.f32 %v4844, %v5105
        %v5138 = vadd.f32 %v4845, %v5106
        %v5139 = vadd.f32 %v4846, %v5107
        %v5140 = vadd.f32 %v4847, %v5108
        %v5141 = vadd.f32 %v4848, %v5109
        %v5142 = vadd.f32 %v4849, %v5110
        %v5143 = vadd.f32 %v4850, %v5111
        %v5144 = vadd.f32 %v4851, %v5112
        %v5145 = vadd.f32 %v4852, %v5113
        %v5146 = vadd.f32 %v4853, %v5114
        %v5147 = vadd.f32 %v4854, %v5115
        %v5148 = vadd.f32 %v4855, %v5116
        %v5149 = vadd.f32 %v4856, %v5117
        %v5150 = vadd.f32 %v4857, %v5118
        %v5151 = vadd.f32 %v4858, %v5119
        %v5152 = vadd.f32 %v4859, %v5120
        %v5153 = vadd.f32 %v4860, %v5121
        %v5154 = vadd.f32 %v4861, %v5122
        %v5155 = vadd.f32 %v4862, %v5123
        %v5156 = vadd.f32 %v4863, %v5124
        %v5157 = vadd.f32 %v4864, %v5125
        %v5158 = vadd.f32 %v4865, %v5126
        %v5159 = vadd.f32 %v4866, %v5127
        %v5160 = vadd.f32 %v4867, %v5128
        %v5161 = vadd.f32 %v4868, %v5129
        %v5162 = vadd.f32 %v4869, %v5130
        %v5163 = vadd.f32 %v4870, %v5131
        %v5164 = vadd.f32 %v4871, %v5132
        %v5165 = vld [vmem:[%s390] sm:$0xf]
        %v5166 = vld [vmem:[%s390 + $0x4] sm:$0xf]
        %v5167 = vld [vmem:[%s390 + $0x8] sm:$0x1]
        %v5168 = vld [vmem:[%s390 + $0xc] sm:$0xf]
        %v5169 = vld [vmem:[%s390 + $0x10] sm:$0xf]
        %v5170 = vld [vmem:[%s390 + $0x14] sm:$0x1]
        %v5171 = vld [vmem:[%s390 + $0x18] sm:$0xf]
        %v5172 = vld [vmem:[%s390 + $0x1c] sm:$0xf]
        %v5173 = vld [vmem:[%s390 + $0x20] sm:$0x1]
        %v5174 = vld [vmem:[%s390 + $0x24] sm:$0xf]
        %v5175 = vld [vmem:[%s390 + $0x28] sm:$0xf]
        %v5176 = vld [vmem:[%s390 + $0x2c] sm:$0x1]
        %v5177 = vld [vmem:[%s390 + $0x30] sm:$0xf]
        %v5178 = vld [vmem:[%s390 + $0x34] sm:$0xf]
        %v5179 = vld [vmem:[%s390 + $0x38] sm:$0x1]
        %v5180 = vld [vmem:[%s390 + $0x3c] sm:$0xf]
        %v5181 = vld [vmem:[%s390 + $0x40] sm:$0xf]
        %v5182 = vld [vmem:[%s390 + $0x44] sm:$0x1]
        %v5183 = vld [vmem:[%s390 + $0x48] sm:$0xf]
        %v5184 = vld [vmem:[%s390 + $0x4c] sm:$0xf]
        %v5185 = vld [vmem:[%s390 + $0x50] sm:$0x1]
        %v5186 = vld [vmem:[%s390 + $0x54] sm:$0xf]
        %v5187 = vld [vmem:[%s390 + $0x58] sm:$0xf]
        %v5188 = vld [vmem:[%s390 + $0x5c] sm:$0x1]
        %v5189 = vld [vmem:[%s390 + $0x60] sm:$0xf]
        %v5190 = vld [vmem:[%s390 + $0x64] sm:$0xf]
        %v5191 = vld [vmem:[%s390 + $0x68] sm:$0x1]
        %v5192 = vld [vmem:[%s390 + $0x6c] sm:$0xf]
        %v5193 = vld [vmem:[%s390 + $0x70] sm:$0xf]
        %v5194 = vld [vmem:[%s390 + $0x74] sm:$0x1]
        %v5195 = vld [vmem:[%s390 + $0x78] sm:$0xf]
        %v5196 = vld [vmem:[%s390 + $0x7c] sm:$0xf]
        %v5197 = vld [vmem:[%s390 + $0x80] sm:$0x1]
        %v5198 = vld [vmem:[%s390 + $0x84] sm:$0xf]
        %v5199 = vld [vmem:[%s390 + $0x88] sm:$0xf]
        %v5200 = vld [vmem:[%s390 + $0x8c] sm:$0x1]
        %v5201 = vld [vmem:[%s390 + $0x90] sm:$0xf]
        %v5202 = vld [vmem:[%s390 + $0x94] sm:$0xf]
        %v5203 = vld [vmem:[%s390 + $0x98] sm:$0x1]
        %v5204 = vld [vmem:[%s390 + $0x9c] sm:$0xf]
        %v5205 = vld [vmem:[%s390 + $0xa0] sm:$0xf]
        %v5206 = vld [vmem:[%s390 + $0xa4] sm:$0x1]
        %v5207 = vld [vmem:[%s390 + $0xa8] sm:$0xf]
        %v5208 = vld [vmem:[%s390 + $0xac] sm:$0xf]
        %v5209 = vld [vmem:[%s390 + $0xb0] sm:$0x1]
        %v5210 = vld [vmem:[%s390 + $0xb4] sm:$0xf]
        %v5211 = vld [vmem:[%s390 + $0xb8] sm:$0xf]
        %v5212 = vld [vmem:[%s390 + $0xbc] sm:$0x1]
        %v5214 = vshrl.u32 %v5165, 16
        %v5216 = vrot.slane %v5214, 4
        %v5217 = vshll.u32 %v5165, 16
        %v5219 = vrot.slane %v5217, 5
        %v5220 = vor.u32 %v5216, %v5219
        %v5221 = vrot.slane %v5220, 4
        %v5223 = vshll.u32 %v5166, 16
        %v5225 = vrot.slane %v5223, 5
        %v5226 = vsel %vm746, %v5221, %v5225
        %v5227 = vshrl.u32 %v5166, 16
        %v5229 = vrot.slane %v5227, 4
        %v5230 = vor.u32 %v5229, %v5225
        %v5231 = vrot.slane %v5230, 4
        %v5233 = vshll.u32 %v5167, 16
        %v5235 = vrot.slane %v5233, 5
        %v5236 = vsel %vm746, %v5231, %v5235
        %v5238 = vshrl.u32 %v5168, 16
        %v5240 = vrot.slane %v5238, 4
        %v5241 = vshll.u32 %v5168, 16
        %v5243 = vrot.slane %v5241, 5
        %v5244 = vor.u32 %v5240, %v5243
        %v5245 = vrot.slane %v5244, 4
        %v5247 = vshll.u32 %v5169, 16
        %v5249 = vrot.slane %v5247, 5
        %v5250 = vsel %vm746, %v5245, %v5249
        %v5251 = vshrl.u32 %v5169, 16
        %v5253 = vrot.slane %v5251, 4
        %v5254 = vor.u32 %v5253, %v5249
        %v5255 = vrot.slane %v5254, 4
        %v5257 = vshll.u32 %v5170, 16
        %v5259 = vrot.slane %v5257, 5
        %v5260 = vsel %vm746, %v5255, %v5259
        %v5262 = vshrl.u32 %v5171, 16
        %v5264 = vrot.slane %v5262, 4
        %v5265 = vshll.u32 %v5171, 16
        %v5267 = vrot.slane %v5265, 5
        %v5268 = vor.u32 %v5264, %v5267
        %v5269 = vrot.slane %v5268, 4
        %v5271 = vshll.u32 %v5172, 16
        %v5273 = vrot.slane %v5271, 5
        %v5274 = vsel %vm746, %v5269, %v5273
        %v5275 = vshrl.u32 %v5172, 16
        %v5277 = vrot.slane %v5275, 4
        %v5278 = vor.u32 %v5277, %v5273
        %v5279 = vrot.slane %v5278, 4
        %v5281 = vshll.u32 %v5173, 16
        %v5283 = vrot.slane %v5281, 5
        %v5284 = vsel %vm746, %v5279, %v5283
        %v5286 = vshrl.u32 %v5174, 16
        %v5288 = vrot.slane %v5286, 4
        %v5289 = vshll.u32 %v5174, 16
        %v5291 = vrot.slane %v5289, 5
        %v5292 = vor.u32 %v5288, %v5291
        %v5293 = vrot.slane %v5292, 4
        %v5295 = vshll.u32 %v5175, 16
        %v5297 = vrot.slane %v5295, 5
        %v5298 = vsel %vm746, %v5293, %v5297
        %v5299 = vshrl.u32 %v5175, 16
        %v5301 = vrot.slane %v5299, 4
        %v5302 = vor.u32 %v5301, %v5297
        %v5303 = vrot.slane %v5302, 4
        %v5305 = vshll.u32 %v5176, 16
        %v5307 = vrot.slane %v5305, 5
        %v5308 = vsel %vm746, %v5303, %v5307
        %v5310 = vshrl.u32 %v5177, 16
        %v5312 = vrot.slane %v5310, 4
        %v5313 = vshll.u32 %v5177, 16
        %v5315 = vrot.slane %v5313, 5
        %v5316 = vor.u32 %v5312, %v5315
        %v5317 = vrot.slane %v5316, 4
        %v5319 = vshll.u32 %v5178, 16
        %v5321 = vrot.slane %v5319, 5
        %v5322 = vsel %vm746, %v5317, %v5321
        %v5323 = vshrl.u32 %v5178, 16
        %v5325 = vrot.slane %v5323, 4
        %v5326 = vor.u32 %v5325, %v5321
        %v5327 = vrot.slane %v5326, 4
        %v5329 = vshll.u32 %v5179, 16
        %v5331 = vrot.slane %v5329, 5
        %v5332 = vsel %vm746, %v5327, %v5331
        %v5334 = vshrl.u32 %v5180, 16
        %v5336 = vrot.slane %v5334, 4
        %v5337 = vshll.u32 %v5180, 16
        %v5339 = vrot.slane %v5337, 5
        %v5340 = vor.u32 %v5336, %v5339
        %v5341 = vrot.slane %v5340, 4
        %v5343 = vshll.u32 %v5181, 16
        %v5345 = vrot.slane %v5343, 5
        %v5346 = vsel %vm746, %v5341, %v5345
        %v5347 = vshrl.u32 %v5181, 16
        %v5349 = vrot.slane %v5347, 4
        %v5350 = vor.u32 %v5349, %v5345
        %v5351 = vrot.slane %v5350, 4
        %v5353 = vshll.u32 %v5182, 16
        %v5355 = vrot.slane %v5353, 5
        %v5356 = vsel %vm746, %v5351, %v5355
        %v5358 = vshrl.u32 %v5183, 16
        %v5360 = vrot.slane %v5358, 4
        %v5361 = vshll.u32 %v5183, 16
        %v5363 = vrot.slane %v5361, 5
        %v5364 = vor.u32 %v5360, %v5363
        %v5365 = vrot.slane %v5364, 4
        %v5367 = vshll.u32 %v5184, 16
        %v5369 = vrot.slane %v5367, 5
        %v5370 = vsel %vm746, %v5365, %v5369
        %v5371 = vshrl.u32 %v5184, 16
        %v5373 = vrot.slane %v5371, 4
        %v5374 = vor.u32 %v5373, %v5369
        %v5375 = vrot.slane %v5374, 4
        %v5377 = vshll.u32 %v5185, 16
        %v5379 = vrot.slane %v5377, 5
        %v5380 = vsel %vm746, %v5375, %v5379
        %v5382 = vshrl.u32 %v5186, 16
        %v5384 = vrot.slane %v5382, 4
        %v5385 = vshll.u32 %v5186, 16
        %v5387 = vrot.slane %v5385, 5
        %v5388 = vor.u32 %v5384, %v5387
        %v5389 = vrot.slane %v5388, 4
        %v5391 = vshll.u32 %v5187, 16
        %v5393 = vrot.slane %v5391, 5
        %v5394 = vsel %vm746, %v5389, %v5393
        %v5395 = vshrl.u32 %v5187, 16
        %v5397 = vrot.slane %v5395, 4
        %v5398 = vor.u32 %v5397, %v5393
        %v5399 = vrot.slane %v5398, 4
        %v5401 = vshll.u32 %v5188, 16
        %v5403 = vrot.slane %v5401, 5
        %v5404 = vsel %vm746, %v5399, %v5403
        %v5406 = vshrl.u32 %v5189, 16
        %v5408 = vrot.slane %v5406, 4
        %v5409 = vshll.u32 %v5189, 16
        %v5411 = vrot.slane %v5409, 5
        %v5412 = vor.u32 %v5408, %v5411
        %v5413 = vrot.slane %v5412, 4
        %v5415 = vshll.u32 %v5190, 16
        %v5417 = vrot.slane %v5415, 5
        %v5418 = vsel %vm746, %v5413, %v5417
        %v5419 = vshrl.u32 %v5190, 16
        %v5421 = vrot.slane %v5419, 4
        %v5422 = vor.u32 %v5421, %v5417
        %v5423 = vrot.slane %v5422, 4
        %v5425 = vshll.u32 %v5191, 16
        %v5427 = vrot.slane %v5425, 5
        %v5428 = vsel %vm746, %v5423, %v5427
        %v5430 = vshrl.u32 %v5192, 16
        %v5432 = vrot.slane %v5430, 4
        %v5433 = vshll.u32 %v5192, 16
        %v5435 = vrot.slane %v5433, 5
        %v5436 = vor.u32 %v5432, %v5435
        %v5437 = vrot.slane %v5436, 4
        %v5439 = vshll.u32 %v5193, 16
        %v5441 = vrot.slane %v5439, 5
        %v5442 = vsel %vm746, %v5437, %v5441
        %v5443 = vshrl.u32 %v5193, 16
        %v5445 = vrot.slane %v5443, 4
        %v5446 = vor.u32 %v5445, %v5441
        %v5447 = vrot.slane %v5446, 4
        %v5449 = vshll.u32 %v5194, 16
        %v5451 = vrot.slane %v5449, 5
        %v5452 = vsel %vm746, %v5447, %v5451
        %v5454 = vshrl.u32 %v5195, 16
        %v5456 = vrot.slane %v5454, 4
        %v5457 = vshll.u32 %v5195, 16
        %v5459 = vrot.slane %v5457, 5
        %v5460 = vor.u32 %v5456, %v5459
        %v5461 = vrot.slane %v5460, 4
        %v5463 = vshll.u32 %v5196, 16
        %v5465 = vrot.slane %v5463, 5
        %v5466 = vsel %vm746, %v5461, %v5465
        %v5467 = vshrl.u32 %v5196, 16
        %v5469 = vrot.slane %v5467, 4
        %v5470 = vor.u32 %v5469, %v5465
        %v5471 = vrot.slane %v5470, 4
        %v5473 = vshll.u32 %v5197, 16
        %v5475 = vrot.slane %v5473, 5
        %v5476 = vsel %vm746, %v5471, %v5475
        %v5478 = vshrl.u32 %v5198, 16
        %v5480 = vrot.slane %v5478, 4
        %v5481 = vshll.u32 %v5198, 16
        %v5483 = vrot.slane %v5481, 5
        %v5484 = vor.u32 %v5480, %v5483
        %v5485 = vrot.slane %v5484, 4
        %v5487 = vshll.u32 %v5199, 16
        %v5489 = vrot.slane %v5487, 5
        %v5490 = vsel %vm746, %v5485, %v5489
        %v5491 = vshrl.u32 %v5199, 16
        %v5493 = vrot.slane %v5491, 4
        %v5494 = vor.u32 %v5493, %v5489
        %v5495 = vrot.slane %v5494, 4
        %v5497 = vshll.u32 %v5200, 16
        %v5499 = vrot.slane %v5497, 5
        %v5500 = vsel %vm746, %v5495, %v5499
        %v5502 = vshrl.u32 %v5201, 16
        %v5504 = vrot.slane %v5502, 4
        %v5505 = vshll.u32 %v5201, 16
        %v5507 = vrot.slane %v5505, 5
        %v5508 = vor.u32 %v5504, %v5507
        %v5509 = vrot.slane %v5508, 4
        %v5511 = vshll.u32 %v5202, 16
        %v5513 = vrot.slane %v5511, 5
        %v5514 = vsel %vm746, %v5509, %v5513
        %v5515 = vshrl.u32 %v5202, 16
        %v5517 = vrot.slane %v5515, 4
        %v5518 = vor.u32 %v5517, %v5513
        %v5519 = vrot.slane %v5518, 4
        %v5521 = vshll.u32 %v5203, 16
        %v5523 = vrot.slane %v5521, 5
        %v5524 = vsel %vm746, %v5519, %v5523
        %v5526 = vshrl.u32 %v5204, 16
        %v5528 = vrot.slane %v5526, 4
        %v5529 = vshll.u32 %v5204, 16
        %v5531 = vrot.slane %v5529, 5
        %v5532 = vor.u32 %v5528, %v5531
        %v5533 = vrot.slane %v5532, 4
        %v5535 = vshll.u32 %v5205, 16
        %v5537 = vrot.slane %v5535, 5
        %v5538 = vsel %vm746, %v5533, %v5537
        %v5539 = vshrl.u32 %v5205, 16
        %v5541 = vrot.slane %v5539, 4
        %v5542 = vor.u32 %v5541, %v5537
        %v5543 = vrot.slane %v5542, 4
        %v5545 = vshll.u32 %v5206, 16
        %v5547 = vrot.slane %v5545, 5
        %v5548 = vsel %vm746, %v5543, %v5547
        %v5550 = vshrl.u32 %v5207, 16
        %v5552 = vrot.slane %v5550, 4
        %v5553 = vshll.u32 %v5207, 16
        %v5555 = vrot.slane %v5553, 5
        %v5556 = vor.u32 %v5552, %v5555
        %v5557 = vrot.slane %v5556, 4
        %v5559 = vshll.u32 %v5208, 16
        %v5561 = vrot.slane %v5559, 5
        %v5562 = vsel %vm746, %v5557, %v5561
        %v5563 = vshrl.u32 %v5208, 16
        %v5565 = vrot.slane %v5563, 4
        %v5566 = vor.u32 %v5565, %v5561
        %v5567 = vrot.slane %v5566, 4
        %v5569 = vshll.u32 %v5209, 16
        %v5571 = vrot.slane %v5569, 5
        %v5572 = vsel %vm746, %v5567, %v5571
        %v5574 = vshrl.u32 %v5210, 16
        %v5576 = vrot.slane %v5574, 4
        %v5577 = vshll.u32 %v5210, 16
        %v5579 = vrot.slane %v5577, 5
        %v5580 = vor.u32 %v5576, %v5579
        %v5581 = vrot.slane %v5580, 4
        %v5583 = vshll.u32 %v5211, 16
        %v5585 = vrot.slane %v5583, 5
        %v5586 = vsel %vm746, %v5581, %v5585
        %v5587 = vshrl.u32 %v5211, 16
        %v5589 = vrot.slane %v5587, 4
        %v5590 = vor.u32 %v5589, %v5585
        %v5591 = vrot.slane %v5590, 4
        %v5593 = vshll.u32 %v5212, 16
        %v5595 = vrot.slane %v5593, 5
        %v5596 = vsel %vm746, %v5591, %v5595
        %v5629 = vunpack.c.l.bf16 %v5226
        %v5630 = vunpack.c.l.bf16 %v5236
        %v5631 = vunpack.c.l.bf16 %v5250
        %v5632 = vunpack.c.l.bf16 %v5260
        %v5633 = vunpack.c.l.bf16 %v5274
        %v5634 = vunpack.c.l.bf16 %v5284
        %v5635 = vunpack.c.l.bf16 %v5298
        %v5636 = vunpack.c.l.bf16 %v5308
        %v5637 = vunpack.c.l.bf16 %v5322
        %v5638 = vunpack.c.l.bf16 %v5332
        %v5639 = vunpack.c.l.bf16 %v5346
        %v5640 = vunpack.c.l.bf16 %v5356
        %v5641 = vunpack.c.l.bf16 %v5370
        %v5642 = vunpack.c.l.bf16 %v5380
        %v5643 = vunpack.c.l.bf16 %v5394
        %v5644 = vunpack.c.l.bf16 %v5404
        %v5645 = vunpack.c.l.bf16 %v5418
        %v5646 = vunpack.c.l.bf16 %v5428
        %v5647 = vunpack.c.l.bf16 %v5442
        %v5648 = vunpack.c.l.bf16 %v5452
        %v5649 = vunpack.c.l.bf16 %v5466
        %v5650 = vunpack.c.l.bf16 %v5476
        %v5651 = vunpack.c.l.bf16 %v5490
        %v5652 = vunpack.c.l.bf16 %v5500
        %v5653 = vunpack.c.l.bf16 %v5514
        %v5654 = vunpack.c.l.bf16 %v5524
        %v5655 = vunpack.c.l.bf16 %v5538
        %v5656 = vunpack.c.l.bf16 %v5548
        %v5657 = vunpack.c.l.bf16 %v5562
        %v5658 = vunpack.c.l.bf16 %v5572
        %v5659 = vunpack.c.l.bf16 %v5586
        %v5660 = vunpack.c.l.bf16 %v5596
        %v5661 = vld [vmem:[%s3 + $0xa] sm:$0x1]
        %5663 = vset.pattern.permute.xlu0 0
        %5664 = vperm.xlu0 %5663, %v5629
        %v5665 = vpop.permute.xlu0 %5664
        %5668 = vset.pattern.permute.xlu0 0
        %5669 = vperm.xlu0 %5668, %v5630
        %v5670 = vpop.permute.xlu0 %5669
        %5673 = vset.pattern.permute.xlu0 0
        %5674 = vperm.xlu0 %5673, %v5631
        %v5675 = vpop.permute.xlu0 %5674
        %5678 = vset.pattern.permute.xlu0 0
        %5679 = vperm.xlu0 %5678, %v5632
        %v5680 = vpop.permute.xlu0 %5679
        %5683 = vset.pattern.permute.xlu0 0
        %5684 = vperm.xlu0 %5683, %v5633
        %v5685 = vpop.permute.xlu0 %5684
        %5688 = vset.pattern.permute.xlu0 0
        %5689 = vperm.xlu0 %5688, %v5634
        %v5690 = vpop.permute.xlu0 %5689
        %5693 = vset.pattern.permute.xlu0 0
        %5694 = vperm.xlu0 %5693, %v5635
        %v5695 = vpop.permute.xlu0 %5694
        %5698 = vset.pattern.permute.xlu0 0
        %5699 = vperm.xlu0 %5698, %v5636
        %v5700 = vpop.permute.xlu0 %5699
        %5703 = vset.pattern.permute.xlu0 0
        %5704 = vperm.xlu0 %5703, %v5637
        %v5705 = vpop.permute.xlu0 %5704
        %5708 = vset.pattern.permute.xlu0 0
        %5709 = vperm.xlu0 %5708, %v5638
        %v5710 = vpop.permute.xlu0 %5709
        %5713 = vset.pattern.permute.xlu0 0
        %5714 = vperm.xlu0 %5713, %v5639
        %v5715 = vpop.permute.xlu0 %5714
        %5718 = vset.pattern.permute.xlu0 0
        %5719 = vperm.xlu0 %5718, %v5640
        %v5720 = vpop.permute.xlu0 %5719
        %5723 = vset.pattern.permute.xlu0 0
        %5724 = vperm.xlu0 %5723, %v5641
        %v5725 = vpop.permute.xlu0 %5724
        %5728 = vset.pattern.permute.xlu0 0
        %5729 = vperm.xlu0 %5728, %v5642
        %v5730 = vpop.permute.xlu0 %5729
        %5733 = vset.pattern.permute.xlu0 0
        %5734 = vperm.xlu0 %5733, %v5643
        %v5735 = vpop.permute.xlu0 %5734
        %5738 = vset.pattern.permute.xlu0 0
        %5739 = vperm.xlu0 %5738, %v5644
        %v5740 = vpop.permute.xlu0 %5739
        %5743 = vset.pattern.permute.xlu0 0
        %5744 = vperm.xlu0 %5743, %v5645
        %v5745 = vpop.permute.xlu0 %5744
        %5748 = vset.pattern.permute.xlu0 0
        %5749 = vperm.xlu0 %5748, %v5646
        %v5750 = vpop.permute.xlu0 %5749
        %5753 = vset.pattern.permute.xlu0 0
        %5754 = vperm.xlu0 %5753, %v5647
        %v5755 = vpop.permute.xlu0 %5754
        %5758 = vset.pattern.permute.xlu0 0
        %5759 = vperm.xlu0 %5758, %v5648
        %v5760 = vpop.permute.xlu0 %5759
        %5763 = vset.pattern.permute.xlu0 0
        %5764 = vperm.xlu0 %5763, %v5649
        %v5765 = vpop.permute.xlu0 %5764
        %5768 = vset.pattern.permute.xlu0 0
        %5769 = vperm.xlu0 %5768, %v5650
        %v5770 = vpop.permute.xlu0 %5769
        %5773 = vset.pattern.permute.xlu0 0
        %5774 = vperm.xlu0 %5773, %v5651
        %v5775 = vpop.permute.xlu0 %5774
        %5778 = vset.pattern.permute.xlu0 0
        %5779 = vperm.xlu0 %5778, %v5652
        %v5780 = vpop.permute.xlu0 %5779
        %5783 = vset.pattern.permute.xlu0 0
        %5784 = vperm.xlu0 %5783, %v5653
        %v5785 = vpop.permute.xlu0 %5784
        %5788 = vset.pattern.permute.xlu0 0
        %5789 = vperm.xlu0 %5788, %v5654
        %v5790 = vpop.permute.xlu0 %5789
        %5793 = vset.pattern.permute.xlu0 0
        %5794 = vperm.xlu0 %5793, %v5655
        %v5795 = vpop.permute.xlu0 %5794
        %5798 = vset.pattern.permute.xlu0 0
        %5799 = vperm.xlu0 %5798, %v5656
        %v5800 = vpop.permute.xlu0 %5799
        %5803 = vset.pattern.permute.xlu0 0
        %5804 = vperm.xlu0 %5803, %v5657
        %v5805 = vpop.permute.xlu0 %5804
        %5808 = vset.pattern.permute.xlu0 0
        %5809 = vperm.xlu0 %5808, %v5658
        %v5810 = vpop.permute.xlu0 %5809
        %5813 = vset.pattern.permute.xlu0 0
        %5814 = vperm.xlu0 %5813, %v5659
        %v5815 = vpop.permute.xlu0 %5814
        %5818 = vset.pattern.permute.xlu0 0
        %5819 = vperm.xlu0 %5818, %v5660
        %v5820 = vpop.permute.xlu0 %5819
        %v5822 = vlaneseq
        %v5823 = vshrl.u32 %v5822, 7
        %v5824 = vsub.s32 0, %v5823
        %v5825 = vrot.slane %v5661, %v5824
        %v5826 = vmul.f32 %v5665, %v5825
        %v5827 = vmul.f32 %v5670, %v5825
        %v5828 = vmul.f32 %v5675, %v5825
        %v5829 = vmul.f32 %v5680, %v5825
        %v5830 = vmul.f32 %v5685, %v5825
        %v5831 = vmul.f32 %v5690, %v5825
        %v5832 = vmul.f32 %v5695, %v5825
        %v5833 = vmul.f32 %v5700, %v5825
        %v5834 = vmul.f32 %v5705, %v5825
        %v5835 = vmul.f32 %v5710, %v5825
        %v5836 = vmul.f32 %v5715, %v5825
        %v5837 = vmul.f32 %v5720, %v5825
        %v5838 = vmul.f32 %v5725, %v5825
        %v5839 = vmul.f32 %v5730, %v5825
        %v5840 = vmul.f32 %v5735, %v5825
        %v5841 = vmul.f32 %v5740, %v5825
        %v5842 = vmul.f32 %v5745, %v5825
        %v5843 = vmul.f32 %v5750, %v5825
        %v5844 = vmul.f32 %v5755, %v5825
        %v5845 = vmul.f32 %v5760, %v5825
        %v5846 = vmul.f32 %v5765, %v5825
        %v5847 = vmul.f32 %v5770, %v5825
        %v5848 = vmul.f32 %v5775, %v5825
        %v5849 = vmul.f32 %v5780, %v5825
        %v5850 = vmul.f32 %v5785, %v5825
        %v5851 = vmul.f32 %v5790, %v5825
        %v5852 = vmul.f32 %v5795, %v5825
        %v5853 = vmul.f32 %v5800, %v5825
        %v5854 = vmul.f32 %v5805, %v5825
        %v5855 = vmul.f32 %v5810, %v5825
        %v5856 = vmul.f32 %v5815, %v5825
        %v5857 = vmul.f32 %v5820, %v5825
        %v5858 = vadd.f32 %v5133, %v5826
        %v5859 = vadd.f32 %v5134, %v5827
        %v5860 = vadd.f32 %v5135, %v5828
        %v5861 = vadd.f32 %v5136, %v5829
        %v5862 = vadd.f32 %v5137, %v5830
        %v5863 = vadd.f32 %v5138, %v5831
        %v5864 = vadd.f32 %v5139, %v5832
        %v5865 = vadd.f32 %v5140, %v5833
        %v5866 = vadd.f32 %v5141, %v5834
        %v5867 = vadd.f32 %v5142, %v5835
        %v5868 = vadd.f32 %v5143, %v5836
        %v5869 = vadd.f32 %v5144, %v5837
        %v5870 = vadd.f32 %v5145, %v5838
        %v5871 = vadd.f32 %v5146, %v5839
        %v5872 = vadd.f32 %v5147, %v5840
        %v5873 = vadd.f32 %v5148, %v5841
        %v5874 = vadd.f32 %v5149, %v5842
        %v5875 = vadd.f32 %v5150, %v5843
        %v5876 = vadd.f32 %v5151, %v5844
        %v5877 = vadd.f32 %v5152, %v5845
        %v5878 = vadd.f32 %v5153, %v5846
        %v5879 = vadd.f32 %v5154, %v5847
        %v5880 = vadd.f32 %v5155, %v5848
        %v5881 = vadd.f32 %v5156, %v5849
        %v5882 = vadd.f32 %v5157, %v5850
        %v5883 = vadd.f32 %v5158, %v5851
        %v5884 = vadd.f32 %v5159, %v5852
        %v5885 = vadd.f32 %v5160, %v5853
        %v5886 = vadd.f32 %v5161, %v5854
        %v5887 = vadd.f32 %v5162, %v5855
        %v5888 = vadd.f32 %v5163, %v5856
        %v5889 = vadd.f32 %v5164, %v5857
        %v5890 = vld [vmem:[%s390] sm:$0xe]
        %v5891 = vld [vmem:[%s390 + $0xc] sm:$0xe]
        %v5892 = vld [vmem:[%s390 + $0x18] sm:$0xe]
        %v5893 = vld [vmem:[%s390 + $0x24] sm:$0xe]
        %v5894 = vld [vmem:[%s390 + $0x30] sm:$0xe]
        %v5895 = vld [vmem:[%s390 + $0x3c] sm:$0xe]
        %v5896 = vld [vmem:[%s390 + $0x48] sm:$0xe]
        %v5897 = vld [vmem:[%s390 + $0x54] sm:$0xe]
        %v5898 = vld [vmem:[%s390 + $0x60] sm:$0xe]
        %v5899 = vld [vmem:[%s390 + $0x6c] sm:$0xe]
        %v5900 = vld [vmem:[%s390 + $0x78] sm:$0xe]
        %v5901 = vld [vmem:[%s390 + $0x84] sm:$0xe]
        %v5902 = vld [vmem:[%s390 + $0x90] sm:$0xe]
        %v5903 = vld [vmem:[%s390 + $0x9c] sm:$0xe]
        %v5904 = vld [vmem:[%s390 + $0xa8] sm:$0xe]
        %v5905 = vld [vmem:[%s390 + $0xb4] sm:$0xe]
        %v5954 = vrot.slane %v5890, 5
        %v5955 = vrot.slane %v5954, 4
        %v5956 = vrot.slane %v5166, 5
        %v5957 = vsel %vm1490, %v5955, %v5956
        %v5958 = vrot.slane %v5956, 4
        %v5959 = vrot.slane %v5167, 5
        %v5960 = vsel %vm1490, %v5958, %v5959
        %v5961 = vrot.slane %v5891, 5
        %v5962 = vrot.slane %v5961, 4
        %v5963 = vrot.slane %v5169, 5
        %v5964 = vsel %vm1490, %v5962, %v5963
        %v5965 = vrot.slane %v5963, 4
        %v5966 = vrot.slane %v5170, 5
        %v5967 = vsel %vm1490, %v5965, %v5966
        %v5968 = vrot.slane %v5892, 5
        %v5969 = vrot.slane %v5968, 4
        %v5970 = vrot.slane %v5172, 5
        %v5971 = vsel %vm1490, %v5969, %v5970
        %v5972 = vrot.slane %v5970, 4
        %v5973 = vrot.slane %v5173, 5
        %v5974 = vsel %vm1490, %v5972, %v5973
        %v5975 = vrot.slane %v5893, 5
        %v5976 = vrot.slane %v5975, 4
        %v5977 = vrot.slane %v5175, 5
        %v5978 = vsel %vm1490, %v5976, %v5977
        %v5979 = vrot.slane %v5977, 4
        %v5980 = vrot.slane %v5176, 5
        %v5981 = vsel %vm1490, %v5979, %v5980
        %v5982 = vrot.slane %v5894, 5
        %v5983 = vrot.slane %v5982, 4
        %v5984 = vrot.slane %v5178, 5
        %v5985 = vsel %vm1490, %v5983, %v5984
        %v5986 = vrot.slane %v5984, 4
        %v5987 = vrot.slane %v5179, 5
        %v5988 = vsel %vm1490, %v5986, %v5987
        %v5989 = vrot.slane %v5895, 5
        %v5990 = vrot.slane %v5989, 4
        %v5991 = vrot.slane %v5181, 5
        %v5992 = vsel %vm1490, %v5990, %v5991
        %v5993 = vrot.slane %v5991, 4
        %v5994 = vrot.slane %v5182, 5
        %v5995 = vsel %vm1490, %v5993, %v5994
        %v5996 = vrot.slane %v5896, 5
        %v5997 = vrot.slane %v5996, 4
        %v5998 = vrot.slane %v5184, 5
        %v5999 = vsel %vm1490, %v5997, %v5998
        %v6000 = vrot.slane %v5998, 4
        %v6001 = vrot.slane %v5185, 5
        %v6002 = vsel %vm1490, %v6000, %v6001
        %v6003 = vrot.slane %v5897, 5
        %v6004 = vrot.slane %v6003, 4
        %v6005 = vrot.slane %v5187, 5
        %v6006 = vsel %vm1490, %v6004, %v6005
        %v6007 = vrot.slane %v6005, 4
        %v6008 = vrot.slane %v5188, 5
        %v6009 = vsel %vm1490, %v6007, %v6008
        %v6010 = vrot.slane %v5898, 5
        %v6011 = vrot.slane %v6010, 4
        %v6012 = vrot.slane %v5190, 5
        %v6013 = vsel %vm1490, %v6011, %v6012
        %v6014 = vrot.slane %v6012, 4
        %v6015 = vrot.slane %v5191, 5
        %v6016 = vsel %vm1490, %v6014, %v6015
        %v6017 = vrot.slane %v5899, 5
        %v6018 = vrot.slane %v6017, 4
        %v6019 = vrot.slane %v5193, 5
        %v6020 = vsel %vm1490, %v6018, %v6019
        %v6021 = vrot.slane %v6019, 4
        %v6022 = vrot.slane %v5194, 5
        %v6023 = vsel %vm1490, %v6021, %v6022
        %v6024 = vrot.slane %v5900, 5
        %v6025 = vrot.slane %v6024, 4
        %v6026 = vrot.slane %v5196, 5
        %v6027 = vsel %vm1490, %v6025, %v6026
        %v6028 = vrot.slane %v6026, 4
        %v6029 = vrot.slane %v5197, 5
        %v6030 = vsel %vm1490, %v6028, %v6029
        %v6031 = vrot.slane %v5901, 5
        %v6032 = vrot.slane %v6031, 4
        %v6033 = vrot.slane %v5199, 5
        %v6034 = vsel %vm1490, %v6032, %v6033
        %v6035 = vrot.slane %v6033, 4
        %v6036 = vrot.slane %v5200, 5
        %v6037 = vsel %vm1490, %v6035, %v6036
        %v6038 = vrot.slane %v5902, 5
        %v6039 = vrot.slane %v6038, 4
        %v6040 = vrot.slane %v5202, 5
        %v6041 = vsel %vm1490, %v6039, %v6040
        %v6042 = vrot.slane %v6040, 4
        %v6043 = vrot.slane %v5203, 5
        %v6044 = vsel %vm1490, %v6042, %v6043
        %v6045 = vrot.slane %v5903, 5
        %v6046 = vrot.slane %v6045, 4
        %v6047 = vrot.slane %v5205, 5
        %v6048 = vsel %vm1490, %v6046, %v6047
        %v6049 = vrot.slane %v6047, 4
        %v6050 = vrot.slane %v5206, 5
        %v6051 = vsel %vm1490, %v6049, %v6050
        %v6052 = vrot.slane %v5904, 5
        %v6053 = vrot.slane %v6052, 4
        %v6054 = vrot.slane %v5208, 5
        %v6055 = vsel %vm1490, %v6053, %v6054
        %v6056 = vrot.slane %v6054, 4
        %v6057 = vrot.slane %v5209, 5
        %v6058 = vsel %vm1490, %v6056, %v6057
        %v6059 = vrot.slane %v5905, 5
        %v6060 = vrot.slane %v6059, 4
        %v6061 = vrot.slane %v5211, 5
        %v6062 = vsel %vm1490, %v6060, %v6061
        %v6063 = vrot.slane %v6061, 4
        %v6064 = vrot.slane %v5212, 5
        %v6065 = vsel %vm1490, %v6063, %v6064
        %v6098 = vunpack.c.l.bf16 %v5957
        %v6099 = vunpack.c.l.bf16 %v5960
        %v6100 = vunpack.c.l.bf16 %v5964
        %v6101 = vunpack.c.l.bf16 %v5967
        %v6102 = vunpack.c.l.bf16 %v5971
        %v6103 = vunpack.c.l.bf16 %v5974
        %v6104 = vunpack.c.l.bf16 %v5978
        %v6105 = vunpack.c.l.bf16 %v5981
        %v6106 = vunpack.c.l.bf16 %v5985
        %v6107 = vunpack.c.l.bf16 %v5988
        %v6108 = vunpack.c.l.bf16 %v5992
        %v6109 = vunpack.c.l.bf16 %v5995
        %v6110 = vunpack.c.l.bf16 %v5999
        %v6111 = vunpack.c.l.bf16 %v6002
        %v6112 = vunpack.c.l.bf16 %v6006
        %v6113 = vunpack.c.l.bf16 %v6009
        %v6114 = vunpack.c.l.bf16 %v6013
        %v6115 = vunpack.c.l.bf16 %v6016
        %v6116 = vunpack.c.l.bf16 %v6020
        %v6117 = vunpack.c.l.bf16 %v6023
        %v6118 = vunpack.c.l.bf16 %v6027
        %v6119 = vunpack.c.l.bf16 %v6030
        %v6120 = vunpack.c.l.bf16 %v6034
        %v6121 = vunpack.c.l.bf16 %v6037
        %v6122 = vunpack.c.l.bf16 %v6041
        %v6123 = vunpack.c.l.bf16 %v6044
        %v6124 = vunpack.c.l.bf16 %v6048
        %v6125 = vunpack.c.l.bf16 %v6051
        %v6126 = vunpack.c.l.bf16 %v6055
        %v6127 = vunpack.c.l.bf16 %v6058
        %v6128 = vunpack.c.l.bf16 %v6062
        %v6129 = vunpack.c.l.bf16 %v6065
        %v6130 = vld [vmem:[%s3 + $0xb] sm:$0x1]
        %6132 = vset.pattern.permute.xlu0 0
        %6133 = vperm.xlu0 %6132, %v6098
        %v6134 = vpop.permute.xlu0 %6133
        %6137 = vset.pattern.permute.xlu0 0
        %6138 = vperm.xlu0 %6137, %v6099
        %v6139 = vpop.permute.xlu0 %6138
        %6142 = vset.pattern.permute.xlu0 0
        %6143 = vperm.xlu0 %6142, %v6100
        %v6144 = vpop.permute.xlu0 %6143
        %6147 = vset.pattern.permute.xlu0 0
        %6148 = vperm.xlu0 %6147, %v6101
        %v6149 = vpop.permute.xlu0 %6148
        %6152 = vset.pattern.permute.xlu0 0
        %6153 = vperm.xlu0 %6152, %v6102
        %v6154 = vpop.permute.xlu0 %6153
        %6157 = vset.pattern.permute.xlu0 0
        %6158 = vperm.xlu0 %6157, %v6103
        %v6159 = vpop.permute.xlu0 %6158
        %6162 = vset.pattern.permute.xlu0 0
        %6163 = vperm.xlu0 %6162, %v6104
        %v6164 = vpop.permute.xlu0 %6163
        %6167 = vset.pattern.permute.xlu0 0
        %6168 = vperm.xlu0 %6167, %v6105
        %v6169 = vpop.permute.xlu0 %6168
        %6172 = vset.pattern.permute.xlu0 0
        %6173 = vperm.xlu0 %6172, %v6106
        %v6174 = vpop.permute.xlu0 %6173
        %6177 = vset.pattern.permute.xlu0 0
        %6178 = vperm.xlu0 %6177, %v6107
        %v6179 = vpop.permute.xlu0 %6178
        %6182 = vset.pattern.permute.xlu0 0
        %6183 = vperm.xlu0 %6182, %v6108
        %v6184 = vpop.permute.xlu0 %6183
        %6187 = vset.pattern.permute.xlu0 0
        %6188 = vperm.xlu0 %6187, %v6109
        %v6189 = vpop.permute.xlu0 %6188
        %6192 = vset.pattern.permute.xlu0 0
        %6193 = vperm.xlu0 %6192, %v6110
        %v6194 = vpop.permute.xlu0 %6193
        %6197 = vset.pattern.permute.xlu0 0
        %6198 = vperm.xlu0 %6197, %v6111
        %v6199 = vpop.permute.xlu0 %6198
        %6202 = vset.pattern.permute.xlu0 0
        %6203 = vperm.xlu0 %6202, %v6112
        %v6204 = vpop.permute.xlu0 %6203
        %6207 = vset.pattern.permute.xlu0 0
        %6208 = vperm.xlu0 %6207, %v6113
        %v6209 = vpop.permute.xlu0 %6208
        %6212 = vset.pattern.permute.xlu0 0
        %6213 = vperm.xlu0 %6212, %v6114
        %v6214 = vpop.permute.xlu0 %6213
        %6217 = vset.pattern.permute.xlu0 0
        %6218 = vperm.xlu0 %6217, %v6115
        %v6219 = vpop.permute.xlu0 %6218
        %6222 = vset.pattern.permute.xlu0 0
        %6223 = vperm.xlu0 %6222, %v6116
        %v6224 = vpop.permute.xlu0 %6223
        %6227 = vset.pattern.permute.xlu0 0
        %6228 = vperm.xlu0 %6227, %v6117
        %v6229 = vpop.permute.xlu0 %6228
        %6232 = vset.pattern.permute.xlu0 0
        %6233 = vperm.xlu0 %6232, %v6118
        %v6234 = vpop.permute.xlu0 %6233
        %6237 = vset.pattern.permute.xlu0 0
        %6238 = vperm.xlu0 %6237, %v6119
        %v6239 = vpop.permute.xlu0 %6238
        %6242 = vset.pattern.permute.xlu0 0
        %6243 = vperm.xlu0 %6242, %v6120
        %v6244 = vpop.permute.xlu0 %6243
        %6247 = vset.pattern.permute.xlu0 0
        %6248 = vperm.xlu0 %6247, %v6121
        %v6249 = vpop.permute.xlu0 %6248
        %6252 = vset.pattern.permute.xlu0 0
        %6253 = vperm.xlu0 %6252, %v6122
        %v6254 = vpop.permute.xlu0 %6253
        %6257 = vset.pattern.permute.xlu0 0
        %6258 = vperm.xlu0 %6257, %v6123
        %v6259 = vpop.permute.xlu0 %6258
        %6262 = vset.pattern.permute.xlu0 0
        %6263 = vperm.xlu0 %6262, %v6124
        %v6264 = vpop.permute.xlu0 %6263
        %6267 = vset.pattern.permute.xlu0 0
        %6268 = vperm.xlu0 %6267, %v6125
        %v6269 = vpop.permute.xlu0 %6268
        %6272 = vset.pattern.permute.xlu0 0
        %6273 = vperm.xlu0 %6272, %v6126
        %v6274 = vpop.permute.xlu0 %6273
        %6277 = vset.pattern.permute.xlu0 0
        %6278 = vperm.xlu0 %6277, %v6127
        %v6279 = vpop.permute.xlu0 %6278
        %6282 = vset.pattern.permute.xlu0 0
        %6283 = vperm.xlu0 %6282, %v6128
        %v6284 = vpop.permute.xlu0 %6283
        %6287 = vset.pattern.permute.xlu0 0
        %6288 = vperm.xlu0 %6287, %v6129
        %v6289 = vpop.permute.xlu0 %6288
        %v6291 = vlaneseq
        %v6292 = vshrl.u32 %v6291, 7
        %v6293 = vsub.s32 0, %v6292
        %v6294 = vrot.slane %v6130, %v6293
        %v6295 = vmul.f32 %v6134, %v6294
        %v6296 = vmul.f32 %v6139, %v6294
        %v6297 = vmul.f32 %v6144, %v6294
        %v6298 = vmul.f32 %v6149, %v6294
        %v6299 = vmul.f32 %v6154, %v6294
        %v6300 = vmul.f32 %v6159, %v6294
        %v6301 = vmul.f32 %v6164, %v6294
        %v6302 = vmul.f32 %v6169, %v6294
        %v6303 = vmul.f32 %v6174, %v6294
        %v6304 = vmul.f32 %v6179, %v6294
        %v6305 = vmul.f32 %v6184, %v6294
        %v6306 = vmul.f32 %v6189, %v6294
        %v6307 = vmul.f32 %v6194, %v6294
        %v6308 = vmul.f32 %v6199, %v6294
        %v6309 = vmul.f32 %v6204, %v6294
        %v6310 = vmul.f32 %v6209, %v6294
        %v6311 = vmul.f32 %v6214, %v6294
        %v6312 = vmul.f32 %v6219, %v6294
        %v6313 = vmul.f32 %v6224, %v6294
        %v6314 = vmul.f32 %v6229, %v6294
        %v6315 = vmul.f32 %v6234, %v6294
        %v6316 = vmul.f32 %v6239, %v6294
        %v6317 = vmul.f32 %v6244, %v6294
        %v6318 = vmul.f32 %v6249, %v6294
        %v6319 = vmul.f32 %v6254, %v6294
        %v6320 = vmul.f32 %v6259, %v6294
        %v6321 = vmul.f32 %v6264, %v6294
        %v6322 = vmul.f32 %v6269, %v6294
        %v6323 = vmul.f32 %v6274, %v6294
        %v6324 = vmul.f32 %v6279, %v6294
        %v6325 = vmul.f32 %v6284, %v6294
        %v6326 = vmul.f32 %v6289, %v6294
        %v6327 = vadd.f32 %v5858, %v6295
        %v6328 = vadd.f32 %v5859, %v6296
        %v6329 = vadd.f32 %v5860, %v6297
        %v6330 = vadd.f32 %v5861, %v6298
        %v6331 = vadd.f32 %v5862, %v6299
        %v6332 = vadd.f32 %v5863, %v6300
        %v6333 = vadd.f32 %v5864, %v6301
        %v6334 = vadd.f32 %v5865, %v6302
        %v6335 = vadd.f32 %v5866, %v6303
        %v6336 = vadd.f32 %v5867, %v6304
        %v6337 = vadd.f32 %v5868, %v6305
        %v6338 = vadd.f32 %v5869, %v6306
        %v6339 = vadd.f32 %v5870, %v6307
        %v6340 = vadd.f32 %v5871, %v6308
        %v6341 = vadd.f32 %v5872, %v6309
        %v6342 = vadd.f32 %v5873, %v6310
        %v6343 = vadd.f32 %v5874, %v6311
        %v6344 = vadd.f32 %v5875, %v6312
        %v6345 = vadd.f32 %v5876, %v6313
        %v6346 = vadd.f32 %v5877, %v6314
        %v6347 = vadd.f32 %v5878, %v6315
        %v6348 = vadd.f32 %v5879, %v6316
        %v6349 = vadd.f32 %v5880, %v6317
        %v6350 = vadd.f32 %v5881, %v6318
        %v6351 = vadd.f32 %v5882, %v6319
        %v6352 = vadd.f32 %v5883, %v6320
        %v6353 = vadd.f32 %v5884, %v6321
        %v6354 = vadd.f32 %v5885, %v6322
        %v6355 = vadd.f32 %v5886, %v6323
        %v6356 = vadd.f32 %v5887, %v6324
        %v6357 = vadd.f32 %v5888, %v6325
        %v6358 = vadd.f32 %v5889, %v6326
        %s6359 = scalar_lea.vmem %s390, 12
        %v6360 = vld [vmem:[%s6359] sm:$0xf]
        %v6361 = vld [vmem:[%s6359 + $0x4] sm:$0xf]
        %v6362 = vld [vmem:[%s6359 + $0xc] sm:$0xf]
        %v6363 = vld [vmem:[%s6359 + $0x10] sm:$0xf]
        %v6364 = vld [vmem:[%s6359 + $0x18] sm:$0xf]
        %v6365 = vld [vmem:[%s6359 + $0x1c] sm:$0xf]
        %v6366 = vld [vmem:[%s6359 + $0x24] sm:$0xf]
        %v6367 = vld [vmem:[%s6359 + $0x28] sm:$0xf]
        %v6368 = vld [vmem:[%s6359 + $0x30] sm:$0xf]
        %v6369 = vld [vmem:[%s6359 + $0x34] sm:$0xf]
        %v6370 = vld [vmem:[%s6359 + $0x3c] sm:$0xf]
        %v6371 = vld [vmem:[%s6359 + $0x40] sm:$0xf]
        %v6372 = vld [vmem:[%s6359 + $0x48] sm:$0xf]
        %v6373 = vld [vmem:[%s6359 + $0x4c] sm:$0xf]
        %v6374 = vld [vmem:[%s6359 + $0x54] sm:$0xf]
        %v6375 = vld [vmem:[%s6359 + $0x58] sm:$0xf]
        %v6376 = vld [vmem:[%s6359 + $0x60] sm:$0xf]
        %v6377 = vld [vmem:[%s6359 + $0x64] sm:$0xf]
        %v6378 = vld [vmem:[%s6359 + $0x6c] sm:$0xf]
        %v6379 = vld [vmem:[%s6359 + $0x70] sm:$0xf]
        %v6380 = vld [vmem:[%s6359 + $0x78] sm:$0xf]
        %v6381 = vld [vmem:[%s6359 + $0x7c] sm:$0xf]
        %v6382 = vld [vmem:[%s6359 + $0x84] sm:$0xf]
        %v6383 = vld [vmem:[%s6359 + $0x88] sm:$0xf]
        %v6384 = vld [vmem:[%s6359 + $0x90] sm:$0xf]
        %v6385 = vld [vmem:[%s6359 + $0x94] sm:$0xf]
        %v6386 = vld [vmem:[%s6359 + $0x9c] sm:$0xf]
        %v6387 = vld [vmem:[%s6359 + $0xa0] sm:$0xf]
        %v6388 = vld [vmem:[%s6359 + $0xa8] sm:$0xf]
        %v6389 = vld [vmem:[%s6359 + $0xac] sm:$0xf]
        %v6390 = vld [vmem:[%s6359 + $0xb4] sm:$0xf]
        %v6391 = vld [vmem:[%s6359 + $0xb8] sm:$0xf]
        %v6392 = vunpack.c.l.bf16 %v6360
        %v6393 = vunpack.c.l.bf16 %v6361
        %v6394 = vunpack.c.l.bf16 %v6362
        %v6395 = vunpack.c.l.bf16 %v6363
        %v6396 = vunpack.c.l.bf16 %v6364
        %v6397 = vunpack.c.l.bf16 %v6365
        %v6398 = vunpack.c.l.bf16 %v6366
        %v6399 = vunpack.c.l.bf16 %v6367
        %v6400 = vunpack.c.l.bf16 %v6368
        %v6401 = vunpack.c.l.bf16 %v6369
        %v6402 = vunpack.c.l.bf16 %v6370
        %v6403 = vunpack.c.l.bf16 %v6371
        %v6404 = vunpack.c.l.bf16 %v6372
        %v6405 = vunpack.c.l.bf16 %v6373
        %v6406 = vunpack.c.l.bf16 %v6374
        %v6407 = vunpack.c.l.bf16 %v6375
        %v6408 = vunpack.c.l.bf16 %v6376
        %v6409 = vunpack.c.l.bf16 %v6377
        %v6410 = vunpack.c.l.bf16 %v6378
        %v6411 = vunpack.c.l.bf16 %v6379
        %v6412 = vunpack.c.l.bf16 %v6380
        %v6413 = vunpack.c.l.bf16 %v6381
        %v6414 = vunpack.c.l.bf16 %v6382
        %v6415 = vunpack.c.l.bf16 %v6383
        %v6416 = vunpack.c.l.bf16 %v6384
        %v6417 = vunpack.c.l.bf16 %v6385
        %v6418 = vunpack.c.l.bf16 %v6386
        %v6419 = vunpack.c.l.bf16 %v6387
        %v6420 = vunpack.c.l.bf16 %v6388
        %v6421 = vunpack.c.l.bf16 %v6389
        %v6422 = vunpack.c.l.bf16 %v6390
        %v6423 = vunpack.c.l.bf16 %v6391
        %v6424 = vld [vmem:[%s3 + $0xc] sm:$0x1]
        %6426 = vset.pattern.permute.xlu0 0
        %6427 = vperm.xlu0 %6426, %v6392
        %v6428 = vpop.permute.xlu0 %6427
        %6431 = vset.pattern.permute.xlu0 0
        %6432 = vperm.xlu0 %6431, %v6393
        %v6433 = vpop.permute.xlu0 %6432
        %6436 = vset.pattern.permute.xlu0 0
        %6437 = vperm.xlu0 %6436, %v6394
        %v6438 = vpop.permute.xlu0 %6437
        %6441 = vset.pattern.permute.xlu0 0
        %6442 = vperm.xlu0 %6441, %v6395
        %v6443 = vpop.permute.xlu0 %6442
        %6446 = vset.pattern.permute.xlu0 0
        %6447 = vperm.xlu0 %6446, %v6396
        %v6448 = vpop.permute.xlu0 %6447
        %6451 = vset.pattern.permute.xlu0 0
        %6452 = vperm.xlu0 %6451, %v6397
        %v6453 = vpop.permute.xlu0 %6452
        %6456 = vset.pattern.permute.xlu0 0
        %6457 = vperm.xlu0 %6456, %v6398
        %v6458 = vpop.permute.xlu0 %6457
        %6461 = vset.pattern.permute.xlu0 0
        %6462 = vperm.xlu0 %6461, %v6399
        %v6463 = vpop.permute.xlu0 %6462
        %6466 = vset.pattern.permute.xlu0 0
        %6467 = vperm.xlu0 %6466, %v6400
        %v6468 = vpop.permute.xlu0 %6467
        %6471 = vset.pattern.permute.xlu0 0
        %6472 = vperm.xlu0 %6471, %v6401
        %v6473 = vpop.permute.xlu0 %6472
        %6476 = vset.pattern.permute.xlu0 0
        %6477 = vperm.xlu0 %6476, %v6402
        %v6478 = vpop.permute.xlu0 %6477
        %6481 = vset.pattern.permute.xlu0 0
        %6482 = vperm.xlu0 %6481, %v6403
        %v6483 = vpop.permute.xlu0 %6482
        %6486 = vset.pattern.permute.xlu0 0
        %6487 = vperm.xlu0 %6486, %v6404
        %v6488 = vpop.permute.xlu0 %6487
        %6491 = vset.pattern.permute.xlu0 0
        %6492 = vperm.xlu0 %6491, %v6405
        %v6493 = vpop.permute.xlu0 %6492
        %6496 = vset.pattern.permute.xlu0 0
        %6497 = vperm.xlu0 %6496, %v6406
        %v6498 = vpop.permute.xlu0 %6497
        %6501 = vset.pattern.permute.xlu0 0
        %6502 = vperm.xlu0 %6501, %v6407
        %v6503 = vpop.permute.xlu0 %6502
        %6506 = vset.pattern.permute.xlu0 0
        %6507 = vperm.xlu0 %6506, %v6408
        %v6508 = vpop.permute.xlu0 %6507
        %6511 = vset.pattern.permute.xlu0 0
        %6512 = vperm.xlu0 %6511, %v6409
        %v6513 = vpop.permute.xlu0 %6512
        %6516 = vset.pattern.permute.xlu0 0
        %6517 = vperm.xlu0 %6516, %v6410
        %v6518 = vpop.permute.xlu0 %6517
        %6521 = vset.pattern.permute.xlu0 0
        %6522 = vperm.xlu0 %6521, %v6411
        %v6523 = vpop.permute.xlu0 %6522
        %6526 = vset.pattern.permute.xlu0 0
        %6527 = vperm.xlu0 %6526, %v6412
        %v6528 = vpop.permute.xlu0 %6527
        %6531 = vset.pattern.permute.xlu0 0
        %6532 = vperm.xlu0 %6531, %v6413
        %v6533 = vpop.permute.xlu0 %6532
        %6536 = vset.pattern.permute.xlu0 0
        %6537 = vperm.xlu0 %6536, %v6414
        %v6538 = vpop.permute.xlu0 %6537
        %6541 = vset.pattern.permute.xlu0 0
        %6542 = vperm.xlu0 %6541, %v6415
        %v6543 = vpop.permute.xlu0 %6542
        %6546 = vset.pattern.permute.xlu0 0
        %6547 = vperm.xlu0 %6546, %v6416
        %v6548 = vpop.permute.xlu0 %6547
        %6551 = vset.pattern.permute.xlu0 0
        %6552 = vperm.xlu0 %6551, %v6417
        %v6553 = vpop.permute.xlu0 %6552
        %6556 = vset.pattern.permute.xlu0 0
        %6557 = vperm.xlu0 %6556, %v6418
        %v6558 = vpop.permute.xlu0 %6557
        %6561 = vset.pattern.permute.xlu0 0
        %6562 = vperm.xlu0 %6561, %v6419
        %v6563 = vpop.permute.xlu0 %6562
        %6566 = vset.pattern.permute.xlu0 0
        %6567 = vperm.xlu0 %6566, %v6420
        %v6568 = vpop.permute.xlu0 %6567
        %6571 = vset.pattern.permute.xlu0 0
        %6572 = vperm.xlu0 %6571, %v6421
        %v6573 = vpop.permute.xlu0 %6572
        %6576 = vset.pattern.permute.xlu0 0
        %6577 = vperm.xlu0 %6576, %v6422
        %v6578 = vpop.permute.xlu0 %6577
        %6581 = vset.pattern.permute.xlu0 0
        %6582 = vperm.xlu0 %6581, %v6423
        %v6583 = vpop.permute.xlu0 %6582
        %v6585 = vlaneseq
        %v6586 = vshrl.u32 %v6585, 7
        %v6587 = vsub.s32 0, %v6586
        %v6588 = vrot.slane %v6424, %v6587
        %v6589 = vmul.f32 %v6428, %v6588
        %v6590 = vmul.f32 %v6433, %v6588
        %v6591 = vmul.f32 %v6438, %v6588
        %v6592 = vmul.f32 %v6443, %v6588
        %v6593 = vmul.f32 %v6448, %v6588
        %v6594 = vmul.f32 %v6453, %v6588
        %v6595 = vmul.f32 %v6458, %v6588
        %v6596 = vmul.f32 %v6463, %v6588
        %v6597 = vmul.f32 %v6468, %v6588
        %v6598 = vmul.f32 %v6473, %v6588
        %v6599 = vmul.f32 %v6478, %v6588
        %v6600 = vmul.f32 %v6483, %v6588
        %v6601 = vmul.f32 %v6488, %v6588
        %v6602 = vmul.f32 %v6493, %v6588
        %v6603 = vmul.f32 %v6498, %v6588
        %v6604 = vmul.f32 %v6503, %v6588
        %v6605 = vmul.f32 %v6508, %v6588
        %v6606 = vmul.f32 %v6513, %v6588
        %v6607 = vmul.f32 %v6518, %v6588
        %v6608 = vmul.f32 %v6523, %v6588
        %v6609 = vmul.f32 %v6528, %v6588
        %v6610 = vmul.f32 %v6533, %v6588
        %v6611 = vmul.f32 %v6538, %v6588
        %v6612 = vmul.f32 %v6543, %v6588
        %v6613 = vmul.f32 %v6548, %v6588
        %v6614 = vmul.f32 %v6553, %v6588
        %v6615 = vmul.f32 %v6558, %v6588
        %v6616 = vmul.f32 %v6563, %v6588
        %v6617 = vmul.f32 %v6568, %v6588
        %v6618 = vmul.f32 %v6573, %v6588
        %v6619 = vmul.f32 %v6578, %v6588
        %v6620 = vmul.f32 %v6583, %v6588
        %v6621 = vadd.f32 %v6327, %v6589
        %v6622 = vadd.f32 %v6328, %v6590
        %v6623 = vadd.f32 %v6329, %v6591
        %v6624 = vadd.f32 %v6330, %v6592
        %v6625 = vadd.f32 %v6331, %v6593
        %v6626 = vadd.f32 %v6332, %v6594
        %v6627 = vadd.f32 %v6333, %v6595
        %v6628 = vadd.f32 %v6334, %v6596
        %v6629 = vadd.f32 %v6335, %v6597
        %v6630 = vadd.f32 %v6336, %v6598
        %v6631 = vadd.f32 %v6337, %v6599
        %v6632 = vadd.f32 %v6338, %v6600
        %v6633 = vadd.f32 %v6339, %v6601
        %v6634 = vadd.f32 %v6340, %v6602
        %v6635 = vadd.f32 %v6341, %v6603
        %v6636 = vadd.f32 %v6342, %v6604
        %v6637 = vadd.f32 %v6343, %v6605
        %v6638 = vadd.f32 %v6344, %v6606
        %v6639 = vadd.f32 %v6345, %v6607
        %v6640 = vadd.f32 %v6346, %v6608
        %v6641 = vadd.f32 %v6347, %v6609
        %v6642 = vadd.f32 %v6348, %v6610
        %v6643 = vadd.f32 %v6349, %v6611
        %v6644 = vadd.f32 %v6350, %v6612
        %v6645 = vadd.f32 %v6351, %v6613
        %v6646 = vadd.f32 %v6352, %v6614
        %v6647 = vadd.f32 %v6353, %v6615
        %v6648 = vadd.f32 %v6354, %v6616
        %v6649 = vadd.f32 %v6355, %v6617
        %v6650 = vadd.f32 %v6356, %v6618
        %v6651 = vadd.f32 %v6357, %v6619
        %v6652 = vadd.f32 %v6358, %v6620
        %v6653 = vld [vmem:[%s6359] sm:$0xf]
        %v6654 = vld [vmem:[%s6359 + $0x4] sm:$0xf]
        %v6655 = vld [vmem:[%s6359 + $0x8] sm:$0x1]
        %v6656 = vld [vmem:[%s6359 + $0xc] sm:$0xf]
        %v6657 = vld [vmem:[%s6359 + $0x10] sm:$0xf]
        %v6658 = vld [vmem:[%s6359 + $0x14] sm:$0x1]
        %v6659 = vld [vmem:[%s6359 + $0x18] sm:$0xf]
        %v6660 = vld [vmem:[%s6359 + $0x1c] sm:$0xf]
        %v6661 = vld [vmem:[%s6359 + $0x20] sm:$0x1]
        %v6662 = vld [vmem:[%s6359 + $0x24] sm:$0xf]
        %v6663 = vld [vmem:[%s6359 + $0x28] sm:$0xf]
        %v6664 = vld [vmem:[%s6359 + $0x2c] sm:$0x1]
        %v6665 = vld [vmem:[%s6359 + $0x30] sm:$0xf]
        %v6666 = vld [vmem:[%s6359 + $0x34] sm:$0xf]
        %v6667 = vld [vmem:[%s6359 + $0x38] sm:$0x1]
        %v6668 = vld [vmem:[%s6359 + $0x3c] sm:$0xf]
        %v6669 = vld [vmem:[%s6359 + $0x40] sm:$0xf]
        %v6670 = vld [vmem:[%s6359 + $0x44] sm:$0x1]
        %v6671 = vld [vmem:[%s6359 + $0x48] sm:$0xf]
        %v6672 = vld [vmem:[%s6359 + $0x4c] sm:$0xf]
        %v6673 = vld [vmem:[%s6359 + $0x50] sm:$0x1]
        %v6674 = vld [vmem:[%s6359 + $0x54] sm:$0xf]
        %v6675 = vld [vmem:[%s6359 + $0x58] sm:$0xf]
        %v6676 = vld [vmem:[%s6359 + $0x5c] sm:$0x1]
        %v6677 = vld [vmem:[%s6359 + $0x60] sm:$0xf]
        %v6678 = vld [vmem:[%s6359 + $0x64] sm:$0xf]
        %v6679 = vld [vmem:[%s6359 + $0x68] sm:$0x1]
        %v6680 = vld [vmem:[%s6359 + $0x6c] sm:$0xf]
        %v6681 = vld [vmem:[%s6359 + $0x70] sm:$0xf]
        %v6682 = vld [vmem:[%s6359 + $0x74] sm:$0x1]
        %v6683 = vld [vmem:[%s6359 + $0x78] sm:$0xf]
        %v6684 = vld [vmem:[%s6359 + $0x7c] sm:$0xf]
        %v6685 = vld [vmem:[%s6359 + $0x80] sm:$0x1]
        %v6686 = vld [vmem:[%s6359 + $0x84] sm:$0xf]
        %v6687 = vld [vmem:[%s6359 + $0x88] sm:$0xf]
        %v6688 = vld [vmem:[%s6359 + $0x8c] sm:$0x1]
        %v6689 = vld [vmem:[%s6359 + $0x90] sm:$0xf]
        %v6690 = vld [vmem:[%s6359 + $0x94] sm:$0xf]
        %v6691 = vld [vmem:[%s6359 + $0x98] sm:$0x1]
        %v6692 = vld [vmem:[%s6359 + $0x9c] sm:$0xf]
        %v6693 = vld [vmem:[%s6359 + $0xa0] sm:$0xf]
        %v6694 = vld [vmem:[%s6359 + $0xa4] sm:$0x1]
        %v6695 = vld [vmem:[%s6359 + $0xa8] sm:$0xf]
        %v6696 = vld [vmem:[%s6359 + $0xac] sm:$0xf]
        %v6697 = vld [vmem:[%s6359 + $0xb0] sm:$0x1]
        %v6698 = vld [vmem:[%s6359 + $0xb4] sm:$0xf]
        %v6699 = vld [vmem:[%s6359 + $0xb8] sm:$0xf]
        %v6700 = vld [vmem:[%s6359 + $0xbc] sm:$0x1]
        %v6702 = vshrl.u32 %v6653, 16
        %v6704 = vrot.slane %v6702, 4
        %v6705 = vshll.u32 %v6653, 16
        %v6707 = vrot.slane %v6705, 5
        %v6708 = vor.u32 %v6704, %v6707
        %v6709 = vrot.slane %v6708, 4
        %v6711 = vshll.u32 %v6654, 16
        %v6713 = vrot.slane %v6711, 5
        %v6714 = vsel %vm746, %v6709, %v6713
        %v6715 = vshrl.u32 %v6654, 16
        %v6717 = vrot.slane %v6715, 4
        %v6718 = vor.u32 %v6717, %v6713
        %v6719 = vrot.slane %v6718, 4
        %v6721 = vshll.u32 %v6655, 16
        %v6723 = vrot.slane %v6721, 5
        %v6724 = vsel %vm746, %v6719, %v6723
        %v6726 = vshrl.u32 %v6656, 16
        %v6728 = vrot.slane %v6726, 4
        %v6729 = vshll.u32 %v6656, 16
        %v6731 = vrot.slane %v6729, 5
        %v6732 = vor.u32 %v6728, %v6731
        %v6733 = vrot.slane %v6732, 4
        %v6735 = vshll.u32 %v6657, 16
        %v6737 = vrot.slane %v6735, 5
        %v6738 = vsel %vm746, %v6733, %v6737
        %v6739 = vshrl.u32 %v6657, 16
        %v6741 = vrot.slane %v6739, 4
        %v6742 = vor.u32 %v6741, %v6737
        %v6743 = vrot.slane %v6742, 4
        %v6745 = vshll.u32 %v6658, 16
        %v6747 = vrot.slane %v6745, 5
        %v6748 = vsel %vm746, %v6743, %v6747
        %v6750 = vshrl.u32 %v6659, 16
        %v6752 = vrot.slane %v6750, 4
        %v6753 = vshll.u32 %v6659, 16
        %v6755 = vrot.slane %v6753, 5
        %v6756 = vor.u32 %v6752, %v6755
        %v6757 = vrot.slane %v6756, 4
        %v6759 = vshll.u32 %v6660, 16
        %v6761 = vrot.slane %v6759, 5
        %v6762 = vsel %vm746, %v6757, %v6761
        %v6763 = vshrl.u32 %v6660, 16
        %v6765 = vrot.slane %v6763, 4
        %v6766 = vor.u32 %v6765, %v6761
        %v6767 = vrot.slane %v6766, 4
        %v6769 = vshll.u32 %v6661, 16
        %v6771 = vrot.slane %v6769, 5
        %v6772 = vsel %vm746, %v6767, %v6771
        %v6774 = vshrl.u32 %v6662, 16
        %v6776 = vrot.slane %v6774, 4
        %v6777 = vshll.u32 %v6662, 16
        %v6779 = vrot.slane %v6777, 5
        %v6780 = vor.u32 %v6776, %v6779
        %v6781 = vrot.slane %v6780, 4
        %v6783 = vshll.u32 %v6663, 16
        %v6785 = vrot.slane %v6783, 5
        %v6786 = vsel %vm746, %v6781, %v6785
        %v6787 = vshrl.u32 %v6663, 16
        %v6789 = vrot.slane %v6787, 4
        %v6790 = vor.u32 %v6789, %v6785
        %v6791 = vrot.slane %v6790, 4
        %v6793 = vshll.u32 %v6664, 16
        %v6795 = vrot.slane %v6793, 5
        %v6796 = vsel %vm746, %v6791, %v6795
        %v6798 = vshrl.u32 %v6665, 16
        %v6800 = vrot.slane %v6798, 4
        %v6801 = vshll.u32 %v6665, 16
        %v6803 = vrot.slane %v6801, 5
        %v6804 = vor.u32 %v6800, %v6803
        %v6805 = vrot.slane %v6804, 4
        %v6807 = vshll.u32 %v6666, 16
        %v6809 = vrot.slane %v6807, 5
        %v6810 = vsel %vm746, %v6805, %v6809
        %v6811 = vshrl.u32 %v6666, 16
        %v6813 = vrot.slane %v6811, 4
        %v6814 = vor.u32 %v6813, %v6809
        %v6815 = vrot.slane %v6814, 4
        %v6817 = vshll.u32 %v6667, 16
        %v6819 = vrot.slane %v6817, 5
        %v6820 = vsel %vm746, %v6815, %v6819
        %v6822 = vshrl.u32 %v6668, 16
        %v6824 = vrot.slane %v6822, 4
        %v6825 = vshll.u32 %v6668, 16
        %v6827 = vrot.slane %v6825, 5
        %v6828 = vor.u32 %v6824, %v6827
        %v6829 = vrot.slane %v6828, 4
        %v6831 = vshll.u32 %v6669, 16
        %v6833 = vrot.slane %v6831, 5
        %v6834 = vsel %vm746, %v6829, %v6833
        %v6835 = vshrl.u32 %v6669, 16
        %v6837 = vrot.slane %v6835, 4
        %v6838 = vor.u32 %v6837, %v6833
        %v6839 = vrot.slane %v6838, 4
        %v6841 = vshll.u32 %v6670, 16
        %v6843 = vrot.slane %v6841, 5
        %v6844 = vsel %vm746, %v6839, %v6843
        %v6846 = vshrl.u32 %v6671, 16
        %v6848 = vrot.slane %v6846, 4
        %v6849 = vshll.u32 %v6671, 16
        %v6851 = vrot.slane %v6849, 5
        %v6852 = vor.u32 %v6848, %v6851
        %v6853 = vrot.slane %v6852, 4
        %v6855 = vshll.u32 %v6672, 16
        %v6857 = vrot.slane %v6855, 5
        %v6858 = vsel %vm746, %v6853, %v6857
        %v6859 = vshrl.u32 %v6672, 16
        %v6861 = vrot.slane %v6859, 4
        %v6862 = vor.u32 %v6861, %v6857
        %v6863 = vrot.slane %v6862, 4
        %v6865 = vshll.u32 %v6673, 16
        %v6867 = vrot.slane %v6865, 5
        %v6868 = vsel %vm746, %v6863, %v6867
        %v6870 = vshrl.u32 %v6674, 16
        %v6872 = vrot.slane %v6870, 4
        %v6873 = vshll.u32 %v6674, 16
        %v6875 = vrot.slane %v6873, 5
        %v6876 = vor.u32 %v6872, %v6875
        %v6877 = vrot.slane %v6876, 4
        %v6879 = vshll.u32 %v6675, 16
        %v6881 = vrot.slane %v6879, 5
        %v6882 = vsel %vm746, %v6877, %v6881
        %v6883 = vshrl.u32 %v6675, 16
        %v6885 = vrot.slane %v6883, 4
        %v6886 = vor.u32 %v6885, %v6881
        %v6887 = vrot.slane %v6886, 4
        %v6889 = vshll.u32 %v6676, 16
        %v6891 = vrot.slane %v6889, 5
        %v6892 = vsel %vm746, %v6887, %v6891
        %v6894 = vshrl.u32 %v6677, 16
        %v6896 = vrot.slane %v6894, 4
        %v6897 = vshll.u32 %v6677, 16
        %v6899 = vrot.slane %v6897, 5
        %v6900 = vor.u32 %v6896, %v6899
        %v6901 = vrot.slane %v6900, 4
        %v6903 = vshll.u32 %v6678, 16
        %v6905 = vrot.slane %v6903, 5
        %v6906 = vsel %vm746, %v6901, %v6905
        %v6907 = vshrl.u32 %v6678, 16
        %v6909 = vrot.slane %v6907, 4
        %v6910 = vor.u32 %v6909, %v6905
        %v6911 = vrot.slane %v6910, 4
        %v6913 = vshll.u32 %v6679, 16
        %v6915 = vrot.slane %v6913, 5
        %v6916 = vsel %vm746, %v6911, %v6915
        %v6918 = vshrl.u32 %v6680, 16
        %v6920 = vrot.slane %v6918, 4
        %v6921 = vshll.u32 %v6680, 16
        %v6923 = vrot.slane %v6921, 5
        %v6924 = vor.u32 %v6920, %v6923
        %v6925 = vrot.slane %v6924, 4
        %v6927 = vshll.u32 %v6681, 16
        %v6929 = vrot.slane %v6927, 5
        %v6930 = vsel %vm746, %v6925, %v6929
        %v6931 = vshrl.u32 %v6681, 16
        %v6933 = vrot.slane %v6931, 4
        %v6934 = vor.u32 %v6933, %v6929
        %v6935 = vrot.slane %v6934, 4
        %v6937 = vshll.u32 %v6682, 16
        %v6939 = vrot.slane %v6937, 5
        %v6940 = vsel %vm746, %v6935, %v6939
        %v6942 = vshrl.u32 %v6683, 16
        %v6944 = vrot.slane %v6942, 4
        %v6945 = vshll.u32 %v6683, 16
        %v6947 = vrot.slane %v6945, 5
        %v6948 = vor.u32 %v6944, %v6947
        %v6949 = vrot.slane %v6948, 4
        %v6951 = vshll.u32 %v6684, 16
        %v6953 = vrot.slane %v6951, 5
        %v6954 = vsel %vm746, %v6949, %v6953
        %v6955 = vshrl.u32 %v6684, 16
        %v6957 = vrot.slane %v6955, 4
        %v6958 = vor.u32 %v6957, %v6953
        %v6959 = vrot.slane %v6958, 4
        %v6961 = vshll.u32 %v6685, 16
        %v6963 = vrot.slane %v6961, 5
        %v6964 = vsel %vm746, %v6959, %v6963
        %v6966 = vshrl.u32 %v6686, 16
        %v6968 = vrot.slane %v6966, 4
        %v6969 = vshll.u32 %v6686, 16
        %v6971 = vrot.slane %v6969, 5
        %v6972 = vor.u32 %v6968, %v6971
        %v6973 = vrot.slane %v6972, 4
        %v6975 = vshll.u32 %v6687, 16
        %v6977 = vrot.slane %v6975, 5
        %v6978 = vsel %vm746, %v6973, %v6977
        %v6979 = vshrl.u32 %v6687, 16
        %v6981 = vrot.slane %v6979, 4
        %v6982 = vor.u32 %v6981, %v6977
        %v6983 = vrot.slane %v6982, 4
        %v6985 = vshll.u32 %v6688, 16
        %v6987 = vrot.slane %v6985, 5
        %v6988 = vsel %vm746, %v6983, %v6987
        %v6990 = vshrl.u32 %v6689, 16
        %v6992 = vrot.slane %v6990, 4
        %v6993 = vshll.u32 %v6689, 16
        %v6995 = vrot.slane %v6993, 5
        %v6996 = vor.u32 %v6992, %v6995
        %v6997 = vrot.slane %v6996, 4
        %v6999 = vshll.u32 %v6690, 16
        %v7001 = vrot.slane %v6999, 5
        %v7002 = vsel %vm746, %v6997, %v7001
        %v7003 = vshrl.u32 %v6690, 16
        %v7005 = vrot.slane %v7003, 4
        %v7006 = vor.u32 %v7005, %v7001
        %v7007 = vrot.slane %v7006, 4
        %v7009 = vshll.u32 %v6691, 16
        %v7011 = vrot.slane %v7009, 5
        %v7012 = vsel %vm746, %v7007, %v7011
        %v7014 = vshrl.u32 %v6692, 16
        %v7016 = vrot.slane %v7014, 4
        %v7017 = vshll.u32 %v6692, 16
        %v7019 = vrot.slane %v7017, 5
        %v7020 = vor.u32 %v7016, %v7019
        %v7021 = vrot.slane %v7020, 4
        %v7023 = vshll.u32 %v6693, 16
        %v7025 = vrot.slane %v7023, 5
        %v7026 = vsel %vm746, %v7021, %v7025
        %v7027 = vshrl.u32 %v6693, 16
        %v7029 = vrot.slane %v7027, 4
        %v7030 = vor.u32 %v7029, %v7025
        %v7031 = vrot.slane %v7030, 4
        %v7033 = vshll.u32 %v6694, 16
        %v7035 = vrot.slane %v7033, 5
        %v7036 = vsel %vm746, %v7031, %v7035
        %v7038 = vshrl.u32 %v6695, 16
        %v7040 = vrot.slane %v7038, 4
        %v7041 = vshll.u32 %v6695, 16
        %v7043 = vrot.slane %v7041, 5
        %v7044 = vor.u32 %v7040, %v7043
        %v7045 = vrot.slane %v7044, 4
        %v7047 = vshll.u32 %v6696, 16
        %v7049 = vrot.slane %v7047, 5
        %v7050 = vsel %vm746, %v7045, %v7049
        %v7051 = vshrl.u32 %v6696, 16
        %v7053 = vrot.slane %v7051, 4
        %v7054 = vor.u32 %v7053, %v7049
        %v7055 = vrot.slane %v7054, 4
        %v7057 = vshll.u32 %v6697, 16
        %v7059 = vrot.slane %v7057, 5
        %v7060 = vsel %vm746, %v7055, %v7059
        %v7062 = vshrl.u32 %v6698, 16
        %v7064 = vrot.slane %v7062, 4
        %v7065 = vshll.u32 %v6698, 16
        %v7067 = vrot.slane %v7065, 5
        %v7068 = vor.u32 %v7064, %v7067
        %v7069 = vrot.slane %v7068, 4
        %v7071 = vshll.u32 %v6699, 16
        %v7073 = vrot.slane %v7071, 5
        %v7074 = vsel %vm746, %v7069, %v7073
        %v7075 = vshrl.u32 %v6699, 16
        %v7077 = vrot.slane %v7075, 4
        %v7078 = vor.u32 %v7077, %v7073
        %v7079 = vrot.slane %v7078, 4
        %v7081 = vshll.u32 %v6700, 16
        %v7083 = vrot.slane %v7081, 5
        %v7084 = vsel %vm746, %v7079, %v7083
        %v7117 = vunpack.c.l.bf16 %v6714
        %v7118 = vunpack.c.l.bf16 %v6724
        %v7119 = vunpack.c.l.bf16 %v6738
        %v7120 = vunpack.c.l.bf16 %v6748
        %v7121 = vunpack.c.l.bf16 %v6762
        %v7122 = vunpack.c.l.bf16 %v6772
        %v7123 = vunpack.c.l.bf16 %v6786
        %v7124 = vunpack.c.l.bf16 %v6796
        %v7125 = vunpack.c.l.bf16 %v6810
        %v7126 = vunpack.c.l.bf16 %v6820
        %v7127 = vunpack.c.l.bf16 %v6834
        %v7128 = vunpack.c.l.bf16 %v6844
        %v7129 = vunpack.c.l.bf16 %v6858
        %v7130 = vunpack.c.l.bf16 %v6868
        %v7131 = vunpack.c.l.bf16 %v6882
        %v7132 = vunpack.c.l.bf16 %v6892
        %v7133 = vunpack.c.l.bf16 %v6906
        %v7134 = vunpack.c.l.bf16 %v6916
        %v7135 = vunpack.c.l.bf16 %v6930
        %v7136 = vunpack.c.l.bf16 %v6940
        %v7137 = vunpack.c.l.bf16 %v6954
        %v7138 = vunpack.c.l.bf16 %v6964
        %v7139 = vunpack.c.l.bf16 %v6978
        %v7140 = vunpack.c.l.bf16 %v6988
        %v7141 = vunpack.c.l.bf16 %v7002
        %v7142 = vunpack.c.l.bf16 %v7012
        %v7143 = vunpack.c.l.bf16 %v7026
        %v7144 = vunpack.c.l.bf16 %v7036
        %v7145 = vunpack.c.l.bf16 %v7050
        %v7146 = vunpack.c.l.bf16 %v7060
        %v7147 = vunpack.c.l.bf16 %v7074
        %v7148 = vunpack.c.l.bf16 %v7084
        %v7149 = vld [vmem:[%s3 + $0xd] sm:$0x1]
        %7151 = vset.pattern.permute.xlu0 0
        %7152 = vperm.xlu0 %7151, %v7117
        %v7153 = vpop.permute.xlu0 %7152
        %7156 = vset.pattern.permute.xlu0 0
        %7157 = vperm.xlu0 %7156, %v7118
        %v7158 = vpop.permute.xlu0 %7157
        %7161 = vset.pattern.permute.xlu0 0
        %7162 = vperm.xlu0 %7161, %v7119
        %v7163 = vpop.permute.xlu0 %7162
        %7166 = vset.pattern.permute.xlu0 0
        %7167 = vperm.xlu0 %7166, %v7120
        %v7168 = vpop.permute.xlu0 %7167
        %7171 = vset.pattern.permute.xlu0 0
        %7172 = vperm.xlu0 %7171, %v7121
        %v7173 = vpop.permute.xlu0 %7172
        %7176 = vset.pattern.permute.xlu0 0
        %7177 = vperm.xlu0 %7176, %v7122
        %v7178 = vpop.permute.xlu0 %7177
        %7181 = vset.pattern.permute.xlu0 0
        %7182 = vperm.xlu0 %7181, %v7123
        %v7183 = vpop.permute.xlu0 %7182
        %7186 = vset.pattern.permute.xlu0 0
        %7187 = vperm.xlu0 %7186, %v7124
        %v7188 = vpop.permute.xlu0 %7187
        %7191 = vset.pattern.permute.xlu0 0
        %7192 = vperm.xlu0 %7191, %v7125
        %v7193 = vpop.permute.xlu0 %7192
        %7196 = vset.pattern.permute.xlu0 0
        %7197 = vperm.xlu0 %7196, %v7126
        %v7198 = vpop.permute.xlu0 %7197
        %7201 = vset.pattern.permute.xlu0 0
        %7202 = vperm.xlu0 %7201, %v7127
        %v7203 = vpop.permute.xlu0 %7202
        %7206 = vset.pattern.permute.xlu0 0
        %7207 = vperm.xlu0 %7206, %v7128
        %v7208 = vpop.permute.xlu0 %7207
        %7211 = vset.pattern.permute.xlu0 0
        %7212 = vperm.xlu0 %7211, %v7129
        %v7213 = vpop.permute.xlu0 %7212
        %7216 = vset.pattern.permute.xlu0 0
        %7217 = vperm.xlu0 %7216, %v7130
        %v7218 = vpop.permute.xlu0 %7217
        %7221 = vset.pattern.permute.xlu0 0
        %7222 = vperm.xlu0 %7221, %v7131
        %v7223 = vpop.permute.xlu0 %7222
        %7226 = vset.pattern.permute.xlu0 0
        %7227 = vperm.xlu0 %7226, %v7132
        %v7228 = vpop.permute.xlu0 %7227
        %7231 = vset.pattern.permute.xlu0 0
        %7232 = vperm.xlu0 %7231, %v7133
        %v7233 = vpop.permute.xlu0 %7232
        %7236 = vset.pattern.permute.xlu0 0
        %7237 = vperm.xlu0 %7236, %v7134
        %v7238 = vpop.permute.xlu0 %7237
        %7241 = vset.pattern.permute.xlu0 0
        %7242 = vperm.xlu0 %7241, %v7135
        %v7243 = vpop.permute.xlu0 %7242
        %7246 = vset.pattern.permute.xlu0 0
        %7247 = vperm.xlu0 %7246, %v7136
        %v7248 = vpop.permute.xlu0 %7247
        %7251 = vset.pattern.permute.xlu0 0
        %7252 = vperm.xlu0 %7251, %v7137
        %v7253 = vpop.permute.xlu0 %7252
        %7256 = vset.pattern.permute.xlu0 0
        %7257 = vperm.xlu0 %7256, %v7138
        %v7258 = vpop.permute.xlu0 %7257
        %7261 = vset.pattern.permute.xlu0 0
        %7262 = vperm.xlu0 %7261, %v7139
        %v7263 = vpop.permute.xlu0 %7262
        %7266 = vset.pattern.permute.xlu0 0
        %7267 = vperm.xlu0 %7266, %v7140
        %v7268 = vpop.permute.xlu0 %7267
        %7271 = vset.pattern.permute.xlu0 0
        %7272 = vperm.xlu0 %7271, %v7141
        %v7273 = vpop.permute.xlu0 %7272
        %7276 = vset.pattern.permute.xlu0 0
        %7277 = vperm.xlu0 %7276, %v7142
        %v7278 = vpop.permute.xlu0 %7277
        %7281 = vset.pattern.permute.xlu0 0
        %7282 = vperm.xlu0 %7281, %v7143
        %v7283 = vpop.permute.xlu0 %7282
        %7286 = vset.pattern.permute.xlu0 0
        %7287 = vperm.xlu0 %7286, %v7144
        %v7288 = vpop.permute.xlu0 %7287
        %7291 = vset.pattern.permute.xlu0 0
        %7292 = vperm.xlu0 %7291, %v7145
        %v7293 = vpop.permute.xlu0 %7292
        %7296 = vset.pattern.permute.xlu0 0
        %7297 = vperm.xlu0 %7296, %v7146
        %v7298 = vpop.permute.xlu0 %7297
        %7301 = vset.pattern.permute.xlu0 0
        %7302 = vperm.xlu0 %7301, %v7147
        %v7303 = vpop.permute.xlu0 %7302
        %7306 = vset.pattern.permute.xlu0 0
        %7307 = vperm.xlu0 %7306, %v7148
        %v7308 = vpop.permute.xlu0 %7307
        %v7310 = vlaneseq
        %v7311 = vshrl.u32 %v7310, 7
        %v7312 = vsub.s32 0, %v7311
        %v7313 = vrot.slane %v7149, %v7312
        %v7314 = vmul.f32 %v7153, %v7313
        %v7315 = vmul.f32 %v7158, %v7313
        %v7316 = vmul.f32 %v7163, %v7313
        %v7317 = vmul.f32 %v7168, %v7313
        %v7318 = vmul.f32 %v7173, %v7313
        %v7319 = vmul.f32 %v7178, %v7313
        %v7320 = vmul.f32 %v7183, %v7313
        %v7321 = vmul.f32 %v7188, %v7313
        %v7322 = vmul.f32 %v7193, %v7313
        %v7323 = vmul.f32 %v7198, %v7313
        %v7324 = vmul.f32 %v7203, %v7313
        %v7325 = vmul.f32 %v7208, %v7313
        %v7326 = vmul.f32 %v7213, %v7313
        %v7327 = vmul.f32 %v7218, %v7313
        %v7328 = vmul.f32 %v7223, %v7313
        %v7329 = vmul.f32 %v7228, %v7313
        %v7330 = vmul.f32 %v7233, %v7313
        %v7331 = vmul.f32 %v7238, %v7313
        %v7332 = vmul.f32 %v7243, %v7313
        %v7333 = vmul.f32 %v7248, %v7313
        %v7334 = vmul.f32 %v7253, %v7313
        %v7335 = vmul.f32 %v7258, %v7313
        %v7336 = vmul.f32 %v7263, %v7313
        %v7337 = vmul.f32 %v7268, %v7313
        %v7338 = vmul.f32 %v7273, %v7313
        %v7339 = vmul.f32 %v7278, %v7313
        %v7340 = vmul.f32 %v7283, %v7313
        %v7341 = vmul.f32 %v7288, %v7313
        %v7342 = vmul.f32 %v7293, %v7313
        %v7343 = vmul.f32 %v7298, %v7313
        %v7344 = vmul.f32 %v7303, %v7313
        %v7345 = vmul.f32 %v7308, %v7313
        %v7346 = vadd.f32 %v6621, %v7314
        %v7347 = vadd.f32 %v6622, %v7315
        %v7348 = vadd.f32 %v6623, %v7316
        %v7349 = vadd.f32 %v6624, %v7317
        %v7350 = vadd.f32 %v6625, %v7318
        %v7351 = vadd.f32 %v6626, %v7319
        %v7352 = vadd.f32 %v6627, %v7320
        %v7353 = vadd.f32 %v6628, %v7321
        %v7354 = vadd.f32 %v6629, %v7322
        %v7355 = vadd.f32 %v6630, %v7323
        %v7356 = vadd.f32 %v6631, %v7324
        %v7357 = vadd.f32 %v6632, %v7325
        %v7358 = vadd.f32 %v6633, %v7326
        %v7359 = vadd.f32 %v6634, %v7327
        %v7360 = vadd.f32 %v6635, %v7328
        %v7361 = vadd.f32 %v6636, %v7329
        %v7362 = vadd.f32 %v6637, %v7330
        %v7363 = vadd.f32 %v6638, %v7331
        %v7364 = vadd.f32 %v6639, %v7332
        %v7365 = vadd.f32 %v6640, %v7333
        %v7366 = vadd.f32 %v6641, %v7334
        %v7367 = vadd.f32 %v6642, %v7335
        %v7368 = vadd.f32 %v6643, %v7336
        %v7369 = vadd.f32 %v6644, %v7337
        %v7370 = vadd.f32 %v6645, %v7338
        %v7371 = vadd.f32 %v6646, %v7339
        %v7372 = vadd.f32 %v6647, %v7340
        %v7373 = vadd.f32 %v6648, %v7341
        %v7374 = vadd.f32 %v6649, %v7342
        %v7375 = vadd.f32 %v6650, %v7343
        %v7376 = vadd.f32 %v6651, %v7344
        %v7377 = vadd.f32 %v6652, %v7345
        %v7378 = vld [vmem:[%s6359] sm:$0xe]
        %v7379 = vld [vmem:[%s6359 + $0xc] sm:$0xe]
        %v7380 = vld [vmem:[%s6359 + $0x18] sm:$0xe]
        %v7381 = vld [vmem:[%s6359 + $0x24] sm:$0xe]
        %v7382 = vld [vmem:[%s6359 + $0x30] sm:$0xe]
        %v7383 = vld [vmem:[%s6359 + $0x3c] sm:$0xe]
        %v7384 = vld [vmem:[%s6359 + $0x48] sm:$0xe]
        %v7385 = vld [vmem:[%s6359 + $0x54] sm:$0xe]
        %v7386 = vld [vmem:[%s6359 + $0x60] sm:$0xe]
        %v7387 = vld [vmem:[%s6359 + $0x6c] sm:$0xe]
        %v7388 = vld [vmem:[%s6359 + $0x78] sm:$0xe]
        %v7389 = vld [vmem:[%s6359 + $0x84] sm:$0xe]
        %v7390 = vld [vmem:[%s6359 + $0x90] sm:$0xe]
        %v7391 = vld [vmem:[%s6359 + $0x9c] sm:$0xe]
        %v7392 = vld [vmem:[%s6359 + $0xa8] sm:$0xe]
        %v7393 = vld [vmem:[%s6359 + $0xb4] sm:$0xe]
        %v7442 = vrot.slane %v7378, 5
        %v7443 = vrot.slane %v7442, 4
        %v7444 = vrot.slane %v6654, 5
        %v7445 = vsel %vm1490, %v7443, %v7444
        %v7446 = vrot.slane %v7444, 4
        %v7447 = vrot.slane %v6655, 5
        %v7448 = vsel %vm1490, %v7446, %v7447
        %v7449 = vrot.slane %v7379, 5
        %v7450 = vrot.slane %v7449, 4
        %v7451 = vrot.slane %v6657, 5
        %v7452 = vsel %vm1490, %v7450, %v7451
        %v7453 = vrot.slane %v7451, 4
        %v7454 = vrot.slane %v6658, 5
        %v7455 = vsel %vm1490, %v7453, %v7454
        %v7456 = vrot.slane %v7380, 5
        %v7457 = vrot.slane %v7456, 4
        %v7458 = vrot.slane %v6660, 5
        %v7459 = vsel %vm1490, %v7457, %v7458
        %v7460 = vrot.slane %v7458, 4
        %v7461 = vrot.slane %v6661, 5
        %v7462 = vsel %vm1490, %v7460, %v7461
        %v7463 = vrot.slane %v7381, 5
        %v7464 = vrot.slane %v7463, 4
        %v7465 = vrot.slane %v6663, 5
        %v7466 = vsel %vm1490, %v7464, %v7465
        %v7467 = vrot.slane %v7465, 4
        %v7468 = vrot.slane %v6664, 5
        %v7469 = vsel %vm1490, %v7467, %v7468
        %v7470 = vrot.slane %v7382, 5
        %v7471 = vrot.slane %v7470, 4
        %v7472 = vrot.slane %v6666, 5
        %v7473 = vsel %vm1490, %v7471, %v7472
        %v7474 = vrot.slane %v7472, 4
        %v7475 = vrot.slane %v6667, 5
        %v7476 = vsel %vm1490, %v7474, %v7475
        %v7477 = vrot.slane %v7383, 5
        %v7478 = vrot.slane %v7477, 4
        %v7479 = vrot.slane %v6669, 5
        %v7480 = vsel %vm1490, %v7478, %v7479
        %v7481 = vrot.slane %v7479, 4
        %v7482 = vrot.slane %v6670, 5
        %v7483 = vsel %vm1490, %v7481, %v7482
        %v7484 = vrot.slane %v7384, 5
        %v7485 = vrot.slane %v7484, 4
        %v7486 = vrot.slane %v6672, 5
        %v7487 = vsel %vm1490, %v7485, %v7486
        %v7488 = vrot.slane %v7486, 4
        %v7489 = vrot.slane %v6673, 5
        %v7490 = vsel %vm1490, %v7488, %v7489
        %v7491 = vrot.slane %v7385, 5
        %v7492 = vrot.slane %v7491, 4
        %v7493 = vrot.slane %v6675, 5
        %v7494 = vsel %vm1490, %v7492, %v7493
        %v7495 = vrot.slane %v7493, 4
        %v7496 = vrot.slane %v6676, 5
        %v7497 = vsel %vm1490, %v7495, %v7496
        %v7498 = vrot.slane %v7386, 5
        %v7499 = vrot.slane %v7498, 4
        %v7500 = vrot.slane %v6678, 5
        %v7501 = vsel %vm1490, %v7499, %v7500
        %v7502 = vrot.slane %v7500, 4
        %v7503 = vrot.slane %v6679, 5
        %v7504 = vsel %vm1490, %v7502, %v7503
        %v7505 = vrot.slane %v7387, 5
        %v7506 = vrot.slane %v7505, 4
        %v7507 = vrot.slane %v6681, 5
        %v7508 = vsel %vm1490, %v7506, %v7507
        %v7509 = vrot.slane %v7507, 4
        %v7510 = vrot.slane %v6682, 5
        %v7511 = vsel %vm1490, %v7509, %v7510
        %v7512 = vrot.slane %v7388, 5
        %v7513 = vrot.slane %v7512, 4
        %v7514 = vrot.slane %v6684, 5
        %v7515 = vsel %vm1490, %v7513, %v7514
        %v7516 = vrot.slane %v7514, 4
        %v7517 = vrot.slane %v6685, 5
        %v7518 = vsel %vm1490, %v7516, %v7517
        %v7519 = vrot.slane %v7389, 5
        %v7520 = vrot.slane %v7519, 4
        %v7521 = vrot.slane %v6687, 5
        %v7522 = vsel %vm1490, %v7520, %v7521
        %v7523 = vrot.slane %v7521, 4
        %v7524 = vrot.slane %v6688, 5
        %v7525 = vsel %vm1490, %v7523, %v7524
        %v7526 = vrot.slane %v7390, 5
        %v7527 = vrot.slane %v7526, 4
        %v7528 = vrot.slane %v6690, 5
        %v7529 = vsel %vm1490, %v7527, %v7528
        %v7530 = vrot.slane %v7528, 4
        %v7531 = vrot.slane %v6691, 5
        %v7532 = vsel %vm1490, %v7530, %v7531
        %v7533 = vrot.slane %v7391, 5
        %v7534 = vrot.slane %v7533, 4
        %v7535 = vrot.slane %v6693, 5
        %v7536 = vsel %vm1490, %v7534, %v7535
        %v7537 = vrot.slane %v7535, 4
        %v7538 = vrot.slane %v6694, 5
        %v7539 = vsel %vm1490, %v7537, %v7538
        %v7540 = vrot.slane %v7392, 5
        %v7541 = vrot.slane %v7540, 4
        %v7542 = vrot.slane %v6696, 5
        %v7543 = vsel %vm1490, %v7541, %v7542
        %v7544 = vrot.slane %v7542, 4
        %v7545 = vrot.slane %v6697, 5
        %v7546 = vsel %vm1490, %v7544, %v7545
        %v7547 = vrot.slane %v7393, 5
        %v7548 = vrot.slane %v7547, 4
        %v7549 = vrot.slane %v6699, 5
        %v7550 = vsel %vm1490, %v7548, %v7549
        %v7551 = vrot.slane %v7549, 4
        %v7552 = vrot.slane %v6700, 5
        %v7553 = vsel %vm1490, %v7551, %v7552
        %v7586 = vunpack.c.l.bf16 %v7445
        %v7587 = vunpack.c.l.bf16 %v7448
        %v7588 = vunpack.c.l.bf16 %v7452
        %v7589 = vunpack.c.l.bf16 %v7455
        %v7590 = vunpack.c.l.bf16 %v7459
        %v7591 = vunpack.c.l.bf16 %v7462
        %v7592 = vunpack.c.l.bf16 %v7466
        %v7593 = vunpack.c.l.bf16 %v7469
        %v7594 = vunpack.c.l.bf16 %v7473
        %v7595 = vunpack.c.l.bf16 %v7476
        %v7596 = vunpack.c.l.bf16 %v7480
        %v7597 = vunpack.c.l.bf16 %v7483
        %v7598 = vunpack.c.l.bf16 %v7487
        %v7599 = vunpack.c.l.bf16 %v7490
        %v7600 = vunpack.c.l.bf16 %v7494
        %v7601 = vunpack.c.l.bf16 %v7497
        %v7602 = vunpack.c.l.bf16 %v7501
        %v7603 = vunpack.c.l.bf16 %v7504
        %v7604 = vunpack.c.l.bf16 %v7508
        %v7605 = vunpack.c.l.bf16 %v7511
        %v7606 = vunpack.c.l.bf16 %v7515
        %v7607 = vunpack.c.l.bf16 %v7518
        %v7608 = vunpack.c.l.bf16 %v7522
        %v7609 = vunpack.c.l.bf16 %v7525
        %v7610 = vunpack.c.l.bf16 %v7529
        %v7611 = vunpack.c.l.bf16 %v7532
        %v7612 = vunpack.c.l.bf16 %v7536
        %v7613 = vunpack.c.l.bf16 %v7539
        %v7614 = vunpack.c.l.bf16 %v7543
        %v7615 = vunpack.c.l.bf16 %v7546
        %v7616 = vunpack.c.l.bf16 %v7550
        %v7617 = vunpack.c.l.bf16 %v7553
        %v7618 = vld [vmem:[%s3 + $0xe] sm:$0x1]
        %7620 = vset.pattern.permute.xlu0 0
        %7621 = vperm.xlu0 %7620, %v7586
        %v7622 = vpop.permute.xlu0 %7621
        %7625 = vset.pattern.permute.xlu0 0
        %7626 = vperm.xlu0 %7625, %v7587
        %v7627 = vpop.permute.xlu0 %7626
        %7630 = vset.pattern.permute.xlu0 0
        %7631 = vperm.xlu0 %7630, %v7588
        %v7632 = vpop.permute.xlu0 %7631
        %7635 = vset.pattern.permute.xlu0 0
        %7636 = vperm.xlu0 %7635, %v7589
        %v7637 = vpop.permute.xlu0 %7636
        %7640 = vset.pattern.permute.xlu0 0
        %7641 = vperm.xlu0 %7640, %v7590
        %v7642 = vpop.permute.xlu0 %7641
        %7645 = vset.pattern.permute.xlu0 0
        %7646 = vperm.xlu0 %7645, %v7591
        %v7647 = vpop.permute.xlu0 %7646
        %7650 = vset.pattern.permute.xlu0 0
        %7651 = vperm.xlu0 %7650, %v7592
        %v7652 = vpop.permute.xlu0 %7651
        %7655 = vset.pattern.permute.xlu0 0
        %7656 = vperm.xlu0 %7655, %v7593
        %v7657 = vpop.permute.xlu0 %7656
        %7660 = vset.pattern.permute.xlu0 0
        %7661 = vperm.xlu0 %7660, %v7594
        %v7662 = vpop.permute.xlu0 %7661
        %7665 = vset.pattern.permute.xlu0 0
        %7666 = vperm.xlu0 %7665, %v7595
        %v7667 = vpop.permute.xlu0 %7666
        %7670 = vset.pattern.permute.xlu0 0
        %7671 = vperm.xlu0 %7670, %v7596
        %v7672 = vpop.permute.xlu0 %7671
        %7675 = vset.pattern.permute.xlu0 0
        %7676 = vperm.xlu0 %7675, %v7597
        %v7677 = vpop.permute.xlu0 %7676
        %7680 = vset.pattern.permute.xlu0 0
        %7681 = vperm.xlu0 %7680, %v7598
        %v7682 = vpop.permute.xlu0 %7681
        %7685 = vset.pattern.permute.xlu0 0
        %7686 = vperm.xlu0 %7685, %v7599
        %v7687 = vpop.permute.xlu0 %7686
        %7690 = vset.pattern.permute.xlu0 0
        %7691 = vperm.xlu0 %7690, %v7600
        %v7692 = vpop.permute.xlu0 %7691
        %7695 = vset.pattern.permute.xlu0 0
        %7696 = vperm.xlu0 %7695, %v7601
        %v7697 = vpop.permute.xlu0 %7696
        %7700 = vset.pattern.permute.xlu0 0
        %7701 = vperm.xlu0 %7700, %v7602
        %v7702 = vpop.permute.xlu0 %7701
        %7705 = vset.pattern.permute.xlu0 0
        %7706 = vperm.xlu0 %7705, %v7603
        %v7707 = vpop.permute.xlu0 %7706
        %7710 = vset.pattern.permute.xlu0 0
        %7711 = vperm.xlu0 %7710, %v7604
        %v7712 = vpop.permute.xlu0 %7711
        %7715 = vset.pattern.permute.xlu0 0
        %7716 = vperm.xlu0 %7715, %v7605
        %v7717 = vpop.permute.xlu0 %7716
        %7720 = vset.pattern.permute.xlu0 0
        %7721 = vperm.xlu0 %7720, %v7606
        %v7722 = vpop.permute.xlu0 %7721
        %7725 = vset.pattern.permute.xlu0 0
        %7726 = vperm.xlu0 %7725, %v7607
        %v7727 = vpop.permute.xlu0 %7726
        %7730 = vset.pattern.permute.xlu0 0
        %7731 = vperm.xlu0 %7730, %v7608
        %v7732 = vpop.permute.xlu0 %7731
        %7735 = vset.pattern.permute.xlu0 0
        %7736 = vperm.xlu0 %7735, %v7609
        %v7737 = vpop.permute.xlu0 %7736
        %7740 = vset.pattern.permute.xlu0 0
        %7741 = vperm.xlu0 %7740, %v7610
        %v7742 = vpop.permute.xlu0 %7741
        %7745 = vset.pattern.permute.xlu0 0
        %7746 = vperm.xlu0 %7745, %v7611
        %v7747 = vpop.permute.xlu0 %7746
        %7750 = vset.pattern.permute.xlu0 0
        %7751 = vperm.xlu0 %7750, %v7612
        %v7752 = vpop.permute.xlu0 %7751
        %7755 = vset.pattern.permute.xlu0 0
        %7756 = vperm.xlu0 %7755, %v7613
        %v7757 = vpop.permute.xlu0 %7756
        %7760 = vset.pattern.permute.xlu0 0
        %7761 = vperm.xlu0 %7760, %v7614
        %v7762 = vpop.permute.xlu0 %7761
        %7765 = vset.pattern.permute.xlu0 0
        %7766 = vperm.xlu0 %7765, %v7615
        %v7767 = vpop.permute.xlu0 %7766
        %7770 = vset.pattern.permute.xlu0 0
        %7771 = vperm.xlu0 %7770, %v7616
        %v7772 = vpop.permute.xlu0 %7771
        %7775 = vset.pattern.permute.xlu0 0
        %7776 = vperm.xlu0 %7775, %v7617
        %v7777 = vpop.permute.xlu0 %7776
        %v7779 = vlaneseq
        %v7780 = vshrl.u32 %v7779, 7
        %v7781 = vsub.s32 0, %v7780
        %v7782 = vrot.slane %v7618, %v7781
        %v7783 = vmul.f32 %v7622, %v7782
        %v7784 = vmul.f32 %v7627, %v7782
        %v7785 = vmul.f32 %v7632, %v7782
        %v7786 = vmul.f32 %v7637, %v7782
        %v7787 = vmul.f32 %v7642, %v7782
        %v7788 = vmul.f32 %v7647, %v7782
        %v7789 = vmul.f32 %v7652, %v7782
        %v7790 = vmul.f32 %v7657, %v7782
        %v7791 = vmul.f32 %v7662, %v7782
        %v7792 = vmul.f32 %v7667, %v7782
        %v7793 = vmul.f32 %v7672, %v7782
        %v7794 = vmul.f32 %v7677, %v7782
        %v7795 = vmul.f32 %v7682, %v7782
        %v7796 = vmul.f32 %v7687, %v7782
        %v7797 = vmul.f32 %v7692, %v7782
        %v7798 = vmul.f32 %v7697, %v7782
        %v7799 = vmul.f32 %v7702, %v7782
        %v7800 = vmul.f32 %v7707, %v7782
        %v7801 = vmul.f32 %v7712, %v7782
        %v7802 = vmul.f32 %v7717, %v7782
        %v7803 = vmul.f32 %v7722, %v7782
        %v7804 = vmul.f32 %v7727, %v7782
        %v7805 = vmul.f32 %v7732, %v7782
        %v7806 = vmul.f32 %v7737, %v7782
        %v7807 = vmul.f32 %v7742, %v7782
        %v7808 = vmul.f32 %v7747, %v7782
        %v7809 = vmul.f32 %v7752, %v7782
        %v7810 = vmul.f32 %v7757, %v7782
        %v7811 = vmul.f32 %v7762, %v7782
        %v7812 = vmul.f32 %v7767, %v7782
        %v7813 = vmul.f32 %v7772, %v7782
        %v7814 = vmul.f32 %v7777, %v7782
        %v7815 = vadd.f32 %v7346, %v7783
        %v7816 = vadd.f32 %v7347, %v7784
        %v7817 = vadd.f32 %v7348, %v7785
        %v7818 = vadd.f32 %v7349, %v7786
        %v7819 = vadd.f32 %v7350, %v7787
        %v7820 = vadd.f32 %v7351, %v7788
        %v7821 = vadd.f32 %v7352, %v7789
        %v7822 = vadd.f32 %v7353, %v7790
        %v7823 = vadd.f32 %v7354, %v7791
        %v7824 = vadd.f32 %v7355, %v7792
        %v7825 = vadd.f32 %v7356, %v7793
        %v7826 = vadd.f32 %v7357, %v7794
        %v7827 = vadd.f32 %v7358, %v7795
        %v7828 = vadd.f32 %v7359, %v7796
        %v7829 = vadd.f32 %v7360, %v7797
        %v7830 = vadd.f32 %v7361, %v7798
        %v7831 = vadd.f32 %v7362, %v7799
        %v7832 = vadd.f32 %v7363, %v7800
        %v7833 = vadd.f32 %v7364, %v7801
        %v7834 = vadd.f32 %v7365, %v7802
        %v7835 = vadd.f32 %v7366, %v7803
        %v7836 = vadd.f32 %v7367, %v7804
        %v7837 = vadd.f32 %v7368, %v7805
        %v7838 = vadd.f32 %v7369, %v7806
        %v7839 = vadd.f32 %v7370, %v7807
        %v7840 = vadd.f32 %v7371, %v7808
        %v7841 = vadd.f32 %v7372, %v7809
        %v7842 = vadd.f32 %v7373, %v7810
        %v7843 = vadd.f32 %v7374, %v7811
        %v7844 = vadd.f32 %v7375, %v7812
        %v7845 = vadd.f32 %v7376, %v7813
        %v7846 = vadd.f32 %v7377, %v7814
        %s7847 = scalar_lea.vmem %s390, 24
        %v7848 = vld [vmem:[%s7847] sm:$0xf]
        %v7849 = vld [vmem:[%s7847 + $0x4] sm:$0xf]
        %v7850 = vld [vmem:[%s7847 + $0xc] sm:$0xf]
        %v7851 = vld [vmem:[%s7847 + $0x10] sm:$0xf]
        %v7852 = vld [vmem:[%s7847 + $0x18] sm:$0xf]
        %v7853 = vld [vmem:[%s7847 + $0x1c] sm:$0xf]
        %v7854 = vld [vmem:[%s7847 + $0x24] sm:$0xf]
        %v7855 = vld [vmem:[%s7847 + $0x28] sm:$0xf]
        %v7856 = vld [vmem:[%s7847 + $0x30] sm:$0xf]
        %v7857 = vld [vmem:[%s7847 + $0x34] sm:$0xf]
        %v7858 = vld [vmem:[%s7847 + $0x3c] sm:$0xf]
        %v7859 = vld [vmem:[%s7847 + $0x40] sm:$0xf]
        %v7860 = vld [vmem:[%s7847 + $0x48] sm:$0xf]
        %v7861 = vld [vmem:[%s7847 + $0x4c] sm:$0xf]
        %v7862 = vld [vmem:[%s7847 + $0x54] sm:$0xf]
        %v7863 = vld [vmem:[%s7847 + $0x58] sm:$0xf]
        %v7864 = vld [vmem:[%s7847 + $0x60] sm:$0xf]
        %v7865 = vld [vmem:[%s7847 + $0x64] sm:$0xf]
        %v7866 = vld [vmem:[%s7847 + $0x6c] sm:$0xf]
        %v7867 = vld [vmem:[%s7847 + $0x70] sm:$0xf]
        %v7868 = vld [vmem:[%s7847 + $0x78] sm:$0xf]
        %v7869 = vld [vmem:[%s7847 + $0x7c] sm:$0xf]
        %v7870 = vld [vmem:[%s7847 + $0x84] sm:$0xf]
        %v7871 = vld [vmem:[%s7847 + $0x88] sm:$0xf]
        %v7872 = vld [vmem:[%s7847 + $0x90] sm:$0xf]
        %v7873 = vld [vmem:[%s7847 + $0x94] sm:$0xf]
        %v7874 = vld [vmem:[%s7847 + $0x9c] sm:$0xf]
        %v7875 = vld [vmem:[%s7847 + $0xa0] sm:$0xf]
        %v7876 = vld [vmem:[%s7847 + $0xa8] sm:$0xf]
        %v7877 = vld [vmem:[%s7847 + $0xac] sm:$0xf]
        %v7878 = vld [vmem:[%s7847 + $0xb4] sm:$0xf]
        %v7879 = vld [vmem:[%s7847 + $0xb8] sm:$0xf]
        %v7880 = vunpack.c.l.bf16 %v7848
        %v7881 = vunpack.c.l.bf16 %v7849
        %v7882 = vunpack.c.l.bf16 %v7850
        %v7883 = vunpack.c.l.bf16 %v7851
        %v7884 = vunpack.c.l.bf16 %v7852
        %v7885 = vunpack.c.l.bf16 %v7853
        %v7886 = vunpack.c.l.bf16 %v7854
        %v7887 = vunpack.c.l.bf16 %v7855
        %v7888 = vunpack.c.l.bf16 %v7856
        %v7889 = vunpack.c.l.bf16 %v7857
        %v7890 = vunpack.c.l.bf16 %v7858
        %v7891 = vunpack.c.l.bf16 %v7859
        %v7892 = vunpack.c.l.bf16 %v7860
        %v7893 = vunpack.c.l.bf16 %v7861
        %v7894 = vunpack.c.l.bf16 %v7862
        %v7895 = vunpack.c.l.bf16 %v7863
        %v7896 = vunpack.c.l.bf16 %v7864
        %v7897 = vunpack.c.l.bf16 %v7865
        %v7898 = vunpack.c.l.bf16 %v7866
        %v7899 = vunpack.c.l.bf16 %v7867
        %v7900 = vunpack.c.l.bf16 %v7868
        %v7901 = vunpack.c.l.bf16 %v7869
        %v7902 = vunpack.c.l.bf16 %v7870
        %v7903 = vunpack.c.l.bf16 %v7871
        %v7904 = vunpack.c.l.bf16 %v7872
        %v7905 = vunpack.c.l.bf16 %v7873
        %v7906 = vunpack.c.l.bf16 %v7874
        %v7907 = vunpack.c.l.bf16 %v7875
        %v7908 = vunpack.c.l.bf16 %v7876
        %v7909 = vunpack.c.l.bf16 %v7877
        %v7910 = vunpack.c.l.bf16 %v7878
        %v7911 = vunpack.c.l.bf16 %v7879
        %v7912 = vld [vmem:[%s3 + $0xf] sm:$0x1]
        %7914 = vset.pattern.permute.xlu0 0
        %7915 = vperm.xlu0 %7914, %v7880
        %v7916 = vpop.permute.xlu0 %7915
        %7919 = vset.pattern.permute.xlu0 0
        %7920 = vperm.xlu0 %7919, %v7881
        %v7921 = vpop.permute.xlu0 %7920
        %7924 = vset.pattern.permute.xlu0 0
        %7925 = vperm.xlu0 %7924, %v7882
        %v7926 = vpop.permute.xlu0 %7925
        %7929 = vset.pattern.permute.xlu0 0
        %7930 = vperm.xlu0 %7929, %v7883
        %v7931 = vpop.permute.xlu0 %7930
        %7934 = vset.pattern.permute.xlu0 0
        %7935 = vperm.xlu0 %7934, %v7884
        %v7936 = vpop.permute.xlu0 %7935
        %7939 = vset.pattern.permute.xlu0 0
        %7940 = vperm.xlu0 %7939, %v7885
        %v7941 = vpop.permute.xlu0 %7940
        %7944 = vset.pattern.permute.xlu0 0
        %7945 = vperm.xlu0 %7944, %v7886
        %v7946 = vpop.permute.xlu0 %7945
        %7949 = vset.pattern.permute.xlu0 0
        %7950 = vperm.xlu0 %7949, %v7887
        %v7951 = vpop.permute.xlu0 %7950
        %7954 = vset.pattern.permute.xlu0 0
        %7955 = vperm.xlu0 %7954, %v7888
        %v7956 = vpop.permute.xlu0 %7955
        %7959 = vset.pattern.permute.xlu0 0
        %7960 = vperm.xlu0 %7959, %v7889
        %v7961 = vpop.permute.xlu0 %7960
        %7964 = vset.pattern.permute.xlu0 0
        %7965 = vperm.xlu0 %7964, %v7890
        %v7966 = vpop.permute.xlu0 %7965
        %7969 = vset.pattern.permute.xlu0 0
        %7970 = vperm.xlu0 %7969, %v7891
        %v7971 = vpop.permute.xlu0 %7970
        %7974 = vset.pattern.permute.xlu0 0
        %7975 = vperm.xlu0 %7974, %v7892
        %v7976 = vpop.permute.xlu0 %7975
        %7979 = vset.pattern.permute.xlu0 0
        %7980 = vperm.xlu0 %7979, %v7893
        %v7981 = vpop.permute.xlu0 %7980
        %7984 = vset.pattern.permute.xlu0 0
        %7985 = vperm.xlu0 %7984, %v7894
        %v7986 = vpop.permute.xlu0 %7985
        %7989 = vset.pattern.permute.xlu0 0
        %7990 = vperm.xlu0 %7989, %v7895
        %v7991 = vpop.permute.xlu0 %7990
        %7994 = vset.pattern.permute.xlu0 0
        %7995 = vperm.xlu0 %7994, %v7896
        %v7996 = vpop.permute.xlu0 %7995
        %7999 = vset.pattern.permute.xlu0 0
        %8000 = vperm.xlu0 %7999, %v7897
        %v8001 = vpop.permute.xlu0 %8000
        %8004 = vset.pattern.permute.xlu0 0
        %8005 = vperm.xlu0 %8004, %v7898
        %v8006 = vpop.permute.xlu0 %8005
        %8009 = vset.pattern.permute.xlu0 0
        %8010 = vperm.xlu0 %8009, %v7899
        %v8011 = vpop.permute.xlu0 %8010
        %8014 = vset.pattern.permute.xlu0 0
        %8015 = vperm.xlu0 %8014, %v7900
        %v8016 = vpop.permute.xlu0 %8015
        %8019 = vset.pattern.permute.xlu0 0
        %8020 = vperm.xlu0 %8019, %v7901
        %v8021 = vpop.permute.xlu0 %8020
        %8024 = vset.pattern.permute.xlu0 0
        %8025 = vperm.xlu0 %8024, %v7902
        %v8026 = vpop.permute.xlu0 %8025
        %8029 = vset.pattern.permute.xlu0 0
        %8030 = vperm.xlu0 %8029, %v7903
        %v8031 = vpop.permute.xlu0 %8030
        %8034 = vset.pattern.permute.xlu0 0
        %8035 = vperm.xlu0 %8034, %v7904
        %v8036 = vpop.permute.xlu0 %8035
        %8039 = vset.pattern.permute.xlu0 0
        %8040 = vperm.xlu0 %8039, %v7905
        %v8041 = vpop.permute.xlu0 %8040
        %8044 = vset.pattern.permute.xlu0 0
        %8045 = vperm.xlu0 %8044, %v7906
        %v8046 = vpop.permute.xlu0 %8045
        %8049 = vset.pattern.permute.xlu0 0
        %8050 = vperm.xlu0 %8049, %v7907
        %v8051 = vpop.permute.xlu0 %8050
        %8054 = vset.pattern.permute.xlu0 0
        %8055 = vperm.xlu0 %8054, %v7908
        %v8056 = vpop.permute.xlu0 %8055
        %8059 = vset.pattern.permute.xlu0 0
        %8060 = vperm.xlu0 %8059, %v7909
        %v8061 = vpop.permute.xlu0 %8060
        %8064 = vset.pattern.permute.xlu0 0
        %8065 = vperm.xlu0 %8064, %v7910
        %v8066 = vpop.permute.xlu0 %8065
        %8069 = vset.pattern.permute.xlu0 0
        %8070 = vperm.xlu0 %8069, %v7911
        %v8071 = vpop.permute.xlu0 %8070
        %v8073 = vlaneseq
        %v8074 = vshrl.u32 %v8073, 7
        %v8075 = vsub.s32 0, %v8074
        %v8076 = vrot.slane %v7912, %v8075
        %v8077 = vmul.f32 %v7916, %v8076
        %v8078 = vmul.f32 %v7921, %v8076
        %v8079 = vmul.f32 %v7926, %v8076
        %v8080 = vmul.f32 %v7931, %v8076
        %v8081 = vmul.f32 %v7936, %v8076
        %v8082 = vmul.f32 %v7941, %v8076
        %v8083 = vmul.f32 %v7946, %v8076
        %v8084 = vmul.f32 %v7951, %v8076
        %v8085 = vmul.f32 %v7956, %v8076
        %v8086 = vmul.f32 %v7961, %v8076
        %v8087 = vmul.f32 %v7966, %v8076
        %v8088 = vmul.f32 %v7971, %v8076
        %v8089 = vmul.f32 %v7976, %v8076
        %v8090 = vmul.f32 %v7981, %v8076
        %v8091 = vmul.f32 %v7986, %v8076
        %v8092 = vmul.f32 %v7991, %v8076
        %v8093 = vmul.f32 %v7996, %v8076
        %v8094 = vmul.f32 %v8001, %v8076
        %v8095 = vmul.f32 %v8006, %v8076
        %v8096 = vmul.f32 %v8011, %v8076
        %v8097 = vmul.f32 %v8016, %v8076
        %v8098 = vmul.f32 %v8021, %v8076
        %v8099 = vmul.f32 %v8026, %v8076
        %v8100 = vmul.f32 %v8031, %v8076
        %v8101 = vmul.f32 %v8036, %v8076
        %v8102 = vmul.f32 %v8041, %v8076
        %v8103 = vmul.f32 %v8046, %v8076
        %v8104 = vmul.f32 %v8051, %v8076
        %v8105 = vmul.f32 %v8056, %v8076
        %v8106 = vmul.f32 %v8061, %v8076
        %v8107 = vmul.f32 %v8066, %v8076
        %v8108 = vmul.f32 %v8071, %v8076
        %v8109 = vadd.f32 %v7815, %v8077
        %v8110 = vadd.f32 %v7816, %v8078
        %v8111 = vadd.f32 %v7817, %v8079
        %v8112 = vadd.f32 %v7818, %v8080
        %v8113 = vadd.f32 %v7819, %v8081
        %v8114 = vadd.f32 %v7820, %v8082
        %v8115 = vadd.f32 %v7821, %v8083
        %v8116 = vadd.f32 %v7822, %v8084
        %v8117 = vadd.f32 %v7823, %v8085
        %v8118 = vadd.f32 %v7824, %v8086
        %v8119 = vadd.f32 %v7825, %v8087
        %v8120 = vadd.f32 %v7826, %v8088
        %v8121 = vadd.f32 %v7827, %v8089
        %v8122 = vadd.f32 %v7828, %v8090
        %v8123 = vadd.f32 %v7829, %v8091
        %v8124 = vadd.f32 %v7830, %v8092
        %v8125 = vadd.f32 %v7831, %v8093
        %v8126 = vadd.f32 %v7832, %v8094
        %v8127 = vadd.f32 %v7833, %v8095
        %v8128 = vadd.f32 %v7834, %v8096
        %v8129 = vadd.f32 %v7835, %v8097
        %v8130 = vadd.f32 %v7836, %v8098
        %v8131 = vadd.f32 %v7837, %v8099
        %v8132 = vadd.f32 %v7838, %v8100
        %v8133 = vadd.f32 %v7839, %v8101
        %v8134 = vadd.f32 %v7840, %v8102
        %v8135 = vadd.f32 %v7841, %v8103
        %v8136 = vadd.f32 %v7842, %v8104
        %v8137 = vadd.f32 %v7843, %v8105
        %v8138 = vadd.f32 %v7844, %v8106
        %v8139 = vadd.f32 %v7845, %v8107
        %v8140 = vadd.f32 %v7846, %v8108
        %v8141 = vld [vmem:[%s7847] sm:$0xf]
        %v8142 = vld [vmem:[%s7847 + $0x4] sm:$0xf]
        %v8143 = vld [vmem:[%s7847 + $0x8] sm:$0x1]
        %v8144 = vld [vmem:[%s7847 + $0xc] sm:$0xf]
        %v8145 = vld [vmem:[%s7847 + $0x10] sm:$0xf]
        %v8146 = vld [vmem:[%s7847 + $0x14] sm:$0x1]
        %v8147 = vld [vmem:[%s7847 + $0x18] sm:$0xf]
        %v8148 = vld [vmem:[%s7847 + $0x1c] sm:$0xf]
        %v8149 = vld [vmem:[%s7847 + $0x20] sm:$0x1]
        %v8150 = vld [vmem:[%s7847 + $0x24] sm:$0xf]
        %v8151 = vld [vmem:[%s7847 + $0x28] sm:$0xf]
        %v8152 = vld [vmem:[%s7847 + $0x2c] sm:$0x1]
        %v8153 = vld [vmem:[%s7847 + $0x30] sm:$0xf]
        %v8154 = vld [vmem:[%s7847 + $0x34] sm:$0xf]
        %v8155 = vld [vmem:[%s7847 + $0x38] sm:$0x1]
        %v8156 = vld [vmem:[%s7847 + $0x3c] sm:$0xf]
        %v8157 = vld [vmem:[%s7847 + $0x40] sm:$0xf]
        %v8158 = vld [vmem:[%s7847 + $0x44] sm:$0x1]
        %v8159 = vld [vmem:[%s7847 + $0x48] sm:$0xf]
        %v8160 = vld [vmem:[%s7847 + $0x4c] sm:$0xf]
        %v8161 = vld [vmem:[%s7847 + $0x50] sm:$0x1]
        %v8162 = vld [vmem:[%s7847 + $0x54] sm:$0xf]
        %v8163 = vld [vmem:[%s7847 + $0x58] sm:$0xf]
        %v8164 = vld [vmem:[%s7847 + $0x5c] sm:$0x1]
        %v8165 = vld [vmem:[%s7847 + $0x60] sm:$0xf]
        %v8166 = vld [vmem:[%s7847 + $0x64] sm:$0xf]
        %v8167 = vld [vmem:[%s7847 + $0x68] sm:$0x1]
        %v8168 = vld [vmem:[%s7847 + $0x6c] sm:$0xf]
        %v8169 = vld [vmem:[%s7847 + $0x70] sm:$0xf]
        %v8170 = vld [vmem:[%s7847 + $0x74] sm:$0x1]
        %v8171 = vld [vmem:[%s7847 + $0x78] sm:$0xf]
        %v8172 = vld [vmem:[%s7847 + $0x7c] sm:$0xf]
        %v8173 = vld [vmem:[%s7847 + $0x80] sm:$0x1]
        %v8174 = vld [vmem:[%s7847 + $0x84] sm:$0xf]
        %v8175 = vld [vmem:[%s7847 + $0x88] sm:$0xf]
        %v8176 = vld [vmem:[%s7847 + $0x8c] sm:$0x1]
        %v8177 = vld [vmem:[%s7847 + $0x90] sm:$0xf]
        %v8178 = vld [vmem:[%s7847 + $0x94] sm:$0xf]
        %v8179 = vld [vmem:[%s7847 + $0x98] sm:$0x1]
        %v8180 = vld [vmem:[%s7847 + $0x9c] sm:$0xf]
        %v8181 = vld [vmem:[%s7847 + $0xa0] sm:$0xf]
        %v8182 = vld [vmem:[%s7847 + $0xa4] sm:$0x1]
        %v8183 = vld [vmem:[%s7847 + $0xa8] sm:$0xf]
        %v8184 = vld [vmem:[%s7847 + $0xac] sm:$0xf]
        %v8185 = vld [vmem:[%s7847 + $0xb0] sm:$0x1]
        %v8186 = vld [vmem:[%s7847 + $0xb4] sm:$0xf]
        %v8187 = vld [vmem:[%s7847 + $0xb8] sm:$0xf]
        %v8188 = vld [vmem:[%s7847 + $0xbc] sm:$0x1]
        %v8190 = vshrl.u32 %v8141, 16
        %v8192 = vrot.slane %v8190, 4
        %v8193 = vshll.u32 %v8141, 16
        %v8195 = vrot.slane %v8193, 5
        %v8196 = vor.u32 %v8192, %v8195
        %v8197 = vrot.slane %v8196, 4
        %v8199 = vshll.u32 %v8142, 16
        %v8201 = vrot.slane %v8199, 5
        %v8202 = vsel %vm746, %v8197, %v8201
        %v8203 = vshrl.u32 %v8142, 16
        %v8205 = vrot.slane %v8203, 4
        %v8206 = vor.u32 %v8205, %v8201
        %v8207 = vrot.slane %v8206, 4
        %v8209 = vshll.u32 %v8143, 16
        %v8211 = vrot.slane %v8209, 5
        %v8212 = vsel %vm746, %v8207, %v8211
        %v8214 = vshrl.u32 %v8144, 16
        %v8216 = vrot.slane %v8214, 4
        %v8217 = vshll.u32 %v8144, 16
        %v8219 = vrot.slane %v8217, 5
        %v8220 = vor.u32 %v8216, %v8219
        %v8221 = vrot.slane %v8220, 4
        %v8223 = vshll.u32 %v8145, 16
        %v8225 = vrot.slane %v8223, 5
        %v8226 = vsel %vm746, %v8221, %v8225
        %v8227 = vshrl.u32 %v8145, 16
        %v8229 = vrot.slane %v8227, 4
        %v8230 = vor.u32 %v8229, %v8225
        %v8231 = vrot.slane %v8230, 4
        %v8233 = vshll.u32 %v8146, 16
        %v8235 = vrot.slane %v8233, 5
        %v8236 = vsel %vm746, %v8231, %v8235
        %v8238 = vshrl.u32 %v8147, 16
        %v8240 = vrot.slane %v8238, 4
        %v8241 = vshll.u32 %v8147, 16
        %v8243 = vrot.slane %v8241, 5
        %v8244 = vor.u32 %v8240, %v8243
        %v8245 = vrot.slane %v8244, 4
        %v8247 = vshll.u32 %v8148, 16
        %v8249 = vrot.slane %v8247, 5
        %v8250 = vsel %vm746, %v8245, %v8249
        %v8251 = vshrl.u32 %v8148, 16
        %v8253 = vrot.slane %v8251, 4
        %v8254 = vor.u32 %v8253, %v8249
        %v8255 = vrot.slane %v8254, 4
        %v8257 = vshll.u32 %v8149, 16
        %v8259 = vrot.slane %v8257, 5
        %v8260 = vsel %vm746, %v8255, %v8259
        %v8262 = vshrl.u32 %v8150, 16
        %v8264 = vrot.slane %v8262, 4
        %v8265 = vshll.u32 %v8150, 16
        %v8267 = vrot.slane %v8265, 5
        %v8268 = vor.u32 %v8264, %v8267
        %v8269 = vrot.slane %v8268, 4
        %v8271 = vshll.u32 %v8151, 16
        %v8273 = vrot.slane %v8271, 5
        %v8274 = vsel %vm746, %v8269, %v8273
        %v8275 = vshrl.u32 %v8151, 16
        %v8277 = vrot.slane %v8275, 4
        %v8278 = vor.u32 %v8277, %v8273
        %v8279 = vrot.slane %v8278, 4
        %v8281 = vshll.u32 %v8152, 16
        %v8283 = vrot.slane %v8281, 5
        %v8284 = vsel %vm746, %v8279, %v8283
        %v8286 = vshrl.u32 %v8153, 16
        %v8288 = vrot.slane %v8286, 4
        %v8289 = vshll.u32 %v8153, 16
        %v8291 = vrot.slane %v8289, 5
        %v8292 = vor.u32 %v8288, %v8291
        %v8293 = vrot.slane %v8292, 4
        %v8295 = vshll.u32 %v8154, 16
        %v8297 = vrot.slane %v8295, 5
        %v8298 = vsel %vm746, %v8293, %v8297
        %v8299 = vshrl.u32 %v8154, 16
        %v8301 = vrot.slane %v8299, 4
        %v8302 = vor.u32 %v8301, %v8297
        %v8303 = vrot.slane %v8302, 4
        %v8305 = vshll.u32 %v8155, 16
        %v8307 = vrot.slane %v8305, 5
        %v8308 = vsel %vm746, %v8303, %v8307
        %v8310 = vshrl.u32 %v8156, 16
        %v8312 = vrot.slane %v8310, 4
        %v8313 = vshll.u32 %v8156, 16
        %v8315 = vrot.slane %v8313, 5
        %v8316 = vor.u32 %v8312, %v8315
        %v8317 = vrot.slane %v8316, 4
        %v8319 = vshll.u32 %v8157, 16
        %v8321 = vrot.slane %v8319, 5
        %v8322 = vsel %vm746, %v8317, %v8321
        %v8323 = vshrl.u32 %v8157, 16
        %v8325 = vrot.slane %v8323, 4
        %v8326 = vor.u32 %v8325, %v8321
        %v8327 = vrot.slane %v8326, 4
        %v8329 = vshll.u32 %v8158, 16
        %v8331 = vrot.slane %v8329, 5
        %v8332 = vsel %vm746, %v8327, %v8331
        %v8334 = vshrl.u32 %v8159, 16
        %v8336 = vrot.slane %v8334, 4
        %v8337 = vshll.u32 %v8159, 16
        %v8339 = vrot.slane %v8337, 5
        %v8340 = vor.u32 %v8336, %v8339
        %v8341 = vrot.slane %v8340, 4
        %v8343 = vshll.u32 %v8160, 16
        %v8345 = vrot.slane %v8343, 5
        %v8346 = vsel %vm746, %v8341, %v8345
        %v8347 = vshrl.u32 %v8160, 16
        %v8349 = vrot.slane %v8347, 4
        %v8350 = vor.u32 %v8349, %v8345
        %v8351 = vrot.slane %v8350, 4
        %v8353 = vshll.u32 %v8161, 16
        %v8355 = vrot.slane %v8353, 5
        %v8356 = vsel %vm746, %v8351, %v8355
        %v8358 = vshrl.u32 %v8162, 16
        %v8360 = vrot.slane %v8358, 4
        %v8361 = vshll.u32 %v8162, 16
        %v8363 = vrot.slane %v8361, 5
        %v8364 = vor.u32 %v8360, %v8363
        %v8365 = vrot.slane %v8364, 4
        %v8367 = vshll.u32 %v8163, 16
        %v8369 = vrot.slane %v8367, 5
        %v8370 = vsel %vm746, %v8365, %v8369
        %v8371 = vshrl.u32 %v8163, 16
        %v8373 = vrot.slane %v8371, 4
        %v8374 = vor.u32 %v8373, %v8369
        %v8375 = vrot.slane %v8374, 4
        %v8377 = vshll.u32 %v8164, 16
        %v8379 = vrot.slane %v8377, 5
        %v8380 = vsel %vm746, %v8375, %v8379
        %v8382 = vshrl.u32 %v8165, 16
        %v8384 = vrot.slane %v8382, 4
        %v8385 = vshll.u32 %v8165, 16
        %v8387 = vrot.slane %v8385, 5
        %v8388 = vor.u32 %v8384, %v8387
        %v8389 = vrot.slane %v8388, 4
        %v8391 = vshll.u32 %v8166, 16
        %v8393 = vrot.slane %v8391, 5
        %v8394 = vsel %vm746, %v8389, %v8393
        %v8395 = vshrl.u32 %v8166, 16
        %v8397 = vrot.slane %v8395, 4
        %v8398 = vor.u32 %v8397, %v8393
        %v8399 = vrot.slane %v8398, 4
        %v8401 = vshll.u32 %v8167, 16
        %v8403 = vrot.slane %v8401, 5
        %v8404 = vsel %vm746, %v8399, %v8403
        %v8406 = vshrl.u32 %v8168, 16
        %v8408 = vrot.slane %v8406, 4
        %v8409 = vshll.u32 %v8168, 16
        %v8411 = vrot.slane %v8409, 5
        %v8412 = vor.u32 %v8408, %v8411
        %v8413 = vrot.slane %v8412, 4
        %v8415 = vshll.u32 %v8169, 16
        %v8417 = vrot.slane %v8415, 5
        %v8418 = vsel %vm746, %v8413, %v8417
        %v8419 = vshrl.u32 %v8169, 16
        %v8421 = vrot.slane %v8419, 4
        %v8422 = vor.u32 %v8421, %v8417
        %v8423 = vrot.slane %v8422, 4
        %v8425 = vshll.u32 %v8170, 16
        %v8427 = vrot.slane %v8425, 5
        %v8428 = vsel %vm746, %v8423, %v8427
        %v8430 = vshrl.u32 %v8171, 16
        %v8432 = vrot.slane %v8430, 4
        %v8433 = vshll.u32 %v8171, 16
        %v8435 = vrot.slane %v8433, 5
        %v8436 = vor.u32 %v8432, %v8435
        %v8437 = vrot.slane %v8436, 4
        %v8439 = vshll.u32 %v8172, 16
        %v8441 = vrot.slane %v8439, 5
        %v8442 = vsel %vm746, %v8437, %v8441
        %v8443 = vshrl.u32 %v8172, 16
        %v8445 = vrot.slane %v8443, 4
        %v8446 = vor.u32 %v8445, %v8441
        %v8447 = vrot.slane %v8446, 4
        %v8449 = vshll.u32 %v8173, 16
        %v8451 = vrot.slane %v8449, 5
        %v8452 = vsel %vm746, %v8447, %v8451
        %v8454 = vshrl.u32 %v8174, 16
        %v8456 = vrot.slane %v8454, 4
        %v8457 = vshll.u32 %v8174, 16
        %v8459 = vrot.slane %v8457, 5
        %v8460 = vor.u32 %v8456, %v8459
        %v8461 = vrot.slane %v8460, 4
        %v8463 = vshll.u32 %v8175, 16
        %v8465 = vrot.slane %v8463, 5
        %v8466 = vsel %vm746, %v8461, %v8465
        %v8467 = vshrl.u32 %v8175, 16
        %v8469 = vrot.slane %v8467, 4
        %v8470 = vor.u32 %v8469, %v8465
        %v8471 = vrot.slane %v8470, 4
        %v8473 = vshll.u32 %v8176, 16
        %v8475 = vrot.slane %v8473, 5
        %v8476 = vsel %vm746, %v8471, %v8475
        %v8478 = vshrl.u32 %v8177, 16
        %v8480 = vrot.slane %v8478, 4
        %v8481 = vshll.u32 %v8177, 16
        %v8483 = vrot.slane %v8481, 5
        %v8484 = vor.u32 %v8480, %v8483
        %v8485 = vrot.slane %v8484, 4
        %v8487 = vshll.u32 %v8178, 16
        %v8489 = vrot.slane %v8487, 5
        %v8490 = vsel %vm746, %v8485, %v8489
        %v8491 = vshrl.u32 %v8178, 16
        %v8493 = vrot.slane %v8491, 4
        %v8494 = vor.u32 %v8493, %v8489
        %v8495 = vrot.slane %v8494, 4
        %v8497 = vshll.u32 %v8179, 16
        %v8499 = vrot.slane %v8497, 5
        %v8500 = vsel %vm746, %v8495, %v8499
        %v8502 = vshrl.u32 %v8180, 16
        %v8504 = vrot.slane %v8502, 4
        %v8505 = vshll.u32 %v8180, 16
        %v8507 = vrot.slane %v8505, 5
        %v8508 = vor.u32 %v8504, %v8507
        %v8509 = vrot.slane %v8508, 4
        %v8511 = vshll.u32 %v8181, 16
        %v8513 = vrot.slane %v8511, 5
        %v8514 = vsel %vm746, %v8509, %v8513
        %v8515 = vshrl.u32 %v8181, 16
        %v8517 = vrot.slane %v8515, 4
        %v8518 = vor.u32 %v8517, %v8513
        %v8519 = vrot.slane %v8518, 4
        %v8521 = vshll.u32 %v8182, 16
        %v8523 = vrot.slane %v8521, 5
        %v8524 = vsel %vm746, %v8519, %v8523
        %v8526 = vshrl.u32 %v8183, 16
        %v8528 = vrot.slane %v8526, 4
        %v8529 = vshll.u32 %v8183, 16
        %v8531 = vrot.slane %v8529, 5
        %v8532 = vor.u32 %v8528, %v8531
        %v8533 = vrot.slane %v8532, 4
        %v8535 = vshll.u32 %v8184, 16
        %v8537 = vrot.slane %v8535, 5
        %v8538 = vsel %vm746, %v8533, %v8537
        %v8539 = vshrl.u32 %v8184, 16
        %v8541 = vrot.slane %v8539, 4
        %v8542 = vor.u32 %v8541, %v8537
        %v8543 = vrot.slane %v8542, 4
        %v8545 = vshll.u32 %v8185, 16
        %v8547 = vrot.slane %v8545, 5
        %v8548 = vsel %vm746, %v8543, %v8547
        %v8550 = vshrl.u32 %v8186, 16
        %v8552 = vrot.slane %v8550, 4
        %v8553 = vshll.u32 %v8186, 16
        %v8555 = vrot.slane %v8553, 5
        %v8556 = vor.u32 %v8552, %v8555
        %v8557 = vrot.slane %v8556, 4
        %v8559 = vshll.u32 %v8187, 16
        %v8561 = vrot.slane %v8559, 5
        %v8562 = vsel %vm746, %v8557, %v8561
        %v8563 = vshrl.u32 %v8187, 16
        %v8565 = vrot.slane %v8563, 4
        %v8566 = vor.u32 %v8565, %v8561
        %v8567 = vrot.slane %v8566, 4
        %v8569 = vshll.u32 %v8188, 16
        %v8571 = vrot.slane %v8569, 5
        %v8572 = vsel %vm746, %v8567, %v8571
        %v8605 = vunpack.c.l.bf16 %v8202
        %v8606 = vunpack.c.l.bf16 %v8212
        %v8607 = vunpack.c.l.bf16 %v8226
        %v8608 = vunpack.c.l.bf16 %v8236
        %v8609 = vunpack.c.l.bf16 %v8250
        %v8610 = vunpack.c.l.bf16 %v8260
        %v8611 = vunpack.c.l.bf16 %v8274
        %v8612 = vunpack.c.l.bf16 %v8284
        %v8613 = vunpack.c.l.bf16 %v8298
        %v8614 = vunpack.c.l.bf16 %v8308
        %v8615 = vunpack.c.l.bf16 %v8322
        %v8616 = vunpack.c.l.bf16 %v8332
        %v8617 = vunpack.c.l.bf16 %v8346
        %v8618 = vunpack.c.l.bf16 %v8356
        %v8619 = vunpack.c.l.bf16 %v8370
        %v8620 = vunpack.c.l.bf16 %v8380
        %v8621 = vunpack.c.l.bf16 %v8394
        %v8622 = vunpack.c.l.bf16 %v8404
        %v8623 = vunpack.c.l.bf16 %v8418
        %v8624 = vunpack.c.l.bf16 %v8428
        %v8625 = vunpack.c.l.bf16 %v8442
        %v8626 = vunpack.c.l.bf16 %v8452
        %v8627 = vunpack.c.l.bf16 %v8466
        %v8628 = vunpack.c.l.bf16 %v8476
        %v8629 = vunpack.c.l.bf16 %v8490
        %v8630 = vunpack.c.l.bf16 %v8500
        %v8631 = vunpack.c.l.bf16 %v8514
        %v8632 = vunpack.c.l.bf16 %v8524
        %v8633 = vunpack.c.l.bf16 %v8538
        %v8634 = vunpack.c.l.bf16 %v8548
        %v8635 = vunpack.c.l.bf16 %v8562
        %v8636 = vunpack.c.l.bf16 %v8572
        %v8637 = vld [vmem:[%s3 + $0x10] sm:$0x1]
        %8639 = vset.pattern.permute.xlu0 0
        %8640 = vperm.xlu0 %8639, %v8605
        %v8641 = vpop.permute.xlu0 %8640
        %8644 = vset.pattern.permute.xlu0 0
        %8645 = vperm.xlu0 %8644, %v8606
        %v8646 = vpop.permute.xlu0 %8645
        %8649 = vset.pattern.permute.xlu0 0
        %8650 = vperm.xlu0 %8649, %v8607
        %v8651 = vpop.permute.xlu0 %8650
        %8654 = vset.pattern.permute.xlu0 0
        %8655 = vperm.xlu0 %8654, %v8608
        %v8656 = vpop.permute.xlu0 %8655
        %8659 = vset.pattern.permute.xlu0 0
        %8660 = vperm.xlu0 %8659, %v8609
        %v8661 = vpop.permute.xlu0 %8660
        %8664 = vset.pattern.permute.xlu0 0
        %8665 = vperm.xlu0 %8664, %v8610
        %v8666 = vpop.permute.xlu0 %8665
        %8669 = vset.pattern.permute.xlu0 0
        %8670 = vperm.xlu0 %8669, %v8611
        %v8671 = vpop.permute.xlu0 %8670
        %8674 = vset.pattern.permute.xlu0 0
        %8675 = vperm.xlu0 %8674, %v8612
        %v8676 = vpop.permute.xlu0 %8675
        %8679 = vset.pattern.permute.xlu0 0
        %8680 = vperm.xlu0 %8679, %v8613
        %v8681 = vpop.permute.xlu0 %8680
        %8684 = vset.pattern.permute.xlu0 0
        %8685 = vperm.xlu0 %8684, %v8614
        %v8686 = vpop.permute.xlu0 %8685
        %8689 = vset.pattern.permute.xlu0 0
        %8690 = vperm.xlu0 %8689, %v8615
        %v8691 = vpop.permute.xlu0 %8690
        %8694 = vset.pattern.permute.xlu0 0
        %8695 = vperm.xlu0 %8694, %v8616
        %v8696 = vpop.permute.xlu0 %8695
        %8699 = vset.pattern.permute.xlu0 0
        %8700 = vperm.xlu0 %8699, %v8617
        %v8701 = vpop.permute.xlu0 %8700
        %8704 = vset.pattern.permute.xlu0 0
        %8705 = vperm.xlu0 %8704, %v8618
        %v8706 = vpop.permute.xlu0 %8705
        %8709 = vset.pattern.permute.xlu0 0
        %8710 = vperm.xlu0 %8709, %v8619
        %v8711 = vpop.permute.xlu0 %8710
        %8714 = vset.pattern.permute.xlu0 0
        %8715 = vperm.xlu0 %8714, %v8620
        %v8716 = vpop.permute.xlu0 %8715
        %8719 = vset.pattern.permute.xlu0 0
        %8720 = vperm.xlu0 %8719, %v8621
        %v8721 = vpop.permute.xlu0 %8720
        %8724 = vset.pattern.permute.xlu0 0
        %8725 = vperm.xlu0 %8724, %v8622
        %v8726 = vpop.permute.xlu0 %8725
        %8729 = vset.pattern.permute.xlu0 0
        %8730 = vperm.xlu0 %8729, %v8623
        %v8731 = vpop.permute.xlu0 %8730
        %8734 = vset.pattern.permute.xlu0 0
        %8735 = vperm.xlu0 %8734, %v8624
        %v8736 = vpop.permute.xlu0 %8735
        %8739 = vset.pattern.permute.xlu0 0
        %8740 = vperm.xlu0 %8739, %v8625
        %v8741 = vpop.permute.xlu0 %8740
        %8744 = vset.pattern.permute.xlu0 0
        %8745 = vperm.xlu0 %8744, %v8626
        %v8746 = vpop.permute.xlu0 %8745
        %8749 = vset.pattern.permute.xlu0 0
        %8750 = vperm.xlu0 %8749, %v8627
        %v8751 = vpop.permute.xlu0 %8750
        %8754 = vset.pattern.permute.xlu0 0
        %8755 = vperm.xlu0 %8754, %v8628
        %v8756 = vpop.permute.xlu0 %8755
        %8759 = vset.pattern.permute.xlu0 0
        %8760 = vperm.xlu0 %8759, %v8629
        %v8761 = vpop.permute.xlu0 %8760
        %8764 = vset.pattern.permute.xlu0 0
        %8765 = vperm.xlu0 %8764, %v8630
        %v8766 = vpop.permute.xlu0 %8765
        %8769 = vset.pattern.permute.xlu0 0
        %8770 = vperm.xlu0 %8769, %v8631
        %v8771 = vpop.permute.xlu0 %8770
        %8774 = vset.pattern.permute.xlu0 0
        %8775 = vperm.xlu0 %8774, %v8632
        %v8776 = vpop.permute.xlu0 %8775
        %8779 = vset.pattern.permute.xlu0 0
        %8780 = vperm.xlu0 %8779, %v8633
        %v8781 = vpop.permute.xlu0 %8780
        %8784 = vset.pattern.permute.xlu0 0
        %8785 = vperm.xlu0 %8784, %v8634
        %v8786 = vpop.permute.xlu0 %8785
        %8789 = vset.pattern.permute.xlu0 0
        %8790 = vperm.xlu0 %8789, %v8635
        %v8791 = vpop.permute.xlu0 %8790
        %8794 = vset.pattern.permute.xlu0 0
        %8795 = vperm.xlu0 %8794, %v8636
        %v8796 = vpop.permute.xlu0 %8795
        %v8798 = vlaneseq
        %v8799 = vshrl.u32 %v8798, 7
        %v8800 = vsub.s32 0, %v8799
        %v8801 = vrot.slane %v8637, %v8800
        %v8802 = vmul.f32 %v8641, %v8801
        %v8803 = vmul.f32 %v8646, %v8801
        %v8804 = vmul.f32 %v8651, %v8801
        %v8805 = vmul.f32 %v8656, %v8801
        %v8806 = vmul.f32 %v8661, %v8801
        %v8807 = vmul.f32 %v8666, %v8801
        %v8808 = vmul.f32 %v8671, %v8801
        %v8809 = vmul.f32 %v8676, %v8801
        %v8810 = vmul.f32 %v8681, %v8801
        %v8811 = vmul.f32 %v8686, %v8801
        %v8812 = vmul.f32 %v8691, %v8801
        %v8813 = vmul.f32 %v8696, %v8801
        %v8814 = vmul.f32 %v8701, %v8801
        %v8815 = vmul.f32 %v8706, %v8801
        %v8816 = vmul.f32 %v8711, %v8801
        %v8817 = vmul.f32 %v8716, %v8801
        %v8818 = vmul.f32 %v8721, %v8801
        %v8819 = vmul.f32 %v8726, %v8801
        %v8820 = vmul.f32 %v8731, %v8801
        %v8821 = vmul.f32 %v8736, %v8801
        %v8822 = vmul.f32 %v8741, %v8801
        %v8823 = vmul.f32 %v8746, %v8801
        %v8824 = vmul.f32 %v8751, %v8801
        %v8825 = vmul.f32 %v8756, %v8801
        %v8826 = vmul.f32 %v8761, %v8801
        %v8827 = vmul.f32 %v8766, %v8801
        %v8828 = vmul.f32 %v8771, %v8801
        %v8829 = vmul.f32 %v8776, %v8801
        %v8830 = vmul.f32 %v8781, %v8801
        %v8831 = vmul.f32 %v8786, %v8801
        %v8832 = vmul.f32 %v8791, %v8801
        %v8833 = vmul.f32 %v8796, %v8801
        %v8834 = vadd.f32 %v8109, %v8802
        %v8835 = vadd.f32 %v8110, %v8803
        %v8836 = vadd.f32 %v8111, %v8804
        %v8837 = vadd.f32 %v8112, %v8805
        %v8838 = vadd.f32 %v8113, %v8806
        %v8839 = vadd.f32 %v8114, %v8807
        %v8840 = vadd.f32 %v8115, %v8808
        %v8841 = vadd.f32 %v8116, %v8809
        %v8842 = vadd.f32 %v8117, %v8810
        %v8843 = vadd.f32 %v8118, %v8811
        %v8844 = vadd.f32 %v8119, %v8812
        %v8845 = vadd.f32 %v8120, %v8813
        %v8846 = vadd.f32 %v8121, %v8814
        %v8847 = vadd.f32 %v8122, %v8815
        %v8848 = vadd.f32 %v8123, %v8816
        %v8849 = vadd.f32 %v8124, %v8817
        %v8850 = vadd.f32 %v8125, %v8818
        %v8851 = vadd.f32 %v8126, %v8819
        %v8852 = vadd.f32 %v8127, %v8820
        %v8853 = vadd.f32 %v8128, %v8821
        %v8854 = vadd.f32 %v8129, %v8822
        %v8855 = vadd.f32 %v8130, %v8823
        %v8856 = vadd.f32 %v8131, %v8824
        %v8857 = vadd.f32 %v8132, %v8825
        %v8858 = vadd.f32 %v8133, %v8826
        %v8859 = vadd.f32 %v8134, %v8827
        %v8860 = vadd.f32 %v8135, %v8828
        %v8861 = vadd.f32 %v8136, %v8829
        %v8862 = vadd.f32 %v8137, %v8830
        %v8863 = vadd.f32 %v8138, %v8831
        %v8864 = vadd.f32 %v8139, %v8832
        %v8865 = vadd.f32 %v8140, %v8833
        %v8866 = vld [vmem:[%s7847] sm:$0xe]
        %v8867 = vld [vmem:[%s7847 + $0xc] sm:$0xe]
        %v8868 = vld [vmem:[%s7847 + $0x18] sm:$0xe]
        %v8869 = vld [vmem:[%s7847 + $0x24] sm:$0xe]
        %v8870 = vld [vmem:[%s7847 + $0x30] sm:$0xe]
        %v8871 = vld [vmem:[%s7847 + $0x3c] sm:$0xe]
        %v8872 = vld [vmem:[%s7847 + $0x48] sm:$0xe]
        %v8873 = vld [vmem:[%s7847 + $0x54] sm:$0xe]
        %v8874 = vld [vmem:[%s7847 + $0x60] sm:$0xe]
        %v8875 = vld [vmem:[%s7847 + $0x6c] sm:$0xe]
        %v8876 = vld [vmem:[%s7847 + $0x78] sm:$0xe]
        %v8877 = vld [vmem:[%s7847 + $0x84] sm:$0xe]
        %v8878 = vld [vmem:[%s7847 + $0x90] sm:$0xe]
        %v8879 = vld [vmem:[%s7847 + $0x9c] sm:$0xe]
        %v8880 = vld [vmem:[%s7847 + $0xa8] sm:$0xe]
        %v8881 = vld [vmem:[%s7847 + $0xb4] sm:$0xe]
        %v8930 = vrot.slane %v8866, 5
        %v8931 = vrot.slane %v8930, 4
        %v8932 = vrot.slane %v8142, 5
        %v8933 = vsel %vm1490, %v8931, %v8932
        %v8934 = vrot.slane %v8932, 4
        %v8935 = vrot.slane %v8143, 5
        %v8936 = vsel %vm1490, %v8934, %v8935
        %v8937 = vrot.slane %v8867, 5
        %v8938 = vrot.slane %v8937, 4
        %v8939 = vrot.slane %v8145, 5
        %v8940 = vsel %vm1490, %v8938, %v8939
        %v8941 = vrot.slane %v8939, 4
        %v8942 = vrot.slane %v8146, 5
        %v8943 = vsel %vm1490, %v8941, %v8942
        %v8944 = vrot.slane %v8868, 5
        %v8945 = vrot.slane %v8944, 4
        %v8946 = vrot.slane %v8148, 5
        %v8947 = vsel %vm1490, %v8945, %v8946
        %v8948 = vrot.slane %v8946, 4
        %v8949 = vrot.slane %v8149, 5
        %v8950 = vsel %vm1490, %v8948, %v8949
        %v8951 = vrot.slane %v8869, 5
        %v8952 = vrot.slane %v8951, 4
        %v8953 = vrot.slane %v8151, 5
        %v8954 = vsel %vm1490, %v8952, %v8953
        %v8955 = vrot.slane %v8953, 4
        %v8956 = vrot.slane %v8152, 5
        %v8957 = vsel %vm1490, %v8955, %v8956
        %v8958 = vrot.slane %v8870, 5
        %v8959 = vrot.slane %v8958, 4
        %v8960 = vrot.slane %v8154, 5
        %v8961 = vsel %vm1490, %v8959, %v8960
        %v8962 = vrot.slane %v8960, 4
        %v8963 = vrot.slane %v8155, 5
        %v8964 = vsel %vm1490, %v8962, %v8963
        %v8965 = vrot.slane %v8871, 5
        %v8966 = vrot.slane %v8965, 4
        %v8967 = vrot.slane %v8157, 5
        %v8968 = vsel %vm1490, %v8966, %v8967
        %v8969 = vrot.slane %v8967, 4
        %v8970 = vrot.slane %v8158, 5
        %v8971 = vsel %vm1490, %v8969, %v8970
        %v8972 = vrot.slane %v8872, 5
        %v8973 = vrot.slane %v8972, 4
        %v8974 = vrot.slane %v8160, 5
        %v8975 = vsel %vm1490, %v8973, %v8974
        %v8976 = vrot.slane %v8974, 4
        %v8977 = vrot.slane %v8161, 5
        %v8978 = vsel %vm1490, %v8976, %v8977
        %v8979 = vrot.slane %v8873, 5
        %v8980 = vrot.slane %v8979, 4
        %v8981 = vrot.slane %v8163, 5
        %v8982 = vsel %vm1490, %v8980, %v8981
        %v8983 = vrot.slane %v8981, 4
        %v8984 = vrot.slane %v8164, 5
        %v8985 = vsel %vm1490, %v8983, %v8984
        %v8986 = vrot.slane %v8874, 5
        %v8987 = vrot.slane %v8986, 4
        %v8988 = vrot.slane %v8166, 5
        %v8989 = vsel %vm1490, %v8987, %v8988
        %v8990 = vrot.slane %v8988, 4
        %v8991 = vrot.slane %v8167, 5
        %v8992 = vsel %vm1490, %v8990, %v8991
        %v8993 = vrot.slane %v8875, 5
        %v8994 = vrot.slane %v8993, 4
        %v8995 = vrot.slane %v8169, 5
        %v8996 = vsel %vm1490, %v8994, %v8995
        %v8997 = vrot.slane %v8995, 4
        %v8998 = vrot.slane %v8170, 5
        %v8999 = vsel %vm1490, %v8997, %v8998
        %v9000 = vrot.slane %v8876, 5
        %v9001 = vrot.slane %v9000, 4
        %v9002 = vrot.slane %v8172, 5
        %v9003 = vsel %vm1490, %v9001, %v9002
        %v9004 = vrot.slane %v9002, 4
        %v9005 = vrot.slane %v8173, 5
        %v9006 = vsel %vm1490, %v9004, %v9005
        %v9007 = vrot.slane %v8877, 5
        %v9008 = vrot.slane %v9007, 4
        %v9009 = vrot.slane %v8175, 5
        %v9010 = vsel %vm1490, %v9008, %v9009
        %v9011 = vrot.slane %v9009, 4
        %v9012 = vrot.slane %v8176, 5
        %v9013 = vsel %vm1490, %v9011, %v9012
        %v9014 = vrot.slane %v8878, 5
        %v9015 = vrot.slane %v9014, 4
        %v9016 = vrot.slane %v8178, 5
        %v9017 = vsel %vm1490, %v9015, %v9016
        %v9018 = vrot.slane %v9016, 4
        %v9019 = vrot.slane %v8179, 5
        %v9020 = vsel %vm1490, %v9018, %v9019
        %v9021 = vrot.slane %v8879, 5
        %v9022 = vrot.slane %v9021, 4
        %v9023 = vrot.slane %v8181, 5
        %v9024 = vsel %vm1490, %v9022, %v9023
        %v9025 = vrot.slane %v9023, 4
        %v9026 = vrot.slane %v8182, 5
        %v9027 = vsel %vm1490, %v9025, %v9026
        %v9028 = vrot.slane %v8880, 5
        %v9029 = vrot.slane %v9028, 4
        %v9030 = vrot.slane %v8184, 5
        %v9031 = vsel %vm1490, %v9029, %v9030
        %v9032 = vrot.slane %v9030, 4
        %v9033 = vrot.slane %v8185, 5
        %v9034 = vsel %vm1490, %v9032, %v9033
        %v9035 = vrot.slane %v8881, 5
        %v9036 = vrot.slane %v9035, 4
        %v9037 = vrot.slane %v8187, 5
        %v9038 = vsel %vm1490, %v9036, %v9037
        %v9039 = vrot.slane %v9037, 4
        %v9040 = vrot.slane %v8188, 5
        %v9041 = vsel %vm1490, %v9039, %v9040
        %v9074 = vunpack.c.l.bf16 %v8933
        %v9075 = vunpack.c.l.bf16 %v8936
        %v9076 = vunpack.c.l.bf16 %v8940
        %v9077 = vunpack.c.l.bf16 %v8943
        %v9078 = vunpack.c.l.bf16 %v8947
        %v9079 = vunpack.c.l.bf16 %v8950
        %v9080 = vunpack.c.l.bf16 %v8954
        %v9081 = vunpack.c.l.bf16 %v8957
        %v9082 = vunpack.c.l.bf16 %v8961
        %v9083 = vunpack.c.l.bf16 %v8964
        %v9084 = vunpack.c.l.bf16 %v8968
        %v9085 = vunpack.c.l.bf16 %v8971
        %v9086 = vunpack.c.l.bf16 %v8975
        %v9087 = vunpack.c.l.bf16 %v8978
        %v9088 = vunpack.c.l.bf16 %v8982
        %v9089 = vunpack.c.l.bf16 %v8985
        %v9090 = vunpack.c.l.bf16 %v8989
        %v9091 = vunpack.c.l.bf16 %v8992
        %v9092 = vunpack.c.l.bf16 %v8996
        %v9093 = vunpack.c.l.bf16 %v8999
        %v9094 = vunpack.c.l.bf16 %v9003
        %v9095 = vunpack.c.l.bf16 %v9006
        %v9096 = vunpack.c.l.bf16 %v9010
        %v9097 = vunpack.c.l.bf16 %v9013
        %v9098 = vunpack.c.l.bf16 %v9017
        %v9099 = vunpack.c.l.bf16 %v9020
        %v9100 = vunpack.c.l.bf16 %v9024
        %v9101 = vunpack.c.l.bf16 %v9027
        %v9102 = vunpack.c.l.bf16 %v9031
        %v9103 = vunpack.c.l.bf16 %v9034
        %v9104 = vunpack.c.l.bf16 %v9038
        %v9105 = vunpack.c.l.bf16 %v9041
        %v9106 = vld [vmem:[%s3 + $0x11] sm:$0x1]
        %9108 = vset.pattern.permute.xlu0 0
        %9109 = vperm.xlu0 %9108, %v9074
        %v9110 = vpop.permute.xlu0 %9109
        %9113 = vset.pattern.permute.xlu0 0
        %9114 = vperm.xlu0 %9113, %v9075
        %v9115 = vpop.permute.xlu0 %9114
        %9118 = vset.pattern.permute.xlu0 0
        %9119 = vperm.xlu0 %9118, %v9076
        %v9120 = vpop.permute.xlu0 %9119
        %9123 = vset.pattern.permute.xlu0 0
        %9124 = vperm.xlu0 %9123, %v9077
        %v9125 = vpop.permute.xlu0 %9124
        %9128 = vset.pattern.permute.xlu0 0
        %9129 = vperm.xlu0 %9128, %v9078
        %v9130 = vpop.permute.xlu0 %9129
        %9133 = vset.pattern.permute.xlu0 0
        %9134 = vperm.xlu0 %9133, %v9079
        %v9135 = vpop.permute.xlu0 %9134
        %9138 = vset.pattern.permute.xlu0 0
        %9139 = vperm.xlu0 %9138, %v9080
        %v9140 = vpop.permute.xlu0 %9139
        %9143 = vset.pattern.permute.xlu0 0
        %9144 = vperm.xlu0 %9143, %v9081
        %v9145 = vpop.permute.xlu0 %9144
        %9148 = vset.pattern.permute.xlu0 0
        %9149 = vperm.xlu0 %9148, %v9082
        %v9150 = vpop.permute.xlu0 %9149
        %9153 = vset.pattern.permute.xlu0 0
        %9154 = vperm.xlu0 %9153, %v9083
        %v9155 = vpop.permute.xlu0 %9154
        %9158 = vset.pattern.permute.xlu0 0
        %9159 = vperm.xlu0 %9158, %v9084
        %v9160 = vpop.permute.xlu0 %9159
        %9163 = vset.pattern.permute.xlu0 0
        %9164 = vperm.xlu0 %9163, %v9085
        %v9165 = vpop.permute.xlu0 %9164
        %9168 = vset.pattern.permute.xlu0 0
        %9169 = vperm.xlu0 %9168, %v9086
        %v9170 = vpop.permute.xlu0 %9169
        %9173 = vset.pattern.permute.xlu0 0
        %9174 = vperm.xlu0 %9173, %v9087
        %v9175 = vpop.permute.xlu0 %9174
        %9178 = vset.pattern.permute.xlu0 0
        %9179 = vperm.xlu0 %9178, %v9088
        %v9180 = vpop.permute.xlu0 %9179
        %9183 = vset.pattern.permute.xlu0 0
        %9184 = vperm.xlu0 %9183, %v9089
        %v9185 = vpop.permute.xlu0 %9184
        %9188 = vset.pattern.permute.xlu0 0
        %9189 = vperm.xlu0 %9188, %v9090
        %v9190 = vpop.permute.xlu0 %9189
        %9193 = vset.pattern.permute.xlu0 0
        %9194 = vperm.xlu0 %9193, %v9091
        %v9195 = vpop.permute.xlu0 %9194
        %9198 = vset.pattern.permute.xlu0 0
        %9199 = vperm.xlu0 %9198, %v9092
        %v9200 = vpop.permute.xlu0 %9199
        %9203 = vset.pattern.permute.xlu0 0
        %9204 = vperm.xlu0 %9203, %v9093
        %v9205 = vpop.permute.xlu0 %9204
        %9208 = vset.pattern.permute.xlu0 0
        %9209 = vperm.xlu0 %9208, %v9094
        %v9210 = vpop.permute.xlu0 %9209
        %9213 = vset.pattern.permute.xlu0 0
        %9214 = vperm.xlu0 %9213, %v9095
        %v9215 = vpop.permute.xlu0 %9214
        %9218 = vset.pattern.permute.xlu0 0
        %9219 = vperm.xlu0 %9218, %v9096
        %v9220 = vpop.permute.xlu0 %9219
        %9223 = vset.pattern.permute.xlu0 0
        %9224 = vperm.xlu0 %9223, %v9097
        %v9225 = vpop.permute.xlu0 %9224
        %9228 = vset.pattern.permute.xlu0 0
        %9229 = vperm.xlu0 %9228, %v9098
        %v9230 = vpop.permute.xlu0 %9229
        %9233 = vset.pattern.permute.xlu0 0
        %9234 = vperm.xlu0 %9233, %v9099
        %v9235 = vpop.permute.xlu0 %9234
        %9238 = vset.pattern.permute.xlu0 0
        %9239 = vperm.xlu0 %9238, %v9100
        %v9240 = vpop.permute.xlu0 %9239
        %9243 = vset.pattern.permute.xlu0 0
        %9244 = vperm.xlu0 %9243, %v9101
        %v9245 = vpop.permute.xlu0 %9244
        %9248 = vset.pattern.permute.xlu0 0
        %9249 = vperm.xlu0 %9248, %v9102
        %v9250 = vpop.permute.xlu0 %9249
        %9253 = vset.pattern.permute.xlu0 0
        %9254 = vperm.xlu0 %9253, %v9103
        %v9255 = vpop.permute.xlu0 %9254
        %9258 = vset.pattern.permute.xlu0 0
        %9259 = vperm.xlu0 %9258, %v9104
        %v9260 = vpop.permute.xlu0 %9259
        %9263 = vset.pattern.permute.xlu0 0
        %9264 = vperm.xlu0 %9263, %v9105
        %v9265 = vpop.permute.xlu0 %9264
        %v9267 = vlaneseq
        %v9268 = vshrl.u32 %v9267, 7
        %v9269 = vsub.s32 0, %v9268
        %v9270 = vrot.slane %v9106, %v9269
        %v9271 = vmul.f32 %v9110, %v9270
        %v9272 = vmul.f32 %v9115, %v9270
        %v9273 = vmul.f32 %v9120, %v9270
        %v9274 = vmul.f32 %v9125, %v9270
        %v9275 = vmul.f32 %v9130, %v9270
        %v9276 = vmul.f32 %v9135, %v9270
        %v9277 = vmul.f32 %v9140, %v9270
        %v9278 = vmul.f32 %v9145, %v9270
        %v9279 = vmul.f32 %v9150, %v9270
        %v9280 = vmul.f32 %v9155, %v9270
        %v9281 = vmul.f32 %v9160, %v9270
        %v9282 = vmul.f32 %v9165, %v9270
        %v9283 = vmul.f32 %v9170, %v9270
        %v9284 = vmul.f32 %v9175, %v9270
        %v9285 = vmul.f32 %v9180, %v9270
        %v9286 = vmul.f32 %v9185, %v9270
        %v9287 = vmul.f32 %v9190, %v9270
        %v9288 = vmul.f32 %v9195, %v9270
        %v9289 = vmul.f32 %v9200, %v9270
        %v9290 = vmul.f32 %v9205, %v9270
        %v9291 = vmul.f32 %v9210, %v9270
        %v9292 = vmul.f32 %v9215, %v9270
        %v9293 = vmul.f32 %v9220, %v9270
        %v9294 = vmul.f32 %v9225, %v9270
        %v9295 = vmul.f32 %v9230, %v9270
        %v9296 = vmul.f32 %v9235, %v9270
        %v9297 = vmul.f32 %v9240, %v9270
        %v9298 = vmul.f32 %v9245, %v9270
        %v9299 = vmul.f32 %v9250, %v9270
        %v9300 = vmul.f32 %v9255, %v9270
        %v9301 = vmul.f32 %v9260, %v9270
        %v9302 = vmul.f32 %v9265, %v9270
        %v9303 = vadd.f32 %v8834, %v9271
        %v9304 = vadd.f32 %v8835, %v9272
        %v9305 = vadd.f32 %v8836, %v9273
        %v9306 = vadd.f32 %v8837, %v9274
        %v9307 = vadd.f32 %v8838, %v9275
        %v9308 = vadd.f32 %v8839, %v9276
        %v9309 = vadd.f32 %v8840, %v9277
        %v9310 = vadd.f32 %v8841, %v9278
        %v9311 = vadd.f32 %v8842, %v9279
        %v9312 = vadd.f32 %v8843, %v9280
        %v9313 = vadd.f32 %v8844, %v9281
        %v9314 = vadd.f32 %v8845, %v9282
        %v9315 = vadd.f32 %v8846, %v9283
        %v9316 = vadd.f32 %v8847, %v9284
        %v9317 = vadd.f32 %v8848, %v9285
        %v9318 = vadd.f32 %v8849, %v9286
        %v9319 = vadd.f32 %v8850, %v9287
        %v9320 = vadd.f32 %v8851, %v9288
        %v9321 = vadd.f32 %v8852, %v9289
        %v9322 = vadd.f32 %v8853, %v9290
        %v9323 = vadd.f32 %v8854, %v9291
        %v9324 = vadd.f32 %v8855, %v9292
        %v9325 = vadd.f32 %v8856, %v9293
        %v9326 = vadd.f32 %v8857, %v9294
        %v9327 = vadd.f32 %v8858, %v9295
        %v9328 = vadd.f32 %v8859, %v9296
        %v9329 = vadd.f32 %v8860, %v9297
        %v9330 = vadd.f32 %v8861, %v9298
        %v9331 = vadd.f32 %v8862, %v9299
        %v9332 = vadd.f32 %v8863, %v9300
        %v9333 = vadd.f32 %v8864, %v9301
        %v9334 = vadd.f32 %v8865, %v9302
        %v9335 = vld [vmem:[%s401] sm:$0xf]
        %v9336 = vld [vmem:[%s401 + $0x4] sm:$0xf]
        %v9337 = vld [vmem:[%s401 + $0xc] sm:$0xf]
        %v9338 = vld [vmem:[%s401 + $0x10] sm:$0xf]
        %v9339 = vld [vmem:[%s401 + $0x18] sm:$0xf]
        %v9340 = vld [vmem:[%s401 + $0x1c] sm:$0xf]
        %v9341 = vld [vmem:[%s401 + $0x24] sm:$0xf]
        %v9342 = vld [vmem:[%s401 + $0x28] sm:$0xf]
        %v9343 = vld [vmem:[%s401 + $0x30] sm:$0xf]
        %v9344 = vld [vmem:[%s401 + $0x34] sm:$0xf]
        %v9345 = vld [vmem:[%s401 + $0x3c] sm:$0xf]
        %v9346 = vld [vmem:[%s401 + $0x40] sm:$0xf]
        %v9347 = vld [vmem:[%s401 + $0x48] sm:$0xf]
        %v9348 = vld [vmem:[%s401 + $0x4c] sm:$0xf]
        %v9349 = vld [vmem:[%s401 + $0x54] sm:$0xf]
        %v9350 = vld [vmem:[%s401 + $0x58] sm:$0xf]
        %v9351 = vld [vmem:[%s401 + $0x60] sm:$0xf]
        %v9352 = vld [vmem:[%s401 + $0x64] sm:$0xf]
        %v9353 = vld [vmem:[%s401 + $0x6c] sm:$0xf]
        %v9354 = vld [vmem:[%s401 + $0x70] sm:$0xf]
        %v9355 = vld [vmem:[%s401 + $0x78] sm:$0xf]
        %v9356 = vld [vmem:[%s401 + $0x7c] sm:$0xf]
        %v9357 = vld [vmem:[%s401 + $0x84] sm:$0xf]
        %v9358 = vld [vmem:[%s401 + $0x88] sm:$0xf]
        %v9359 = vld [vmem:[%s401 + $0x90] sm:$0xf]
        %v9360 = vld [vmem:[%s401 + $0x94] sm:$0xf]
        %v9361 = vld [vmem:[%s401 + $0x9c] sm:$0xf]
        %v9362 = vld [vmem:[%s401 + $0xa0] sm:$0xf]
        %v9363 = vld [vmem:[%s401 + $0xa8] sm:$0xf]
        %v9364 = vld [vmem:[%s401 + $0xac] sm:$0xf]
        %v9365 = vld [vmem:[%s401 + $0xb4] sm:$0xf]
        %v9366 = vld [vmem:[%s401 + $0xb8] sm:$0xf]
        %v9367 = vunpack.c.l.bf16 %v9335
        %v9368 = vunpack.c.l.bf16 %v9336
        %v9369 = vunpack.c.l.bf16 %v9337
        %v9370 = vunpack.c.l.bf16 %v9338
        %v9371 = vunpack.c.l.bf16 %v9339
        %v9372 = vunpack.c.l.bf16 %v9340
        %v9373 = vunpack.c.l.bf16 %v9341
        %v9374 = vunpack.c.l.bf16 %v9342
        %v9375 = vunpack.c.l.bf16 %v9343
        %v9376 = vunpack.c.l.bf16 %v9344
        %v9377 = vunpack.c.l.bf16 %v9345
        %v9378 = vunpack.c.l.bf16 %v9346
        %v9379 = vunpack.c.l.bf16 %v9347
        %v9380 = vunpack.c.l.bf16 %v9348
        %v9381 = vunpack.c.l.bf16 %v9349
        %v9382 = vunpack.c.l.bf16 %v9350
        %v9383 = vunpack.c.l.bf16 %v9351
        %v9384 = vunpack.c.l.bf16 %v9352
        %v9385 = vunpack.c.l.bf16 %v9353
        %v9386 = vunpack.c.l.bf16 %v9354
        %v9387 = vunpack.c.l.bf16 %v9355
        %v9388 = vunpack.c.l.bf16 %v9356
        %v9389 = vunpack.c.l.bf16 %v9357
        %v9390 = vunpack.c.l.bf16 %v9358
        %v9391 = vunpack.c.l.bf16 %v9359
        %v9392 = vunpack.c.l.bf16 %v9360
        %v9393 = vunpack.c.l.bf16 %v9361
        %v9394 = vunpack.c.l.bf16 %v9362
        %v9395 = vunpack.c.l.bf16 %v9363
        %v9396 = vunpack.c.l.bf16 %v9364
        %v9397 = vunpack.c.l.bf16 %v9365
        %v9398 = vunpack.c.l.bf16 %v9366
        %v9399 = vld [vmem:[%s3 + $0x12] sm:$0x1]
        %9401 = vset.pattern.permute.xlu0 0
        %9402 = vperm.xlu0 %9401, %v9367
        %v9403 = vpop.permute.xlu0 %9402
        %9406 = vset.pattern.permute.xlu0 0
        %9407 = vperm.xlu0 %9406, %v9368
        %v9408 = vpop.permute.xlu0 %9407
        %9411 = vset.pattern.permute.xlu0 0
        %9412 = vperm.xlu0 %9411, %v9369
        %v9413 = vpop.permute.xlu0 %9412
        %9416 = vset.pattern.permute.xlu0 0
        %9417 = vperm.xlu0 %9416, %v9370
        %v9418 = vpop.permute.xlu0 %9417
        %9421 = vset.pattern.permute.xlu0 0
        %9422 = vperm.xlu0 %9421, %v9371
        %v9423 = vpop.permute.xlu0 %9422
        %9426 = vset.pattern.permute.xlu0 0
        %9427 = vperm.xlu0 %9426, %v9372
        %v9428 = vpop.permute.xlu0 %9427
        %9431 = vset.pattern.permute.xlu0 0
        %9432 = vperm.xlu0 %9431, %v9373
        %v9433 = vpop.permute.xlu0 %9432
        %9436 = vset.pattern.permute.xlu0 0
        %9437 = vperm.xlu0 %9436, %v9374
        %v9438 = vpop.permute.xlu0 %9437
        %9441 = vset.pattern.permute.xlu0 0
        %9442 = vperm.xlu0 %9441, %v9375
        %v9443 = vpop.permute.xlu0 %9442
        %9446 = vset.pattern.permute.xlu0 0
        %9447 = vperm.xlu0 %9446, %v9376
        %v9448 = vpop.permute.xlu0 %9447
        %9451 = vset.pattern.permute.xlu0 0
        %9452 = vperm.xlu0 %9451, %v9377
        %v9453 = vpop.permute.xlu0 %9452
        %9456 = vset.pattern.permute.xlu0 0
        %9457 = vperm.xlu0 %9456, %v9378
        %v9458 = vpop.permute.xlu0 %9457
        %9461 = vset.pattern.permute.xlu0 0
        %9462 = vperm.xlu0 %9461, %v9379
        %v9463 = vpop.permute.xlu0 %9462
        %9466 = vset.pattern.permute.xlu0 0
        %9467 = vperm.xlu0 %9466, %v9380
        %v9468 = vpop.permute.xlu0 %9467
        %9471 = vset.pattern.permute.xlu0 0
        %9472 = vperm.xlu0 %9471, %v9381
        %v9473 = vpop.permute.xlu0 %9472
        %9476 = vset.pattern.permute.xlu0 0
        %9477 = vperm.xlu0 %9476, %v9382
        %v9478 = vpop.permute.xlu0 %9477
        %9481 = vset.pattern.permute.xlu0 0
        %9482 = vperm.xlu0 %9481, %v9383
        %v9483 = vpop.permute.xlu0 %9482
        %9486 = vset.pattern.permute.xlu0 0
        %9487 = vperm.xlu0 %9486, %v9384
        %v9488 = vpop.permute.xlu0 %9487
        %9491 = vset.pattern.permute.xlu0 0
        %9492 = vperm.xlu0 %9491, %v9385
        %v9493 = vpop.permute.xlu0 %9492
        %9496 = vset.pattern.permute.xlu0 0
        %9497 = vperm.xlu0 %9496, %v9386
        %v9498 = vpop.permute.xlu0 %9497
        %9501 = vset.pattern.permute.xlu0 0
        %9502 = vperm.xlu0 %9501, %v9387
        %v9503 = vpop.permute.xlu0 %9502
        %9506 = vset.pattern.permute.xlu0 0
        %9507 = vperm.xlu0 %9506, %v9388
        %v9508 = vpop.permute.xlu0 %9507
        %9511 = vset.pattern.permute.xlu0 0
        %9512 = vperm.xlu0 %9511, %v9389
        %v9513 = vpop.permute.xlu0 %9512
        %9516 = vset.pattern.permute.xlu0 0
        %9517 = vperm.xlu0 %9516, %v9390
        %v9518 = vpop.permute.xlu0 %9517
        %9521 = vset.pattern.permute.xlu0 0
        %9522 = vperm.xlu0 %9521, %v9391
        %v9523 = vpop.permute.xlu0 %9522
        %9526 = vset.pattern.permute.xlu0 0
        %9527 = vperm.xlu0 %9526, %v9392
        %v9528 = vpop.permute.xlu0 %9527
        %9531 = vset.pattern.permute.xlu0 0
        %9532 = vperm.xlu0 %9531, %v9393
        %v9533 = vpop.permute.xlu0 %9532
        %9536 = vset.pattern.permute.xlu0 0
        %9537 = vperm.xlu0 %9536, %v9394
        %v9538 = vpop.permute.xlu0 %9537
        %9541 = vset.pattern.permute.xlu0 0
        %9542 = vperm.xlu0 %9541, %v9395
        %v9543 = vpop.permute.xlu0 %9542
        %9546 = vset.pattern.permute.xlu0 0
        %9547 = vperm.xlu0 %9546, %v9396
        %v9548 = vpop.permute.xlu0 %9547
        %9551 = vset.pattern.permute.xlu0 0
        %9552 = vperm.xlu0 %9551, %v9397
        %v9553 = vpop.permute.xlu0 %9552
        %9556 = vset.pattern.permute.xlu0 0
        %9557 = vperm.xlu0 %9556, %v9398
        %v9558 = vpop.permute.xlu0 %9557
        %v9560 = vlaneseq
        %v9561 = vshrl.u32 %v9560, 7
        %v9562 = vsub.s32 0, %v9561
        %v9563 = vrot.slane %v9399, %v9562
        %v9564 = vmul.f32 %v9403, %v9563
        %v9565 = vmul.f32 %v9408, %v9563
        %v9566 = vmul.f32 %v9413, %v9563
        %v9567 = vmul.f32 %v9418, %v9563
        %v9568 = vmul.f32 %v9423, %v9563
        %v9569 = vmul.f32 %v9428, %v9563
        %v9570 = vmul.f32 %v9433, %v9563
        %v9571 = vmul.f32 %v9438, %v9563
        %v9572 = vmul.f32 %v9443, %v9563
        %v9573 = vmul.f32 %v9448, %v9563
        %v9574 = vmul.f32 %v9453, %v9563
        %v9575 = vmul.f32 %v9458, %v9563
        %v9576 = vmul.f32 %v9463, %v9563
        %v9577 = vmul.f32 %v9468, %v9563
        %v9578 = vmul.f32 %v9473, %v9563
        %v9579 = vmul.f32 %v9478, %v9563
        %v9580 = vmul.f32 %v9483, %v9563
        %v9581 = vmul.f32 %v9488, %v9563
        %v9582 = vmul.f32 %v9493, %v9563
        %v9583 = vmul.f32 %v9498, %v9563
        %v9584 = vmul.f32 %v9503, %v9563
        %v9585 = vmul.f32 %v9508, %v9563
        %v9586 = vmul.f32 %v9513, %v9563
        %v9587 = vmul.f32 %v9518, %v9563
        %v9588 = vmul.f32 %v9523, %v9563
        %v9589 = vmul.f32 %v9528, %v9563
        %v9590 = vmul.f32 %v9533, %v9563
        %v9591 = vmul.f32 %v9538, %v9563
        %v9592 = vmul.f32 %v9543, %v9563
        %v9593 = vmul.f32 %v9548, %v9563
        %v9594 = vmul.f32 %v9553, %v9563
        %v9595 = vmul.f32 %v9558, %v9563
        %v9596 = vadd.f32 %v9303, %v9564
        %v9597 = vadd.f32 %v9304, %v9565
        %v9598 = vadd.f32 %v9305, %v9566
        %v9599 = vadd.f32 %v9306, %v9567
        %v9600 = vadd.f32 %v9307, %v9568
        %v9601 = vadd.f32 %v9308, %v9569
        %v9602 = vadd.f32 %v9309, %v9570
        %v9603 = vadd.f32 %v9310, %v9571
        %v9604 = vadd.f32 %v9311, %v9572
        %v9605 = vadd.f32 %v9312, %v9573
        %v9606 = vadd.f32 %v9313, %v9574
        %v9607 = vadd.f32 %v9314, %v9575
        %v9608 = vadd.f32 %v9315, %v9576
        %v9609 = vadd.f32 %v9316, %v9577
        %v9610 = vadd.f32 %v9317, %v9578
        %v9611 = vadd.f32 %v9318, %v9579
        %v9612 = vadd.f32 %v9319, %v9580
        %v9613 = vadd.f32 %v9320, %v9581
        %v9614 = vadd.f32 %v9321, %v9582
        %v9615 = vadd.f32 %v9322, %v9583
        %v9616 = vadd.f32 %v9323, %v9584
        %v9617 = vadd.f32 %v9324, %v9585
        %v9618 = vadd.f32 %v9325, %v9586
        %v9619 = vadd.f32 %v9326, %v9587
        %v9620 = vadd.f32 %v9327, %v9588
        %v9621 = vadd.f32 %v9328, %v9589
        %v9622 = vadd.f32 %v9329, %v9590
        %v9623 = vadd.f32 %v9330, %v9591
        %v9624 = vadd.f32 %v9331, %v9592
        %v9625 = vadd.f32 %v9332, %v9593
        %v9626 = vadd.f32 %v9333, %v9594
        %v9627 = vadd.f32 %v9334, %v9595
        %v9628 = vld [vmem:[%s401] sm:$0xf]
        %v9629 = vld [vmem:[%s401 + $0x4] sm:$0xf]
        %v9630 = vld [vmem:[%s401 + $0x8] sm:$0x1]
        %v9631 = vld [vmem:[%s401 + $0xc] sm:$0xf]
        %v9632 = vld [vmem:[%s401 + $0x10] sm:$0xf]
        %v9633 = vld [vmem:[%s401 + $0x14] sm:$0x1]
        %v9634 = vld [vmem:[%s401 + $0x18] sm:$0xf]
        %v9635 = vld [vmem:[%s401 + $0x1c] sm:$0xf]
        %v9636 = vld [vmem:[%s401 + $0x20] sm:$0x1]
        %v9637 = vld [vmem:[%s401 + $0x24] sm:$0xf]
        %v9638 = vld [vmem:[%s401 + $0x28] sm:$0xf]
        %v9639 = vld [vmem:[%s401 + $0x2c] sm:$0x1]
        %v9640 = vld [vmem:[%s401 + $0x30] sm:$0xf]
        %v9641 = vld [vmem:[%s401 + $0x34] sm:$0xf]
        %v9642 = vld [vmem:[%s401 + $0x38] sm:$0x1]
        %v9643 = vld [vmem:[%s401 + $0x3c] sm:$0xf]
        %v9644 = vld [vmem:[%s401 + $0x40] sm:$0xf]
        %v9645 = vld [vmem:[%s401 + $0x44] sm:$0x1]
        %v9646 = vld [vmem:[%s401 + $0x48] sm:$0xf]
        %v9647 = vld [vmem:[%s401 + $0x4c] sm:$0xf]
        %v9648 = vld [vmem:[%s401 + $0x50] sm:$0x1]
        %v9649 = vld [vmem:[%s401 + $0x54] sm:$0xf]
        %v9650 = vld [vmem:[%s401 + $0x58] sm:$0xf]
        %v9651 = vld [vmem:[%s401 + $0x5c] sm:$0x1]
        %v9652 = vld [vmem:[%s401 + $0x60] sm:$0xf]
        %v9653 = vld [vmem:[%s401 + $0x64] sm:$0xf]
        %v9654 = vld [vmem:[%s401 + $0x68] sm:$0x1]
        %v9655 = vld [vmem:[%s401 + $0x6c] sm:$0xf]
        %v9656 = vld [vmem:[%s401 + $0x70] sm:$0xf]
        %v9657 = vld [vmem:[%s401 + $0x74] sm:$0x1]
        %v9658 = vld [vmem:[%s401 + $0x78] sm:$0xf]
        %v9659 = vld [vmem:[%s401 + $0x7c] sm:$0xf]
        %v9660 = vld [vmem:[%s401 + $0x80] sm:$0x1]
        %v9661 = vld [vmem:[%s401 + $0x84] sm:$0xf]
        %v9662 = vld [vmem:[%s401 + $0x88] sm:$0xf]
        %v9663 = vld [vmem:[%s401 + $0x8c] sm:$0x1]
        %v9664 = vld [vmem:[%s401 + $0x90] sm:$0xf]
        %v9665 = vld [vmem:[%s401 + $0x94] sm:$0xf]
        %v9666 = vld [vmem:[%s401 + $0x98] sm:$0x1]
        %v9667 = vld [vmem:[%s401 + $0x9c] sm:$0xf]
        %v9668 = vld [vmem:[%s401 + $0xa0] sm:$0xf]
        %v9669 = vld [vmem:[%s401 + $0xa4] sm:$0x1]
        %v9670 = vld [vmem:[%s401 + $0xa8] sm:$0xf]
        %v9671 = vld [vmem:[%s401 + $0xac] sm:$0xf]
        %v9672 = vld [vmem:[%s401 + $0xb0] sm:$0x1]
        %v9673 = vld [vmem:[%s401 + $0xb4] sm:$0xf]
        %v9674 = vld [vmem:[%s401 + $0xb8] sm:$0xf]
        %v9675 = vld [vmem:[%s401 + $0xbc] sm:$0x1]
        %v9677 = vshrl.u32 %v9628, 16
        %v9679 = vrot.slane %v9677, 4
        %v9680 = vshll.u32 %v9628, 16
        %v9682 = vrot.slane %v9680, 5
        %v9683 = vor.u32 %v9679, %v9682
        %v9684 = vrot.slane %v9683, 4
        %v9686 = vshll.u32 %v9629, 16
        %v9688 = vrot.slane %v9686, 5
        %v9689 = vsel %vm746, %v9684, %v9688
        %v9690 = vshrl.u32 %v9629, 16
        %v9692 = vrot.slane %v9690, 4
        %v9693 = vor.u32 %v9692, %v9688
        %v9694 = vrot.slane %v9693, 4
        %v9696 = vshll.u32 %v9630, 16
        %v9698 = vrot.slane %v9696, 5
        %v9699 = vsel %vm746, %v9694, %v9698
        %v9701 = vshrl.u32 %v9631, 16
        %v9703 = vrot.slane %v9701, 4
        %v9704 = vshll.u32 %v9631, 16
        %v9706 = vrot.slane %v9704, 5
        %v9707 = vor.u32 %v9703, %v9706
        %v9708 = vrot.slane %v9707, 4
        %v9710 = vshll.u32 %v9632, 16
        %v9712 = vrot.slane %v9710, 5
        %v9713 = vsel %vm746, %v9708, %v9712
        %v9714 = vshrl.u32 %v9632, 16
        %v9716 = vrot.slane %v9714, 4
        %v9717 = vor.u32 %v9716, %v9712
        %v9718 = vrot.slane %v9717, 4
        %v9720 = vshll.u32 %v9633, 16
        %v9722 = vrot.slane %v9720, 5
        %v9723 = vsel %vm746, %v9718, %v9722
        %v9725 = vshrl.u32 %v9634, 16
        %v9727 = vrot.slane %v9725, 4
        %v9728 = vshll.u32 %v9634, 16
        %v9730 = vrot.slane %v9728, 5
        %v9731 = vor.u32 %v9727, %v9730
        %v9732 = vrot.slane %v9731, 4
        %v9734 = vshll.u32 %v9635, 16
        %v9736 = vrot.slane %v9734, 5
        %v9737 = vsel %vm746, %v9732, %v9736
        %v9738 = vshrl.u32 %v9635, 16
        %v9740 = vrot.slane %v9738, 4
        %v9741 = vor.u32 %v9740, %v9736
        %v9742 = vrot.slane %v9741, 4
        %v9744 = vshll.u32 %v9636, 16
        %v9746 = vrot.slane %v9744, 5
        %v9747 = vsel %vm746, %v9742, %v9746
        %v9749 = vshrl.u32 %v9637, 16
        %v9751 = vrot.slane %v9749, 4
        %v9752 = vshll.u32 %v9637, 16
        %v9754 = vrot.slane %v9752, 5
        %v9755 = vor.u32 %v9751, %v9754
        %v9756 = vrot.slane %v9755, 4
        %v9758 = vshll.u32 %v9638, 16
        %v9760 = vrot.slane %v9758, 5
        %v9761 = vsel %vm746, %v9756, %v9760
        %v9762 = vshrl.u32 %v9638, 16
        %v9764 = vrot.slane %v9762, 4
        %v9765 = vor.u32 %v9764, %v9760
        %v9766 = vrot.slane %v9765, 4
        %v9768 = vshll.u32 %v9639, 16
        %v9770 = vrot.slane %v9768, 5
        %v9771 = vsel %vm746, %v9766, %v9770
        %v9773 = vshrl.u32 %v9640, 16
        %v9775 = vrot.slane %v9773, 4
        %v9776 = vshll.u32 %v9640, 16
        %v9778 = vrot.slane %v9776, 5
        %v9779 = vor.u32 %v9775, %v9778
        %v9780 = vrot.slane %v9779, 4
        %v9782 = vshll.u32 %v9641, 16
        %v9784 = vrot.slane %v9782, 5
        %v9785 = vsel %vm746, %v9780, %v9784
        %v9786 = vshrl.u32 %v9641, 16
        %v9788 = vrot.slane %v9786, 4
        %v9789 = vor.u32 %v9788, %v9784
        %v9790 = vrot.slane %v9789, 4
        %v9792 = vshll.u32 %v9642, 16
        %v9794 = vrot.slane %v9792, 5
        %v9795 = vsel %vm746, %v9790, %v9794
        %v9797 = vshrl.u32 %v9643, 16
        %v9799 = vrot.slane %v9797, 4
        %v9800 = vshll.u32 %v9643, 16
        %v9802 = vrot.slane %v9800, 5
        %v9803 = vor.u32 %v9799, %v9802
        %v9804 = vrot.slane %v9803, 4
        %v9806 = vshll.u32 %v9644, 16
        %v9808 = vrot.slane %v9806, 5
        %v9809 = vsel %vm746, %v9804, %v9808
        %v9810 = vshrl.u32 %v9644, 16
        %v9812 = vrot.slane %v9810, 4
        %v9813 = vor.u32 %v9812, %v9808
        %v9814 = vrot.slane %v9813, 4
        %v9816 = vshll.u32 %v9645, 16
        %v9818 = vrot.slane %v9816, 5
        %v9819 = vsel %vm746, %v9814, %v9818
        %v9821 = vshrl.u32 %v9646, 16
        %v9823 = vrot.slane %v9821, 4
        %v9824 = vshll.u32 %v9646, 16
        %v9826 = vrot.slane %v9824, 5
        %v9827 = vor.u32 %v9823, %v9826
        %v9828 = vrot.slane %v9827, 4
        %v9830 = vshll.u32 %v9647, 16
        %v9832 = vrot.slane %v9830, 5
        %v9833 = vsel %vm746, %v9828, %v9832
        %v9834 = vshrl.u32 %v9647, 16
        %v9836 = vrot.slane %v9834, 4
        %v9837 = vor.u32 %v9836, %v9832
        %v9838 = vrot.slane %v9837, 4
        %v9840 = vshll.u32 %v9648, 16
        %v9842 = vrot.slane %v9840, 5
        %v9843 = vsel %vm746, %v9838, %v9842
        %v9845 = vshrl.u32 %v9649, 16
        %v9847 = vrot.slane %v9845, 4
        %v9848 = vshll.u32 %v9649, 16
        %v9850 = vrot.slane %v9848, 5
        %v9851 = vor.u32 %v9847, %v9850
        %v9852 = vrot.slane %v9851, 4
        %v9854 = vshll.u32 %v9650, 16
        %v9856 = vrot.slane %v9854, 5
        %v9857 = vsel %vm746, %v9852, %v9856
        %v9858 = vshrl.u32 %v9650, 16
        %v9860 = vrot.slane %v9858, 4
        %v9861 = vor.u32 %v9860, %v9856
        %v9862 = vrot.slane %v9861, 4
        %v9864 = vshll.u32 %v9651, 16
        %v9866 = vrot.slane %v9864, 5
        %v9867 = vsel %vm746, %v9862, %v9866
        %v9869 = vshrl.u32 %v9652, 16
        %v9871 = vrot.slane %v9869, 4
        %v9872 = vshll.u32 %v9652, 16
        %v9874 = vrot.slane %v9872, 5
        %v9875 = vor.u32 %v9871, %v9874
        %v9876 = vrot.slane %v9875, 4
        %v9878 = vshll.u32 %v9653, 16
        %v9880 = vrot.slane %v9878, 5
        %v9881 = vsel %vm746, %v9876, %v9880
        %v9882 = vshrl.u32 %v9653, 16
        %v9884 = vrot.slane %v9882, 4
        %v9885 = vor.u32 %v9884, %v9880
        %v9886 = vrot.slane %v9885, 4
        %v9888 = vshll.u32 %v9654, 16
        %v9890 = vrot.slane %v9888, 5
        %v9891 = vsel %vm746, %v9886, %v9890
        %v9893 = vshrl.u32 %v9655, 16
        %v9895 = vrot.slane %v9893, 4
        %v9896 = vshll.u32 %v9655, 16
        %v9898 = vrot.slane %v9896, 5
        %v9899 = vor.u32 %v9895, %v9898
        %v9900 = vrot.slane %v9899, 4
        %v9902 = vshll.u32 %v9656, 16
        %v9904 = vrot.slane %v9902, 5
        %v9905 = vsel %vm746, %v9900, %v9904
        %v9906 = vshrl.u32 %v9656, 16
        %v9908 = vrot.slane %v9906, 4
        %v9909 = vor.u32 %v9908, %v9904
        %v9910 = vrot.slane %v9909, 4
        %v9912 = vshll.u32 %v9657, 16
        %v9914 = vrot.slane %v9912, 5
        %v9915 = vsel %vm746, %v9910, %v9914
        %v9917 = vshrl.u32 %v9658, 16
        %v9919 = vrot.slane %v9917, 4
        %v9920 = vshll.u32 %v9658, 16
        %v9922 = vrot.slane %v9920, 5
        %v9923 = vor.u32 %v9919, %v9922
        %v9924 = vrot.slane %v9923, 4
        %v9926 = vshll.u32 %v9659, 16
        %v9928 = vrot.slane %v9926, 5
        %v9929 = vsel %vm746, %v9924, %v9928
        %v9930 = vshrl.u32 %v9659, 16
        %v9932 = vrot.slane %v9930, 4
        %v9933 = vor.u32 %v9932, %v9928
        %v9934 = vrot.slane %v9933, 4
        %v9936 = vshll.u32 %v9660, 16
        %v9938 = vrot.slane %v9936, 5
        %v9939 = vsel %vm746, %v9934, %v9938
        %v9941 = vshrl.u32 %v9661, 16
        %v9943 = vrot.slane %v9941, 4
        %v9944 = vshll.u32 %v9661, 16
        %v9946 = vrot.slane %v9944, 5
        %v9947 = vor.u32 %v9943, %v9946
        %v9948 = vrot.slane %v9947, 4
        %v9950 = vshll.u32 %v9662, 16
        %v9952 = vrot.slane %v9950, 5
        %v9953 = vsel %vm746, %v9948, %v9952
        %v9954 = vshrl.u32 %v9662, 16
        %v9956 = vrot.slane %v9954, 4
        %v9957 = vor.u32 %v9956, %v9952
        %v9958 = vrot.slane %v9957, 4
        %v9960 = vshll.u32 %v9663, 16
        %v9962 = vrot.slane %v9960, 5
        %v9963 = vsel %vm746, %v9958, %v9962
        %v9965 = vshrl.u32 %v9664, 16
        %v9967 = vrot.slane %v9965, 4
        %v9968 = vshll.u32 %v9664, 16
        %v9970 = vrot.slane %v9968, 5
        %v9971 = vor.u32 %v9967, %v9970
        %v9972 = vrot.slane %v9971, 4
        %v9974 = vshll.u32 %v9665, 16
        %v9976 = vrot.slane %v9974, 5
        %v9977 = vsel %vm746, %v9972, %v9976
        %v9978 = vshrl.u32 %v9665, 16
        %v9980 = vrot.slane %v9978, 4
        %v9981 = vor.u32 %v9980, %v9976
        %v9982 = vrot.slane %v9981, 4
        %v9984 = vshll.u32 %v9666, 16
        %v9986 = vrot.slane %v9984, 5
        %v9987 = vsel %vm746, %v9982, %v9986
        %v9989 = vshrl.u32 %v9667, 16
        %v9991 = vrot.slane %v9989, 4
        %v9992 = vshll.u32 %v9667, 16
        %v9994 = vrot.slane %v9992, 5
        %v9995 = vor.u32 %v9991, %v9994
        %v9996 = vrot.slane %v9995, 4
        %v9998 = vshll.u32 %v9668, 16
        %v10000 = vrot.slane %v9998, 5
        %v10001 = vsel %vm746, %v9996, %v10000
        %v10002 = vshrl.u32 %v9668, 16
        %v10004 = vrot.slane %v10002, 4
        %v10005 = vor.u32 %v10004, %v10000
        %v10006 = vrot.slane %v10005, 4
        %v10008 = vshll.u32 %v9669, 16
        %v10010 = vrot.slane %v10008, 5
        %v10011 = vsel %vm746, %v10006, %v10010
        %v10013 = vshrl.u32 %v9670, 16
        %v10015 = vrot.slane %v10013, 4
        %v10016 = vshll.u32 %v9670, 16
        %v10018 = vrot.slane %v10016, 5
        %v10019 = vor.u32 %v10015, %v10018
        %v10020 = vrot.slane %v10019, 4
        %v10022 = vshll.u32 %v9671, 16
        %v10024 = vrot.slane %v10022, 5
        %v10025 = vsel %vm746, %v10020, %v10024
        %v10026 = vshrl.u32 %v9671, 16
        %v10028 = vrot.slane %v10026, 4
        %v10029 = vor.u32 %v10028, %v10024
        %v10030 = vrot.slane %v10029, 4
        %v10032 = vshll.u32 %v9672, 16
        %v10034 = vrot.slane %v10032, 5
        %v10035 = vsel %vm746, %v10030, %v10034
        %v10037 = vshrl.u32 %v9673, 16
        %v10039 = vrot.slane %v10037, 4
        %v10040 = vshll.u32 %v9673, 16
        %v10042 = vrot.slane %v10040, 5
        %v10043 = vor.u32 %v10039, %v10042
        %v10044 = vrot.slane %v10043, 4
        %v10046 = vshll.u32 %v9674, 16
        %v10048 = vrot.slane %v10046, 5
        %v10049 = vsel %vm746, %v10044, %v10048
        %v10050 = vshrl.u32 %v9674, 16
        %v10052 = vrot.slane %v10050, 4
        %v10053 = vor.u32 %v10052, %v10048
        %v10054 = vrot.slane %v10053, 4
        %v10056 = vshll.u32 %v9675, 16
        %v10058 = vrot.slane %v10056, 5
        %v10059 = vsel %vm746, %v10054, %v10058
        %v10092 = vunpack.c.l.bf16 %v9689
        %v10093 = vunpack.c.l.bf16 %v9699
        %v10094 = vunpack.c.l.bf16 %v9713
        %v10095 = vunpack.c.l.bf16 %v9723
        %v10096 = vunpack.c.l.bf16 %v9737
        %v10097 = vunpack.c.l.bf16 %v9747
        %v10098 = vunpack.c.l.bf16 %v9761
        %v10099 = vunpack.c.l.bf16 %v9771
        %v10100 = vunpack.c.l.bf16 %v9785
        %v10101 = vunpack.c.l.bf16 %v9795
        %v10102 = vunpack.c.l.bf16 %v9809
        %v10103 = vunpack.c.l.bf16 %v9819
        %v10104 = vunpack.c.l.bf16 %v9833
        %v10105 = vunpack.c.l.bf16 %v9843
        %v10106 = vunpack.c.l.bf16 %v9857
        %v10107 = vunpack.c.l.bf16 %v9867
        %v10108 = vunpack.c.l.bf16 %v9881
        %v10109 = vunpack.c.l.bf16 %v9891
        %v10110 = vunpack.c.l.bf16 %v9905
        %v10111 = vunpack.c.l.bf16 %v9915
        %v10112 = vunpack.c.l.bf16 %v9929
        %v10113 = vunpack.c.l.bf16 %v9939
        %v10114 = vunpack.c.l.bf16 %v9953
        %v10115 = vunpack.c.l.bf16 %v9963
        %v10116 = vunpack.c.l.bf16 %v9977
        %v10117 = vunpack.c.l.bf16 %v9987
        %v10118 = vunpack.c.l.bf16 %v10001
        %v10119 = vunpack.c.l.bf16 %v10011
        %v10120 = vunpack.c.l.bf16 %v10025
        %v10121 = vunpack.c.l.bf16 %v10035
        %v10122 = vunpack.c.l.bf16 %v10049
        %v10123 = vunpack.c.l.bf16 %v10059
        %v10124 = vld [vmem:[%s3 + $0x13] sm:$0x1]
        %10126 = vset.pattern.permute.xlu0 0
        %10127 = vperm.xlu0 %10126, %v10092
        %v10128 = vpop.permute.xlu0 %10127
        %10131 = vset.pattern.permute.xlu0 0
        %10132 = vperm.xlu0 %10131, %v10093
        %v10133 = vpop.permute.xlu0 %10132
        %10136 = vset.pattern.permute.xlu0 0
        %10137 = vperm.xlu0 %10136, %v10094
        %v10138 = vpop.permute.xlu0 %10137
        %10141 = vset.pattern.permute.xlu0 0
        %10142 = vperm.xlu0 %10141, %v10095
        %v10143 = vpop.permute.xlu0 %10142
        %10146 = vset.pattern.permute.xlu0 0
        %10147 = vperm.xlu0 %10146, %v10096
        %v10148 = vpop.permute.xlu0 %10147
        %10151 = vset.pattern.permute.xlu0 0
        %10152 = vperm.xlu0 %10151, %v10097
        %v10153 = vpop.permute.xlu0 %10152
        %10156 = vset.pattern.permute.xlu0 0
        %10157 = vperm.xlu0 %10156, %v10098
        %v10158 = vpop.permute.xlu0 %10157
        %10161 = vset.pattern.permute.xlu0 0
        %10162 = vperm.xlu0 %10161, %v10099
        %v10163 = vpop.permute.xlu0 %10162
        %10166 = vset.pattern.permute.xlu0 0
        %10167 = vperm.xlu0 %10166, %v10100
        %v10168 = vpop.permute.xlu0 %10167
        %10171 = vset.pattern.permute.xlu0 0
        %10172 = vperm.xlu0 %10171, %v10101
        %v10173 = vpop.permute.xlu0 %10172
        %10176 = vset.pattern.permute.xlu0 0
        %10177 = vperm.xlu0 %10176, %v10102
        %v10178 = vpop.permute.xlu0 %10177
        %10181 = vset.pattern.permute.xlu0 0
        %10182 = vperm.xlu0 %10181, %v10103
        %v10183 = vpop.permute.xlu0 %10182
        %10186 = vset.pattern.permute.xlu0 0
        %10187 = vperm.xlu0 %10186, %v10104
        %v10188 = vpop.permute.xlu0 %10187
        %10191 = vset.pattern.permute.xlu0 0
        %10192 = vperm.xlu0 %10191, %v10105
        %v10193 = vpop.permute.xlu0 %10192
        %10196 = vset.pattern.permute.xlu0 0
        %10197 = vperm.xlu0 %10196, %v10106
        %v10198 = vpop.permute.xlu0 %10197
        %10201 = vset.pattern.permute.xlu0 0
        %10202 = vperm.xlu0 %10201, %v10107
        %v10203 = vpop.permute.xlu0 %10202
        %10206 = vset.pattern.permute.xlu0 0
        %10207 = vperm.xlu0 %10206, %v10108
        %v10208 = vpop.permute.xlu0 %10207
        %10211 = vset.pattern.permute.xlu0 0
        %10212 = vperm.xlu0 %10211, %v10109
        %v10213 = vpop.permute.xlu0 %10212
        %10216 = vset.pattern.permute.xlu0 0
        %10217 = vperm.xlu0 %10216, %v10110
        %v10218 = vpop.permute.xlu0 %10217
        %10221 = vset.pattern.permute.xlu0 0
        %10222 = vperm.xlu0 %10221, %v10111
        %v10223 = vpop.permute.xlu0 %10222
        %10226 = vset.pattern.permute.xlu0 0
        %10227 = vperm.xlu0 %10226, %v10112
        %v10228 = vpop.permute.xlu0 %10227
        %10231 = vset.pattern.permute.xlu0 0
        %10232 = vperm.xlu0 %10231, %v10113
        %v10233 = vpop.permute.xlu0 %10232
        %10236 = vset.pattern.permute.xlu0 0
        %10237 = vperm.xlu0 %10236, %v10114
        %v10238 = vpop.permute.xlu0 %10237
        %10241 = vset.pattern.permute.xlu0 0
        %10242 = vperm.xlu0 %10241, %v10115
        %v10243 = vpop.permute.xlu0 %10242
        %10246 = vset.pattern.permute.xlu0 0
        %10247 = vperm.xlu0 %10246, %v10116
        %v10248 = vpop.permute.xlu0 %10247
        %10251 = vset.pattern.permute.xlu0 0
        %10252 = vperm.xlu0 %10251, %v10117
        %v10253 = vpop.permute.xlu0 %10252
        %10256 = vset.pattern.permute.xlu0 0
        %10257 = vperm.xlu0 %10256, %v10118
        %v10258 = vpop.permute.xlu0 %10257
        %10261 = vset.pattern.permute.xlu0 0
        %10262 = vperm.xlu0 %10261, %v10119
        %v10263 = vpop.permute.xlu0 %10262
        %10266 = vset.pattern.permute.xlu0 0
        %10267 = vperm.xlu0 %10266, %v10120
        %v10268 = vpop.permute.xlu0 %10267
        %10271 = vset.pattern.permute.xlu0 0
        %10272 = vperm.xlu0 %10271, %v10121
        %v10273 = vpop.permute.xlu0 %10272
        %10276 = vset.pattern.permute.xlu0 0
        %10277 = vperm.xlu0 %10276, %v10122
        %v10278 = vpop.permute.xlu0 %10277
        %10281 = vset.pattern.permute.xlu0 0
        %10282 = vperm.xlu0 %10281, %v10123
        %v10283 = vpop.permute.xlu0 %10282
        %v10285 = vlaneseq
        %v10286 = vshrl.u32 %v10285, 7
        %v10287 = vsub.s32 0, %v10286
        %v10288 = vrot.slane %v10124, %v10287
        %v10289 = vmul.f32 %v10128, %v10288
        %v10290 = vmul.f32 %v10133, %v10288
        %v10291 = vmul.f32 %v10138, %v10288
        %v10292 = vmul.f32 %v10143, %v10288
        %v10293 = vmul.f32 %v10148, %v10288
        %v10294 = vmul.f32 %v10153, %v10288
        %v10295 = vmul.f32 %v10158, %v10288
        %v10296 = vmul.f32 %v10163, %v10288
        %v10297 = vmul.f32 %v10168, %v10288
        %v10298 = vmul.f32 %v10173, %v10288
        %v10299 = vmul.f32 %v10178, %v10288
        %v10300 = vmul.f32 %v10183, %v10288
        %v10301 = vmul.f32 %v10188, %v10288
        %v10302 = vmul.f32 %v10193, %v10288
        %v10303 = vmul.f32 %v10198, %v10288
        %v10304 = vmul.f32 %v10203, %v10288
        %v10305 = vmul.f32 %v10208, %v10288
        %v10306 = vmul.f32 %v10213, %v10288
        %v10307 = vmul.f32 %v10218, %v10288
        %v10308 = vmul.f32 %v10223, %v10288
        %v10309 = vmul.f32 %v10228, %v10288
        %v10310 = vmul.f32 %v10233, %v10288
        %v10311 = vmul.f32 %v10238, %v10288
        %v10312 = vmul.f32 %v10243, %v10288
        %v10313 = vmul.f32 %v10248, %v10288
        %v10314 = vmul.f32 %v10253, %v10288
        %v10315 = vmul.f32 %v10258, %v10288
        %v10316 = vmul.f32 %v10263, %v10288
        %v10317 = vmul.f32 %v10268, %v10288
        %v10318 = vmul.f32 %v10273, %v10288
        %v10319 = vmul.f32 %v10278, %v10288
        %v10320 = vmul.f32 %v10283, %v10288
        %v10321 = vadd.f32 %v9596, %v10289
        %v10322 = vadd.f32 %v9597, %v10290
        %v10323 = vadd.f32 %v9598, %v10291
        %v10324 = vadd.f32 %v9599, %v10292
        %v10325 = vadd.f32 %v9600, %v10293
        %v10326 = vadd.f32 %v9601, %v10294
        %v10327 = vadd.f32 %v9602, %v10295
        %v10328 = vadd.f32 %v9603, %v10296
        %v10329 = vadd.f32 %v9604, %v10297
        %v10330 = vadd.f32 %v9605, %v10298
        %v10331 = vadd.f32 %v9606, %v10299
        %v10332 = vadd.f32 %v9607, %v10300
        %v10333 = vadd.f32 %v9608, %v10301
        %v10334 = vadd.f32 %v9609, %v10302
        %v10335 = vadd.f32 %v9610, %v10303
        %v10336 = vadd.f32 %v9611, %v10304
        %v10337 = vadd.f32 %v9612, %v10305
        %v10338 = vadd.f32 %v9613, %v10306
        %v10339 = vadd.f32 %v9614, %v10307
        %v10340 = vadd.f32 %v9615, %v10308
        %v10341 = vadd.f32 %v9616, %v10309
        %v10342 = vadd.f32 %v9617, %v10310
        %v10343 = vadd.f32 %v9618, %v10311
        %v10344 = vadd.f32 %v9619, %v10312
        %v10345 = vadd.f32 %v9620, %v10313
        %v10346 = vadd.f32 %v9621, %v10314
        %v10347 = vadd.f32 %v9622, %v10315
        %v10348 = vadd.f32 %v9623, %v10316
        %v10349 = vadd.f32 %v9624, %v10317
        %v10350 = vadd.f32 %v9625, %v10318
        %v10351 = vadd.f32 %v9626, %v10319
        %v10352 = vadd.f32 %v9627, %v10320
        %v10353 = vld [vmem:[%s401] sm:$0xe]
        %v10354 = vld [vmem:[%s401 + $0xc] sm:$0xe]
        %v10355 = vld [vmem:[%s401 + $0x18] sm:$0xe]
        %v10356 = vld [vmem:[%s401 + $0x24] sm:$0xe]
        %v10357 = vld [vmem:[%s401 + $0x30] sm:$0xe]
        %v10358 = vld [vmem:[%s401 + $0x3c] sm:$0xe]
        %v10359 = vld [vmem:[%s401 + $0x48] sm:$0xe]
        %v10360 = vld [vmem:[%s401 + $0x54] sm:$0xe]
        %v10361 = vld [vmem:[%s401 + $0x60] sm:$0xe]
        %v10362 = vld [vmem:[%s401 + $0x6c] sm:$0xe]
        %v10363 = vld [vmem:[%s401 + $0x78] sm:$0xe]
        %v10364 = vld [vmem:[%s401 + $0x84] sm:$0xe]
        %v10365 = vld [vmem:[%s401 + $0x90] sm:$0xe]
        %v10366 = vld [vmem:[%s401 + $0x9c] sm:$0xe]
        %v10367 = vld [vmem:[%s401 + $0xa8] sm:$0xe]
        %v10368 = vld [vmem:[%s401 + $0xb4] sm:$0xe]
        %v10417 = vrot.slane %v10353, 5
        %v10418 = vrot.slane %v10417, 4
        %v10419 = vrot.slane %v9629, 5
        %v10420 = vsel %vm1490, %v10418, %v10419
        %v10421 = vrot.slane %v10419, 4
        %v10422 = vrot.slane %v9630, 5
        %v10423 = vsel %vm1490, %v10421, %v10422
        %v10424 = vrot.slane %v10354, 5
        %v10425 = vrot.slane %v10424, 4
        %v10426 = vrot.slane %v9632, 5
        %v10427 = vsel %vm1490, %v10425, %v10426
        %v10428 = vrot.slane %v10426, 4
        %v10429 = vrot.slane %v9633, 5
        %v10430 = vsel %vm1490, %v10428, %v10429
        %v10431 = vrot.slane %v10355, 5
        %v10432 = vrot.slane %v10431, 4
        %v10433 = vrot.slane %v9635, 5
        %v10434 = vsel %vm1490, %v10432, %v10433
        %v10435 = vrot.slane %v10433, 4
        %v10436 = vrot.slane %v9636, 5
        %v10437 = vsel %vm1490, %v10435, %v10436
        %v10438 = vrot.slane %v10356, 5
        %v10439 = vrot.slane %v10438, 4
        %v10440 = vrot.slane %v9638, 5
        %v10441 = vsel %vm1490, %v10439, %v10440
        %v10442 = vrot.slane %v10440, 4
        %v10443 = vrot.slane %v9639, 5
        %v10444 = vsel %vm1490, %v10442, %v10443
        %v10445 = vrot.slane %v10357, 5
        %v10446 = vrot.slane %v10445, 4
        %v10447 = vrot.slane %v9641, 5
        %v10448 = vsel %vm1490, %v10446, %v10447
        %v10449 = vrot.slane %v10447, 4
        %v10450 = vrot.slane %v9642, 5
        %v10451 = vsel %vm1490, %v10449, %v10450
        %v10452 = vrot.slane %v10358, 5
        %v10453 = vrot.slane %v10452, 4
        %v10454 = vrot.slane %v9644, 5
        %v10455 = vsel %vm1490, %v10453, %v10454
        %v10456 = vrot.slane %v10454, 4
        %v10457 = vrot.slane %v9645, 5
        %v10458 = vsel %vm1490, %v10456, %v10457
        %v10459 = vrot.slane %v10359, 5
        %v10460 = vrot.slane %v10459, 4
        %v10461 = vrot.slane %v9647, 5
        %v10462 = vsel %vm1490, %v10460, %v10461
        %v10463 = vrot.slane %v10461, 4
        %v10464 = vrot.slane %v9648, 5
        %v10465 = vsel %vm1490, %v10463, %v10464
        %v10466 = vrot.slane %v10360, 5
        %v10467 = vrot.slane %v10466, 4
        %v10468 = vrot.slane %v9650, 5
        %v10469 = vsel %vm1490, %v10467, %v10468
        %v10470 = vrot.slane %v10468, 4
        %v10471 = vrot.slane %v9651, 5
        %v10472 = vsel %vm1490, %v10470, %v10471
        %v10473 = vrot.slane %v10361, 5
        %v10474 = vrot.slane %v10473, 4
        %v10475 = vrot.slane %v9653, 5
        %v10476 = vsel %vm1490, %v10474, %v10475
        %v10477 = vrot.slane %v10475, 4
        %v10478 = vrot.slane %v9654, 5
        %v10479 = vsel %vm1490, %v10477, %v10478
        %v10480 = vrot.slane %v10362, 5
        %v10481 = vrot.slane %v10480, 4
        %v10482 = vrot.slane %v9656, 5
        %v10483 = vsel %vm1490, %v10481, %v10482
        %v10484 = vrot.slane %v10482, 4
        %v10485 = vrot.slane %v9657, 5
        %v10486 = vsel %vm1490, %v10484, %v10485
        %v10487 = vrot.slane %v10363, 5
        %v10488 = vrot.slane %v10487, 4
        %v10489 = vrot.slane %v9659, 5
        %v10490 = vsel %vm1490, %v10488, %v10489
        %v10491 = vrot.slane %v10489, 4
        %v10492 = vrot.slane %v9660, 5
        %v10493 = vsel %vm1490, %v10491, %v10492
        %v10494 = vrot.slane %v10364, 5
        %v10495 = vrot.slane %v10494, 4
        %v10496 = vrot.slane %v9662, 5
        %v10497 = vsel %vm1490, %v10495, %v10496
        %v10498 = vrot.slane %v10496, 4
        %v10499 = vrot.slane %v9663, 5
        %v10500 = vsel %vm1490, %v10498, %v10499
        %v10501 = vrot.slane %v10365, 5
        %v10502 = vrot.slane %v10501, 4
        %v10503 = vrot.slane %v9665, 5
        %v10504 = vsel %vm1490, %v10502, %v10503
        %v10505 = vrot.slane %v10503, 4
        %v10506 = vrot.slane %v9666, 5
        %v10507 = vsel %vm1490, %v10505, %v10506
        %v10508 = vrot.slane %v10366, 5
        %v10509 = vrot.slane %v10508, 4
        %v10510 = vrot.slane %v9668, 5
        %v10511 = vsel %vm1490, %v10509, %v10510
        %v10512 = vrot.slane %v10510, 4
        %v10513 = vrot.slane %v9669, 5
        %v10514 = vsel %vm1490, %v10512, %v10513
        %v10515 = vrot.slane %v10367, 5
        %v10516 = vrot.slane %v10515, 4
        %v10517 = vrot.slane %v9671, 5
        %v10518 = vsel %vm1490, %v10516, %v10517
        %v10519 = vrot.slane %v10517, 4
        %v10520 = vrot.slane %v9672, 5
        %v10521 = vsel %vm1490, %v10519, %v10520
        %v10522 = vrot.slane %v10368, 5
        %v10523 = vrot.slane %v10522, 4
        %v10524 = vrot.slane %v9674, 5
        %v10525 = vsel %vm1490, %v10523, %v10524
        %v10526 = vrot.slane %v10524, 4
        %v10527 = vrot.slane %v9675, 5
        %v10528 = vsel %vm1490, %v10526, %v10527
        %v10561 = vunpack.c.l.bf16 %v10420
        %v10562 = vunpack.c.l.bf16 %v10423
        %v10563 = vunpack.c.l.bf16 %v10427
        %v10564 = vunpack.c.l.bf16 %v10430
        %v10565 = vunpack.c.l.bf16 %v10434
        %v10566 = vunpack.c.l.bf16 %v10437
        %v10567 = vunpack.c.l.bf16 %v10441
        %v10568 = vunpack.c.l.bf16 %v10444
        %v10569 = vunpack.c.l.bf16 %v10448
        %v10570 = vunpack.c.l.bf16 %v10451
        %v10571 = vunpack.c.l.bf16 %v10455
        %v10572 = vunpack.c.l.bf16 %v10458
        %v10573 = vunpack.c.l.bf16 %v10462
        %v10574 = vunpack.c.l.bf16 %v10465
        %v10575 = vunpack.c.l.bf16 %v10469
        %v10576 = vunpack.c.l.bf16 %v10472
        %v10577 = vunpack.c.l.bf16 %v10476
        %v10578 = vunpack.c.l.bf16 %v10479
        %v10579 = vunpack.c.l.bf16 %v10483
        %v10580 = vunpack.c.l.bf16 %v10486
        %v10581 = vunpack.c.l.bf16 %v10490
        %v10582 = vunpack.c.l.bf16 %v10493
        %v10583 = vunpack.c.l.bf16 %v10497
        %v10584 = vunpack.c.l.bf16 %v10500
        %v10585 = vunpack.c.l.bf16 %v10504
        %v10586 = vunpack.c.l.bf16 %v10507
        %v10587 = vunpack.c.l.bf16 %v10511
        %v10588 = vunpack.c.l.bf16 %v10514
        %v10589 = vunpack.c.l.bf16 %v10518
        %v10590 = vunpack.c.l.bf16 %v10521
        %v10591 = vunpack.c.l.bf16 %v10525
        %v10592 = vunpack.c.l.bf16 %v10528
        %v10593 = vld [vmem:[%s3 + $0x14] sm:$0x1]
        %10595 = vset.pattern.permute.xlu0 0
        %10596 = vperm.xlu0 %10595, %v10561
        %v10597 = vpop.permute.xlu0 %10596
        %10600 = vset.pattern.permute.xlu0 0
        %10601 = vperm.xlu0 %10600, %v10562
        %v10602 = vpop.permute.xlu0 %10601
        %10605 = vset.pattern.permute.xlu0 0
        %10606 = vperm.xlu0 %10605, %v10563
        %v10607 = vpop.permute.xlu0 %10606
        %10610 = vset.pattern.permute.xlu0 0
        %10611 = vperm.xlu0 %10610, %v10564
        %v10612 = vpop.permute.xlu0 %10611
        %10615 = vset.pattern.permute.xlu0 0
        %10616 = vperm.xlu0 %10615, %v10565
        %v10617 = vpop.permute.xlu0 %10616
        %10620 = vset.pattern.permute.xlu0 0
        %10621 = vperm.xlu0 %10620, %v10566
        %v10622 = vpop.permute.xlu0 %10621
        %10625 = vset.pattern.permute.xlu0 0
        %10626 = vperm.xlu0 %10625, %v10567
        %v10627 = vpop.permute.xlu0 %10626
        %10630 = vset.pattern.permute.xlu0 0
        %10631 = vperm.xlu0 %10630, %v10568
        %v10632 = vpop.permute.xlu0 %10631
        %10635 = vset.pattern.permute.xlu0 0
        %10636 = vperm.xlu0 %10635, %v10569
        %v10637 = vpop.permute.xlu0 %10636
        %10640 = vset.pattern.permute.xlu0 0
        %10641 = vperm.xlu0 %10640, %v10570
        %v10642 = vpop.permute.xlu0 %10641
        %10645 = vset.pattern.permute.xlu0 0
        %10646 = vperm.xlu0 %10645, %v10571
        %v10647 = vpop.permute.xlu0 %10646
        %10650 = vset.pattern.permute.xlu0 0
        %10651 = vperm.xlu0 %10650, %v10572
        %v10652 = vpop.permute.xlu0 %10651
        %10655 = vset.pattern.permute.xlu0 0
        %10656 = vperm.xlu0 %10655, %v10573
        %v10657 = vpop.permute.xlu0 %10656
        %10660 = vset.pattern.permute.xlu0 0
        %10661 = vperm.xlu0 %10660, %v10574
        %v10662 = vpop.permute.xlu0 %10661
        %10665 = vset.pattern.permute.xlu0 0
        %10666 = vperm.xlu0 %10665, %v10575
        %v10667 = vpop.permute.xlu0 %10666
        %10670 = vset.pattern.permute.xlu0 0
        %10671 = vperm.xlu0 %10670, %v10576
        %v10672 = vpop.permute.xlu0 %10671
        %10675 = vset.pattern.permute.xlu0 0
        %10676 = vperm.xlu0 %10675, %v10577
        %v10677 = vpop.permute.xlu0 %10676
        %10680 = vset.pattern.permute.xlu0 0
        %10681 = vperm.xlu0 %10680, %v10578
        %v10682 = vpop.permute.xlu0 %10681
        %10685 = vset.pattern.permute.xlu0 0
        %10686 = vperm.xlu0 %10685, %v10579
        %v10687 = vpop.permute.xlu0 %10686
        %10690 = vset.pattern.permute.xlu0 0
        %10691 = vperm.xlu0 %10690, %v10580
        %v10692 = vpop.permute.xlu0 %10691
        %10695 = vset.pattern.permute.xlu0 0
        %10696 = vperm.xlu0 %10695, %v10581
        %v10697 = vpop.permute.xlu0 %10696
        %10700 = vset.pattern.permute.xlu0 0
        %10701 = vperm.xlu0 %10700, %v10582
        %v10702 = vpop.permute.xlu0 %10701
        %10705 = vset.pattern.permute.xlu0 0
        %10706 = vperm.xlu0 %10705, %v10583
        %v10707 = vpop.permute.xlu0 %10706
        %10710 = vset.pattern.permute.xlu0 0
        %10711 = vperm.xlu0 %10710, %v10584
        %v10712 = vpop.permute.xlu0 %10711
        %10715 = vset.pattern.permute.xlu0 0
        %10716 = vperm.xlu0 %10715, %v10585
        %v10717 = vpop.permute.xlu0 %10716
        %10720 = vset.pattern.permute.xlu0 0
        %10721 = vperm.xlu0 %10720, %v10586
        %v10722 = vpop.permute.xlu0 %10721
        %10725 = vset.pattern.permute.xlu0 0
        %10726 = vperm.xlu0 %10725, %v10587
        %v10727 = vpop.permute.xlu0 %10726
        %10730 = vset.pattern.permute.xlu0 0
        %10731 = vperm.xlu0 %10730, %v10588
        %v10732 = vpop.permute.xlu0 %10731
        %10735 = vset.pattern.permute.xlu0 0
        %10736 = vperm.xlu0 %10735, %v10589
        %v10737 = vpop.permute.xlu0 %10736
        %10740 = vset.pattern.permute.xlu0 0
        %10741 = vperm.xlu0 %10740, %v10590
        %v10742 = vpop.permute.xlu0 %10741
        %10745 = vset.pattern.permute.xlu0 0
        %10746 = vperm.xlu0 %10745, %v10591
        %v10747 = vpop.permute.xlu0 %10746
        %10750 = vset.pattern.permute.xlu0 0
        %10751 = vperm.xlu0 %10750, %v10592
        %v10752 = vpop.permute.xlu0 %10751
        %v10754 = vlaneseq
        %v10755 = vshrl.u32 %v10754, 7
        %v10756 = vsub.s32 0, %v10755
        %v10757 = vrot.slane %v10593, %v10756
        %v10758 = vmul.f32 %v10597, %v10757
        %v10759 = vmul.f32 %v10602, %v10757
        %v10760 = vmul.f32 %v10607, %v10757
        %v10761 = vmul.f32 %v10612, %v10757
        %v10762 = vmul.f32 %v10617, %v10757
        %v10763 = vmul.f32 %v10622, %v10757
        %v10764 = vmul.f32 %v10627, %v10757
        %v10765 = vmul.f32 %v10632, %v10757
        %v10766 = vmul.f32 %v10637, %v10757
        %v10767 = vmul.f32 %v10642, %v10757
        %v10768 = vmul.f32 %v10647, %v10757
        %v10769 = vmul.f32 %v10652, %v10757
        %v10770 = vmul.f32 %v10657, %v10757
        %v10771 = vmul.f32 %v10662, %v10757
        %v10772 = vmul.f32 %v10667, %v10757
        %v10773 = vmul.f32 %v10672, %v10757
        %v10774 = vmul.f32 %v10677, %v10757
        %v10775 = vmul.f32 %v10682, %v10757
        %v10776 = vmul.f32 %v10687, %v10757
        %v10777 = vmul.f32 %v10692, %v10757
        %v10778 = vmul.f32 %v10697, %v10757
        %v10779 = vmul.f32 %v10702, %v10757
        %v10780 = vmul.f32 %v10707, %v10757
        %v10781 = vmul.f32 %v10712, %v10757
        %v10782 = vmul.f32 %v10717, %v10757
        %v10783 = vmul.f32 %v10722, %v10757
        %v10784 = vmul.f32 %v10727, %v10757
        %v10785 = vmul.f32 %v10732, %v10757
        %v10786 = vmul.f32 %v10737, %v10757
        %v10787 = vmul.f32 %v10742, %v10757
        %v10788 = vmul.f32 %v10747, %v10757
        %v10789 = vmul.f32 %v10752, %v10757
        %v10790 = vadd.f32 %v10321, %v10758
        %v10791 = vadd.f32 %v10322, %v10759
        %v10792 = vadd.f32 %v10323, %v10760
        %v10793 = vadd.f32 %v10324, %v10761
        %v10794 = vadd.f32 %v10325, %v10762
        %v10795 = vadd.f32 %v10326, %v10763
        %v10796 = vadd.f32 %v10327, %v10764
        %v10797 = vadd.f32 %v10328, %v10765
        %v10798 = vadd.f32 %v10329, %v10766
        %v10799 = vadd.f32 %v10330, %v10767
        %v10800 = vadd.f32 %v10331, %v10768
        %v10801 = vadd.f32 %v10332, %v10769
        %v10802 = vadd.f32 %v10333, %v10770
        %v10803 = vadd.f32 %v10334, %v10771
        %v10804 = vadd.f32 %v10335, %v10772
        %v10805 = vadd.f32 %v10336, %v10773
        %v10806 = vadd.f32 %v10337, %v10774
        %v10807 = vadd.f32 %v10338, %v10775
        %v10808 = vadd.f32 %v10339, %v10776
        %v10809 = vadd.f32 %v10340, %v10777
        %v10810 = vadd.f32 %v10341, %v10778
        %v10811 = vadd.f32 %v10342, %v10779
        %v10812 = vadd.f32 %v10343, %v10780
        %v10813 = vadd.f32 %v10344, %v10781
        %v10814 = vadd.f32 %v10345, %v10782
        %v10815 = vadd.f32 %v10346, %v10783
        %v10816 = vadd.f32 %v10347, %v10784
        %v10817 = vadd.f32 %v10348, %v10785
        %v10818 = vadd.f32 %v10349, %v10786
        %v10819 = vadd.f32 %v10350, %v10787
        %v10820 = vadd.f32 %v10351, %v10788
        %v10821 = vadd.f32 %v10352, %v10789
        %s10822 = scalar_lea.vmem %s401, 12
        %v10823 = vld [vmem:[%s10822] sm:$0xf]
        %v10824 = vld [vmem:[%s10822 + $0x4] sm:$0xf]
        %v10825 = vld [vmem:[%s10822 + $0xc] sm:$0xf]
        %v10826 = vld [vmem:[%s10822 + $0x10] sm:$0xf]
        %v10827 = vld [vmem:[%s10822 + $0x18] sm:$0xf]
        %v10828 = vld [vmem:[%s10822 + $0x1c] sm:$0xf]
        %v10829 = vld [vmem:[%s10822 + $0x24] sm:$0xf]
        %v10830 = vld [vmem:[%s10822 + $0x28] sm:$0xf]
        %v10831 = vld [vmem:[%s10822 + $0x30] sm:$0xf]
        %v10832 = vld [vmem:[%s10822 + $0x34] sm:$0xf]
        %v10833 = vld [vmem:[%s10822 + $0x3c] sm:$0xf]
        %v10834 = vld [vmem:[%s10822 + $0x40] sm:$0xf]
        %v10835 = vld [vmem:[%s10822 + $0x48] sm:$0xf]
        %v10836 = vld [vmem:[%s10822 + $0x4c] sm:$0xf]
        %v10837 = vld [vmem:[%s10822 + $0x54] sm:$0xf]
        %v10838 = vld [vmem:[%s10822 + $0x58] sm:$0xf]
        %v10839 = vld [vmem:[%s10822 + $0x60] sm:$0xf]
        %v10840 = vld [vmem:[%s10822 + $0x64] sm:$0xf]
        %v10841 = vld [vmem:[%s10822 + $0x6c] sm:$0xf]
        %v10842 = vld [vmem:[%s10822 + $0x70] sm:$0xf]
        %v10843 = vld [vmem:[%s10822 + $0x78] sm:$0xf]
        %v10844 = vld [vmem:[%s10822 + $0x7c] sm:$0xf]
        %v10845 = vld [vmem:[%s10822 + $0x84] sm:$0xf]
        %v10846 = vld [vmem:[%s10822 + $0x88] sm:$0xf]
        %v10847 = vld [vmem:[%s10822 + $0x90] sm:$0xf]
        %v10848 = vld [vmem:[%s10822 + $0x94] sm:$0xf]
        %v10849 = vld [vmem:[%s10822 + $0x9c] sm:$0xf]
        %v10850 = vld [vmem:[%s10822 + $0xa0] sm:$0xf]
        %v10851 = vld [vmem:[%s10822 + $0xa8] sm:$0xf]
        %v10852 = vld [vmem:[%s10822 + $0xac] sm:$0xf]
        %v10853 = vld [vmem:[%s10822 + $0xb4] sm:$0xf]
        %v10854 = vld [vmem:[%s10822 + $0xb8] sm:$0xf]
        %v10855 = vunpack.c.l.bf16 %v10823
        %v10856 = vunpack.c.l.bf16 %v10824
        %v10857 = vunpack.c.l.bf16 %v10825
        %v10858 = vunpack.c.l.bf16 %v10826
        %v10859 = vunpack.c.l.bf16 %v10827
        %v10860 = vunpack.c.l.bf16 %v10828
        %v10861 = vunpack.c.l.bf16 %v10829
        %v10862 = vunpack.c.l.bf16 %v10830
        %v10863 = vunpack.c.l.bf16 %v10831
        %v10864 = vunpack.c.l.bf16 %v10832
        %v10865 = vunpack.c.l.bf16 %v10833
        %v10866 = vunpack.c.l.bf16 %v10834
        %v10867 = vunpack.c.l.bf16 %v10835
        %v10868 = vunpack.c.l.bf16 %v10836
        %v10869 = vunpack.c.l.bf16 %v10837
        %v10870 = vunpack.c.l.bf16 %v10838
        %v10871 = vunpack.c.l.bf16 %v10839
        %v10872 = vunpack.c.l.bf16 %v10840
        %v10873 = vunpack.c.l.bf16 %v10841
        %v10874 = vunpack.c.l.bf16 %v10842
        %v10875 = vunpack.c.l.bf16 %v10843
        %v10876 = vunpack.c.l.bf16 %v10844
        %v10877 = vunpack.c.l.bf16 %v10845
        %v10878 = vunpack.c.l.bf16 %v10846
        %v10879 = vunpack.c.l.bf16 %v10847
        %v10880 = vunpack.c.l.bf16 %v10848
        %v10881 = vunpack.c.l.bf16 %v10849
        %v10882 = vunpack.c.l.bf16 %v10850
        %v10883 = vunpack.c.l.bf16 %v10851
        %v10884 = vunpack.c.l.bf16 %v10852
        %v10885 = vunpack.c.l.bf16 %v10853
        %v10886 = vunpack.c.l.bf16 %v10854
        %v10887 = vld [vmem:[%s3 + $0x15] sm:$0x1]
        %10889 = vset.pattern.permute.xlu0 0
        %10890 = vperm.xlu0 %10889, %v10855
        %v10891 = vpop.permute.xlu0 %10890
        %10894 = vset.pattern.permute.xlu0 0
        %10895 = vperm.xlu0 %10894, %v10856
        %v10896 = vpop.permute.xlu0 %10895
        %10899 = vset.pattern.permute.xlu0 0
        %10900 = vperm.xlu0 %10899, %v10857
        %v10901 = vpop.permute.xlu0 %10900
        %10904 = vset.pattern.permute.xlu0 0
        %10905 = vperm.xlu0 %10904, %v10858
        %v10906 = vpop.permute.xlu0 %10905
        %10909 = vset.pattern.permute.xlu0 0
        %10910 = vperm.xlu0 %10909, %v10859
        %v10911 = vpop.permute.xlu0 %10910
        %10914 = vset.pattern.permute.xlu0 0
        %10915 = vperm.xlu0 %10914, %v10860
        %v10916 = vpop.permute.xlu0 %10915
        %10919 = vset.pattern.permute.xlu0 0
        %10920 = vperm.xlu0 %10919, %v10861
        %v10921 = vpop.permute.xlu0 %10920
        %10924 = vset.pattern.permute.xlu0 0
        %10925 = vperm.xlu0 %10924, %v10862
        %v10926 = vpop.permute.xlu0 %10925
        %10929 = vset.pattern.permute.xlu0 0
        %10930 = vperm.xlu0 %10929, %v10863
        %v10931 = vpop.permute.xlu0 %10930
        %10934 = vset.pattern.permute.xlu0 0
        %10935 = vperm.xlu0 %10934, %v10864
        %v10936 = vpop.permute.xlu0 %10935
        %10939 = vset.pattern.permute.xlu0 0
        %10940 = vperm.xlu0 %10939, %v10865
        %v10941 = vpop.permute.xlu0 %10940
        %10944 = vset.pattern.permute.xlu0 0
        %10945 = vperm.xlu0 %10944, %v10866
        %v10946 = vpop.permute.xlu0 %10945
        %10949 = vset.pattern.permute.xlu0 0
        %10950 = vperm.xlu0 %10949, %v10867
        %v10951 = vpop.permute.xlu0 %10950
        %10954 = vset.pattern.permute.xlu0 0
        %10955 = vperm.xlu0 %10954, %v10868
        %v10956 = vpop.permute.xlu0 %10955
        %10959 = vset.pattern.permute.xlu0 0
        %10960 = vperm.xlu0 %10959, %v10869
        %v10961 = vpop.permute.xlu0 %10960
        %10964 = vset.pattern.permute.xlu0 0
        %10965 = vperm.xlu0 %10964, %v10870
        %v10966 = vpop.permute.xlu0 %10965
        %10969 = vset.pattern.permute.xlu0 0
        %10970 = vperm.xlu0 %10969, %v10871
        %v10971 = vpop.permute.xlu0 %10970
        %10974 = vset.pattern.permute.xlu0 0
        %10975 = vperm.xlu0 %10974, %v10872
        %v10976 = vpop.permute.xlu0 %10975
        %10979 = vset.pattern.permute.xlu0 0
        %10980 = vperm.xlu0 %10979, %v10873
        %v10981 = vpop.permute.xlu0 %10980
        %10984 = vset.pattern.permute.xlu0 0
        %10985 = vperm.xlu0 %10984, %v10874
        %v10986 = vpop.permute.xlu0 %10985
        %10989 = vset.pattern.permute.xlu0 0
        %10990 = vperm.xlu0 %10989, %v10875
        %v10991 = vpop.permute.xlu0 %10990
        %10994 = vset.pattern.permute.xlu0 0
        %10995 = vperm.xlu0 %10994, %v10876
        %v10996 = vpop.permute.xlu0 %10995
        %10999 = vset.pattern.permute.xlu0 0
        %11000 = vperm.xlu0 %10999, %v10877
        %v11001 = vpop.permute.xlu0 %11000
        %11004 = vset.pattern.permute.xlu0 0
        %11005 = vperm.xlu0 %11004, %v10878
        %v11006 = vpop.permute.xlu0 %11005
        %11009 = vset.pattern.permute.xlu0 0
        %11010 = vperm.xlu0 %11009, %v10879
        %v11011 = vpop.permute.xlu0 %11010
        %11014 = vset.pattern.permute.xlu0 0
        %11015 = vperm.xlu0 %11014, %v10880
        %v11016 = vpop.permute.xlu0 %11015
        %11019 = vset.pattern.permute.xlu0 0
        %11020 = vperm.xlu0 %11019, %v10881
        %v11021 = vpop.permute.xlu0 %11020
        %11024 = vset.pattern.permute.xlu0 0
        %11025 = vperm.xlu0 %11024, %v10882
        %v11026 = vpop.permute.xlu0 %11025
        %11029 = vset.pattern.permute.xlu0 0
        %11030 = vperm.xlu0 %11029, %v10883
        %v11031 = vpop.permute.xlu0 %11030
        %11034 = vset.pattern.permute.xlu0 0
        %11035 = vperm.xlu0 %11034, %v10884
        %v11036 = vpop.permute.xlu0 %11035
        %11039 = vset.pattern.permute.xlu0 0
        %11040 = vperm.xlu0 %11039, %v10885
        %v11041 = vpop.permute.xlu0 %11040
        %11044 = vset.pattern.permute.xlu0 0
        %11045 = vperm.xlu0 %11044, %v10886
        %v11046 = vpop.permute.xlu0 %11045
        %v11048 = vlaneseq
        %v11049 = vshrl.u32 %v11048, 7
        %v11050 = vsub.s32 0, %v11049
        %v11051 = vrot.slane %v10887, %v11050
        %v11052 = vmul.f32 %v10891, %v11051
        %v11053 = vmul.f32 %v10896, %v11051
        %v11054 = vmul.f32 %v10901, %v11051
        %v11055 = vmul.f32 %v10906, %v11051
        %v11056 = vmul.f32 %v10911, %v11051
        %v11057 = vmul.f32 %v10916, %v11051
        %v11058 = vmul.f32 %v10921, %v11051
        %v11059 = vmul.f32 %v10926, %v11051
        %v11060 = vmul.f32 %v10931, %v11051
        %v11061 = vmul.f32 %v10936, %v11051
        %v11062 = vmul.f32 %v10941, %v11051
        %v11063 = vmul.f32 %v10946, %v11051
        %v11064 = vmul.f32 %v10951, %v11051
        %v11065 = vmul.f32 %v10956, %v11051
        %v11066 = vmul.f32 %v10961, %v11051
        %v11067 = vmul.f32 %v10966, %v11051
        %v11068 = vmul.f32 %v10971, %v11051
        %v11069 = vmul.f32 %v10976, %v11051
        %v11070 = vmul.f32 %v10981, %v11051
        %v11071 = vmul.f32 %v10986, %v11051
        %v11072 = vmul.f32 %v10991, %v11051
        %v11073 = vmul.f32 %v10996, %v11051
        %v11074 = vmul.f32 %v11001, %v11051
        %v11075 = vmul.f32 %v11006, %v11051
        %v11076 = vmul.f32 %v11011, %v11051
        %v11077 = vmul.f32 %v11016, %v11051
        %v11078 = vmul.f32 %v11021, %v11051
        %v11079 = vmul.f32 %v11026, %v11051
        %v11080 = vmul.f32 %v11031, %v11051
        %v11081 = vmul.f32 %v11036, %v11051
        %v11082 = vmul.f32 %v11041, %v11051
        %v11083 = vmul.f32 %v11046, %v11051
        %v11084 = vadd.f32 %v10790, %v11052
        %v11085 = vadd.f32 %v10791, %v11053
        %v11086 = vadd.f32 %v10792, %v11054
        %v11087 = vadd.f32 %v10793, %v11055
        %v11088 = vadd.f32 %v10794, %v11056
        %v11089 = vadd.f32 %v10795, %v11057
        %v11090 = vadd.f32 %v10796, %v11058
        %v11091 = vadd.f32 %v10797, %v11059
        %v11092 = vadd.f32 %v10798, %v11060
        %v11093 = vadd.f32 %v10799, %v11061
        %v11094 = vadd.f32 %v10800, %v11062
        %v11095 = vadd.f32 %v10801, %v11063
        %v11096 = vadd.f32 %v10802, %v11064
        %v11097 = vadd.f32 %v10803, %v11065
        %v11098 = vadd.f32 %v10804, %v11066
        %v11099 = vadd.f32 %v10805, %v11067
        %v11100 = vadd.f32 %v10806, %v11068
        %v11101 = vadd.f32 %v10807, %v11069
        %v11102 = vadd.f32 %v10808, %v11070
        %v11103 = vadd.f32 %v10809, %v11071
        %v11104 = vadd.f32 %v10810, %v11072
        %v11105 = vadd.f32 %v10811, %v11073
        %v11106 = vadd.f32 %v10812, %v11074
        %v11107 = vadd.f32 %v10813, %v11075
        %v11108 = vadd.f32 %v10814, %v11076
        %v11109 = vadd.f32 %v10815, %v11077
        %v11110 = vadd.f32 %v10816, %v11078
        %v11111 = vadd.f32 %v10817, %v11079
        %v11112 = vadd.f32 %v10818, %v11080
        %v11113 = vadd.f32 %v10819, %v11081
        %v11114 = vadd.f32 %v10820, %v11082
        %v11115 = vadd.f32 %v10821, %v11083
        %v11116 = vld [vmem:[%s10822] sm:$0xf]
        %v11117 = vld [vmem:[%s10822 + $0x4] sm:$0xf]
        %v11118 = vld [vmem:[%s10822 + $0x8] sm:$0x1]
        %v11119 = vld [vmem:[%s10822 + $0xc] sm:$0xf]
        %v11120 = vld [vmem:[%s10822 + $0x10] sm:$0xf]
        %v11121 = vld [vmem:[%s10822 + $0x14] sm:$0x1]
        %v11122 = vld [vmem:[%s10822 + $0x18] sm:$0xf]
        %v11123 = vld [vmem:[%s10822 + $0x1c] sm:$0xf]
        %v11124 = vld [vmem:[%s10822 + $0x20] sm:$0x1]
        %v11125 = vld [vmem:[%s10822 + $0x24] sm:$0xf]
        %v11126 = vld [vmem:[%s10822 + $0x28] sm:$0xf]
        %v11127 = vld [vmem:[%s10822 + $0x2c] sm:$0x1]
        %v11128 = vld [vmem:[%s10822 + $0x30] sm:$0xf]
        %v11129 = vld [vmem:[%s10822 + $0x34] sm:$0xf]
        %v11130 = vld [vmem:[%s10822 + $0x38] sm:$0x1]
        %v11131 = vld [vmem:[%s10822 + $0x3c] sm:$0xf]
        %v11132 = vld [vmem:[%s10822 + $0x40] sm:$0xf]
        %v11133 = vld [vmem:[%s10822 + $0x44] sm:$0x1]
        %v11134 = vld [vmem:[%s10822 + $0x48] sm:$0xf]
        %v11135 = vld [vmem:[%s10822 + $0x4c] sm:$0xf]
        %v11136 = vld [vmem:[%s10822 + $0x50] sm:$0x1]
        %v11137 = vld [vmem:[%s10822 + $0x54] sm:$0xf]
        %v11138 = vld [vmem:[%s10822 + $0x58] sm:$0xf]
        %v11139 = vld [vmem:[%s10822 + $0x5c] sm:$0x1]
        %v11140 = vld [vmem:[%s10822 + $0x60] sm:$0xf]
        %v11141 = vld [vmem:[%s10822 + $0x64] sm:$0xf]
        %v11142 = vld [vmem:[%s10822 + $0x68] sm:$0x1]
        %v11143 = vld [vmem:[%s10822 + $0x6c] sm:$0xf]
        %v11144 = vld [vmem:[%s10822 + $0x70] sm:$0xf]
        %v11145 = vld [vmem:[%s10822 + $0x74] sm:$0x1]
        %v11146 = vld [vmem:[%s10822 + $0x78] sm:$0xf]
        %v11147 = vld [vmem:[%s10822 + $0x7c] sm:$0xf]
        %v11148 = vld [vmem:[%s10822 + $0x80] sm:$0x1]
        %v11149 = vld [vmem:[%s10822 + $0x84] sm:$0xf]
        %v11150 = vld [vmem:[%s10822 + $0x88] sm:$0xf]
        %v11151 = vld [vmem:[%s10822 + $0x8c] sm:$0x1]
        %v11152 = vld [vmem:[%s10822 + $0x90] sm:$0xf]
        %v11153 = vld [vmem:[%s10822 + $0x94] sm:$0xf]
        %v11154 = vld [vmem:[%s10822 + $0x98] sm:$0x1]
        %v11155 = vld [vmem:[%s10822 + $0x9c] sm:$0xf]
        %v11156 = vld [vmem:[%s10822 + $0xa0] sm:$0xf]
        %v11157 = vld [vmem:[%s10822 + $0xa4] sm:$0x1]
        %v11158 = vld [vmem:[%s10822 + $0xa8] sm:$0xf]
        %v11159 = vld [vmem:[%s10822 + $0xac] sm:$0xf]
        %v11160 = vld [vmem:[%s10822 + $0xb0] sm:$0x1]
        %v11161 = vld [vmem:[%s10822 + $0xb4] sm:$0xf]
        %v11162 = vld [vmem:[%s10822 + $0xb8] sm:$0xf]
        %v11163 = vld [vmem:[%s10822 + $0xbc] sm:$0x1]
        %v11165 = vshrl.u32 %v11116, 16
        %v11167 = vrot.slane %v11165, 4
        %v11168 = vshll.u32 %v11116, 16
        %v11170 = vrot.slane %v11168, 5
        %v11171 = vor.u32 %v11167, %v11170
        %v11172 = vrot.slane %v11171, 4
        %v11174 = vshll.u32 %v11117, 16
        %v11176 = vrot.slane %v11174, 5
        %v11177 = vsel %vm746, %v11172, %v11176
        %v11178 = vshrl.u32 %v11117, 16
        %v11180 = vrot.slane %v11178, 4
        %v11181 = vor.u32 %v11180, %v11176
        %v11182 = vrot.slane %v11181, 4
        %v11184 = vshll.u32 %v11118, 16
        %v11186 = vrot.slane %v11184, 5
        %v11187 = vsel %vm746, %v11182, %v11186
        %v11189 = vshrl.u32 %v11119, 16
        %v11191 = vrot.slane %v11189, 4
        %v11192 = vshll.u32 %v11119, 16
        %v11194 = vrot.slane %v11192, 5
        %v11195 = vor.u32 %v11191, %v11194
        %v11196 = vrot.slane %v11195, 4
        %v11198 = vshll.u32 %v11120, 16
        %v11200 = vrot.slane %v11198, 5
        %v11201 = vsel %vm746, %v11196, %v11200
        %v11202 = vshrl.u32 %v11120, 16
        %v11204 = vrot.slane %v11202, 4
        %v11205 = vor.u32 %v11204, %v11200
        %v11206 = vrot.slane %v11205, 4
        %v11208 = vshll.u32 %v11121, 16
        %v11210 = vrot.slane %v11208, 5
        %v11211 = vsel %vm746, %v11206, %v11210
        %v11213 = vshrl.u32 %v11122, 16
        %v11215 = vrot.slane %v11213, 4
        %v11216 = vshll.u32 %v11122, 16
        %v11218 = vrot.slane %v11216, 5
        %v11219 = vor.u32 %v11215, %v11218
        %v11220 = vrot.slane %v11219, 4
        %v11222 = vshll.u32 %v11123, 16
        %v11224 = vrot.slane %v11222, 5
        %v11225 = vsel %vm746, %v11220, %v11224
        %v11226 = vshrl.u32 %v11123, 16
        %v11228 = vrot.slane %v11226, 4
        %v11229 = vor.u32 %v11228, %v11224
        %v11230 = vrot.slane %v11229, 4
        %v11232 = vshll.u32 %v11124, 16
        %v11234 = vrot.slane %v11232, 5
        %v11235 = vsel %vm746, %v11230, %v11234
        %v11237 = vshrl.u32 %v11125, 16
        %v11239 = vrot.slane %v11237, 4
        %v11240 = vshll.u32 %v11125, 16
        %v11242 = vrot.slane %v11240, 5
        %v11243 = vor.u32 %v11239, %v11242
        %v11244 = vrot.slane %v11243, 4
        %v11246 = vshll.u32 %v11126, 16
        %v11248 = vrot.slane %v11246, 5
        %v11249 = vsel %vm746, %v11244, %v11248
        %v11250 = vshrl.u32 %v11126, 16
        %v11252 = vrot.slane %v11250, 4
        %v11253 = vor.u32 %v11252, %v11248
        %v11254 = vrot.slane %v11253, 4
        %v11256 = vshll.u32 %v11127, 16
        %v11258 = vrot.slane %v11256, 5
        %v11259 = vsel %vm746, %v11254, %v11258
        %v11261 = vshrl.u32 %v11128, 16
        %v11263 = vrot.slane %v11261, 4
        %v11264 = vshll.u32 %v11128, 16
        %v11266 = vrot.slane %v11264, 5
        %v11267 = vor.u32 %v11263, %v11266
        %v11268 = vrot.slane %v11267, 4
        %v11270 = vshll.u32 %v11129, 16
        %v11272 = vrot.slane %v11270, 5
        %v11273 = vsel %vm746, %v11268, %v11272
        %v11274 = vshrl.u32 %v11129, 16
        %v11276 = vrot.slane %v11274, 4
        %v11277 = vor.u32 %v11276, %v11272
        %v11278 = vrot.slane %v11277, 4
        %v11280 = vshll.u32 %v11130, 16
        %v11282 = vrot.slane %v11280, 5
        %v11283 = vsel %vm746, %v11278, %v11282
        %v11285 = vshrl.u32 %v11131, 16
        %v11287 = vrot.slane %v11285, 4
        %v11288 = vshll.u32 %v11131, 16
        %v11290 = vrot.slane %v11288, 5
        %v11291 = vor.u32 %v11287, %v11290
        %v11292 = vrot.slane %v11291, 4
        %v11294 = vshll.u32 %v11132, 16
        %v11296 = vrot.slane %v11294, 5
        %v11297 = vsel %vm746, %v11292, %v11296
        %v11298 = vshrl.u32 %v11132, 16
        %v11300 = vrot.slane %v11298, 4
        %v11301 = vor.u32 %v11300, %v11296
        %v11302 = vrot.slane %v11301, 4
        %v11304 = vshll.u32 %v11133, 16
        %v11306 = vrot.slane %v11304, 5
        %v11307 = vsel %vm746, %v11302, %v11306
        %v11309 = vshrl.u32 %v11134, 16
        %v11311 = vrot.slane %v11309, 4
        %v11312 = vshll.u32 %v11134, 16
        %v11314 = vrot.slane %v11312, 5
        %v11315 = vor.u32 %v11311, %v11314
        %v11316 = vrot.slane %v11315, 4
        %v11318 = vshll.u32 %v11135, 16
        %v11320 = vrot.slane %v11318, 5
        %v11321 = vsel %vm746, %v11316, %v11320
        %v11322 = vshrl.u32 %v11135, 16
        %v11324 = vrot.slane %v11322, 4
        %v11325 = vor.u32 %v11324, %v11320
        %v11326 = vrot.slane %v11325, 4
        %v11328 = vshll.u32 %v11136, 16
        %v11330 = vrot.slane %v11328, 5
        %v11331 = vsel %vm746, %v11326, %v11330
        %v11333 = vshrl.u32 %v11137, 16
        %v11335 = vrot.slane %v11333, 4
        %v11336 = vshll.u32 %v11137, 16
        %v11338 = vrot.slane %v11336, 5
        %v11339 = vor.u32 %v11335, %v11338
        %v11340 = vrot.slane %v11339, 4
        %v11342 = vshll.u32 %v11138, 16
        %v11344 = vrot.slane %v11342, 5
        %v11345 = vsel %vm746, %v11340, %v11344
        %v11346 = vshrl.u32 %v11138, 16
        %v11348 = vrot.slane %v11346, 4
        %v11349 = vor.u32 %v11348, %v11344
        %v11350 = vrot.slane %v11349, 4
        %v11352 = vshll.u32 %v11139, 16
        %v11354 = vrot.slane %v11352, 5
        %v11355 = vsel %vm746, %v11350, %v11354
        %v11357 = vshrl.u32 %v11140, 16
        %v11359 = vrot.slane %v11357, 4
        %v11360 = vshll.u32 %v11140, 16
        %v11362 = vrot.slane %v11360, 5
        %v11363 = vor.u32 %v11359, %v11362
        %v11364 = vrot.slane %v11363, 4
        %v11366 = vshll.u32 %v11141, 16
        %v11368 = vrot.slane %v11366, 5
        %v11369 = vsel %vm746, %v11364, %v11368
        %v11370 = vshrl.u32 %v11141, 16
        %v11372 = vrot.slane %v11370, 4
        %v11373 = vor.u32 %v11372, %v11368
        %v11374 = vrot.slane %v11373, 4
        %v11376 = vshll.u32 %v11142, 16
        %v11378 = vrot.slane %v11376, 5
        %v11379 = vsel %vm746, %v11374, %v11378
        %v11381 = vshrl.u32 %v11143, 16
        %v11383 = vrot.slane %v11381, 4
        %v11384 = vshll.u32 %v11143, 16
        %v11386 = vrot.slane %v11384, 5
        %v11387 = vor.u32 %v11383, %v11386
        %v11388 = vrot.slane %v11387, 4
        %v11390 = vshll.u32 %v11144, 16
        %v11392 = vrot.slane %v11390, 5
        %v11393 = vsel %vm746, %v11388, %v11392
        %v11394 = vshrl.u32 %v11144, 16
        %v11396 = vrot.slane %v11394, 4
        %v11397 = vor.u32 %v11396, %v11392
        %v11398 = vrot.slane %v11397, 4
        %v11400 = vshll.u32 %v11145, 16
        %v11402 = vrot.slane %v11400, 5
        %v11403 = vsel %vm746, %v11398, %v11402
        %v11405 = vshrl.u32 %v11146, 16
        %v11407 = vrot.slane %v11405, 4
        %v11408 = vshll.u32 %v11146, 16
        %v11410 = vrot.slane %v11408, 5
        %v11411 = vor.u32 %v11407, %v11410
        %v11412 = vrot.slane %v11411, 4
        %v11414 = vshll.u32 %v11147, 16
        %v11416 = vrot.slane %v11414, 5
        %v11417 = vsel %vm746, %v11412, %v11416
        %v11418 = vshrl.u32 %v11147, 16
        %v11420 = vrot.slane %v11418, 4
        %v11421 = vor.u32 %v11420, %v11416
        %v11422 = vrot.slane %v11421, 4
        %v11424 = vshll.u32 %v11148, 16
        %v11426 = vrot.slane %v11424, 5
        %v11427 = vsel %vm746, %v11422, %v11426
        %v11429 = vshrl.u32 %v11149, 16
        %v11431 = vrot.slane %v11429, 4
        %v11432 = vshll.u32 %v11149, 16
        %v11434 = vrot.slane %v11432, 5
        %v11435 = vor.u32 %v11431, %v11434
        %v11436 = vrot.slane %v11435, 4
        %v11438 = vshll.u32 %v11150, 16
        %v11440 = vrot.slane %v11438, 5
        %v11441 = vsel %vm746, %v11436, %v11440
        %v11442 = vshrl.u32 %v11150, 16
        %v11444 = vrot.slane %v11442, 4
        %v11445 = vor.u32 %v11444, %v11440
        %v11446 = vrot.slane %v11445, 4
        %v11448 = vshll.u32 %v11151, 16
        %v11450 = vrot.slane %v11448, 5
        %v11451 = vsel %vm746, %v11446, %v11450
        %v11453 = vshrl.u32 %v11152, 16
        %v11455 = vrot.slane %v11453, 4
        %v11456 = vshll.u32 %v11152, 16
        %v11458 = vrot.slane %v11456, 5
        %v11459 = vor.u32 %v11455, %v11458
        %v11460 = vrot.slane %v11459, 4
        %v11462 = vshll.u32 %v11153, 16
        %v11464 = vrot.slane %v11462, 5
        %v11465 = vsel %vm746, %v11460, %v11464
        %v11466 = vshrl.u32 %v11153, 16
        %v11468 = vrot.slane %v11466, 4
        %v11469 = vor.u32 %v11468, %v11464
        %v11470 = vrot.slane %v11469, 4
        %v11472 = vshll.u32 %v11154, 16
        %v11474 = vrot.slane %v11472, 5
        %v11475 = vsel %vm746, %v11470, %v11474
        %v11477 = vshrl.u32 %v11155, 16
        %v11479 = vrot.slane %v11477, 4
        %v11480 = vshll.u32 %v11155, 16
        %v11482 = vrot.slane %v11480, 5
        %v11483 = vor.u32 %v11479, %v11482
        %v11484 = vrot.slane %v11483, 4
        %v11486 = vshll.u32 %v11156, 16
        %v11488 = vrot.slane %v11486, 5
        %v11489 = vsel %vm746, %v11484, %v11488
        %v11490 = vshrl.u32 %v11156, 16
        %v11492 = vrot.slane %v11490, 4
        %v11493 = vor.u32 %v11492, %v11488
        %v11494 = vrot.slane %v11493, 4
        %v11496 = vshll.u32 %v11157, 16
        %v11498 = vrot.slane %v11496, 5
        %v11499 = vsel %vm746, %v11494, %v11498
        %v11501 = vshrl.u32 %v11158, 16
        %v11503 = vrot.slane %v11501, 4
        %v11504 = vshll.u32 %v11158, 16
        %v11506 = vrot.slane %v11504, 5
        %v11507 = vor.u32 %v11503, %v11506
        %v11508 = vrot.slane %v11507, 4
        %v11510 = vshll.u32 %v11159, 16
        %v11512 = vrot.slane %v11510, 5
        %v11513 = vsel %vm746, %v11508, %v11512
        %v11514 = vshrl.u32 %v11159, 16
        %v11516 = vrot.slane %v11514, 4
        %v11517 = vor.u32 %v11516, %v11512
        %v11518 = vrot.slane %v11517, 4
        %v11520 = vshll.u32 %v11160, 16
        %v11522 = vrot.slane %v11520, 5
        %v11523 = vsel %vm746, %v11518, %v11522
        %v11525 = vshrl.u32 %v11161, 16
        %v11527 = vrot.slane %v11525, 4
        %v11528 = vshll.u32 %v11161, 16
        %v11530 = vrot.slane %v11528, 5
        %v11531 = vor.u32 %v11527, %v11530
        %v11532 = vrot.slane %v11531, 4
        %v11534 = vshll.u32 %v11162, 16
        %v11536 = vrot.slane %v11534, 5
        %v11537 = vsel %vm746, %v11532, %v11536
        %v11538 = vshrl.u32 %v11162, 16
        %v11540 = vrot.slane %v11538, 4
        %v11541 = vor.u32 %v11540, %v11536
        %v11542 = vrot.slane %v11541, 4
        %v11544 = vshll.u32 %v11163, 16
        %v11546 = vrot.slane %v11544, 5
        %v11547 = vsel %vm746, %v11542, %v11546
        %v11580 = vunpack.c.l.bf16 %v11177
        %v11581 = vunpack.c.l.bf16 %v11187
        %v11582 = vunpack.c.l.bf16 %v11201
        %v11583 = vunpack.c.l.bf16 %v11211
        %v11584 = vunpack.c.l.bf16 %v11225
        %v11585 = vunpack.c.l.bf16 %v11235
        %v11586 = vunpack.c.l.bf16 %v11249
        %v11587 = vunpack.c.l.bf16 %v11259
        %v11588 = vunpack.c.l.bf16 %v11273
        %v11589 = vunpack.c.l.bf16 %v11283
        %v11590 = vunpack.c.l.bf16 %v11297
        %v11591 = vunpack.c.l.bf16 %v11307
        %v11592 = vunpack.c.l.bf16 %v11321
        %v11593 = vunpack.c.l.bf16 %v11331
        %v11594 = vunpack.c.l.bf16 %v11345
        %v11595 = vunpack.c.l.bf16 %v11355
        %v11596 = vunpack.c.l.bf16 %v11369
        %v11597 = vunpack.c.l.bf16 %v11379
        %v11598 = vunpack.c.l.bf16 %v11393
        %v11599 = vunpack.c.l.bf16 %v11403
        %v11600 = vunpack.c.l.bf16 %v11417
        %v11601 = vunpack.c.l.bf16 %v11427
        %v11602 = vunpack.c.l.bf16 %v11441
        %v11603 = vunpack.c.l.bf16 %v11451
        %v11604 = vunpack.c.l.bf16 %v11465
        %v11605 = vunpack.c.l.bf16 %v11475
        %v11606 = vunpack.c.l.bf16 %v11489
        %v11607 = vunpack.c.l.bf16 %v11499
        %v11608 = vunpack.c.l.bf16 %v11513
        %v11609 = vunpack.c.l.bf16 %v11523
        %v11610 = vunpack.c.l.bf16 %v11537
        %v11611 = vunpack.c.l.bf16 %v11547
        %v11612 = vld [vmem:[%s3 + $0x16] sm:$0x1]
        %11614 = vset.pattern.permute.xlu0 0
        %11615 = vperm.xlu0 %11614, %v11580
        %v11616 = vpop.permute.xlu0 %11615
        %11619 = vset.pattern.permute.xlu0 0
        %11620 = vperm.xlu0 %11619, %v11581
        %v11621 = vpop.permute.xlu0 %11620
        %11624 = vset.pattern.permute.xlu0 0
        %11625 = vperm.xlu0 %11624, %v11582
        %v11626 = vpop.permute.xlu0 %11625
        %11629 = vset.pattern.permute.xlu0 0
        %11630 = vperm.xlu0 %11629, %v11583
        %v11631 = vpop.permute.xlu0 %11630
        %11634 = vset.pattern.permute.xlu0 0
        %11635 = vperm.xlu0 %11634, %v11584
        %v11636 = vpop.permute.xlu0 %11635
        %11639 = vset.pattern.permute.xlu0 0
        %11640 = vperm.xlu0 %11639, %v11585
        %v11641 = vpop.permute.xlu0 %11640
        %11644 = vset.pattern.permute.xlu0 0
        %11645 = vperm.xlu0 %11644, %v11586
        %v11646 = vpop.permute.xlu0 %11645
        %11649 = vset.pattern.permute.xlu0 0
        %11650 = vperm.xlu0 %11649, %v11587
        %v11651 = vpop.permute.xlu0 %11650
        %11654 = vset.pattern.permute.xlu0 0
        %11655 = vperm.xlu0 %11654, %v11588
        %v11656 = vpop.permute.xlu0 %11655
        %11659 = vset.pattern.permute.xlu0 0
        %11660 = vperm.xlu0 %11659, %v11589
        %v11661 = vpop.permute.xlu0 %11660
        %11664 = vset.pattern.permute.xlu0 0
        %11665 = vperm.xlu0 %11664, %v11590
        %v11666 = vpop.permute.xlu0 %11665
        %11669 = vset.pattern.permute.xlu0 0
        %11670 = vperm.xlu0 %11669, %v11591
        %v11671 = vpop.permute.xlu0 %11670
        %11674 = vset.pattern.permute.xlu0 0
        %11675 = vperm.xlu0 %11674, %v11592
        %v11676 = vpop.permute.xlu0 %11675
        %11679 = vset.pattern.permute.xlu0 0
        %11680 = vperm.xlu0 %11679, %v11593
        %v11681 = vpop.permute.xlu0 %11680
        %11684 = vset.pattern.permute.xlu0 0
        %11685 = vperm.xlu0 %11684, %v11594
        %v11686 = vpop.permute.xlu0 %11685
        %11689 = vset.pattern.permute.xlu0 0
        %11690 = vperm.xlu0 %11689, %v11595
        %v11691 = vpop.permute.xlu0 %11690
        %11694 = vset.pattern.permute.xlu0 0
        %11695 = vperm.xlu0 %11694, %v11596
        %v11696 = vpop.permute.xlu0 %11695
        %11699 = vset.pattern.permute.xlu0 0
        %11700 = vperm.xlu0 %11699, %v11597
        %v11701 = vpop.permute.xlu0 %11700
        %11704 = vset.pattern.permute.xlu0 0
        %11705 = vperm.xlu0 %11704, %v11598
        %v11706 = vpop.permute.xlu0 %11705
        %11709 = vset.pattern.permute.xlu0 0
        %11710 = vperm.xlu0 %11709, %v11599
        %v11711 = vpop.permute.xlu0 %11710
        %11714 = vset.pattern.permute.xlu0 0
        %11715 = vperm.xlu0 %11714, %v11600
        %v11716 = vpop.permute.xlu0 %11715
        %11719 = vset.pattern.permute.xlu0 0
        %11720 = vperm.xlu0 %11719, %v11601
        %v11721 = vpop.permute.xlu0 %11720
        %11724 = vset.pattern.permute.xlu0 0
        %11725 = vperm.xlu0 %11724, %v11602
        %v11726 = vpop.permute.xlu0 %11725
        %11729 = vset.pattern.permute.xlu0 0
        %11730 = vperm.xlu0 %11729, %v11603
        %v11731 = vpop.permute.xlu0 %11730
        %11734 = vset.pattern.permute.xlu0 0
        %11735 = vperm.xlu0 %11734, %v11604
        %v11736 = vpop.permute.xlu0 %11735
        %11739 = vset.pattern.permute.xlu0 0
        %11740 = vperm.xlu0 %11739, %v11605
        %v11741 = vpop.permute.xlu0 %11740
        %11744 = vset.pattern.permute.xlu0 0
        %11745 = vperm.xlu0 %11744, %v11606
        %v11746 = vpop.permute.xlu0 %11745
        %11749 = vset.pattern.permute.xlu0 0
        %11750 = vperm.xlu0 %11749, %v11607
        %v11751 = vpop.permute.xlu0 %11750
        %11754 = vset.pattern.permute.xlu0 0
        %11755 = vperm.xlu0 %11754, %v11608
        %v11756 = vpop.permute.xlu0 %11755
        %11759 = vset.pattern.permute.xlu0 0
        %11760 = vperm.xlu0 %11759, %v11609
        %v11761 = vpop.permute.xlu0 %11760
        %11764 = vset.pattern.permute.xlu0 0
        %11765 = vperm.xlu0 %11764, %v11610
        %v11766 = vpop.permute.xlu0 %11765
        %11769 = vset.pattern.permute.xlu0 0
        %11770 = vperm.xlu0 %11769, %v11611
        %v11771 = vpop.permute.xlu0 %11770
        %v11773 = vlaneseq
        %v11774 = vshrl.u32 %v11773, 7
        %v11775 = vsub.s32 0, %v11774
        %v11776 = vrot.slane %v11612, %v11775
        %v11777 = vmul.f32 %v11616, %v11776
        %v11778 = vmul.f32 %v11621, %v11776
        %v11779 = vmul.f32 %v11626, %v11776
        %v11780 = vmul.f32 %v11631, %v11776
        %v11781 = vmul.f32 %v11636, %v11776
        %v11782 = vmul.f32 %v11641, %v11776
        %v11783 = vmul.f32 %v11646, %v11776
        %v11784 = vmul.f32 %v11651, %v11776
        %v11785 = vmul.f32 %v11656, %v11776
        %v11786 = vmul.f32 %v11661, %v11776
        %v11787 = vmul.f32 %v11666, %v11776
        %v11788 = vmul.f32 %v11671, %v11776
        %v11789 = vmul.f32 %v11676, %v11776
        %v11790 = vmul.f32 %v11681, %v11776
        %v11791 = vmul.f32 %v11686, %v11776
        %v11792 = vmul.f32 %v11691, %v11776
        %v11793 = vmul.f32 %v11696, %v11776
        %v11794 = vmul.f32 %v11701, %v11776
        %v11795 = vmul.f32 %v11706, %v11776
        %v11796 = vmul.f32 %v11711, %v11776
        %v11797 = vmul.f32 %v11716, %v11776
        %v11798 = vmul.f32 %v11721, %v11776
        %v11799 = vmul.f32 %v11726, %v11776
        %v11800 = vmul.f32 %v11731, %v11776
        %v11801 = vmul.f32 %v11736, %v11776
        %v11802 = vmul.f32 %v11741, %v11776
        %v11803 = vmul.f32 %v11746, %v11776
        %v11804 = vmul.f32 %v11751, %v11776
        %v11805 = vmul.f32 %v11756, %v11776
        %v11806 = vmul.f32 %v11761, %v11776
        %v11807 = vmul.f32 %v11766, %v11776
        %v11808 = vmul.f32 %v11771, %v11776
        %v11809 = vadd.f32 %v11084, %v11777
        %v11810 = vadd.f32 %v11085, %v11778
        %v11811 = vadd.f32 %v11086, %v11779
        %v11812 = vadd.f32 %v11087, %v11780
        %v11813 = vadd.f32 %v11088, %v11781
        %v11814 = vadd.f32 %v11089, %v11782
        %v11815 = vadd.f32 %v11090, %v11783
        %v11816 = vadd.f32 %v11091, %v11784
        %v11817 = vadd.f32 %v11092, %v11785
        %v11818 = vadd.f32 %v11093, %v11786
        %v11819 = vadd.f32 %v11094, %v11787
        %v11820 = vadd.f32 %v11095, %v11788
        %v11821 = vadd.f32 %v11096, %v11789
        %v11822 = vadd.f32 %v11097, %v11790
        %v11823 = vadd.f32 %v11098, %v11791
        %v11824 = vadd.f32 %v11099, %v11792
        %v11825 = vadd.f32 %v11100, %v11793
        %v11826 = vadd.f32 %v11101, %v11794
        %v11827 = vadd.f32 %v11102, %v11795
        %v11828 = vadd.f32 %v11103, %v11796
        %v11829 = vadd.f32 %v11104, %v11797
        %v11830 = vadd.f32 %v11105, %v11798
        %v11831 = vadd.f32 %v11106, %v11799
        %v11832 = vadd.f32 %v11107, %v11800
        %v11833 = vadd.f32 %v11108, %v11801
        %v11834 = vadd.f32 %v11109, %v11802
        %v11835 = vadd.f32 %v11110, %v11803
        %v11836 = vadd.f32 %v11111, %v11804
        %v11837 = vadd.f32 %v11112, %v11805
        %v11838 = vadd.f32 %v11113, %v11806
        %v11839 = vadd.f32 %v11114, %v11807
        %v11840 = vadd.f32 %v11115, %v11808
        %v11841 = vld [vmem:[%s10822] sm:$0xe]
        %v11842 = vld [vmem:[%s10822 + $0xc] sm:$0xe]
        %v11843 = vld [vmem:[%s10822 + $0x18] sm:$0xe]
        %v11844 = vld [vmem:[%s10822 + $0x24] sm:$0xe]
        %v11845 = vld [vmem:[%s10822 + $0x30] sm:$0xe]
        %v11846 = vld [vmem:[%s10822 + $0x3c] sm:$0xe]
        %v11847 = vld [vmem:[%s10822 + $0x48] sm:$0xe]
        %v11848 = vld [vmem:[%s10822 + $0x54] sm:$0xe]
        %v11849 = vld [vmem:[%s10822 + $0x60] sm:$0xe]
        %v11850 = vld [vmem:[%s10822 + $0x6c] sm:$0xe]
        %v11851 = vld [vmem:[%s10822 + $0x78] sm:$0xe]
        %v11852 = vld [vmem:[%s10822 + $0x84] sm:$0xe]
        %v11853 = vld [vmem:[%s10822 + $0x90] sm:$0xe]
        %v11854 = vld [vmem:[%s10822 + $0x9c] sm:$0xe]
        %v11855 = vld [vmem:[%s10822 + $0xa8] sm:$0xe]
        %v11856 = vld [vmem:[%s10822 + $0xb4] sm:$0xe]
        %v11905 = vrot.slane %v11841, 5
        %v11906 = vrot.slane %v11905, 4
        %v11907 = vrot.slane %v11117, 5
        %v11908 = vsel %vm1490, %v11906, %v11907
        %v11909 = vrot.slane %v11907, 4
        %v11910 = vrot.slane %v11118, 5
        %v11911 = vsel %vm1490, %v11909, %v11910
        %v11912 = vrot.slane %v11842, 5
        %v11913 = vrot.slane %v11912, 4
        %v11914 = vrot.slane %v11120, 5
        %v11915 = vsel %vm1490, %v11913, %v11914
        %v11916 = vrot.slane %v11914, 4
        %v11917 = vrot.slane %v11121, 5
        %v11918 = vsel %vm1490, %v11916, %v11917
        %v11919 = vrot.slane %v11843, 5
        %v11920 = vrot.slane %v11919, 4
        %v11921 = vrot.slane %v11123, 5
        %v11922 = vsel %vm1490, %v11920, %v11921
        %v11923 = vrot.slane %v11921, 4
        %v11924 = vrot.slane %v11124, 5
        %v11925 = vsel %vm1490, %v11923, %v11924
        %v11926 = vrot.slane %v11844, 5
        %v11927 = vrot.slane %v11926, 4
        %v11928 = vrot.slane %v11126, 5
        %v11929 = vsel %vm1490, %v11927, %v11928
        %v11930 = vrot.slane %v11928, 4
        %v11931 = vrot.slane %v11127, 5
        %v11932 = vsel %vm1490, %v11930, %v11931
        %v11933 = vrot.slane %v11845, 5
        %v11934 = vrot.slane %v11933, 4
        %v11935 = vrot.slane %v11129, 5
        %v11936 = vsel %vm1490, %v11934, %v11935
        %v11937 = vrot.slane %v11935, 4
        %v11938 = vrot.slane %v11130, 5
        %v11939 = vsel %vm1490, %v11937, %v11938
        %v11940 = vrot.slane %v11846, 5
        %v11941 = vrot.slane %v11940, 4
        %v11942 = vrot.slane %v11132, 5
        %v11943 = vsel %vm1490, %v11941, %v11942
        %v11944 = vrot.slane %v11942, 4
        %v11945 = vrot.slane %v11133, 5
        %v11946 = vsel %vm1490, %v11944, %v11945
        %v11947 = vrot.slane %v11847, 5
        %v11948 = vrot.slane %v11947, 4
        %v11949 = vrot.slane %v11135, 5
        %v11950 = vsel %vm1490, %v11948, %v11949
        %v11951 = vrot.slane %v11949, 4
        %v11952 = vrot.slane %v11136, 5
        %v11953 = vsel %vm1490, %v11951, %v11952
        %v11954 = vrot.slane %v11848, 5
        %v11955 = vrot.slane %v11954, 4
        %v11956 = vrot.slane %v11138, 5
        %v11957 = vsel %vm1490, %v11955, %v11956
        %v11958 = vrot.slane %v11956, 4
        %v11959 = vrot.slane %v11139, 5
        %v11960 = vsel %vm1490, %v11958, %v11959
        %v11961 = vrot.slane %v11849, 5
        %v11962 = vrot.slane %v11961, 4
        %v11963 = vrot.slane %v11141, 5
        %v11964 = vsel %vm1490, %v11962, %v11963
        %v11965 = vrot.slane %v11963, 4
        %v11966 = vrot.slane %v11142, 5
        %v11967 = vsel %vm1490, %v11965, %v11966
        %v11968 = vrot.slane %v11850, 5
        %v11969 = vrot.slane %v11968, 4
        %v11970 = vrot.slane %v11144, 5
        %v11971 = vsel %vm1490, %v11969, %v11970
        %v11972 = vrot.slane %v11970, 4
        %v11973 = vrot.slane %v11145, 5
        %v11974 = vsel %vm1490, %v11972, %v11973
        %v11975 = vrot.slane %v11851, 5
        %v11976 = vrot.slane %v11975, 4
        %v11977 = vrot.slane %v11147, 5
        %v11978 = vsel %vm1490, %v11976, %v11977
        %v11979 = vrot.slane %v11977, 4
        %v11980 = vrot.slane %v11148, 5
        %v11981 = vsel %vm1490, %v11979, %v11980
        %v11982 = vrot.slane %v11852, 5
        %v11983 = vrot.slane %v11982, 4
        %v11984 = vrot.slane %v11150, 5
        %v11985 = vsel %vm1490, %v11983, %v11984
        %v11986 = vrot.slane %v11984, 4
        %v11987 = vrot.slane %v11151, 5
        %v11988 = vsel %vm1490, %v11986, %v11987
        %v11989 = vrot.slane %v11853, 5
        %v11990 = vrot.slane %v11989, 4
        %v11991 = vrot.slane %v11153, 5
        %v11992 = vsel %vm1490, %v11990, %v11991
        %v11993 = vrot.slane %v11991, 4
        %v11994 = vrot.slane %v11154, 5
        %v11995 = vsel %vm1490, %v11993, %v11994
        %v11996 = vrot.slane %v11854, 5
        %v11997 = vrot.slane %v11996, 4
        %v11998 = vrot.slane %v11156, 5
        %v11999 = vsel %vm1490, %v11997, %v11998
        %v12000 = vrot.slane %v11998, 4
        %v12001 = vrot.slane %v11157, 5
        %v12002 = vsel %vm1490, %v12000, %v12001
        %v12003 = vrot.slane %v11855, 5
        %v12004 = vrot.slane %v12003, 4
        %v12005 = vrot.slane %v11159, 5
        %v12006 = vsel %vm1490, %v12004, %v12005
        %v12007 = vrot.slane %v12005, 4
        %v12008 = vrot.slane %v11160, 5
        %v12009 = vsel %vm1490, %v12007, %v12008
        %v12010 = vrot.slane %v11856, 5
        %v12011 = vrot.slane %v12010, 4
        %v12012 = vrot.slane %v11162, 5
        %v12013 = vsel %vm1490, %v12011, %v12012
        %v12014 = vrot.slane %v12012, 4
        %v12015 = vrot.slane %v11163, 5
        %v12016 = vsel %vm1490, %v12014, %v12015
        %v12049 = vunpack.c.l.bf16 %v11908
        %v12050 = vunpack.c.l.bf16 %v11911
        %v12051 = vunpack.c.l.bf16 %v11915
        %v12052 = vunpack.c.l.bf16 %v11918
        %v12053 = vunpack.c.l.bf16 %v11922
        %v12054 = vunpack.c.l.bf16 %v11925
        %v12055 = vunpack.c.l.bf16 %v11929
        %v12056 = vunpack.c.l.bf16 %v11932
        %v12057 = vunpack.c.l.bf16 %v11936
        %v12058 = vunpack.c.l.bf16 %v11939
        %v12059 = vunpack.c.l.bf16 %v11943
        %v12060 = vunpack.c.l.bf16 %v11946
        %v12061 = vunpack.c.l.bf16 %v11950
        %v12062 = vunpack.c.l.bf16 %v11953
        %v12063 = vunpack.c.l.bf16 %v11957
        %v12064 = vunpack.c.l.bf16 %v11960
        %v12065 = vunpack.c.l.bf16 %v11964
        %v12066 = vunpack.c.l.bf16 %v11967
        %v12067 = vunpack.c.l.bf16 %v11971
        %v12068 = vunpack.c.l.bf16 %v11974
        %v12069 = vunpack.c.l.bf16 %v11978
        %v12070 = vunpack.c.l.bf16 %v11981
        %v12071 = vunpack.c.l.bf16 %v11985
        %v12072 = vunpack.c.l.bf16 %v11988
        %v12073 = vunpack.c.l.bf16 %v11992
        %v12074 = vunpack.c.l.bf16 %v11995
        %v12075 = vunpack.c.l.bf16 %v11999
        %v12076 = vunpack.c.l.bf16 %v12002
        %v12077 = vunpack.c.l.bf16 %v12006
        %v12078 = vunpack.c.l.bf16 %v12009
        %v12079 = vunpack.c.l.bf16 %v12013
        %v12080 = vunpack.c.l.bf16 %v12016
        %v12081 = vld [vmem:[%s3 + $0x17] sm:$0x1]
        %12083 = vset.pattern.permute.xlu0 0
        %12084 = vperm.xlu0 %12083, %v12049
        %v12085 = vpop.permute.xlu0 %12084
        %12088 = vset.pattern.permute.xlu0 0
        %12089 = vperm.xlu0 %12088, %v12050
        %v12090 = vpop.permute.xlu0 %12089
        %12093 = vset.pattern.permute.xlu0 0
        %12094 = vperm.xlu0 %12093, %v12051
        %v12095 = vpop.permute.xlu0 %12094
        %12098 = vset.pattern.permute.xlu0 0
        %12099 = vperm.xlu0 %12098, %v12052
        %v12100 = vpop.permute.xlu0 %12099
        %12103 = vset.pattern.permute.xlu0 0
        %12104 = vperm.xlu0 %12103, %v12053
        %v12105 = vpop.permute.xlu0 %12104
        %12108 = vset.pattern.permute.xlu0 0
        %12109 = vperm.xlu0 %12108, %v12054
        %v12110 = vpop.permute.xlu0 %12109
        %12113 = vset.pattern.permute.xlu0 0
        %12114 = vperm.xlu0 %12113, %v12055
        %v12115 = vpop.permute.xlu0 %12114
        %12118 = vset.pattern.permute.xlu0 0
        %12119 = vperm.xlu0 %12118, %v12056
        %v12120 = vpop.permute.xlu0 %12119
        %12123 = vset.pattern.permute.xlu0 0
        %12124 = vperm.xlu0 %12123, %v12057
        %v12125 = vpop.permute.xlu0 %12124
        %12128 = vset.pattern.permute.xlu0 0
        %12129 = vperm.xlu0 %12128, %v12058
        %v12130 = vpop.permute.xlu0 %12129
        %12133 = vset.pattern.permute.xlu0 0
        %12134 = vperm.xlu0 %12133, %v12059
        %v12135 = vpop.permute.xlu0 %12134
        %12138 = vset.pattern.permute.xlu0 0
        %12139 = vperm.xlu0 %12138, %v12060
        %v12140 = vpop.permute.xlu0 %12139
        %12143 = vset.pattern.permute.xlu0 0
        %12144 = vperm.xlu0 %12143, %v12061
        %v12145 = vpop.permute.xlu0 %12144
        %12148 = vset.pattern.permute.xlu0 0
        %12149 = vperm.xlu0 %12148, %v12062
        %v12150 = vpop.permute.xlu0 %12149
        %12153 = vset.pattern.permute.xlu0 0
        %12154 = vperm.xlu0 %12153, %v12063
        %v12155 = vpop.permute.xlu0 %12154
        %12158 = vset.pattern.permute.xlu0 0
        %12159 = vperm.xlu0 %12158, %v12064
        %v12160 = vpop.permute.xlu0 %12159
        %12163 = vset.pattern.permute.xlu0 0
        %12164 = vperm.xlu0 %12163, %v12065
        %v12165 = vpop.permute.xlu0 %12164
        %12168 = vset.pattern.permute.xlu0 0
        %12169 = vperm.xlu0 %12168, %v12066
        %v12170 = vpop.permute.xlu0 %12169
        %12173 = vset.pattern.permute.xlu0 0
        %12174 = vperm.xlu0 %12173, %v12067
        %v12175 = vpop.permute.xlu0 %12174
        %12178 = vset.pattern.permute.xlu0 0
        %12179 = vperm.xlu0 %12178, %v12068
        %v12180 = vpop.permute.xlu0 %12179
        %12183 = vset.pattern.permute.xlu0 0
        %12184 = vperm.xlu0 %12183, %v12069
        %v12185 = vpop.permute.xlu0 %12184
        %12188 = vset.pattern.permute.xlu0 0
        %12189 = vperm.xlu0 %12188, %v12070
        %v12190 = vpop.permute.xlu0 %12189
        %12193 = vset.pattern.permute.xlu0 0
        %12194 = vperm.xlu0 %12193, %v12071
        %v12195 = vpop.permute.xlu0 %12194
        %12198 = vset.pattern.permute.xlu0 0
        %12199 = vperm.xlu0 %12198, %v12072
        %v12200 = vpop.permute.xlu0 %12199
        %12203 = vset.pattern.permute.xlu0 0
        %12204 = vperm.xlu0 %12203, %v12073
        %v12205 = vpop.permute.xlu0 %12204
        %12208 = vset.pattern.permute.xlu0 0
        %12209 = vperm.xlu0 %12208, %v12074
        %v12210 = vpop.permute.xlu0 %12209
        %12213 = vset.pattern.permute.xlu0 0
        %12214 = vperm.xlu0 %12213, %v12075
        %v12215 = vpop.permute.xlu0 %12214
        %12218 = vset.pattern.permute.xlu0 0
        %12219 = vperm.xlu0 %12218, %v12076
        %v12220 = vpop.permute.xlu0 %12219
        %12223 = vset.pattern.permute.xlu0 0
        %12224 = vperm.xlu0 %12223, %v12077
        %v12225 = vpop.permute.xlu0 %12224
        %12228 = vset.pattern.permute.xlu0 0
        %12229 = vperm.xlu0 %12228, %v12078
        %v12230 = vpop.permute.xlu0 %12229
        %12233 = vset.pattern.permute.xlu0 0
        %12234 = vperm.xlu0 %12233, %v12079
        %v12235 = vpop.permute.xlu0 %12234
        %12238 = vset.pattern.permute.xlu0 0
        %12239 = vperm.xlu0 %12238, %v12080
        %v12240 = vpop.permute.xlu0 %12239
        %v12242 = vlaneseq
        %v12243 = vshrl.u32 %v12242, 7
        %v12244 = vsub.s32 0, %v12243
        %v12245 = vrot.slane %v12081, %v12244
        %v12246 = vmul.f32 %v12085, %v12245
        %v12247 = vmul.f32 %v12090, %v12245
        %v12248 = vmul.f32 %v12095, %v12245
        %v12249 = vmul.f32 %v12100, %v12245
        %v12250 = vmul.f32 %v12105, %v12245
        %v12251 = vmul.f32 %v12110, %v12245
        %v12252 = vmul.f32 %v12115, %v12245
        %v12253 = vmul.f32 %v12120, %v12245
        %v12254 = vmul.f32 %v12125, %v12245
        %v12255 = vmul.f32 %v12130, %v12245
        %v12256 = vmul.f32 %v12135, %v12245
        %v12257 = vmul.f32 %v12140, %v12245
        %v12258 = vmul.f32 %v12145, %v12245
        %v12259 = vmul.f32 %v12150, %v12245
        %v12260 = vmul.f32 %v12155, %v12245
        %v12261 = vmul.f32 %v12160, %v12245
        %v12262 = vmul.f32 %v12165, %v12245
        %v12263 = vmul.f32 %v12170, %v12245
        %v12264 = vmul.f32 %v12175, %v12245
        %v12265 = vmul.f32 %v12180, %v12245
        %v12266 = vmul.f32 %v12185, %v12245
        %v12267 = vmul.f32 %v12190, %v12245
        %v12268 = vmul.f32 %v12195, %v12245
        %v12269 = vmul.f32 %v12200, %v12245
        %v12270 = vmul.f32 %v12205, %v12245
        %v12271 = vmul.f32 %v12210, %v12245
        %v12272 = vmul.f32 %v12215, %v12245
        %v12273 = vmul.f32 %v12220, %v12245
        %v12274 = vmul.f32 %v12225, %v12245
        %v12275 = vmul.f32 %v12230, %v12245
        %v12276 = vmul.f32 %v12235, %v12245
        %v12277 = vmul.f32 %v12240, %v12245
        %v12278 = vadd.f32 %v11809, %v12246
        %v12279 = vadd.f32 %v11810, %v12247
        %v12280 = vadd.f32 %v11811, %v12248
        %v12281 = vadd.f32 %v11812, %v12249
        %v12282 = vadd.f32 %v11813, %v12250
        %v12283 = vadd.f32 %v11814, %v12251
        %v12284 = vadd.f32 %v11815, %v12252
        %v12285 = vadd.f32 %v11816, %v12253
        %v12286 = vadd.f32 %v11817, %v12254
        %v12287 = vadd.f32 %v11818, %v12255
        %v12288 = vadd.f32 %v11819, %v12256
        %v12289 = vadd.f32 %v11820, %v12257
        %v12290 = vadd.f32 %v11821, %v12258
        %v12291 = vadd.f32 %v11822, %v12259
        %v12292 = vadd.f32 %v11823, %v12260
        %v12293 = vadd.f32 %v11824, %v12261
        %v12294 = vadd.f32 %v11825, %v12262
        %v12295 = vadd.f32 %v11826, %v12263
        %v12296 = vadd.f32 %v11827, %v12264
        %v12297 = vadd.f32 %v11828, %v12265
        %v12298 = vadd.f32 %v11829, %v12266
        %v12299 = vadd.f32 %v11830, %v12267
        %v12300 = vadd.f32 %v11831, %v12268
        %v12301 = vadd.f32 %v11832, %v12269
        %v12302 = vadd.f32 %v11833, %v12270
        %v12303 = vadd.f32 %v11834, %v12271
        %v12304 = vadd.f32 %v11835, %v12272
        %v12305 = vadd.f32 %v11836, %v12273
        %v12306 = vadd.f32 %v11837, %v12274
        %v12307 = vadd.f32 %v11838, %v12275
        %v12308 = vadd.f32 %v11839, %v12276
        %v12309 = vadd.f32 %v11840, %v12277
        %s12310 = scalar_lea.vmem %s401, 24
        %v12311 = vld [vmem:[%s12310] sm:$0xf]
        %v12312 = vld [vmem:[%s12310 + $0x4] sm:$0xf]
        %v12313 = vld [vmem:[%s12310 + $0xc] sm:$0xf]
        %v12314 = vld [vmem:[%s12310 + $0x10] sm:$0xf]
        %v12315 = vld [vmem:[%s12310 + $0x18] sm:$0xf]
        %v12316 = vld [vmem:[%s12310 + $0x1c] sm:$0xf]
        %v12317 = vld [vmem:[%s12310 + $0x24] sm:$0xf]
        %v12318 = vld [vmem:[%s12310 + $0x28] sm:$0xf]
        %v12319 = vld [vmem:[%s12310 + $0x30] sm:$0xf]
        %v12320 = vld [vmem:[%s12310 + $0x34] sm:$0xf]
        %v12321 = vld [vmem:[%s12310 + $0x3c] sm:$0xf]
        %v12322 = vld [vmem:[%s12310 + $0x40] sm:$0xf]
        %v12323 = vld [vmem:[%s12310 + $0x48] sm:$0xf]
        %v12324 = vld [vmem:[%s12310 + $0x4c] sm:$0xf]
        %v12325 = vld [vmem:[%s12310 + $0x54] sm:$0xf]
        %v12326 = vld [vmem:[%s12310 + $0x58] sm:$0xf]
        %v12327 = vld [vmem:[%s12310 + $0x60] sm:$0xf]
        %v12328 = vld [vmem:[%s12310 + $0x64] sm:$0xf]
        %v12329 = vld [vmem:[%s12310 + $0x6c] sm:$0xf]
        %v12330 = vld [vmem:[%s12310 + $0x70] sm:$0xf]
        %v12331 = vld [vmem:[%s12310 + $0x78] sm:$0xf]
        %v12332 = vld [vmem:[%s12310 + $0x7c] sm:$0xf]
        %v12333 = vld [vmem:[%s12310 + $0x84] sm:$0xf]
        %v12334 = vld [vmem:[%s12310 + $0x88] sm:$0xf]
        %v12335 = vld [vmem:[%s12310 + $0x90] sm:$0xf]
        %v12336 = vld [vmem:[%s12310 + $0x94] sm:$0xf]
        %v12337 = vld [vmem:[%s12310 + $0x9c] sm:$0xf]
        %v12338 = vld [vmem:[%s12310 + $0xa0] sm:$0xf]
        %v12339 = vld [vmem:[%s12310 + $0xa8] sm:$0xf]
        %v12340 = vld [vmem:[%s12310 + $0xac] sm:$0xf]
        %v12341 = vld [vmem:[%s12310 + $0xb4] sm:$0xf]
        %v12342 = vld [vmem:[%s12310 + $0xb8] sm:$0xf]
        %v12343 = vunpack.c.l.bf16 %v12311
        %v12344 = vunpack.c.l.bf16 %v12312
        %v12345 = vunpack.c.l.bf16 %v12313
        %v12346 = vunpack.c.l.bf16 %v12314
        %v12347 = vunpack.c.l.bf16 %v12315
        %v12348 = vunpack.c.l.bf16 %v12316
        %v12349 = vunpack.c.l.bf16 %v12317
        %v12350 = vunpack.c.l.bf16 %v12318
        %v12351 = vunpack.c.l.bf16 %v12319
        %v12352 = vunpack.c.l.bf16 %v12320
        %v12353 = vunpack.c.l.bf16 %v12321
        %v12354 = vunpack.c.l.bf16 %v12322
        %v12355 = vunpack.c.l.bf16 %v12323
        %v12356 = vunpack.c.l.bf16 %v12324
        %v12357 = vunpack.c.l.bf16 %v12325
        %v12358 = vunpack.c.l.bf16 %v12326
        %v12359 = vunpack.c.l.bf16 %v12327
        %v12360 = vunpack.c.l.bf16 %v12328
        %v12361 = vunpack.c.l.bf16 %v12329
        %v12362 = vunpack.c.l.bf16 %v12330
        %v12363 = vunpack.c.l.bf16 %v12331
        %v12364 = vunpack.c.l.bf16 %v12332
        %v12365 = vunpack.c.l.bf16 %v12333
        %v12366 = vunpack.c.l.bf16 %v12334
        %v12367 = vunpack.c.l.bf16 %v12335
        %v12368 = vunpack.c.l.bf16 %v12336
        %v12369 = vunpack.c.l.bf16 %v12337
        %v12370 = vunpack.c.l.bf16 %v12338
        %v12371 = vunpack.c.l.bf16 %v12339
        %v12372 = vunpack.c.l.bf16 %v12340
        %v12373 = vunpack.c.l.bf16 %v12341
        %v12374 = vunpack.c.l.bf16 %v12342
        %v12375 = vld [vmem:[%s3 + $0x18] sm:$0x1]
        %12377 = vset.pattern.permute.xlu0 0
        %12378 = vperm.xlu0 %12377, %v12343
        %v12379 = vpop.permute.xlu0 %12378
        %12382 = vset.pattern.permute.xlu0 0
        %12383 = vperm.xlu0 %12382, %v12344
        %v12384 = vpop.permute.xlu0 %12383
        %12387 = vset.pattern.permute.xlu0 0
        %12388 = vperm.xlu0 %12387, %v12345
        %v12389 = vpop.permute.xlu0 %12388
        %12392 = vset.pattern.permute.xlu0 0
        %12393 = vperm.xlu0 %12392, %v12346
        %v12394 = vpop.permute.xlu0 %12393
        %12397 = vset.pattern.permute.xlu0 0
        %12398 = vperm.xlu0 %12397, %v12347
        %v12399 = vpop.permute.xlu0 %12398
        %12402 = vset.pattern.permute.xlu0 0
        %12403 = vperm.xlu0 %12402, %v12348
        %v12404 = vpop.permute.xlu0 %12403
        %12407 = vset.pattern.permute.xlu0 0
        %12408 = vperm.xlu0 %12407, %v12349
        %v12409 = vpop.permute.xlu0 %12408
        %12412 = vset.pattern.permute.xlu0 0
        %12413 = vperm.xlu0 %12412, %v12350
        %v12414 = vpop.permute.xlu0 %12413
        %12417 = vset.pattern.permute.xlu0 0
        %12418 = vperm.xlu0 %12417, %v12351
        %v12419 = vpop.permute.xlu0 %12418
        %12422 = vset.pattern.permute.xlu0 0
        %12423 = vperm.xlu0 %12422, %v12352
        %v12424 = vpop.permute.xlu0 %12423
        %12427 = vset.pattern.permute.xlu0 0
        %12428 = vperm.xlu0 %12427, %v12353
        %v12429 = vpop.permute.xlu0 %12428
        %12432 = vset.pattern.permute.xlu0 0
        %12433 = vperm.xlu0 %12432, %v12354
        %v12434 = vpop.permute.xlu0 %12433
        %12437 = vset.pattern.permute.xlu0 0
        %12438 = vperm.xlu0 %12437, %v12355
        %v12439 = vpop.permute.xlu0 %12438
        %12442 = vset.pattern.permute.xlu0 0
        %12443 = vperm.xlu0 %12442, %v12356
        %v12444 = vpop.permute.xlu0 %12443
        %12447 = vset.pattern.permute.xlu0 0
        %12448 = vperm.xlu0 %12447, %v12357
        %v12449 = vpop.permute.xlu0 %12448
        %12452 = vset.pattern.permute.xlu0 0
        %12453 = vperm.xlu0 %12452, %v12358
        %v12454 = vpop.permute.xlu0 %12453
        %12457 = vset.pattern.permute.xlu0 0
        %12458 = vperm.xlu0 %12457, %v12359
        %v12459 = vpop.permute.xlu0 %12458
        %12462 = vset.pattern.permute.xlu0 0
        %12463 = vperm.xlu0 %12462, %v12360
        %v12464 = vpop.permute.xlu0 %12463
        %12467 = vset.pattern.permute.xlu0 0
        %12468 = vperm.xlu0 %12467, %v12361
        %v12469 = vpop.permute.xlu0 %12468
        %12472 = vset.pattern.permute.xlu0 0
        %12473 = vperm.xlu0 %12472, %v12362
        %v12474 = vpop.permute.xlu0 %12473
        %12477 = vset.pattern.permute.xlu0 0
        %12478 = vperm.xlu0 %12477, %v12363
        %v12479 = vpop.permute.xlu0 %12478
        %12482 = vset.pattern.permute.xlu0 0
        %12483 = vperm.xlu0 %12482, %v12364
        %v12484 = vpop.permute.xlu0 %12483
        %12487 = vset.pattern.permute.xlu0 0
        %12488 = vperm.xlu0 %12487, %v12365
        %v12489 = vpop.permute.xlu0 %12488
        %12492 = vset.pattern.permute.xlu0 0
        %12493 = vperm.xlu0 %12492, %v12366
        %v12494 = vpop.permute.xlu0 %12493
        %12497 = vset.pattern.permute.xlu0 0
        %12498 = vperm.xlu0 %12497, %v12367
        %v12499 = vpop.permute.xlu0 %12498
        %12502 = vset.pattern.permute.xlu0 0
        %12503 = vperm.xlu0 %12502, %v12368
        %v12504 = vpop.permute.xlu0 %12503
        %12507 = vset.pattern.permute.xlu0 0
        %12508 = vperm.xlu0 %12507, %v12369
        %v12509 = vpop.permute.xlu0 %12508
        %12512 = vset.pattern.permute.xlu0 0
        %12513 = vperm.xlu0 %12512, %v12370
        %v12514 = vpop.permute.xlu0 %12513
        %12517 = vset.pattern.permute.xlu0 0
        %12518 = vperm.xlu0 %12517, %v12371
        %v12519 = vpop.permute.xlu0 %12518
        %12522 = vset.pattern.permute.xlu0 0
        %12523 = vperm.xlu0 %12522, %v12372
        %v12524 = vpop.permute.xlu0 %12523
        %12527 = vset.pattern.permute.xlu0 0
        %12528 = vperm.xlu0 %12527, %v12373
        %v12529 = vpop.permute.xlu0 %12528
        %12532 = vset.pattern.permute.xlu0 0
        %12533 = vperm.xlu0 %12532, %v12374
        %v12534 = vpop.permute.xlu0 %12533
        %v12536 = vlaneseq
        %v12537 = vshrl.u32 %v12536, 7
        %v12538 = vsub.s32 0, %v12537
        %v12539 = vrot.slane %v12375, %v12538
        %v12540 = vmul.f32 %v12379, %v12539
        %v12541 = vmul.f32 %v12384, %v12539
        %v12542 = vmul.f32 %v12389, %v12539
        %v12543 = vmul.f32 %v12394, %v12539
        %v12544 = vmul.f32 %v12399, %v12539
        %v12545 = vmul.f32 %v12404, %v12539
        %v12546 = vmul.f32 %v12409, %v12539
        %v12547 = vmul.f32 %v12414, %v12539
        %v12548 = vmul.f32 %v12419, %v12539
        %v12549 = vmul.f32 %v12424, %v12539
        %v12550 = vmul.f32 %v12429, %v12539
        %v12551 = vmul.f32 %v12434, %v12539
        %v12552 = vmul.f32 %v12439, %v12539
        %v12553 = vmul.f32 %v12444, %v12539
        %v12554 = vmul.f32 %v12449, %v12539
        %v12555 = vmul.f32 %v12454, %v12539
        %v12556 = vmul.f32 %v12459, %v12539
        %v12557 = vmul.f32 %v12464, %v12539
        %v12558 = vmul.f32 %v12469, %v12539
        %v12559 = vmul.f32 %v12474, %v12539
        %v12560 = vmul.f32 %v12479, %v12539
        %v12561 = vmul.f32 %v12484, %v12539
        %v12562 = vmul.f32 %v12489, %v12539
        %v12563 = vmul.f32 %v12494, %v12539
        %v12564 = vmul.f32 %v12499, %v12539
        %v12565 = vmul.f32 %v12504, %v12539
        %v12566 = vmul.f32 %v12509, %v12539
        %v12567 = vmul.f32 %v12514, %v12539
        %v12568 = vmul.f32 %v12519, %v12539
        %v12569 = vmul.f32 %v12524, %v12539
        %v12570 = vmul.f32 %v12529, %v12539
        %v12571 = vmul.f32 %v12534, %v12539
        %v12572 = vadd.f32 %v12278, %v12540
        %v12573 = vadd.f32 %v12279, %v12541
        %v12574 = vadd.f32 %v12280, %v12542
        %v12575 = vadd.f32 %v12281, %v12543
        %v12576 = vadd.f32 %v12282, %v12544
        %v12577 = vadd.f32 %v12283, %v12545
        %v12578 = vadd.f32 %v12284, %v12546
        %v12579 = vadd.f32 %v12285, %v12547
        %v12580 = vadd.f32 %v12286, %v12548
        %v12581 = vadd.f32 %v12287, %v12549
        %v12582 = vadd.f32 %v12288, %v12550
        %v12583 = vadd.f32 %v12289, %v12551
        %v12584 = vadd.f32 %v12290, %v12552
        %v12585 = vadd.f32 %v12291, %v12553
        %v12586 = vadd.f32 %v12292, %v12554
        %v12587 = vadd.f32 %v12293, %v12555
        %v12588 = vadd.f32 %v12294, %v12556
        %v12589 = vadd.f32 %v12295, %v12557
        %v12590 = vadd.f32 %v12296, %v12558
        %v12591 = vadd.f32 %v12297, %v12559
        %v12592 = vadd.f32 %v12298, %v12560
        %v12593 = vadd.f32 %v12299, %v12561
        %v12594 = vadd.f32 %v12300, %v12562
        %v12595 = vadd.f32 %v12301, %v12563
        %v12596 = vadd.f32 %v12302, %v12564
        %v12597 = vadd.f32 %v12303, %v12565
        %v12598 = vadd.f32 %v12304, %v12566
        %v12599 = vadd.f32 %v12305, %v12567
        %v12600 = vadd.f32 %v12306, %v12568
        %v12601 = vadd.f32 %v12307, %v12569
        %v12602 = vadd.f32 %v12308, %v12570
        %v12603 = vadd.f32 %v12309, %v12571
        %v12604 = vld [vmem:[%s12310] sm:$0xf]
        %v12605 = vld [vmem:[%s12310 + $0x4] sm:$0xf]
        %v12606 = vld [vmem:[%s12310 + $0x8] sm:$0x1]
        %v12607 = vld [vmem:[%s12310 + $0xc] sm:$0xf]
        %v12608 = vld [vmem:[%s12310 + $0x10] sm:$0xf]
        %v12609 = vld [vmem:[%s12310 + $0x14] sm:$0x1]
        %v12610 = vld [vmem:[%s12310 + $0x18] sm:$0xf]
        %v12611 = vld [vmem:[%s12310 + $0x1c] sm:$0xf]
        %v12612 = vld [vmem:[%s12310 + $0x20] sm:$0x1]
        %v12613 = vld [vmem:[%s12310 + $0x24] sm:$0xf]
        %v12614 = vld [vmem:[%s12310 + $0x28] sm:$0xf]
        %v12615 = vld [vmem:[%s12310 + $0x2c] sm:$0x1]
        %v12616 = vld [vmem:[%s12310 + $0x30] sm:$0xf]
        %v12617 = vld [vmem:[%s12310 + $0x34] sm:$0xf]
        %v12618 = vld [vmem:[%s12310 + $0x38] sm:$0x1]
        %v12619 = vld [vmem:[%s12310 + $0x3c] sm:$0xf]
        %v12620 = vld [vmem:[%s12310 + $0x40] sm:$0xf]
        %v12621 = vld [vmem:[%s12310 + $0x44] sm:$0x1]
        %v12622 = vld [vmem:[%s12310 + $0x48] sm:$0xf]
        %v12623 = vld [vmem:[%s12310 + $0x4c] sm:$0xf]
        %v12624 = vld [vmem:[%s12310 + $0x50] sm:$0x1]
        %v12625 = vld [vmem:[%s12310 + $0x54] sm:$0xf]
        %v12626 = vld [vmem:[%s12310 + $0x58] sm:$0xf]
        %v12627 = vld [vmem:[%s12310 + $0x5c] sm:$0x1]
        %v12628 = vld [vmem:[%s12310 + $0x60] sm:$0xf]
        %v12629 = vld [vmem:[%s12310 + $0x64] sm:$0xf]
        %v12630 = vld [vmem:[%s12310 + $0x68] sm:$0x1]
        %v12631 = vld [vmem:[%s12310 + $0x6c] sm:$0xf]
        %v12632 = vld [vmem:[%s12310 + $0x70] sm:$0xf]
        %v12633 = vld [vmem:[%s12310 + $0x74] sm:$0x1]
        %v12634 = vld [vmem:[%s12310 + $0x78] sm:$0xf]
        %v12635 = vld [vmem:[%s12310 + $0x7c] sm:$0xf]
        %v12636 = vld [vmem:[%s12310 + $0x80] sm:$0x1]
        %v12637 = vld [vmem:[%s12310 + $0x84] sm:$0xf]
        %v12638 = vld [vmem:[%s12310 + $0x88] sm:$0xf]
        %v12639 = vld [vmem:[%s12310 + $0x8c] sm:$0x1]
        %v12640 = vld [vmem:[%s12310 + $0x90] sm:$0xf]
        %v12641 = vld [vmem:[%s12310 + $0x94] sm:$0xf]
        %v12642 = vld [vmem:[%s12310 + $0x98] sm:$0x1]
        %v12643 = vld [vmem:[%s12310 + $0x9c] sm:$0xf]
        %v12644 = vld [vmem:[%s12310 + $0xa0] sm:$0xf]
        %v12645 = vld [vmem:[%s12310 + $0xa4] sm:$0x1]
        %v12646 = vld [vmem:[%s12310 + $0xa8] sm:$0xf]
        %v12647 = vld [vmem:[%s12310 + $0xac] sm:$0xf]
        %v12648 = vld [vmem:[%s12310 + $0xb0] sm:$0x1]
        %v12649 = vld [vmem:[%s12310 + $0xb4] sm:$0xf]
        %v12650 = vld [vmem:[%s12310 + $0xb8] sm:$0xf]
        %v12651 = vld [vmem:[%s12310 + $0xbc] sm:$0x1]
        %v12653 = vshrl.u32 %v12604, 16
        %v12655 = vrot.slane %v12653, 4
        %v12656 = vshll.u32 %v12604, 16
        %v12658 = vrot.slane %v12656, 5
        %v12659 = vor.u32 %v12655, %v12658
        %v12660 = vrot.slane %v12659, 4
        %v12662 = vshll.u32 %v12605, 16
        %v12664 = vrot.slane %v12662, 5
        %v12665 = vsel %vm746, %v12660, %v12664
        %v12666 = vshrl.u32 %v12605, 16
        %v12668 = vrot.slane %v12666, 4
        %v12669 = vor.u32 %v12668, %v12664
        %v12670 = vrot.slane %v12669, 4
        %v12672 = vshll.u32 %v12606, 16
        %v12674 = vrot.slane %v12672, 5
        %v12675 = vsel %vm746, %v12670, %v12674
        %v12677 = vshrl.u32 %v12607, 16
        %v12679 = vrot.slane %v12677, 4
        %v12680 = vshll.u32 %v12607, 16
        %v12682 = vrot.slane %v12680, 5
        %v12683 = vor.u32 %v12679, %v12682
        %v12684 = vrot.slane %v12683, 4
        %v12686 = vshll.u32 %v12608, 16
        %v12688 = vrot.slane %v12686, 5
        %v12689 = vsel %vm746, %v12684, %v12688
        %v12690 = vshrl.u32 %v12608, 16
        %v12692 = vrot.slane %v12690, 4
        %v12693 = vor.u32 %v12692, %v12688
        %v12694 = vrot.slane %v12693, 4
        %v12696 = vshll.u32 %v12609, 16
        %v12698 = vrot.slane %v12696, 5
        %v12699 = vsel %vm746, %v12694, %v12698
        %v12701 = vshrl.u32 %v12610, 16
        %v12703 = vrot.slane %v12701, 4
        %v12704 = vshll.u32 %v12610, 16
        %v12706 = vrot.slane %v12704, 5
        %v12707 = vor.u32 %v12703, %v12706
        %v12708 = vrot.slane %v12707, 4
        %v12710 = vshll.u32 %v12611, 16
        %v12712 = vrot.slane %v12710, 5
        %v12713 = vsel %vm746, %v12708, %v12712
        %v12714 = vshrl.u32 %v12611, 16
        %v12716 = vrot.slane %v12714, 4
        %v12717 = vor.u32 %v12716, %v12712
        %v12718 = vrot.slane %v12717, 4
        %v12720 = vshll.u32 %v12612, 16
        %v12722 = vrot.slane %v12720, 5
        %v12723 = vsel %vm746, %v12718, %v12722
        %v12725 = vshrl.u32 %v12613, 16
        %v12727 = vrot.slane %v12725, 4
        %v12728 = vshll.u32 %v12613, 16
        %v12730 = vrot.slane %v12728, 5
        %v12731 = vor.u32 %v12727, %v12730
        %v12732 = vrot.slane %v12731, 4
        %v12734 = vshll.u32 %v12614, 16
        %v12736 = vrot.slane %v12734, 5
        %v12737 = vsel %vm746, %v12732, %v12736
        %v12738 = vshrl.u32 %v12614, 16
        %v12740 = vrot.slane %v12738, 4
        %v12741 = vor.u32 %v12740, %v12736
        %v12742 = vrot.slane %v12741, 4
        %v12744 = vshll.u32 %v12615, 16
        %v12746 = vrot.slane %v12744, 5
        %v12747 = vsel %vm746, %v12742, %v12746
        %v12749 = vshrl.u32 %v12616, 16
        %v12751 = vrot.slane %v12749, 4
        %v12752 = vshll.u32 %v12616, 16
        %v12754 = vrot.slane %v12752, 5
        %v12755 = vor.u32 %v12751, %v12754
        %v12756 = vrot.slane %v12755, 4
        %v12758 = vshll.u32 %v12617, 16
        %v12760 = vrot.slane %v12758, 5
        %v12761 = vsel %vm746, %v12756, %v12760
        %v12762 = vshrl.u32 %v12617, 16
        %v12764 = vrot.slane %v12762, 4
        %v12765 = vor.u32 %v12764, %v12760
        %v12766 = vrot.slane %v12765, 4
        %v12768 = vshll.u32 %v12618, 16
        %v12770 = vrot.slane %v12768, 5
        %v12771 = vsel %vm746, %v12766, %v12770
        %v12773 = vshrl.u32 %v12619, 16
        %v12775 = vrot.slane %v12773, 4
        %v12776 = vshll.u32 %v12619, 16
        %v12778 = vrot.slane %v12776, 5
        %v12779 = vor.u32 %v12775, %v12778
        %v12780 = vrot.slane %v12779, 4
        %v12782 = vshll.u32 %v12620, 16
        %v12784 = vrot.slane %v12782, 5
        %v12785 = vsel %vm746, %v12780, %v12784
        %v12786 = vshrl.u32 %v12620, 16
        %v12788 = vrot.slane %v12786, 4
        %v12789 = vor.u32 %v12788, %v12784
        %v12790 = vrot.slane %v12789, 4
        %v12792 = vshll.u32 %v12621, 16
        %v12794 = vrot.slane %v12792, 5
        %v12795 = vsel %vm746, %v12790, %v12794
        %v12797 = vshrl.u32 %v12622, 16
        %v12799 = vrot.slane %v12797, 4
        %v12800 = vshll.u32 %v12622, 16
        %v12802 = vrot.slane %v12800, 5
        %v12803 = vor.u32 %v12799, %v12802
        %v12804 = vrot.slane %v12803, 4
        %v12806 = vshll.u32 %v12623, 16
        %v12808 = vrot.slane %v12806, 5
        %v12809 = vsel %vm746, %v12804, %v12808
        %v12810 = vshrl.u32 %v12623, 16
        %v12812 = vrot.slane %v12810, 4
        %v12813 = vor.u32 %v12812, %v12808
        %v12814 = vrot.slane %v12813, 4
        %v12816 = vshll.u32 %v12624, 16
        %v12818 = vrot.slane %v12816, 5
        %v12819 = vsel %vm746, %v12814, %v12818
        %v12821 = vshrl.u32 %v12625, 16
        %v12823 = vrot.slane %v12821, 4
        %v12824 = vshll.u32 %v12625, 16
        %v12826 = vrot.slane %v12824, 5
        %v12827 = vor.u32 %v12823, %v12826
        %v12828 = vrot.slane %v12827, 4
        %v12830 = vshll.u32 %v12626, 16
        %v12832 = vrot.slane %v12830, 5
        %v12833 = vsel %vm746, %v12828, %v12832
        %v12834 = vshrl.u32 %v12626, 16
        %v12836 = vrot.slane %v12834, 4
        %v12837 = vor.u32 %v12836, %v12832
        %v12838 = vrot.slane %v12837, 4
        %v12840 = vshll.u32 %v12627, 16
        %v12842 = vrot.slane %v12840, 5
        %v12843 = vsel %vm746, %v12838, %v12842
        %v12845 = vshrl.u32 %v12628, 16
        %v12847 = vrot.slane %v12845, 4
        %v12848 = vshll.u32 %v12628, 16
        %v12850 = vrot.slane %v12848, 5
        %v12851 = vor.u32 %v12847, %v12850
        %v12852 = vrot.slane %v12851, 4
        %v12854 = vshll.u32 %v12629, 16
        %v12856 = vrot.slane %v12854, 5
        %v12857 = vsel %vm746, %v12852, %v12856
        %v12858 = vshrl.u32 %v12629, 16
        %v12860 = vrot.slane %v12858, 4
        %v12861 = vor.u32 %v12860, %v12856
        %v12862 = vrot.slane %v12861, 4
        %v12864 = vshll.u32 %v12630, 16
        %v12866 = vrot.slane %v12864, 5
        %v12867 = vsel %vm746, %v12862, %v12866
        %v12869 = vshrl.u32 %v12631, 16
        %v12871 = vrot.slane %v12869, 4
        %v12872 = vshll.u32 %v12631, 16
        %v12874 = vrot.slane %v12872, 5
        %v12875 = vor.u32 %v12871, %v12874
        %v12876 = vrot.slane %v12875, 4
        %v12878 = vshll.u32 %v12632, 16
        %v12880 = vrot.slane %v12878, 5
        %v12881 = vsel %vm746, %v12876, %v12880
        %v12882 = vshrl.u32 %v12632, 16
        %v12884 = vrot.slane %v12882, 4
        %v12885 = vor.u32 %v12884, %v12880
        %v12886 = vrot.slane %v12885, 4
        %v12888 = vshll.u32 %v12633, 16
        %v12890 = vrot.slane %v12888, 5
        %v12891 = vsel %vm746, %v12886, %v12890
        %v12893 = vshrl.u32 %v12634, 16
        %v12895 = vrot.slane %v12893, 4
        %v12896 = vshll.u32 %v12634, 16
        %v12898 = vrot.slane %v12896, 5
        %v12899 = vor.u32 %v12895, %v12898
        %v12900 = vrot.slane %v12899, 4
        %v12902 = vshll.u32 %v12635, 16
        %v12904 = vrot.slane %v12902, 5
        %v12905 = vsel %vm746, %v12900, %v12904
        %v12906 = vshrl.u32 %v12635, 16
        %v12908 = vrot.slane %v12906, 4
        %v12909 = vor.u32 %v12908, %v12904
        %v12910 = vrot.slane %v12909, 4
        %v12912 = vshll.u32 %v12636, 16
        %v12914 = vrot.slane %v12912, 5
        %v12915 = vsel %vm746, %v12910, %v12914
        %v12917 = vshrl.u32 %v12637, 16
        %v12919 = vrot.slane %v12917, 4
        %v12920 = vshll.u32 %v12637, 16
        %v12922 = vrot.slane %v12920, 5
        %v12923 = vor.u32 %v12919, %v12922
        %v12924 = vrot.slane %v12923, 4
        %v12926 = vshll.u32 %v12638, 16
        %v12928 = vrot.slane %v12926, 5
        %v12929 = vsel %vm746, %v12924, %v12928
        %v12930 = vshrl.u32 %v12638, 16
        %v12932 = vrot.slane %v12930, 4
        %v12933 = vor.u32 %v12932, %v12928
        %v12934 = vrot.slane %v12933, 4
        %v12936 = vshll.u32 %v12639, 16
        %v12938 = vrot.slane %v12936, 5
        %v12939 = vsel %vm746, %v12934, %v12938
        %v12941 = vshrl.u32 %v12640, 16
        %v12943 = vrot.slane %v12941, 4
        %v12944 = vshll.u32 %v12640, 16
        %v12946 = vrot.slane %v12944, 5
        %v12947 = vor.u32 %v12943, %v12946
        %v12948 = vrot.slane %v12947, 4
        %v12950 = vshll.u32 %v12641, 16
        %v12952 = vrot.slane %v12950, 5
        %v12953 = vsel %vm746, %v12948, %v12952
        %v12954 = vshrl.u32 %v12641, 16
        %v12956 = vrot.slane %v12954, 4
        %v12957 = vor.u32 %v12956, %v12952
        %v12958 = vrot.slane %v12957, 4
        %v12960 = vshll.u32 %v12642, 16
        %v12962 = vrot.slane %v12960, 5
        %v12963 = vsel %vm746, %v12958, %v12962
        %v12965 = vshrl.u32 %v12643, 16
        %v12967 = vrot.slane %v12965, 4
        %v12968 = vshll.u32 %v12643, 16
        %v12970 = vrot.slane %v12968, 5
        %v12971 = vor.u32 %v12967, %v12970
        %v12972 = vrot.slane %v12971, 4
        %v12974 = vshll.u32 %v12644, 16
        %v12976 = vrot.slane %v12974, 5
        %v12977 = vsel %vm746, %v12972, %v12976
        %v12978 = vshrl.u32 %v12644, 16
        %v12980 = vrot.slane %v12978, 4
        %v12981 = vor.u32 %v12980, %v12976
        %v12982 = vrot.slane %v12981, 4
        %v12984 = vshll.u32 %v12645, 16
        %v12986 = vrot.slane %v12984, 5
        %v12987 = vsel %vm746, %v12982, %v12986
        %v12989 = vshrl.u32 %v12646, 16
        %v12991 = vrot.slane %v12989, 4
        %v12992 = vshll.u32 %v12646, 16
        %v12994 = vrot.slane %v12992, 5
        %v12995 = vor.u32 %v12991, %v12994
        %v12996 = vrot.slane %v12995, 4
        %v12998 = vshll.u32 %v12647, 16
        %v13000 = vrot.slane %v12998, 5
        %v13001 = vsel %vm746, %v12996, %v13000
        %v13002 = vshrl.u32 %v12647, 16
        %v13004 = vrot.slane %v13002, 4
        %v13005 = vor.u32 %v13004, %v13000
        %v13006 = vrot.slane %v13005, 4
        %v13008 = vshll.u32 %v12648, 16
        %v13010 = vrot.slane %v13008, 5
        %v13011 = vsel %vm746, %v13006, %v13010
        %v13013 = vshrl.u32 %v12649, 16
        %v13015 = vrot.slane %v13013, 4
        %v13016 = vshll.u32 %v12649, 16
        %v13018 = vrot.slane %v13016, 5
        %v13019 = vor.u32 %v13015, %v13018
        %v13020 = vrot.slane %v13019, 4
        %v13022 = vshll.u32 %v12650, 16
        %v13024 = vrot.slane %v13022, 5
        %v13025 = vsel %vm746, %v13020, %v13024
        %v13026 = vshrl.u32 %v12650, 16
        %v13028 = vrot.slane %v13026, 4
        %v13029 = vor.u32 %v13028, %v13024
        %v13030 = vrot.slane %v13029, 4
        %v13032 = vshll.u32 %v12651, 16
        %v13034 = vrot.slane %v13032, 5
        %v13035 = vsel %vm746, %v13030, %v13034
        %v13068 = vunpack.c.l.bf16 %v12665
        %v13069 = vunpack.c.l.bf16 %v12675
        %v13070 = vunpack.c.l.bf16 %v12689
        %v13071 = vunpack.c.l.bf16 %v12699
        %v13072 = vunpack.c.l.bf16 %v12713
        %v13073 = vunpack.c.l.bf16 %v12723
        %v13074 = vunpack.c.l.bf16 %v12737
        %v13075 = vunpack.c.l.bf16 %v12747
        %v13076 = vunpack.c.l.bf16 %v12761
        %v13077 = vunpack.c.l.bf16 %v12771
        %v13078 = vunpack.c.l.bf16 %v12785
        %v13079 = vunpack.c.l.bf16 %v12795
        %v13080 = vunpack.c.l.bf16 %v12809
        %v13081 = vunpack.c.l.bf16 %v12819
        %v13082 = vunpack.c.l.bf16 %v12833
        %v13083 = vunpack.c.l.bf16 %v12843
        %v13084 = vunpack.c.l.bf16 %v12857
        %v13085 = vunpack.c.l.bf16 %v12867
        %v13086 = vunpack.c.l.bf16 %v12881
        %v13087 = vunpack.c.l.bf16 %v12891
        %v13088 = vunpack.c.l.bf16 %v12905
        %v13089 = vunpack.c.l.bf16 %v12915
        %v13090 = vunpack.c.l.bf16 %v12929
        %v13091 = vunpack.c.l.bf16 %v12939
        %v13092 = vunpack.c.l.bf16 %v12953
        %v13093 = vunpack.c.l.bf16 %v12963
        %v13094 = vunpack.c.l.bf16 %v12977
        %v13095 = vunpack.c.l.bf16 %v12987
        %v13096 = vunpack.c.l.bf16 %v13001
        %v13097 = vunpack.c.l.bf16 %v13011
        %v13098 = vunpack.c.l.bf16 %v13025
        %v13099 = vunpack.c.l.bf16 %v13035
        %v13100 = vld [vmem:[%s3 + $0x19] sm:$0x1]
        %13102 = vset.pattern.permute.xlu0 0
        %13103 = vperm.xlu0 %13102, %v13068
        %v13104 = vpop.permute.xlu0 %13103
        %13107 = vset.pattern.permute.xlu0 0
        %13108 = vperm.xlu0 %13107, %v13069
        %v13109 = vpop.permute.xlu0 %13108
        %13112 = vset.pattern.permute.xlu0 0
        %13113 = vperm.xlu0 %13112, %v13070
        %v13114 = vpop.permute.xlu0 %13113
        %13117 = vset.pattern.permute.xlu0 0
        %13118 = vperm.xlu0 %13117, %v13071
        %v13119 = vpop.permute.xlu0 %13118
        %13122 = vset.pattern.permute.xlu0 0
        %13123 = vperm.xlu0 %13122, %v13072
        %v13124 = vpop.permute.xlu0 %13123
        %13127 = vset.pattern.permute.xlu0 0
        %13128 = vperm.xlu0 %13127, %v13073
        %v13129 = vpop.permute.xlu0 %13128
        %13132 = vset.pattern.permute.xlu0 0
        %13133 = vperm.xlu0 %13132, %v13074
        %v13134 = vpop.permute.xlu0 %13133
        %13137 = vset.pattern.permute.xlu0 0
        %13138 = vperm.xlu0 %13137, %v13075
        %v13139 = vpop.permute.xlu0 %13138
        %13142 = vset.pattern.permute.xlu0 0
        %13143 = vperm.xlu0 %13142, %v13076
        %v13144 = vpop.permute.xlu0 %13143
        %13147 = vset.pattern.permute.xlu0 0
        %13148 = vperm.xlu0 %13147, %v13077
        %v13149 = vpop.permute.xlu0 %13148
        %13152 = vset.pattern.permute.xlu0 0
        %13153 = vperm.xlu0 %13152, %v13078
        %v13154 = vpop.permute.xlu0 %13153
        %13157 = vset.pattern.permute.xlu0 0
        %13158 = vperm.xlu0 %13157, %v13079
        %v13159 = vpop.permute.xlu0 %13158
        %13162 = vset.pattern.permute.xlu0 0
        %13163 = vperm.xlu0 %13162, %v13080
        %v13164 = vpop.permute.xlu0 %13163
        %13167 = vset.pattern.permute.xlu0 0
        %13168 = vperm.xlu0 %13167, %v13081
        %v13169 = vpop.permute.xlu0 %13168
        %13172 = vset.pattern.permute.xlu0 0
        %13173 = vperm.xlu0 %13172, %v13082
        %v13174 = vpop.permute.xlu0 %13173
        %13177 = vset.pattern.permute.xlu0 0
        %13178 = vperm.xlu0 %13177, %v13083
        %v13179 = vpop.permute.xlu0 %13178
        %13182 = vset.pattern.permute.xlu0 0
        %13183 = vperm.xlu0 %13182, %v13084
        %v13184 = vpop.permute.xlu0 %13183
        %13187 = vset.pattern.permute.xlu0 0
        %13188 = vperm.xlu0 %13187, %v13085
        %v13189 = vpop.permute.xlu0 %13188
        %13192 = vset.pattern.permute.xlu0 0
        %13193 = vperm.xlu0 %13192, %v13086
        %v13194 = vpop.permute.xlu0 %13193
        %13197 = vset.pattern.permute.xlu0 0
        %13198 = vperm.xlu0 %13197, %v13087
        %v13199 = vpop.permute.xlu0 %13198
        %13202 = vset.pattern.permute.xlu0 0
        %13203 = vperm.xlu0 %13202, %v13088
        %v13204 = vpop.permute.xlu0 %13203
        %13207 = vset.pattern.permute.xlu0 0
        %13208 = vperm.xlu0 %13207, %v13089
        %v13209 = vpop.permute.xlu0 %13208
        %13212 = vset.pattern.permute.xlu0 0
        %13213 = vperm.xlu0 %13212, %v13090
        %v13214 = vpop.permute.xlu0 %13213
        %13217 = vset.pattern.permute.xlu0 0
        %13218 = vperm.xlu0 %13217, %v13091
        %v13219 = vpop.permute.xlu0 %13218
        %13222 = vset.pattern.permute.xlu0 0
        %13223 = vperm.xlu0 %13222, %v13092
        %v13224 = vpop.permute.xlu0 %13223
        %13227 = vset.pattern.permute.xlu0 0
        %13228 = vperm.xlu0 %13227, %v13093
        %v13229 = vpop.permute.xlu0 %13228
        %13232 = vset.pattern.permute.xlu0 0
        %13233 = vperm.xlu0 %13232, %v13094
        %v13234 = vpop.permute.xlu0 %13233
        %13237 = vset.pattern.permute.xlu0 0
        %13238 = vperm.xlu0 %13237, %v13095
        %v13239 = vpop.permute.xlu0 %13238
        %13242 = vset.pattern.permute.xlu0 0
        %13243 = vperm.xlu0 %13242, %v13096
        %v13244 = vpop.permute.xlu0 %13243
        %13247 = vset.pattern.permute.xlu0 0
        %13248 = vperm.xlu0 %13247, %v13097
        %v13249 = vpop.permute.xlu0 %13248
        %13252 = vset.pattern.permute.xlu0 0
        %13253 = vperm.xlu0 %13252, %v13098
        %v13254 = vpop.permute.xlu0 %13253
        %13257 = vset.pattern.permute.xlu0 0
        %13258 = vperm.xlu0 %13257, %v13099
        %v13259 = vpop.permute.xlu0 %13258
        %v13261 = vlaneseq
        %v13262 = vshrl.u32 %v13261, 7
        %v13263 = vsub.s32 0, %v13262
        %v13264 = vrot.slane %v13100, %v13263
        %v13265 = vmul.f32 %v13104, %v13264
        %v13266 = vmul.f32 %v13109, %v13264
        %v13267 = vmul.f32 %v13114, %v13264
        %v13268 = vmul.f32 %v13119, %v13264
        %v13269 = vmul.f32 %v13124, %v13264
        %v13270 = vmul.f32 %v13129, %v13264
        %v13271 = vmul.f32 %v13134, %v13264
        %v13272 = vmul.f32 %v13139, %v13264
        %v13273 = vmul.f32 %v13144, %v13264
        %v13274 = vmul.f32 %v13149, %v13264
        %v13275 = vmul.f32 %v13154, %v13264
        %v13276 = vmul.f32 %v13159, %v13264
        %v13277 = vmul.f32 %v13164, %v13264
        %v13278 = vmul.f32 %v13169, %v13264
        %v13279 = vmul.f32 %v13174, %v13264
        %v13280 = vmul.f32 %v13179, %v13264
        %v13281 = vmul.f32 %v13184, %v13264
        %v13282 = vmul.f32 %v13189, %v13264
        %v13283 = vmul.f32 %v13194, %v13264
        %v13284 = vmul.f32 %v13199, %v13264
        %v13285 = vmul.f32 %v13204, %v13264
        %v13286 = vmul.f32 %v13209, %v13264
        %v13287 = vmul.f32 %v13214, %v13264
        %v13288 = vmul.f32 %v13219, %v13264
        %v13289 = vmul.f32 %v13224, %v13264
        %v13290 = vmul.f32 %v13229, %v13264
        %v13291 = vmul.f32 %v13234, %v13264
        %v13292 = vmul.f32 %v13239, %v13264
        %v13293 = vmul.f32 %v13244, %v13264
        %v13294 = vmul.f32 %v13249, %v13264
        %v13295 = vmul.f32 %v13254, %v13264
        %v13296 = vmul.f32 %v13259, %v13264
        %v13297 = vadd.f32 %v12572, %v13265
        %v13298 = vadd.f32 %v12573, %v13266
        %v13299 = vadd.f32 %v12574, %v13267
        %v13300 = vadd.f32 %v12575, %v13268
        %v13301 = vadd.f32 %v12576, %v13269
        %v13302 = vadd.f32 %v12577, %v13270
        %v13303 = vadd.f32 %v12578, %v13271
        %v13304 = vadd.f32 %v12579, %v13272
        %v13305 = vadd.f32 %v12580, %v13273
        %v13306 = vadd.f32 %v12581, %v13274
        %v13307 = vadd.f32 %v12582, %v13275
        %v13308 = vadd.f32 %v12583, %v13276
        %v13309 = vadd.f32 %v12584, %v13277
        %v13310 = vadd.f32 %v12585, %v13278
        %v13311 = vadd.f32 %v12586, %v13279
        %v13312 = vadd.f32 %v12587, %v13280
        %v13313 = vadd.f32 %v12588, %v13281
        %v13314 = vadd.f32 %v12589, %v13282
        %v13315 = vadd.f32 %v12590, %v13283
        %v13316 = vadd.f32 %v12591, %v13284
        %v13317 = vadd.f32 %v12592, %v13285
        %v13318 = vadd.f32 %v12593, %v13286
        %v13319 = vadd.f32 %v12594, %v13287
        %v13320 = vadd.f32 %v12595, %v13288
        %v13321 = vadd.f32 %v12596, %v13289
        %v13322 = vadd.f32 %v12597, %v13290
        %v13323 = vadd.f32 %v12598, %v13291
        %v13324 = vadd.f32 %v12599, %v13292
        %v13325 = vadd.f32 %v12600, %v13293
        %v13326 = vadd.f32 %v12601, %v13294
        %v13327 = vadd.f32 %v12602, %v13295
        %v13328 = vadd.f32 %v12603, %v13296
        %v13329 = vld [vmem:[%s12310] sm:$0xe]
        %v13330 = vld [vmem:[%s12310 + $0xc] sm:$0xe]
        %v13331 = vld [vmem:[%s12310 + $0x18] sm:$0xe]
        %v13332 = vld [vmem:[%s12310 + $0x24] sm:$0xe]
        %v13333 = vld [vmem:[%s12310 + $0x30] sm:$0xe]
        %v13334 = vld [vmem:[%s12310 + $0x3c] sm:$0xe]
        %v13335 = vld [vmem:[%s12310 + $0x48] sm:$0xe]
        %v13336 = vld [vmem:[%s12310 + $0x54] sm:$0xe]
        %v13337 = vld [vmem:[%s12310 + $0x60] sm:$0xe]
        %v13338 = vld [vmem:[%s12310 + $0x6c] sm:$0xe]
        %v13339 = vld [vmem:[%s12310 + $0x78] sm:$0xe]
        %v13340 = vld [vmem:[%s12310 + $0x84] sm:$0xe]
        %v13341 = vld [vmem:[%s12310 + $0x90] sm:$0xe]
        %v13342 = vld [vmem:[%s12310 + $0x9c] sm:$0xe]
        %v13343 = vld [vmem:[%s12310 + $0xa8] sm:$0xe]
        %v13344 = vld [vmem:[%s12310 + $0xb4] sm:$0xe]
        %v13393 = vrot.slane %v13329, 5
        %v13394 = vrot.slane %v13393, 4
        %v13395 = vrot.slane %v12605, 5
        %v13396 = vsel %vm1490, %v13394, %v13395
        %v13397 = vrot.slane %v13395, 4
        %v13398 = vrot.slane %v12606, 5
        %v13399 = vsel %vm1490, %v13397, %v13398
        %v13400 = vrot.slane %v13330, 5
        %v13401 = vrot.slane %v13400, 4
        %v13402 = vrot.slane %v12608, 5
        %v13403 = vsel %vm1490, %v13401, %v13402
        %v13404 = vrot.slane %v13402, 4
        %v13405 = vrot.slane %v12609, 5
        %v13406 = vsel %vm1490, %v13404, %v13405
        %v13407 = vrot.slane %v13331, 5
        %v13408 = vrot.slane %v13407, 4
        %v13409 = vrot.slane %v12611, 5
        %v13410 = vsel %vm1490, %v13408, %v13409
        %v13411 = vrot.slane %v13409, 4
        %v13412 = vrot.slane %v12612, 5
        %v13413 = vsel %vm1490, %v13411, %v13412
        %v13414 = vrot.slane %v13332, 5
        %v13415 = vrot.slane %v13414, 4
        %v13416 = vrot.slane %v12614, 5
        %v13417 = vsel %vm1490, %v13415, %v13416
        %v13418 = vrot.slane %v13416, 4
        %v13419 = vrot.slane %v12615, 5
        %v13420 = vsel %vm1490, %v13418, %v13419
        %v13421 = vrot.slane %v13333, 5
        %v13422 = vrot.slane %v13421, 4
        %v13423 = vrot.slane %v12617, 5
        %v13424 = vsel %vm1490, %v13422, %v13423
        %v13425 = vrot.slane %v13423, 4
        %v13426 = vrot.slane %v12618, 5
        %v13427 = vsel %vm1490, %v13425, %v13426
        %v13428 = vrot.slane %v13334, 5
        %v13429 = vrot.slane %v13428, 4
        %v13430 = vrot.slane %v12620, 5
        %v13431 = vsel %vm1490, %v13429, %v13430
        %v13432 = vrot.slane %v13430, 4
        %v13433 = vrot.slane %v12621, 5
        %v13434 = vsel %vm1490, %v13432, %v13433
        %v13435 = vrot.slane %v13335, 5
        %v13436 = vrot.slane %v13435, 4
        %v13437 = vrot.slane %v12623, 5
        %v13438 = vsel %vm1490, %v13436, %v13437
        %v13439 = vrot.slane %v13437, 4
        %v13440 = vrot.slane %v12624, 5
        %v13441 = vsel %vm1490, %v13439, %v13440
        %v13442 = vrot.slane %v13336, 5
        %v13443 = vrot.slane %v13442, 4
        %v13444 = vrot.slane %v12626, 5
        %v13445 = vsel %vm1490, %v13443, %v13444
        %v13446 = vrot.slane %v13444, 4
        %v13447 = vrot.slane %v12627, 5
        %v13448 = vsel %vm1490, %v13446, %v13447
        %v13449 = vrot.slane %v13337, 5
        %v13450 = vrot.slane %v13449, 4
        %v13451 = vrot.slane %v12629, 5
        %v13452 = vsel %vm1490, %v13450, %v13451
        %v13453 = vrot.slane %v13451, 4
        %v13454 = vrot.slane %v12630, 5
        %v13455 = vsel %vm1490, %v13453, %v13454
        %v13456 = vrot.slane %v13338, 5
        %v13457 = vrot.slane %v13456, 4
        %v13458 = vrot.slane %v12632, 5
        %v13459 = vsel %vm1490, %v13457, %v13458
        %v13460 = vrot.slane %v13458, 4
        %v13461 = vrot.slane %v12633, 5
        %v13462 = vsel %vm1490, %v13460, %v13461
        %v13463 = vrot.slane %v13339, 5
        %v13464 = vrot.slane %v13463, 4
        %v13465 = vrot.slane %v12635, 5
        %v13466 = vsel %vm1490, %v13464, %v13465
        %v13467 = vrot.slane %v13465, 4
        %v13468 = vrot.slane %v12636, 5
        %v13469 = vsel %vm1490, %v13467, %v13468
        %v13470 = vrot.slane %v13340, 5
        %v13471 = vrot.slane %v13470, 4
        %v13472 = vrot.slane %v12638, 5
        %v13473 = vsel %vm1490, %v13471, %v13472
        %v13474 = vrot.slane %v13472, 4
        %v13475 = vrot.slane %v12639, 5
        %v13476 = vsel %vm1490, %v13474, %v13475
        %v13477 = vrot.slane %v13341, 5
        %v13478 = vrot.slane %v13477, 4
        %v13479 = vrot.slane %v12641, 5
        %v13480 = vsel %vm1490, %v13478, %v13479
        %v13481 = vrot.slane %v13479, 4
        %v13482 = vrot.slane %v12642, 5
        %v13483 = vsel %vm1490, %v13481, %v13482
        %v13484 = vrot.slane %v13342, 5
        %v13485 = vrot.slane %v13484, 4
        %v13486 = vrot.slane %v12644, 5
        %v13487 = vsel %vm1490, %v13485, %v13486
        %v13488 = vrot.slane %v13486, 4
        %v13489 = vrot.slane %v12645, 5
        %v13490 = vsel %vm1490, %v13488, %v13489
        %v13491 = vrot.slane %v13343, 5
        %v13492 = vrot.slane %v13491, 4
        %v13493 = vrot.slane %v12647, 5
        %v13494 = vsel %vm1490, %v13492, %v13493
        %v13495 = vrot.slane %v13493, 4
        %v13496 = vrot.slane %v12648, 5
        %v13497 = vsel %vm1490, %v13495, %v13496
        %v13498 = vrot.slane %v13344, 5
        %v13499 = vrot.slane %v13498, 4
        %v13500 = vrot.slane %v12650, 5
        %v13501 = vsel %vm1490, %v13499, %v13500
        %v13502 = vrot.slane %v13500, 4
        %v13503 = vrot.slane %v12651, 5
        %v13504 = vsel %vm1490, %v13502, %v13503
        %v13537 = vunpack.c.l.bf16 %v13396
        %v13538 = vunpack.c.l.bf16 %v13399
        %v13539 = vunpack.c.l.bf16 %v13403
        %v13540 = vunpack.c.l.bf16 %v13406
        %v13541 = vunpack.c.l.bf16 %v13410
        %v13542 = vunpack.c.l.bf16 %v13413
        %v13543 = vunpack.c.l.bf16 %v13417
        %v13544 = vunpack.c.l.bf16 %v13420
        %v13545 = vunpack.c.l.bf16 %v13424
        %v13546 = vunpack.c.l.bf16 %v13427
        %v13547 = vunpack.c.l.bf16 %v13431
        %v13548 = vunpack.c.l.bf16 %v13434
        %v13549 = vunpack.c.l.bf16 %v13438
        %v13550 = vunpack.c.l.bf16 %v13441
        %v13551 = vunpack.c.l.bf16 %v13445
        %v13552 = vunpack.c.l.bf16 %v13448
        %v13553 = vunpack.c.l.bf16 %v13452
        %v13554 = vunpack.c.l.bf16 %v13455
        %v13555 = vunpack.c.l.bf16 %v13459
        %v13556 = vunpack.c.l.bf16 %v13462
        %v13557 = vunpack.c.l.bf16 %v13466
        %v13558 = vunpack.c.l.bf16 %v13469
        %v13559 = vunpack.c.l.bf16 %v13473
        %v13560 = vunpack.c.l.bf16 %v13476
        %v13561 = vunpack.c.l.bf16 %v13480
        %v13562 = vunpack.c.l.bf16 %v13483
        %v13563 = vunpack.c.l.bf16 %v13487
        %v13564 = vunpack.c.l.bf16 %v13490
        %v13565 = vunpack.c.l.bf16 %v13494
        %v13566 = vunpack.c.l.bf16 %v13497
        %v13567 = vunpack.c.l.bf16 %v13501
        %v13568 = vunpack.c.l.bf16 %v13504
        %v13569 = vld [vmem:[%s3 + $0x1a] sm:$0x1]
        %13571 = vset.pattern.permute.xlu0 0
        %13572 = vperm.xlu0 %13571, %v13537
        %v13573 = vpop.permute.xlu0 %13572
        %13576 = vset.pattern.permute.xlu0 0
        %13577 = vperm.xlu0 %13576, %v13538
        %v13578 = vpop.permute.xlu0 %13577
        %13581 = vset.pattern.permute.xlu0 0
        %13582 = vperm.xlu0 %13581, %v13539
        %v13583 = vpop.permute.xlu0 %13582
        %13586 = vset.pattern.permute.xlu0 0
        %13587 = vperm.xlu0 %13586, %v13540
        %v13588 = vpop.permute.xlu0 %13587
        %13591 = vset.pattern.permute.xlu0 0
        %13592 = vperm.xlu0 %13591, %v13541
        %v13593 = vpop.permute.xlu0 %13592
        %13596 = vset.pattern.permute.xlu0 0
        %13597 = vperm.xlu0 %13596, %v13542
        %v13598 = vpop.permute.xlu0 %13597
        %13601 = vset.pattern.permute.xlu0 0
        %13602 = vperm.xlu0 %13601, %v13543
        %v13603 = vpop.permute.xlu0 %13602
        %13606 = vset.pattern.permute.xlu0 0
        %13607 = vperm.xlu0 %13606, %v13544
        %v13608 = vpop.permute.xlu0 %13607
        %13611 = vset.pattern.permute.xlu0 0
        %13612 = vperm.xlu0 %13611, %v13545
        %v13613 = vpop.permute.xlu0 %13612
        %13616 = vset.pattern.permute.xlu0 0
        %13617 = vperm.xlu0 %13616, %v13546
        %v13618 = vpop.permute.xlu0 %13617
        %13621 = vset.pattern.permute.xlu0 0
        %13622 = vperm.xlu0 %13621, %v13547
        %v13623 = vpop.permute.xlu0 %13622
        %13626 = vset.pattern.permute.xlu0 0
        %13627 = vperm.xlu0 %13626, %v13548
        %v13628 = vpop.permute.xlu0 %13627
        %13631 = vset.pattern.permute.xlu0 0
        %13632 = vperm.xlu0 %13631, %v13549
        %v13633 = vpop.permute.xlu0 %13632
        %13636 = vset.pattern.permute.xlu0 0
        %13637 = vperm.xlu0 %13636, %v13550
        %v13638 = vpop.permute.xlu0 %13637
        %13641 = vset.pattern.permute.xlu0 0
        %13642 = vperm.xlu0 %13641, %v13551
        %v13643 = vpop.permute.xlu0 %13642
        %13646 = vset.pattern.permute.xlu0 0
        %13647 = vperm.xlu0 %13646, %v13552
        %v13648 = vpop.permute.xlu0 %13647
        %13651 = vset.pattern.permute.xlu0 0
        %13652 = vperm.xlu0 %13651, %v13553
        %v13653 = vpop.permute.xlu0 %13652
        %13656 = vset.pattern.permute.xlu0 0
        %13657 = vperm.xlu0 %13656, %v13554
        %v13658 = vpop.permute.xlu0 %13657
        %13661 = vset.pattern.permute.xlu0 0
        %13662 = vperm.xlu0 %13661, %v13555
        %v13663 = vpop.permute.xlu0 %13662
        %13666 = vset.pattern.permute.xlu0 0
        %13667 = vperm.xlu0 %13666, %v13556
        %v13668 = vpop.permute.xlu0 %13667
        %13671 = vset.pattern.permute.xlu0 0
        %13672 = vperm.xlu0 %13671, %v13557
        %v13673 = vpop.permute.xlu0 %13672
        %13676 = vset.pattern.permute.xlu0 0
        %13677 = vperm.xlu0 %13676, %v13558
        %v13678 = vpop.permute.xlu0 %13677
        %13681 = vset.pattern.permute.xlu0 0
        %13682 = vperm.xlu0 %13681, %v13559
        %v13683 = vpop.permute.xlu0 %13682
        %13686 = vset.pattern.permute.xlu0 0
        %13687 = vperm.xlu0 %13686, %v13560
        %v13688 = vpop.permute.xlu0 %13687
        %13691 = vset.pattern.permute.xlu0 0
        %13692 = vperm.xlu0 %13691, %v13561
        %v13693 = vpop.permute.xlu0 %13692
        %13696 = vset.pattern.permute.xlu0 0
        %13697 = vperm.xlu0 %13696, %v13562
        %v13698 = vpop.permute.xlu0 %13697
        %13701 = vset.pattern.permute.xlu0 0
        %13702 = vperm.xlu0 %13701, %v13563
        %v13703 = vpop.permute.xlu0 %13702
        %13706 = vset.pattern.permute.xlu0 0
        %13707 = vperm.xlu0 %13706, %v13564
        %v13708 = vpop.permute.xlu0 %13707
        %13711 = vset.pattern.permute.xlu0 0
        %13712 = vperm.xlu0 %13711, %v13565
        %v13713 = vpop.permute.xlu0 %13712
        %13716 = vset.pattern.permute.xlu0 0
        %13717 = vperm.xlu0 %13716, %v13566
        %v13718 = vpop.permute.xlu0 %13717
        %13721 = vset.pattern.permute.xlu0 0
        %13722 = vperm.xlu0 %13721, %v13567
        %v13723 = vpop.permute.xlu0 %13722
        %13726 = vset.pattern.permute.xlu0 0
        %13727 = vperm.xlu0 %13726, %v13568
        %v13728 = vpop.permute.xlu0 %13727
        %v13730 = vlaneseq
        %v13731 = vshrl.u32 %v13730, 7
        %v13732 = vsub.s32 0, %v13731
        %v13733 = vrot.slane %v13569, %v13732
        %v13734 = vmul.f32 %v13573, %v13733
        %v13735 = vmul.f32 %v13578, %v13733
        %v13736 = vmul.f32 %v13583, %v13733
        %v13737 = vmul.f32 %v13588, %v13733
        %v13738 = vmul.f32 %v13593, %v13733
        %v13739 = vmul.f32 %v13598, %v13733
        %v13740 = vmul.f32 %v13603, %v13733
        %v13741 = vmul.f32 %v13608, %v13733
        %v13742 = vmul.f32 %v13613, %v13733
        %v13743 = vmul.f32 %v13618, %v13733
        %v13744 = vmul.f32 %v13623, %v13733
        %v13745 = vmul.f32 %v13628, %v13733
        %v13746 = vmul.f32 %v13633, %v13733
        %v13747 = vmul.f32 %v13638, %v13733
        %v13748 = vmul.f32 %v13643, %v13733
        %v13749 = vmul.f32 %v13648, %v13733
        %v13750 = vmul.f32 %v13653, %v13733
        %v13751 = vmul.f32 %v13658, %v13733
        %v13752 = vmul.f32 %v13663, %v13733
        %v13753 = vmul.f32 %v13668, %v13733
        %v13754 = vmul.f32 %v13673, %v13733
        %v13755 = vmul.f32 %v13678, %v13733
        %v13756 = vmul.f32 %v13683, %v13733
        %v13757 = vmul.f32 %v13688, %v13733
        %v13758 = vmul.f32 %v13693, %v13733
        %v13759 = vmul.f32 %v13698, %v13733
        %v13760 = vmul.f32 %v13703, %v13733
        %v13761 = vmul.f32 %v13708, %v13733
        %v13762 = vmul.f32 %v13713, %v13733
        %v13763 = vmul.f32 %v13718, %v13733
        %v13764 = vmul.f32 %v13723, %v13733
        %v13765 = vmul.f32 %v13728, %v13733
        %v13766 = vadd.f32 %v13297, %v13734
        %v13767 = vadd.f32 %v13298, %v13735
        %v13768 = vadd.f32 %v13299, %v13736
        %v13769 = vadd.f32 %v13300, %v13737
        %v13770 = vadd.f32 %v13301, %v13738
        %v13771 = vadd.f32 %v13302, %v13739
        %v13772 = vadd.f32 %v13303, %v13740
        %v13773 = vadd.f32 %v13304, %v13741
        %v13774 = vadd.f32 %v13305, %v13742
        %v13775 = vadd.f32 %v13306, %v13743
        %v13776 = vadd.f32 %v13307, %v13744
        %v13777 = vadd.f32 %v13308, %v13745
        %v13778 = vadd.f32 %v13309, %v13746
        %v13779 = vadd.f32 %v13310, %v13747
        %v13780 = vadd.f32 %v13311, %v13748
        %v13781 = vadd.f32 %v13312, %v13749
        %v13782 = vadd.f32 %v13313, %v13750
        %v13783 = vadd.f32 %v13314, %v13751
        %v13784 = vadd.f32 %v13315, %v13752
        %v13785 = vadd.f32 %v13316, %v13753
        %v13786 = vadd.f32 %v13317, %v13754
        %v13787 = vadd.f32 %v13318, %v13755
        %v13788 = vadd.f32 %v13319, %v13756
        %v13789 = vadd.f32 %v13320, %v13757
        %v13790 = vadd.f32 %v13321, %v13758
        %v13791 = vadd.f32 %v13322, %v13759
        %v13792 = vadd.f32 %v13323, %v13760
        %v13793 = vadd.f32 %v13324, %v13761
        %v13794 = vadd.f32 %v13325, %v13762
        %v13795 = vadd.f32 %v13326, %v13763
        %v13796 = vadd.f32 %v13327, %v13764
        %v13797 = vadd.f32 %v13328, %v13765
        %v13798 = vld [vmem:[%s4] sm:$0x1]
        %v13800 = vlaneseq
        %v13801 = vshrl.u32 %v13800, 7
        %v13802 = vsub.s32 0, %v13801
        %v13803 = vrot.slane %v13798, %v13802
        %v13805 = vadd.f32 %v13766, %v13803
        %v13806 = vadd.f32 %v13767, %v13803
        %v13807 = vadd.f32 %v13768, %v13803
        %v13808 = vadd.f32 %v13769, %v13803
        %v13809 = vadd.f32 %v13770, %v13803
        %v13810 = vadd.f32 %v13771, %v13803
        %v13811 = vadd.f32 %v13772, %v13803
        %v13812 = vadd.f32 %v13773, %v13803
        %v13813 = vadd.f32 %v13774, %v13803
        %v13814 = vadd.f32 %v13775, %v13803
        %v13815 = vadd.f32 %v13776, %v13803
        %v13816 = vadd.f32 %v13777, %v13803
        %v13817 = vadd.f32 %v13778, %v13803
        %v13818 = vadd.f32 %v13779, %v13803
        %v13819 = vadd.f32 %v13780, %v13803
        %v13820 = vadd.f32 %v13781, %v13803
        %v13821 = vadd.f32 %v13782, %v13803
        %v13822 = vadd.f32 %v13783, %v13803
        %v13823 = vadd.f32 %v13784, %v13803
        %v13824 = vadd.f32 %v13785, %v13803
        %v13825 = vadd.f32 %v13786, %v13803
        %v13826 = vadd.f32 %v13787, %v13803
        %v13827 = vadd.f32 %v13788, %v13803
        %v13828 = vadd.f32 %v13789, %v13803
        %v13829 = vadd.f32 %v13790, %v13803
        %v13830 = vadd.f32 %v13791, %v13803
        %v13831 = vadd.f32 %v13792, %v13803
        %v13832 = vadd.f32 %v13793, %v13803
        %v13833 = vadd.f32 %v13794, %v13803
        %v13834 = vadd.f32 %v13795, %v13803
        %v13835 = vadd.f32 %v13796, %v13803
        %v13836 = vadd.f32 %v13797, %v13803
        %v13837 = vmax.f32 %v13805, 0.0
        %v13838 = vmax.f32 %v13806, 0.0
        %v13839 = vmax.f32 %v13807, 0.0
        %v13840 = vmax.f32 %v13808, 0.0
        %v13841 = vmax.f32 %v13809, 0.0
        %v13842 = vmax.f32 %v13810, 0.0
        %v13843 = vmax.f32 %v13811, 0.0
        %v13844 = vmax.f32 %v13812, 0.0
        %v13845 = vmax.f32 %v13813, 0.0
        %v13846 = vmax.f32 %v13814, 0.0
        %v13847 = vmax.f32 %v13815, 0.0
        %v13848 = vmax.f32 %v13816, 0.0
        %v13849 = vmax.f32 %v13817, 0.0
        %v13850 = vmax.f32 %v13818, 0.0
        %v13851 = vmax.f32 %v13819, 0.0
        %v13852 = vmax.f32 %v13820, 0.0
        %v13853 = vmax.f32 %v13821, 0.0
        %v13854 = vmax.f32 %v13822, 0.0
        %v13855 = vmax.f32 %v13823, 0.0
        %v13856 = vmax.f32 %v13824, 0.0
        %v13857 = vmax.f32 %v13825, 0.0
        %v13858 = vmax.f32 %v13826, 0.0
        %v13859 = vmax.f32 %v13827, 0.0
        %v13860 = vmax.f32 %v13828, 0.0
        %v13861 = vmax.f32 %v13829, 0.0
        %v13862 = vmax.f32 %v13830, 0.0
        %v13863 = vmax.f32 %v13831, 0.0
        %v13864 = vmax.f32 %v13832, 0.0
        %v13865 = vmax.f32 %v13833, 0.0
        %v13866 = vmax.f32 %v13834, 0.0
        %v13867 = vmax.f32 %v13835, 0.0
        %v13868 = vmax.f32 %v13836, 0.0
        %v13869 = vpack.c.bf16 %v13838, %v13837
        %v13870 = vpack.c.bf16 %v13840, %v13839
        %v13871 = vpack.c.bf16 %v13842, %v13841
        %v13872 = vpack.c.bf16 %v13844, %v13843
        %v13873 = vpack.c.bf16 %v13846, %v13845
        %v13874 = vpack.c.bf16 %v13848, %v13847
        %v13875 = vpack.c.bf16 %v13850, %v13849
        %v13876 = vpack.c.bf16 %v13852, %v13851
        %v13877 = vpack.c.bf16 %v13854, %v13853
        %v13878 = vpack.c.bf16 %v13856, %v13855
        %v13879 = vpack.c.bf16 %v13858, %v13857
        %v13880 = vpack.c.bf16 %v13860, %v13859
        %v13881 = vpack.c.bf16 %v13862, %v13861
        %v13882 = vpack.c.bf16 %v13864, %v13863
        %v13883 = vpack.c.bf16 %v13866, %v13865
        %v13884 = vpack.c.bf16 %v13868, %v13867
        %v13901 = vunpack.c.l.b16 %v13869
        %v13902 = vunpack.c.h.b16 %v13869
        %v13903 = vunpack.c.l.b16 %v13870
        %v13904 = vunpack.c.h.b16 %v13870
        %v13905 = vunpack.c.l.b16 %v13871
        %v13906 = vunpack.c.h.b16 %v13871
        %v13907 = vunpack.c.l.b16 %v13872
        %v13908 = vunpack.c.h.b16 %v13872
        %v13909 = vunpack.c.l.b16 %v13873
        %v13910 = vunpack.c.h.b16 %v13873
        %v13911 = vunpack.c.l.b16 %v13874
        %v13912 = vunpack.c.h.b16 %v13874
        %v13913 = vunpack.c.l.b16 %v13875
        %v13914 = vunpack.c.h.b16 %v13875
        %v13915 = vunpack.c.l.b16 %v13876
        %v13916 = vunpack.c.h.b16 %v13876
        %v13917 = vunpack.c.l.b16 %v13877
        %v13918 = vunpack.c.h.b16 %v13877
        %v13919 = vunpack.c.l.b16 %v13878
        %v13920 = vunpack.c.h.b16 %v13878
        %v13921 = vunpack.c.l.b16 %v13879
        %v13922 = vunpack.c.h.b16 %v13879
        %v13923 = vunpack.c.l.b16 %v13880
        %v13924 = vunpack.c.h.b16 %v13880
        %v13925 = vunpack.c.l.b16 %v13881
        %v13926 = vunpack.c.h.b16 %v13881
        %v13927 = vunpack.c.l.b16 %v13882
        %v13928 = vunpack.c.h.b16 %v13882
        %v13929 = vunpack.c.l.b16 %v13883
        %v13930 = vunpack.c.h.b16 %v13883
        %v13931 = vunpack.c.l.b16 %v13884
        %v13932 = vunpack.c.h.b16 %v13884
        %v13933 = vpack.c.b16 %v13901, %v13901
        %v13934 = vpack.c.b16 %v13902, %v13902
        %v13935 = vpack.c.b16 %v13903, %v13903
        %v13936 = vpack.c.b16 %v13904, %v13904
        %v13937 = vpack.c.b16 %v13905, %v13905
        %v13938 = vpack.c.b16 %v13906, %v13906
        %v13939 = vpack.c.b16 %v13907, %v13907
        %v13940 = vpack.c.b16 %v13908, %v13908
        %v13941 = vpack.c.b16 %v13909, %v13909
        %v13942 = vpack.c.b16 %v13910, %v13910
        %v13943 = vpack.c.b16 %v13911, %v13911
        %v13944 = vpack.c.b16 %v13912, %v13912
        %v13945 = vpack.c.b16 %v13913, %v13913
        %v13946 = vpack.c.b16 %v13914, %v13914
        %v13947 = vpack.c.b16 %v13915, %v13915
        %v13948 = vpack.c.b16 %v13916, %v13916
        %v13949 = vpack.c.b16 %v13917, %v13917
        %v13950 = vpack.c.b16 %v13918, %v13918
        %v13951 = vpack.c.b16 %v13919, %v13919
        %v13952 = vpack.c.b16 %v13920, %v13920
        %v13953 = vpack.c.b16 %v13921, %v13921
        %v13954 = vpack.c.b16 %v13922, %v13922
        %v13955 = vpack.c.b16 %v13923, %v13923
        %v13956 = vpack.c.b16 %v13924, %v13924
        %v13957 = vpack.c.b16 %v13925, %v13925
        %v13958 = vpack.c.b16 %v13926, %v13926
        %v13959 = vpack.c.b16 %v13927, %v13927
        %v13960 = vpack.c.b16 %v13928, %v13928
        %v13961 = vpack.c.b16 %v13929, %v13929
        %v13962 = vpack.c.b16 %v13930, %v13930
        %v13963 = vpack.c.b16 %v13931, %v13931
        %v13964 = vpack.c.b16 %v13932, %v13932
        %vm13997 = vcmask 519168
        %13998 = vst.msk [vmem:[%s359] sm:$0xf] %vm13997, %v13933
        %13999 = vst.msk [vmem:[%s359 + $0x4] sm:$0xf] %vm13997, %v13934
        %14000 = vst.msk [vmem:[%s359 + $0x8] sm:$0xf] %vm13997, %v13935
        %14001 = vst.msk [vmem:[%s359 + $0xc] sm:$0xf] %vm13997, %v13936
        %14002 = vst.msk [vmem:[%s359 + $0x10] sm:$0xf] %vm13997, %v13937
        %14003 = vst.msk [vmem:[%s359 + $0x14] sm:$0xf] %vm13997, %v13938
        %14004 = vst.msk [vmem:[%s359 + $0x18] sm:$0xf] %vm13997, %v13939
        %14005 = vst.msk [vmem:[%s359 + $0x1c] sm:$0xf] %vm13997, %v13940
        %14006 = vst.msk [vmem:[%s359 + $0x20] sm:$0xf] %vm13997, %v13941
        %14007 = vst.msk [vmem:[%s359 + $0x24] sm:$0xf] %vm13997, %v13942
        %14008 = vst.msk [vmem:[%s359 + $0x28] sm:$0xf] %vm13997, %v13943
        %14009 = vst.msk [vmem:[%s359 + $0x2c] sm:$0xf] %vm13997, %v13944
        %14010 = vst.msk [vmem:[%s359 + $0x30] sm:$0xf] %vm13997, %v13945
        %14011 = vst.msk [vmem:[%s359 + $0x34] sm:$0xf] %vm13997, %v13946
        %14012 = vst.msk [vmem:[%s359 + $0x38] sm:$0xf] %vm13997, %v13947
        %14013 = vst.msk [vmem:[%s359 + $0x3c] sm:$0xf] %vm13997, %v13948
        %14014 = vst.msk [vmem:[%s359 + $0x40] sm:$0xf] %vm13997, %v13949
        %14015 = vst.msk [vmem:[%s359 + $0x44] sm:$0xf] %vm13997, %v13950
        %14016 = vst.msk [vmem:[%s359 + $0x48] sm:$0xf] %vm13997, %v13951
        %14017 = vst.msk [vmem:[%s359 + $0x4c] sm:$0xf] %vm13997, %v13952
        %14018 = vst.msk [vmem:[%s359 + $0x50] sm:$0xf] %vm13997, %v13953
        %14019 = vst.msk [vmem:[%s359 + $0x54] sm:$0xf] %vm13997, %v13954
        %14020 = vst.msk [vmem:[%s359 + $0x58] sm:$0xf] %vm13997, %v13955
        %14021 = vst.msk [vmem:[%s359 + $0x5c] sm:$0xf] %vm13997, %v13956
        %14022 = vst.msk [vmem:[%s359 + $0x60] sm:$0xf] %vm13997, %v13957
        %14023 = vst.msk [vmem:[%s359 + $0x64] sm:$0xf] %vm13997, %v13958
        %14024 = vst.msk [vmem:[%s359 + $0x68] sm:$0xf] %vm13997, %v13959
        %14025 = vst.msk [vmem:[%s359 + $0x6c] sm:$0xf] %vm13997, %v13960
        %14026 = vst.msk [vmem:[%s359 + $0x70] sm:$0xf] %vm13997, %v13961
        %14027 = vst.msk [vmem:[%s359 + $0x74] sm:$0xf] %vm13997, %v13962
        %14028 = vst.msk [vmem:[%s359 + $0x78] sm:$0xf] %vm13997, %v13963
        %14029 = vst.msk [vmem:[%s359 + $0x7c] sm:$0xf] %vm13997, %v13964
        %p14030 = scmp.eq.s32.totalorder %s30, 0
        // Predicated region
        $region41: #{tpu_custom_call.1} parent=39 // pred_check
          %p14031 = pneg %p14030
        $region42: #{tpu_custom_call.1} parent=39 // pred_check_branch
          %14033 = sbr.rel (%p14031) target = $region44
        $region43: #{tpu_custom_call.1} parent=39 // pred_region
          %vm14034 = vcmask 516096
          %14035 = vst.msk [vmem:[%s365] sm:$0x1] %vm14034, 0.0
          %14036 = vst.msk [vmem:[%s371] sm:$0x1] %vm14034, 0.0
        $region44: #{tpu_custom_call.1} parent=39 // pred_fallthru
          _
        %v14037 = vld [vmem:[%s365] sm:$0x1]
        %vm14038 = vcmask 523264
        %v14039 = vsel %vm14038, %v13837, 0.0
        %v14040 = vsel %vm14038, %v13838, 0.0
        %v14041 = vadd.f32 %v14039, %v14040
        %v14042 = vsel %vm14038, %v13839, 0.0
        %v14043 = vadd.f32 %v14041, %v14042
        %v14044 = vsel %vm14038, %v13840, 0.0
        %v14045 = vadd.f32 %v14043, %v14044
        %v14046 = vsel %vm14038, %v13841, 0.0
        %v14047 = vadd.f32 %v14045, %v14046
        %v14048 = vsel %vm14038, %v13842, 0.0
        %v14049 = vadd.f32 %v14047, %v14048
        %v14050 = vsel %vm14038, %v13843, 0.0
        %v14051 = vadd.f32 %v14049, %v14050
        %v14052 = vsel %vm14038, %v13844, 0.0
        %v14053 = vadd.f32 %v14051, %v14052
        %v14054 = vsel %vm14038, %v13845, 0.0
        %v14055 = vadd.f32 %v14053, %v14054
        %v14056 = vsel %vm14038, %v13846, 0.0
        %v14057 = vadd.f32 %v14055, %v14056
        %v14058 = vsel %vm14038, %v13847, 0.0
        %v14059 = vadd.f32 %v14057, %v14058
        %v14060 = vsel %vm14038, %v13848, 0.0
        %v14061 = vadd.f32 %v14059, %v14060
        %v14062 = vsel %vm14038, %v13849, 0.0
        %v14063 = vadd.f32 %v14061, %v14062
        %v14064 = vsel %vm14038, %v13850, 0.0
        %v14065 = vadd.f32 %v14063, %v14064
        %v14066 = vsel %vm14038, %v13851, 0.0
        %v14067 = vadd.f32 %v14065, %v14066
        %v14068 = vsel %vm14038, %v13852, 0.0
        %v14069 = vadd.f32 %v14067, %v14068
        %v14070 = vsel %vm14038, %v13853, 0.0
        %v14071 = vadd.f32 %v14069, %v14070
        %v14072 = vsel %vm14038, %v13854, 0.0
        %v14073 = vadd.f32 %v14071, %v14072
        %v14074 = vsel %vm14038, %v13855, 0.0
        %v14075 = vadd.f32 %v14073, %v14074
        %v14076 = vsel %vm14038, %v13856, 0.0
        %v14077 = vadd.f32 %v14075, %v14076
        %v14078 = vsel %vm14038, %v13857, 0.0
        %v14079 = vadd.f32 %v14077, %v14078
        %v14080 = vsel %vm14038, %v13858, 0.0
        %v14081 = vadd.f32 %v14079, %v14080
        %v14082 = vsel %vm14038, %v13859, 0.0
        %v14083 = vadd.f32 %v14081, %v14082
        %v14084 = vsel %vm14038, %v13860, 0.0
        %v14085 = vadd.f32 %v14083, %v14084
        %v14086 = vsel %vm14038, %v13861, 0.0
        %v14087 = vadd.f32 %v14085, %v14086
        %v14088 = vsel %vm14038, %v13862, 0.0
        %v14089 = vadd.f32 %v14087, %v14088
        %v14090 = vsel %vm14038, %v13863, 0.0
        %v14091 = vadd.f32 %v14089, %v14090
        %v14092 = vsel %vm14038, %v13864, 0.0
        %v14093 = vadd.f32 %v14091, %v14092
        %v14094 = vsel %vm14038, %v13865, 0.0
        %v14095 = vadd.f32 %v14093, %v14094
        %v14096 = vsel %vm14038, %v13866, 0.0
        %v14097 = vadd.f32 %v14095, %v14096
        %v14098 = vsel %vm14038, %v13867, 0.0
        %v14099 = vadd.f32 %v14097, %v14098
        %v14100 = vsel %vm14038, %v13868, 0.0
        %v14101 = vadd.f32 %v14099, %v14100
        %v14102 = vrot.slane %v14101, 4
        %v14103 = vadd.f32 %v14101, %v14102
        %v14104 = vrot.slane %v14103, 2
        %v14105 = vadd.f32 %v14103, %v14104
        %v14106 = vrot.slane %v14105, 1
        %v14107 = vadd.f32 %v14105, %v14106
        %v14108 = vadd.f32 %v14037, %v14107
        %vm14109 = vcmask 516096
        %14110 = vst.msk [vmem:[%s365] sm:$0x1] %vm14109, %v14108
        %v14111 = vld [vmem:[%s371] sm:$0x1]
        %v14112 = vmul.f32 %v13837, %v13837
        %v14113 = vmul.f32 %v13838, %v13838
        %v14114 = vmul.f32 %v13839, %v13839
        %v14115 = vmul.f32 %v13840, %v13840
        %v14116 = vmul.f32 %v13841, %v13841
        %v14117 = vmul.f32 %v13842, %v13842
        %v14118 = vmul.f32 %v13843, %v13843
        %v14119 = vmul.f32 %v13844, %v13844
        %v14120 = vmul.f32 %v13845, %v13845
        %v14121 = vmul.f32 %v13846, %v13846
        %v14122 = vmul.f32 %v13847, %v13847
        %v14123 = vmul.f32 %v13848, %v13848
        %v14124 = vmul.f32 %v13849, %v13849
        %v14125 = vmul.f32 %v13850, %v13850
        %v14126 = vmul.f32 %v13851, %v13851
        %v14127 = vmul.f32 %v13852, %v13852
        %v14128 = vmul.f32 %v13853, %v13853
        %v14129 = vmul.f32 %v13854, %v13854
        %v14130 = vmul.f32 %v13855, %v13855
        %v14131 = vmul.f32 %v13856, %v13856
        %v14132 = vmul.f32 %v13857, %v13857
        %v14133 = vmul.f32 %v13858, %v13858
        %v14134 = vmul.f32 %v13859, %v13859
        %v14135 = vmul.f32 %v13860, %v13860
        %v14136 = vmul.f32 %v13861, %v13861
        %v14137 = vmul.f32 %v13862, %v13862
        %v14138 = vmul.f32 %v13863, %v13863
        %v14139 = vmul.f32 %v13864, %v13864
        %v14140 = vmul.f32 %v13865, %v13865
        %v14141 = vmul.f32 %v13866, %v13866
        %v14142 = vmul.f32 %v13867, %v13867
        %v14143 = vmul.f32 %v13868, %v13868
        %v14144 = vsel %vm14038, %v14112, 0.0
        %v14145 = vsel %vm14038, %v14113, 0.0
        %v14146 = vadd.f32 %v14144, %v14145
        %v14147 = vsel %vm14038, %v14114, 0.0
        %v14148 = vadd.f32 %v14146, %v14147
        %v14149 = vsel %vm14038, %v14115, 0.0
        %v14150 = vadd.f32 %v14148, %v14149
        %v14151 = vsel %vm14038, %v14116, 0.0
        %v14152 = vadd.f32 %v14150, %v14151
        %v14153 = vsel %vm14038, %v14117, 0.0
        %v14154 = vadd.f32 %v14152, %v14153
        %v14155 = vsel %vm14038, %v14118, 0.0
        %v14156 = vadd.f32 %v14154, %v14155
        %v14157 = vsel %vm14038, %v14119, 0.0
        %v14158 = vadd.f32 %v14156, %v14157
        %v14159 = vsel %vm14038, %v14120, 0.0
        %v14160 = vadd.f32 %v14158, %v14159
        %v14161 = vsel %vm14038, %v14121, 0.0
        %v14162 = vadd.f32 %v14160, %v14161
        %v14163 = vsel %vm14038, %v14122, 0.0
        %v14164 = vadd.f32 %v14162, %v14163
        %v14165 = vsel %vm14038, %v14123, 0.0
        %v14166 = vadd.f32 %v14164, %v14165
        %v14167 = vsel %vm14038, %v14124, 0.0
        %v14168 = vadd.f32 %v14166, %v14167
        %v14169 = vsel %vm14038, %v14125, 0.0
        %v14170 = vadd.f32 %v14168, %v14169
        %v14171 = vsel %vm14038, %v14126, 0.0
        %v14172 = vadd.f32 %v14170, %v14171
        %v14173 = vsel %vm14038, %v14127, 0.0
        %v14174 = vadd.f32 %v14172, %v14173
        %v14175 = vsel %vm14038, %v14128, 0.0
        %v14176 = vadd.f32 %v14174, %v14175
        %v14177 = vsel %vm14038, %v14129, 0.0
        %v14178 = vadd.f32 %v14176, %v14177
        %v14179 = vsel %vm14038, %v14130, 0.0
        %v14180 = vadd.f32 %v14178, %v14179
        %v14181 = vsel %vm14038, %v14131, 0.0
        %v14182 = vadd.f32 %v14180, %v14181
        %v14183 = vsel %vm14038, %v14132, 0.0
        %v14184 = vadd.f32 %v14182, %v14183
        %v14185 = vsel %vm14038, %v14133, 0.0
        %v14186 = vadd.f32 %v14184, %v14185
        %v14187 = vsel %vm14038, %v14134, 0.0
        %v14188 = vadd.f32 %v14186, %v14187
        %v14189 = vsel %vm14038, %v14135, 0.0
        %v14190 = vadd.f32 %v14188, %v14189
        %v14191 = vsel %vm14038, %v14136, 0.0
        %v14192 = vadd.f32 %v14190, %v14191
        %v14193 = vsel %vm14038, %v14137, 0.0
        %v14194 = vadd.f32 %v14192, %v14193
        %v14195 = vsel %vm14038, %v14138, 0.0
        %v14196 = vadd.f32 %v14194, %v14195
        %v14197 = vsel %vm14038, %v14139, 0.0
        %v14198 = vadd.f32 %v14196, %v14197
        %v14199 = vsel %vm14038, %v14140, 0.0
        %v14200 = vadd.f32 %v14198, %v14199
        %v14201 = vsel %vm14038, %v14141, 0.0
        %v14202 = vadd.f32 %v14200, %v14201
        %v14203 = vsel %vm14038, %v14142, 0.0
        %v14204 = vadd.f32 %v14202, %v14203
        %v14205 = vsel %vm14038, %v14143, 0.0
        %v14206 = vadd.f32 %v14204, %v14205
        %v14207 = vrot.slane %v14206, 4
        %v14208 = vadd.f32 %v14206, %v14207
        %v14209 = vrot.slane %v14208, 2
        %v14210 = vadd.f32 %v14208, %v14209
        %v14211 = vrot.slane %v14210, 1
        %v14212 = vadd.f32 %v14210, %v14211
        %v14213 = vadd.f32 %v14111, %v14212
        %14214 = vst.msk [vmem:[%s371] sm:$0x1] %vm14109, %v14213
        %s14215 = sand.u32 %s177, 1
        %s14216 = scalar_lea.sflag [#allocation3], %s14215
        %s14217 = sand.u32 %s177, 1
        %s14218 = smul.addr %s14217, 128
        %s14219 = scalar_lea.vmem [#allocation2], %s14218
        %s14220 = sand.u32 %s25, 1
        %s14221 = scalar_lea.sflag [#allocation5], %s14220
        %s14222 = sand.u32 %s203, 1
        %s14223 = scalar_lea.vmem [#allocation4], %s14222
        %s14224 = sand.u32 %s25, 1
        %s14225 = scalar_lea.sflag [#allocation5], %s14224
        %s14226 = sand.u32 %s229, 1
        %s14227 = scalar_lea.vmem [#allocation6], %s14226
        // Predicated region
        $region45: #{tpu_custom_call.1} parent=39 // pred_check
          %p14228 = pneg %p187
        $region46: #{tpu_custom_call.1} parent=39 // pred_check_branch
          %14230 = sbr.rel (%p14228) target = $region48
        $region47: #{tpu_custom_call.1} parent=39 // pred_region
          %s14232 = ssub.s32 2048, 2048
          %14233 = vsyncadd %s14216, %s14232
          %s14234 = smul.addr %s30, 32
          %s14235 = smul.addr %s29, 512
          %s14236 = sadd.s32 %s14234, %s14235
          %s14237 = smul.addr %s14236, 64
          %s14238 = scalar_lea.hbm %s5, %s14237
          %s14239 = sshll.u32 %s14219, 4
          %s14240 = int_to_ptr.vmem [resolvable:$true] %s14239
          %14245 = dma.vmem_to_hbm [thread:$0]  %s14240, 2048, %s14238, %s14216, 64, 64, 4
        $region48: #{tpu_custom_call.1} parent=39 // pred_fallthru
          _
        // Predicated region
        $region49: #{tpu_custom_call.1} parent=39 // pred_check
          %p14246 = pneg %p213
        $region50: #{tpu_custom_call.1} parent=39 // pred_check_branch
          %14248 = sbr.rel (%p14246) target = $region52
        $region51: #{tpu_custom_call.1} parent=39 // pred_region
          %s14250 = ssub.s32 16, 16
          %14251 = vsyncadd %s14221, %s14250
          %s14252 = smul.addr %s29, 16
          %s14253 = scalar_lea.hbm %s6, %s14252
          %s14255 = sshll.u32 %s14223, 4
          %s14256 = int_to_ptr.vmem [resolvable:$true] %s14255
          %14258 = dma.vmem_to_hbm [thread:$0]  %s14256, 16, %s14253, %s14221
        $region52: #{tpu_custom_call.1} parent=39 // pred_fallthru
          _
        // Predicated region
        $region53: #{tpu_custom_call.1} parent=39 // pred_check
          %p14259 = pneg %p239
        $region54: #{tpu_custom_call.1} parent=39 // pred_check_branch
          %14261 = sbr.rel (%p14259) target = $region56
        $region55: #{tpu_custom_call.1} parent=39 // pred_region
          %s14263 = ssub.s32 16, 16
          %14264 = vsyncadd %s14225, %s14263
          %s14265 = smul.addr %s29, 16
          %s14266 = scalar_lea.hbm %s7, %s14265
          %s14268 = sshll.u32 %s14227, 4
          %s14269 = int_to_ptr.vmem [resolvable:$true] %s14268
          %14271 = dma.vmem_to_hbm [thread:$0]  %s14269, 16, %s14266, %s14225
        $region56: #{tpu_custom_call.1} parent=39 // pred_fallthru
          _
      $region40: #{tpu_custom_call.1} parent=5 // pred_fallthru
        _
      %p14272 = scmp.le.s32.totalorder 2, %s20
      // Predicated region
      $region57: #{tpu_custom_call.1} parent=5 // pred_check
        %p14273 = pneg %p14272
      $region58: #{tpu_custom_call.1} parent=5 // pred_check_branch
        %14275 = sbr.rel (%p14273) target = $region60
      $region59: #{tpu_custom_call.1} parent=5 // pred_region
        %s14276 = ssub.s32 %s20, 2
        // Predicated region
        $region61: #{tpu_custom_call.1} parent=59 // pred_check
          %p14277 = pneg %p193
        $region62: #{tpu_custom_call.1} parent=59 // pred_check_branch
          %14279 = sbr.rel (%p14277) target = $region64
        $region63: #{tpu_custom_call.1} parent=59 // pred_region
          %s14280 = sand.u32 %s178, 1
          %s14281 = scalar_lea.sflag [#allocation3], %s14280
          %s14282 = sand.u32 %s178, 1
          %s14283 = smul.addr %s14282, 128
          %s14284 = scalar_lea.vmem [#allocation2], %s14283
          %14285 = dma.done %s14281, 2048
        $region64: #{tpu_custom_call.1} parent=59 // pred_fallthru
          _
        // Predicated region
        $region65: #{tpu_custom_call.1} parent=59 // pred_check
          %p14286 = pneg %p219
        $region66: #{tpu_custom_call.1} parent=59 // pred_check_branch
          %14288 = sbr.rel (%p14286) target = $region68
        $region67: #{tpu_custom_call.1} parent=59 // pred_region
          %s14289 = sand.u32 %s26, 1
          %s14290 = scalar_lea.sflag [#allocation5], %s14289
          %s14291 = sand.u32 %s204, 1
          %s14292 = scalar_lea.vmem [#allocation4], %s14291
          %14293 = dma.done %s14290, 16
        $region68: #{tpu_custom_call.1} parent=59 // pred_fallthru
          _
        // Predicated region
        $region69: #{tpu_custom_call.1} parent=59 // pred_check
          %p14294 = pneg %p245
        $region70: #{tpu_custom_call.1} parent=59 // pred_check_branch
          %14296 = sbr.rel (%p14294) target = $region72
        $region71: #{tpu_custom_call.1} parent=59 // pred_region
          %s14297 = sand.u32 %s26, 1
          %s14298 = scalar_lea.sflag [#allocation5], %s14297
          %s14299 = sand.u32 %s230, 1
          %s14300 = scalar_lea.vmem [#allocation6], %s14299
          %14301 = dma.done %s14298, 16
        $region72: #{tpu_custom_call.1} parent=59 // pred_fallthru
          _
      $region60: #{tpu_custom_call.1} parent=5 // pred_fallthru
        _
    $region6: #{tpu_custom_call.1} parent=1 // loop_footer
      %s24 = sadd.s32 1, %s20
    $region7: #{tpu_custom_call.1} parent=1 // loop_footer_branch
      %19 = sbr.rel target = $region3
    $region8: #{tpu_custom_call.1} parent=1 // loop_exit
      _
    %14302 = vsyncpa [#allocation3], 1
    %s14303 = scalar_lea.sflag [#allocation3], 1
    %14304 = vsyncpa %s14303, 1
    %14305 = vsyncpa [#allocation5], 1
    %s14306 = scalar_lea.sflag [#allocation5], 1
    %14307 = vsyncpa %s14306, 1

</llo_original>
